<compile_context>
chip_gen: v7x
topology: tpu7x:2x2x1
jax: 0.10.0
libtpu: 0.0.40
codegen_flags: <defaults>
</compile_context>

<pallas_src>
import numpy as np
import jax
import jax.numpy as jnp
from jax.experimental import pallas as pl
from jax.experimental.pallas import tpu as pltpu

N_BATCH = 2
C_IN = 512          # regress1
H = W = 14          # implied by Linear(2048, ...) after 5x5/3 pool + 128ch 1x1 conv
K_POOL, S_POOL = 5, 3
OH = OW = (H - K_POOL) // S_POOL + 1   # 4
P_SPATIAL = OH * OW                    # 16
C_PROJ = 128
D_HIDDEN = 1024
BLK_J = 512                            # FC1 output-column block per grid step
assert D_HIDDEN % BLK_J == 0


def regression_kernel(x_ref, pmat_ref, convw_ref, convb_ref,
                      w1_ref, b1_ref, headw_ref, headb_ref,
                      out_ref, a_ref):
    # x_ref:     (N*512, 196) f32 (NCHW reshaped, no transpose)
    # pmat_ref:  (16, 196)    f32 (AvgPool as a matmul)
    # convw_ref: (512, 128)   bf16   convb_ref: (1, 128) f32
    # w1_ref:    (2048, BLK_J) bf16  b1_ref:    (1, BLK_J) f32
    # headw_ref: (BLK_J, 8)   f32    headb_ref: (1, 8) f32
    # out_ref:   (N, 8) f32  packed [xyz(3) | wpqr(4) | pad(1)]
    # a_ref:     (N, 2048) bf16 scratch (flattened conv activations)
    j = pl.program_id(0)
    n_batch = out_ref.shape[0]

    @pl.when(j == 0)
    def _init():
        pmat = pmat_ref[...]                                  # (16, 196)
        for n in range(n_batch):
            x_n = x_ref[n * C_IN:(n + 1) * C_IN, :]           # (512, 196)
            # AvgPool2d(5,3): pooled[p, c] = sum_q pmat[p, q] * x_n[c, q]
            pooled = jax.lax.dot_general(
                pmat, x_n,
                dimension_numbers=(((1,), (1,)), ((), ())),   # NT contraction
                preferred_element_type=jnp.float32)           # (16, 512)
            # 1x1 conv (channels -> 128) + bias + ReLU.
            conv = jnp.dot(pooled.astype(jnp.bfloat16), convw_ref[...],
                           preferred_element_type=jnp.float32)
            conv = jnp.maximum(conv + convb_ref[...], 0.0)    # (16, 128) f32
            conv_bf = conv.astype(jnp.bfloat16)
            # Flatten to lanes p*128 + k of row n.  PyTorch's channel-major
            # flatten (k*16 + p) is matched by the (one-time, host-side) FC1
            # weight re-layout.  Per-row stores are used instead of a
            # (16,128)->(1,2048) value reshape (lane-merging relayout); this
            # runs only at j==0 and hides under the next weight-block DMA.
            for p in range(P_SPATIAL):
                a_ref[n:n + 1, p * C_PROJ:(p + 1) * C_PROJ] = conv_bf[p:p + 1, :]
        out_ref[...] = jnp.zeros_like(out_ref)

    # FC1 block: (N, 2048) @ (2048, BLK_J) in bf16, f32 accumulation, + ReLU.
    h = jnp.dot(a_ref[...], w1_ref[...], preferred_element_type=jnp.float32)
    h = jnp.maximum(h + b1_ref[...], 0.0)                     # (N, BLK_J) f32
    # TODO(synk): Dropout(p=0.7) is identity at inference (not sampled here).

    # Fused heads, partial contribution of this D_HIDDEN block.
    out_ref[...] += jnp.dot(h, headw_ref[...],
                            preferred_element_type=jnp.float32)  # (N, 8)

    @pl.when(j == pl.num_programs(0) - 1)
    def _finalize():
        res = out_ref[...] + headb_ref[...]                   # (N, 8)
        col = jax.lax.broadcasted_iota(jnp.int32, res.shape, 1)
        is_q = (col >= 3) & (col < 7)                         # wpqr lanes
        sq = jnp.where(is_q, res * res, 0.0)
        nrm = jnp.sqrt(jnp.sum(sq, axis=1, keepdims=True))
        inv = 1.0 / jnp.maximum(nrm, 1e-12)                   # F.normalize eps
        out_ref[...] = jnp.where(is_q, res * inv, res)


def build_pool_matrix():
    """(16, 196) matrix implementing AvgPool2d(kernel=5, stride=3) on 14x14."""
    pmat = np.zeros((P_SPATIAL, H * W), np.float32)
    for ph in range(OH):
        for pw in range(OW):
            p = ph * OW + pw
            for dh in range(K_POOL):
                for dw in range(K_POOL):
                    hh, ww = ph * S_POOL + dh, pw * S_POOL + dw
                    pmat[p, hh * W + ww] = 1.0 / (K_POOL * K_POOL)
    return jnp.asarray(pmat)


def prepare_params(params):
    """One-time weight preparation (hoisted out of the per-call path)."""
    conv_w, conv_b, fc1_w, fc1_b, xyz_w, xyz_b, wpqr_w, wpqr_b = params
    pmat = build_pool_matrix()                                 # (16, 196) f32
    convw_t = conv_w.T.astype(jnp.bfloat16)                    # (512, 128)
    convb_r = conv_b.reshape(1, C_PROJ)                        # (1, 128) f32
    # PyTorch flatten order is k*16 + p  ->  rearrange FC1 weight to rows
    # p*128 + k, and cast to bf16 (the dominant HBM stream in the kernel).
    w1_flat = jnp.transpose(fc1_w.reshape(D_HIDDEN, C_PROJ, P_SPATIAL),
                            (2, 1, 0)).reshape(P_SPATIAL * C_PROJ, D_HIDDEN)
    w1_flat = w1_flat.astype(jnp.bfloat16)                     # (2048, 1024)
    b1_r = fc1_b.reshape(1, D_HIDDEN)                          # (1, 1024) f32
    # Fused heads: [xyz(3) | wpqr(4) | pad(1)].
    headw = jnp.concatenate(
        [xyz_w.T, wpqr_w.T, jnp.zeros((D_HIDDEN, 1), jnp.float32)], axis=1)  # (1024, 8)
    headb = jnp.concatenate(
        [xyz_b, wpqr_b, jnp.zeros((1,), jnp.float32)]).reshape(1, 8)
    return (pmat, convw_t, convb_r, w1_flat, b1_r, headw, headb)


@jax.jit
def regression_forward(x_nchw, prepped):
    pmat, convw_t, convb_r, w1_flat, b1_r, headw, headb = prepped
    n = x_nchw.shape[0]
    # Free view: (N, 512, 14, 14) -> (N*512, 196); NO transpose, NO extra HBM pass.
    x_r = x_nchw.reshape(n * C_IN, H * W)

    n_j = D_HIDDEN // BLK_J
    grid_spec = pltpu.PrefetchScalarGridSpec(
        num_scalar_prefetch=0,
        grid=(n_j,),
        in_specs=[
            pl.BlockSpec((n * C_IN, H * W), lambda j: (0, 0)),            # x (resident)
            pl.BlockSpec((P_SPATIAL, H * W), lambda j: (0, 0)),           # pool matrix
            pl.BlockSpec((C_IN, C_PROJ), lambda j: (0, 0)),               # conv weight
            pl.BlockSpec((1, C_PROJ), lambda j: (0, 0)),                  # conv bias
            pl.BlockSpec((P_SPATIAL * C_PROJ, BLK_J), lambda j: (0, j)),  # fc1 w (pipelined)
            pl.BlockSpec((1, BLK_J), lambda j: (0, j)),                   # fc1 bias block
            pl.BlockSpec((BLK_J, 8), lambda j: (j, 0)),                   # fused head w block
            pl.BlockSpec((1, 8), lambda j: (0, 0)),                       # fused head bias
        ],
        out_specs=pl.BlockSpec((n, 8), lambda j: (0, 0)),
        scratch_shapes=[pltpu.VMEM((n, P_SPATIAL * C_PROJ), jnp.bfloat16)],
    )
    out = pl.pallas_call(
        regression_kernel,
        out_shape=jax.ShapeDtypeStruct((n, 8), jnp.float32),
        grid_spec=grid_spec,
        compiler_params=pltpu.CompilerParams(
            dimension_semantics=("arbitrary",),
            vmem_limit_bytes=32 * 1024 * 1024),
    )(x_r, pmat, convw_t, convb_r, w1_flat, b1_r, headw, headb)
    return out[:, 0:3], out[:, 3:7]


def reference_forward(x_nchw, params):
    """Pure-JAX reference mirroring the PyTorch module (inference mode)."""
    conv_w, conv_b, fc1_w, fc1_b, xyz_w, xyz_b, wpqr_w, wpqr_b = params
    pooled = jax.lax.reduce_window(x_nchw, 0.0, jax.lax.add,
                                   (1, 1, K_POOL, K_POOL),
                                   (1, 1, S_POOL, S_POOL), 'VALID') / (K_POOL * K_POOL)
    conv = jnp.einsum('kc,nchw->nkhw', conv_w, pooled) + conv_b[None, :, None, None]
    conv = jnp.maximum(conv, 0.0)
    flat = conv.reshape(conv.shape[0], -1)
    h = jnp.maximum(flat @ fc1_w.T + fc1_b, 0.0)
    xyz = h @ xyz_w.T + xyz_b
    wpqr = h @ wpqr_w.T + wpqr_b
    nrm = jnp.sqrt(jnp.sum(wpqr * wpqr, axis=1, keepdims=True))
    return xyz, wpqr / jnp.maximum(nrm, 1e-12)


def init_params(key):
    ks = jax.random.split(key, 8)
    conv_w = jax.random.normal(ks[0], (C_PROJ, C_IN), jnp.float32) * (1.0 / np.sqrt(C_IN))
    conv_b = jax.random.normal(ks[1], (C_PROJ,), jnp.float32) * 0.01
    fc1_w = jax.random.normal(ks[2], (D_HIDDEN, 2048), jnp.float32) * (1.0 / np.sqrt(2048))
    fc1_b = jax.random.normal(ks[3], (D_HIDDEN,), jnp.float32) * 0.01
    xyz_w = jax.random.normal(ks[4], (3, D_HIDDEN), jnp.float32) * (1.0 / np.sqrt(D_HIDDEN))
    xyz_b = jax.random.normal(ks[5], (3,), jnp.float32) * 0.01
    wpqr_w = jax.random.normal(ks[6], (4, D_HIDDEN), jnp.float32) * (1.0 / np.sqrt(D_HIDDEN))
    wpqr_b = jax.random.normal(ks[7], (4,), jnp.float32) * 0.01
    return (conv_w, conv_b, fc1_w, fc1_b, xyz_w, xyz_b, wpqr_w, wpqr_b)


if __name__ == "__main__":
    key = jax.random.PRNGKey(0)
    kx, kp = jax.random.split(key)
    x = jax.random.normal(kx, (N_BATCH, C_IN, H, W), jnp.float32)
    params = init_params(kp)

    # One-time weight prep (cached / reused across calls).
    prepped = prepare_params(params)
    jax.block_until_ready(prepped)

    xyz, wpqr = regression_forward(x, prepped)
    jax.block_until_ready((xyz, wpqr))

    xyz_ref, wpqr_ref = reference_forward(x, params)
    np.testing.assert_allclose(np.asarray(xyz), np.asarray(xyz_ref), rtol=2e-2, atol=2e-2)
    np.testing.assert_allclose(np.asarray(wpqr), np.asarray(wpqr_ref), rtol=2e-2, atol=2e-2)

    print("KERNEL_OK")
</pallas_src>

<mosaic_0001>
module attributes {stable_mosaic.version = 11 : i64} {
  func.func @regression_kernel(%arg0: i32, %arg1: memref<1024x196xf32, #tpu.memory_space<vmem>>, %arg2: memref<16x196xf32, #tpu.memory_space<vmem>>, %arg3: memref<512x128xbf16, #tpu.memory_space<vmem>>, %arg4: memref<1x128xf32, #tpu.memory_space<vmem>>, %arg5: memref<2048x512xbf16, #tpu.memory_space<vmem>>, %arg6: memref<1x512xf32, #tpu.memory_space<vmem>>, %arg7: memref<512x8xf32, #tpu.memory_space<vmem>>, %arg8: memref<1x8xf32, #tpu.memory_space<vmem>>, %arg9: memref<2x8xf32, #tpu.memory_space<vmem>>, %arg10: memref<2x2048xbf16, #tpu.memory_space<vmem>>) attributes {dimension_semantics = [#tpu.dimension_semantics<arbitrary>], iteration_bounds = array<i64: 2>, scalar_prefetch = 0 : i64, scratch_operands = 1 : i64, tpu.core_type = #tpu.core_type<tc>, window_params = [{pipeline_mode = #tpu.pipeline_mode<synchronous>, transform_indices = @transform_0, window_bounds = array<i64: 1024, 196>}, {pipeline_mode = #tpu.pipeline_mode<synchronous>, transform_indices = @transform_1, window_bounds = array<i64: 16, 196>}, {pipeline_mode = #tpu.pipeline_mode<synchronous>, transform_indices = @transform_2, window_bounds = array<i64: 512, 128>}, {pipeline_mode = #tpu.pipeline_mode<synchronous>, transform_indices = @transform_3, window_bounds = array<i64: 1, 128>}, {transform_indices = @transform_4, window_bounds = array<i64: 2048, 512>}, {transform_indices = @transform_5, window_bounds = array<i64: 1, 512>}, {transform_indices = @transform_6, window_bounds = array<i64: 512, 8>}, {pipeline_mode = #tpu.pipeline_mode<synchronous>, transform_indices = @transform_7, window_bounds = array<i64: 1, 8>}, {pipeline_mode = #tpu.pipeline_mode<synchronous>, transform_indices = @transform_8, window_bounds = array<i64: 2, 8>}]} {
    %c0_i32 = arith.constant 0 : i32
    %0 = arith.cmpi eq, %arg0, %c0_i32 : i32
    %1 = arith.extui %0 : i1 to i32
    %c0_i32_0 = arith.constant 0 : i32
    %2 = arith.cmpi ne, %1, %c0_i32_0 : i32
    scf.if %2 {
      %c0_15 = arith.constant 0 : index
      %c0_16 = arith.constant 0 : index
      %19 = vector.load %arg2[%c0_15, %c0_16] : memref<16x196xf32, #tpu.memory_space<vmem>>, vector<16x196xf32>
      %c0_17 = arith.constant 0 : index
      %c0_18 = arith.constant 0 : index
      %20 = vector.load %arg1[%c0_17, %c0_18] : memref<1024x196xf32, #tpu.memory_space<vmem>>, vector<512x196xf32>
      %cst_19 = arith.constant dense<0.000000e+00> : vector<16x512xf32>
      %21 = tpu.matmul %19, %20, %cst_19 {dimension_numbers = #tpu.dot_dimension_numbers<[1], [1], [0], [0], [0, 0, 1, 0], [], []>} : vector<16x196xf32>, vector<512x196xf32>, vector<16x512xf32> -> vector<16x512xf32>
      %22 = arith.truncf %21 : vector<16x512xf32> to vector<16x512xbf16>
      %c0_20 = arith.constant 0 : index
      %c0_21 = arith.constant 0 : index
      %23 = vector.load %arg3[%c0_20, %c0_21] : memref<512x128xbf16, #tpu.memory_space<vmem>>, vector<512x128xbf16>
      %cst_22 = arith.constant dense<0.000000e+00> : vector<16x128xf32>
      %24 = tpu.matmul %22, %23, %cst_22 {dimension_numbers = #tpu.dot_dimension_numbers<[1], [0], [0], [1], [0, 0, 1, 1], [], []>} : vector<16x512xbf16>, vector<512x128xbf16>, vector<16x128xf32> -> vector<16x128xf32>
      %c0_23 = arith.constant 0 : index
      %c0_24 = arith.constant 0 : index
      %25 = vector.load %arg4[%c0_23, %c0_24] : memref<1x128xf32, #tpu.memory_space<vmem>>, vector<1x128xf32>
      %26 = vector.broadcast %25 : vector<1x128xf32> to vector<16x128xf32>
      %27 = arith.addf %24, %26 : vector<16x128xf32>
      %cst_25 = arith.constant 0.000000e+00 : f32
      %28 = vector.broadcast %cst_25 : f32 to vector<16x128xf32>
      %29 = arith.maximumf %27, %28 : vector<16x128xf32>
      %30 = arith.truncf %29 : vector<16x128xf32> to vector<16x128xbf16>
      %31 = vector.extract_strided_slice %30 {offsets = [0, 0], sizes = [1, 128], strides = [1, 1]} : vector<16x128xbf16> to vector<1x128xbf16>
      %c0_26 = arith.constant 0 : index
      %c0_27 = arith.constant 0 : index
      %32 = vector.load %arg10[%c0_26, %c0_27] : memref<2x2048xbf16, #tpu.memory_space<vmem>>, vector<1x128xbf16>
      tpu.vector_store %arg10[%c0_26, %c0_27], %31 {strides = array<i32>} : memref<2x2048xbf16, #tpu.memory_space<vmem>>, vector<1x128xbf16>,
      %33 = vector.extract_strided_slice %30 {offsets = [1, 0], sizes = [1, 128], strides = [1, 1]} : vector<16x128xbf16> to vector<1x128xbf16>
      %c0_28 = arith.constant 0 : index
      %c128 = arith.constant 128 : index
      %34 = vector.load %arg10[%c0_28, %c128] : memref<2x2048xbf16, #tpu.memory_space<vmem>>, vector<1x128xbf16>
      tpu.vector_store %arg10[%c0_28, %c128], %33 {strides = array<i32>} : memref<2x2048xbf16, #tpu.memory_space<vmem>>, vector<1x128xbf16>,
      %35 = vector.extract_strided_slice %30 {offsets = [2, 0], sizes = [1, 128], strides = [1, 1]} : vector<16x128xbf16> to vector<1x128xbf16>
      %c0_29 = arith.constant 0 : index
      %c256 = arith.constant 256 : index
      %36 = vector.load %arg10[%c0_29, %c256] : memref<2x2048xbf16, #tpu.memory_space<vmem>>, vector<1x128xbf16>
      tpu.vector_store %arg10[%c0_29, %c256], %35 {strides = array<i32>} : memref<2x2048xbf16, #tpu.memory_space<vmem>>, vector<1x128xbf16>,
      %37 = vector.extract_strided_slice %30 {offsets = [3, 0], sizes = [1, 128], strides = [1, 1]} : vector<16x128xbf16> to vector<1x128xbf16>
      %c0_30 = arith.constant 0 : index
      %c384 = arith.constant 384 : index
      %38 = vector.load %arg10[%c0_30, %c384] : memref<2x2048xbf16, #tpu.memory_space<vmem>>, vector<1x128xbf16>
      tpu.vector_store %arg10[%c0_30, %c384], %37 {strides = array<i32>} : memref<2x2048xbf16, #tpu.memory_space<vmem>>, vector<1x128xbf16>,
      %39 = vector.extract_strided_slice %30 {offsets = [4, 0], sizes = [1, 128], strides = [1, 1]} : vector<16x128xbf16> to vector<1x128xbf16>
      %c0_31 = arith.constant 0 : index
      %c512 = arith.constant 512 : index
      %40 = vector.load %arg10[%c0_31, %c512] : memref<2x2048xbf16, #tpu.memory_space<vmem>>, vector<1x128xbf16>
      tpu.vector_store %arg10[%c0_31, %c512], %39 {strides = array<i32>} : memref<2x2048xbf16, #tpu.memory_space<vmem>>, vector<1x128xbf16>,
      %41 = vector.extract_strided_slice %30 {offsets = [5, 0], sizes = [1, 128], strides = [1, 1]} : vector<16x128xbf16> to vector<1x128xbf16>
      %c0_32 = arith.constant 0 : index
      %c640 = arith.constant 640 : index
      %42 = vector.load %arg10[%c0_32, %c640] : memref<2x2048xbf16, #tpu.memory_space<vmem>>, vector<1x128xbf16>
      tpu.vector_store %arg10[%c0_32, %c640], %41 {strides = array<i32>} : memref<2x2048xbf16, #tpu.memory_space<vmem>>, vector<1x128xbf16>,
      %43 = vector.extract_strided_slice %30 {offsets = [6, 0], sizes = [1, 128], strides = [1, 1]} : vector<16x128xbf16> to vector<1x128xbf16>
      %c0_33 = arith.constant 0 : index
      %c768 = arith.constant 768 : index
      %44 = vector.load %arg10[%c0_33, %c768] : memref<2x2048xbf16, #tpu.memory_space<vmem>>, vector<1x128xbf16>
      tpu.vector_store %arg10[%c0_33, %c768], %43 {strides = array<i32>} : memref<2x2048xbf16, #tpu.memory_space<vmem>>, vector<1x128xbf16>,
      %45 = vector.extract_strided_slice %30 {offsets = [7, 0], sizes = [1, 128], strides = [1, 1]} : vector<16x128xbf16> to vector<1x128xbf16>
      %c0_34 = arith.constant 0 : index
      %c896 = arith.constant 896 : index
      %46 = vector.load %arg10[%c0_34, %c896] : memref<2x2048xbf16, #tpu.memory_space<vmem>>, vector<1x128xbf16>
      tpu.vector_store %arg10[%c0_34, %c896], %45 {strides = array<i32>} : memref<2x2048xbf16, #tpu.memory_space<vmem>>, vector<1x128xbf16>,
      %47 = vector.extract_strided_slice %30 {offsets = [8, 0], sizes = [1, 128], strides = [1, 1]} : vector<16x128xbf16> to vector<1x128xbf16>
      %c0_35 = arith.constant 0 : index
      %c1024 = arith.constant 1024 : index
      %48 = vector.load %arg10[%c0_35, %c1024] : memref<2x2048xbf16, #tpu.memory_space<vmem>>, vector<1x128xbf16>
      tpu.vector_store %arg10[%c0_35, %c1024], %47 {strides = array<i32>} : memref<2x2048xbf16, #tpu.memory_space<vmem>>, vector<1x128xbf16>,
      %49 = vector.extract_strided_slice %30 {offsets = [9, 0], sizes = [1, 128], strides = [1, 1]} : vector<16x128xbf16> to vector<1x128xbf16>
      %c0_36 = arith.constant 0 : index
      %c1152 = arith.constant 1152 : index
      %50 = vector.load %arg10[%c0_36, %c1152] : memref<2x2048xbf16, #tpu.memory_space<vmem>>, vector<1x128xbf16>
      tpu.vector_store %arg10[%c0_36, %c1152], %49 {strides = array<i32>} : memref<2x2048xbf16, #tpu.memory_space<vmem>>, vector<1x128xbf16>,
      %51 = vector.extract_strided_slice %30 {offsets = [10, 0], sizes = [1, 128], strides = [1, 1]} : vector<16x128xbf16> to vector<1x128xbf16>
      %c0_37 = arith.constant 0 : index
      %c1280 = arith.constant 1280 : index
      %52 = vector.load %arg10[%c0_37, %c1280] : memref<2x2048xbf16, #tpu.memory_space<vmem>>, vector<1x128xbf16>
      tpu.vector_store %arg10[%c0_37, %c1280], %51 {strides = array<i32>} : memref<2x2048xbf16, #tpu.memory_space<vmem>>, vector<1x128xbf16>,
      %53 = vector.extract_strided_slice %30 {offsets = [11, 0], sizes = [1, 128], strides = [1, 1]} : vector<16x128xbf16> to vector<1x128xbf16>
      %c0_38 = arith.constant 0 : index
      %c1408 = arith.constant 1408 : index
      %54 = vector.load %arg10[%c0_38, %c1408] : memref<2x2048xbf16, #tpu.memory_space<vmem>>, vector<1x128xbf16>
      tpu.vector_store %arg10[%c0_38, %c1408], %53 {strides = array<i32>} : memref<2x2048xbf16, #tpu.memory_space<vmem>>, vector<1x128xbf16>,
      %55 = vector.extract_strided_slice %30 {offsets = [12, 0], sizes = [1, 128], strides = [1, 1]} : vector<16x128xbf16> to vector<1x128xbf16>
      %c0_39 = arith.constant 0 : index
      %c1536 = arith.constant 1536 : index
      %56 = vector.load %arg10[%c0_39, %c1536] : memref<2x2048xbf16, #tpu.memory_space<vmem>>, vector<1x128xbf16>
      tpu.vector_store %arg10[%c0_39, %c1536], %55 {strides = array<i32>} : memref<2x2048xbf16, #tpu.memory_space<vmem>>, vector<1x128xbf16>,
      %57 = vector.extract_strided_slice %30 {offsets = [13, 0], sizes = [1, 128], strides = [1, 1]} : vector<16x128xbf16> to vector<1x128xbf16>
      %c0_40 = arith.constant 0 : index
      %c1664 = arith.constant 1664 : index
      %58 = vector.load %arg10[%c0_40, %c1664] : memref<2x2048xbf16, #tpu.memory_space<vmem>>, vector<1x128xbf16>
      tpu.vector_store %arg10[%c0_40, %c1664], %57 {strides = array<i32>} : memref<2x2048xbf16, #tpu.memory_space<vmem>>, vector<1x128xbf16>,
      %59 = vector.extract_strided_slice %30 {offsets = [14, 0], sizes = [1, 128], strides = [1, 1]} : vector<16x128xbf16> to vector<1x128xbf16>
      %c0_41 = arith.constant 0 : index
      %c1792 = arith.constant 1792 : index
      %60 = vector.load %arg10[%c0_41, %c1792] : memref<2x2048xbf16, #tpu.memory_space<vmem>>, vector<1x128xbf16>
      tpu.vector_store %arg10[%c0_41, %c1792], %59 {strides = array<i32>} : memref<2x2048xbf16, #tpu.memory_space<vmem>>, vector<1x128xbf16>,
      %61 = vector.extract_strided_slice %30 {offsets = [15, 0], sizes = [1, 128], strides = [1, 1]} : vector<16x128xbf16> to vector<1x128xbf16>
      %c0_42 = arith.constant 0 : index
      %c1920 = arith.constant 1920 : index
      %62 = vector.load %arg10[%c0_42, %c1920] : memref<2x2048xbf16, #tpu.memory_space<vmem>>, vector<1x128xbf16>
      tpu.vector_store %arg10[%c0_42, %c1920], %61 {strides = array<i32>} : memref<2x2048xbf16, #tpu.memory_space<vmem>>, vector<1x128xbf16>,
      %c512_43 = arith.constant 512 : index
      %c0_44 = arith.constant 0 : index
      %63 = vector.load %arg1[%c512_43, %c0_44] : memref<1024x196xf32, #tpu.memory_space<vmem>>, vector<512x196xf32>
      %cst_45 = arith.constant dense<0.000000e+00> : vector<16x512xf32>
      %64 = tpu.matmul %19, %63, %cst_45 {dimension_numbers = #tpu.dot_dimension_numbers<[1], [1], [0], [0], [0, 0, 1, 0], [], []>} : vector<16x196xf32>, vector<512x196xf32>, vector<16x512xf32> -> vector<16x512xf32>
      %65 = arith.truncf %64 : vector<16x512xf32> to vector<16x512xbf16>
      %c0_46 = arith.constant 0 : index
      %c0_47 = arith.constant 0 : index
      %66 = vector.load %arg3[%c0_46, %c0_47] : memref<512x128xbf16, #tpu.memory_space<vmem>>, vector<512x128xbf16>
      %cst_48 = arith.constant dense<0.000000e+00> : vector<16x128xf32>
      %67 = tpu.matmul %65, %66, %cst_48 {dimension_numbers = #tpu.dot_dimension_numbers<[1], [0], [0], [1], [0, 0, 1, 1], [], []>} : vector<16x512xbf16>, vector<512x128xbf16>, vector<16x128xf32> -> vector<16x128xf32>
      %c0_49 = arith.constant 0 : index
      %c0_50 = arith.constant 0 : index
      %68 = vector.load %arg4[%c0_49, %c0_50] : memref<1x128xf32, #tpu.memory_space<vmem>>, vector<1x128xf32>
      %69 = vector.broadcast %68 : vector<1x128xf32> to vector<16x128xf32>
      %70 = arith.addf %67, %69 : vector<16x128xf32>
      %cst_51 = arith.constant 0.000000e+00 : f32
      %71 = vector.broadcast %cst_51 : f32 to vector<16x128xf32>
      %72 = arith.maximumf %70, %71 : vector<16x128xf32>
      %73 = arith.truncf %72 : vector<16x128xf32> to vector<16x128xbf16>
      %74 = vector.extract_strided_slice %73 {offsets = [0, 0], sizes = [1, 128], strides = [1, 1]} : vector<16x128xbf16> to vector<1x128xbf16>
      %c1 = arith.constant 1 : index
      %c0_52 = arith.constant 0 : index
      %75 = vector.load %arg10[%c1, %c0_52] : memref<2x2048xbf16, #tpu.memory_space<vmem>>, vector<1x128xbf16>
      tpu.vector_store %arg10[%c1, %c0_52], %74 {strides = array<i32>} : memref<2x2048xbf16, #tpu.memory_space<vmem>>, vector<1x128xbf16>,
      %76 = vector.extract_strided_slice %73 {offsets = [1, 0], sizes = [1, 128], strides = [1, 1]} : vector<16x128xbf16> to vector<1x128xbf16>
      %c1_53 = arith.constant 1 : index
      %c128_54 = arith.constant 128 : index
      %77 = vector.load %arg10[%c1_53, %c128_54] : memref<2x2048xbf16, #tpu.memory_space<vmem>>, vector<1x128xbf16>
      tpu.vector_store %arg10[%c1_53, %c128_54], %76 {strides = array<i32>} : memref<2x2048xbf16, #tpu.memory_space<vmem>>, vector<1x128xbf16>,
      %78 = vector.extract_strided_slice %73 {offsets = [2, 0], sizes = [1, 128], strides = [1, 1]} : vector<16x128xbf16> to vector<1x128xbf16>
      %c1_55 = arith.constant 1 : index
      %c256_56 = arith.constant 256 : index
      %79 = vector.load %arg10[%c1_55, %c256_56] : memref<2x2048xbf16, #tpu.memory_space<vmem>>, vector<1x128xbf16>
      tpu.vector_store %arg10[%c1_55, %c256_56], %78 {strides = array<i32>} : memref<2x2048xbf16, #tpu.memory_space<vmem>>, vector<1x128xbf16>,
      %80 = vector.extract_strided_slice %73 {offsets = [3, 0], sizes = [1, 128], strides = [1, 1]} : vector<16x128xbf16> to vector<1x128xbf16>
      %c1_57 = arith.constant 1 : index
      %c384_58 = arith.constant 384 : index
      %81 = vector.load %arg10[%c1_57, %c384_58] : memref<2x2048xbf16, #tpu.memory_space<vmem>>, vector<1x128xbf16>
      tpu.vector_store %arg10[%c1_57, %c384_58], %80 {strides = array<i32>} : memref<2x2048xbf16, #tpu.memory_space<vmem>>, vector<1x128xbf16>,
      %82 = vector.extract_strided_slice %73 {offsets = [4, 0], sizes = [1, 128], strides = [1, 1]} : vector<16x128xbf16> to vector<1x128xbf16>
      %c1_59 = arith.constant 1 : index
      %c512_60 = arith.constant 512 : index
      %83 = vector.load %arg10[%c1_59, %c512_60] : memref<2x2048xbf16, #tpu.memory_space<vmem>>, vector<1x128xbf16>
      tpu.vector_store %arg10[%c1_59, %c512_60], %82 {strides = array<i32>} : memref<2x2048xbf16, #tpu.memory_space<vmem>>, vector<1x128xbf16>,
      %84 = vector.extract_strided_slice %73 {offsets = [5, 0], sizes = [1, 128], strides = [1, 1]} : vector<16x128xbf16> to vector<1x128xbf16>
      %c1_61 = arith.constant 1 : index
      %c640_62 = arith.constant 640 : index
      %85 = vector.load %arg10[%c1_61, %c640_62] : memref<2x2048xbf16, #tpu.memory_space<vmem>>, vector<1x128xbf16>
      tpu.vector_store %arg10[%c1_61, %c640_62], %84 {strides = array<i32>} : memref<2x2048xbf16, #tpu.memory_space<vmem>>, vector<1x128xbf16>,
      %86 = vector.extract_strided_slice %73 {offsets = [6, 0], sizes = [1, 128], strides = [1, 1]} : vector<16x128xbf16> to vector<1x128xbf16>
      %c1_63 = arith.constant 1 : index
      %c768_64 = arith.constant 768 : index
      %87 = vector.load %arg10[%c1_63, %c768_64] : memref<2x2048xbf16, #tpu.memory_space<vmem>>, vector<1x128xbf16>
      tpu.vector_store %arg10[%c1_63, %c768_64], %86 {strides = array<i32>} : memref<2x2048xbf16, #tpu.memory_space<vmem>>, vector<1x128xbf16>,
      %88 = vector.extract_strided_slice %73 {offsets = [7, 0], sizes = [1, 128], strides = [1, 1]} : vector<16x128xbf16> to vector<1x128xbf16>
      %c1_65 = arith.constant 1 : index
      %c896_66 = arith.constant 896 : index
      %89 = vector.load %arg10[%c1_65, %c896_66] : memref<2x2048xbf16, #tpu.memory_space<vmem>>, vector<1x128xbf16>
      tpu.vector_store %arg10[%c1_65, %c896_66], %88 {strides = array<i32>} : memref<2x2048xbf16, #tpu.memory_space<vmem>>, vector<1x128xbf16>,
      %90 = vector.extract_strided_slice %73 {offsets = [8, 0], sizes = [1, 128], strides = [1, 1]} : vector<16x128xbf16> to vector<1x128xbf16>
      %c1_67 = arith.constant 1 : index
      %c1024_68 = arith.constant 1024 : index
      %91 = vector.load %arg10[%c1_67, %c1024_68] : memref<2x2048xbf16, #tpu.memory_space<vmem>>, vector<1x128xbf16>
      tpu.vector_store %arg10[%c1_67, %c1024_68], %90 {strides = array<i32>} : memref<2x2048xbf16, #tpu.memory_space<vmem>>, vector<1x128xbf16>,
      %92 = vector.extract_strided_slice %73 {offsets = [9, 0], sizes = [1, 128], strides = [1, 1]} : vector<16x128xbf16> to vector<1x128xbf16>
      %c1_69 = arith.constant 1 : index
      %c1152_70 = arith.constant 1152 : index
      %93 = vector.load %arg10[%c1_69, %c1152_70] : memref<2x2048xbf16, #tpu.memory_space<vmem>>, vector<1x128xbf16>
      tpu.vector_store %arg10[%c1_69, %c1152_70], %92 {strides = array<i32>} : memref<2x2048xbf16, #tpu.memory_space<vmem>>, vector<1x128xbf16>,
      %94 = vector.extract_strided_slice %73 {offsets = [10, 0], sizes = [1, 128], strides = [1, 1]} : vector<16x128xbf16> to vector<1x128xbf16>
      %c1_71 = arith.constant 1 : index
      %c1280_72 = arith.constant 1280 : index
      %95 = vector.load %arg10[%c1_71, %c1280_72] : memref<2x2048xbf16, #tpu.memory_space<vmem>>, vector<1x128xbf16>
      tpu.vector_store %arg10[%c1_71, %c1280_72], %94 {strides = array<i32>} : memref<2x2048xbf16, #tpu.memory_space<vmem>>, vector<1x128xbf16>,
      %96 = vector.extract_strided_slice %73 {offsets = [11, 0], sizes = [1, 128], strides = [1, 1]} : vector<16x128xbf16> to vector<1x128xbf16>
      %c1_73 = arith.constant 1 : index
      %c1408_74 = arith.constant 1408 : index
      %97 = vector.load %arg10[%c1_73, %c1408_74] : memref<2x2048xbf16, #tpu.memory_space<vmem>>, vector<1x128xbf16>
      tpu.vector_store %arg10[%c1_73, %c1408_74], %96 {strides = array<i32>} : memref<2x2048xbf16, #tpu.memory_space<vmem>>, vector<1x128xbf16>,
      %98 = vector.extract_strided_slice %73 {offsets = [12, 0], sizes = [1, 128], strides = [1, 1]} : vector<16x128xbf16> to vector<1x128xbf16>
      %c1_75 = arith.constant 1 : index
      %c1536_76 = arith.constant 1536 : index
      %99 = vector.load %arg10[%c1_75, %c1536_76] : memref<2x2048xbf16, #tpu.memory_space<vmem>>, vector<1x128xbf16>
      tpu.vector_store %arg10[%c1_75, %c1536_76], %98 {strides = array<i32>} : memref<2x2048xbf16, #tpu.memory_space<vmem>>, vector<1x128xbf16>,
      %100 = vector.extract_strided_slice %73 {offsets = [13, 0], sizes = [1, 128], strides = [1, 1]} : vector<16x128xbf16> to vector<1x128xbf16>
      %c1_77 = arith.constant 1 : index
      %c1664_78 = arith.constant 1664 : index
      %101 = vector.load %arg10[%c1_77, %c1664_78] : memref<2x2048xbf16, #tpu.memory_space<vmem>>, vector<1x128xbf16>
      tpu.vector_store %arg10[%c1_77, %c1664_78], %100 {strides = array<i32>} : memref<2x2048xbf16, #tpu.memory_space<vmem>>, vector<1x128xbf16>,
      %102 = vector.extract_strided_slice %73 {offsets = [14, 0], sizes = [1, 128], strides = [1, 1]} : vector<16x128xbf16> to vector<1x128xbf16>
      %c1_79 = arith.constant 1 : index
      %c1792_80 = arith.constant 1792 : index
      %103 = vector.load %arg10[%c1_79, %c1792_80] : memref<2x2048xbf16, #tpu.memory_space<vmem>>, vector<1x128xbf16>
      tpu.vector_store %arg10[%c1_79, %c1792_80], %102 {strides = array<i32>} : memref<2x2048xbf16, #tpu.memory_space<vmem>>, vector<1x128xbf16>,
      %104 = vector.extract_strided_slice %73 {offsets = [15, 0], sizes = [1, 128], strides = [1, 1]} : vector<16x128xbf16> to vector<1x128xbf16>
      %c1_81 = arith.constant 1 : index
      %c1920_82 = arith.constant 1920 : index
      %105 = vector.load %arg10[%c1_81, %c1920_82] : memref<2x2048xbf16, #tpu.memory_space<vmem>>, vector<1x128xbf16>
      tpu.vector_store %arg10[%c1_81, %c1920_82], %104 {strides = array<i32>} : memref<2x2048xbf16, #tpu.memory_space<vmem>>, vector<1x128xbf16>,
      %cst_83 = arith.constant 0.000000e+00 : f32
      %106 = vector.broadcast %cst_83 : f32 to vector<2x8xf32>
      %c0_84 = arith.constant 0 : index
      %c0_85 = arith.constant 0 : index
      %107 = vector.load %arg9[%c0_84, %c0_85] : memref<2x8xf32, #tpu.memory_space<vmem>>, vector<2x8xf32>
      tpu.vector_store %arg9[%c0_84, %c0_85], %106 {strides = array<i32>} : memref<2x8xf32, #tpu.memory_space<vmem>>, vector<2x8xf32>,
    } else {
    }
    %c0 = arith.constant 0 : index
    %c0_1 = arith.constant 0 : index
    %3 = vector.load %arg10[%c0, %c0_1] : memref<2x2048xbf16, #tpu.memory_space<vmem>>, vector<2x2048xbf16>
    %c0_2 = arith.constant 0 : index
    %c0_3 = arith.constant 0 : index
    %4 = vector.load %arg5[%c0_2, %c0_3] : memref<2048x512xbf16, #tpu.memory_space<vmem>>, vector<2048x512xbf16>
    %cst = arith.constant dense<0.000000e+00> : vector<2x512xf32>
    %5 = tpu.matmul %3, %4, %cst {dimension_numbers = #tpu.dot_dimension_numbers<[1], [0], [0], [1], [0, 0, 1, 1], [], []>} : vector<2x2048xbf16>, vector<2048x512xbf16>, vector<2x512xf32> -> vector<2x512xf32>
    %c0_4 = arith.constant 0 : index
    %c0_5 = arith.constant 0 : index
    %6 = vector.load %arg6[%c0_4, %c0_5] : memref<1x512xf32, #tpu.memory_space<vmem>>, vector<1x512xf32>
    %7 = vector.broadcast %6 : vector<1x512xf32> to vector<2x512xf32>
    %8 = arith.addf %5, %7 : vector<2x512xf32>
    %cst_6 = arith.constant 0.000000e+00 : f32
    %9 = vector.broadcast %cst_6 : f32 to vector<2x512xf32>
    %10 = arith.maximumf %8, %9 : vector<2x512xf32>
    %c0_7 = arith.constant 0 : index
    %c0_8 = arith.constant 0 : index
    %11 = vector.load %arg9[%c0_7, %c0_8] : memref<2x8xf32, #tpu.memory_space<vmem>>, vector<2x8xf32>
    %c0_9 = arith.constant 0 : index
    %c0_10 = arith.constant 0 : index
    %12 = vector.load %arg7[%c0_9, %c0_10] : memref<512x8xf32, #tpu.memory_space<vmem>>, vector<512x8xf32>
    %cst_11 = arith.constant dense<0.000000e+00> : vector<2x8xf32>
    %13 = tpu.matmul %10, %12, %cst_11 {dimension_numbers = #tpu.dot_dimension_numbers<[1], [0], [0], [1], [0, 0, 1, 1], [], []>} : vector<2x512xf32>, vector<512x8xf32>, vector<2x8xf32> -> vector<2x8xf32>
    %14 = arith.addf %11, %13 : vector<2x8xf32>
    %c0_12 = arith.constant 0 : index
    %c0_13 = arith.constant 0 : index
    %15 = vector.load %arg9[%c0_12, %c0_13] : memref<2x8xf32, #tpu.memory_space<vmem>>, vector<2x8xf32>
    tpu.vector_store %arg9[%c0_12, %c0_13], %14 {strides = array<i32>} : memref<2x8xf32, #tpu.memory_space<vmem>>, vector<2x8xf32>,
    %c1_i32 = arith.constant 1 : i32
    %16 = arith.cmpi eq, %arg0, %c1_i32 : i32
    %17 = arith.extui %16 : i1 to i32
    %c0_i32_14 = arith.constant 0 : i32
    %18 = arith.cmpi ne, %17, %c0_i32_14 : i32
    scf.if %18 {
      %c0_15 = arith.constant 0 : index
      %c0_16 = arith.constant 0 : index
      %19 = vector.load %arg9[%c0_15, %c0_16] : memref<2x8xf32, #tpu.memory_space<vmem>>, vector<2x8xf32>
      %c0_17 = arith.constant 0 : index
      %c0_18 = arith.constant 0 : index
      %20 = vector.load %arg8[%c0_17, %c0_18] : memref<1x8xf32, #tpu.memory_space<vmem>>, vector<1x8xf32>
      %21 = vector.broadcast %20 : vector<1x8xf32> to vector<2x8xf32>
      %22 = arith.addf %19, %21 : vector<2x8xf32>
      %23 = tpu.iota {dimensions = array<i32: 1>} : vector<2x8xi32>
      %c3_i32 = arith.constant 3 : i32
      %24 = vector.broadcast %c3_i32 : i32 to vector<2x8xi32>
      %25 = arith.cmpi sge, %23, %24 : vector<2x8xi32>
      %c7_i32 = arith.constant 7 : i32
      %26 = vector.broadcast %c7_i32 : i32 to vector<2x8xi32>
      %27 = arith.cmpi slt, %23, %26 : vector<2x8xi32>
      %28 = arith.andi %25, %27 : vector<2x8xi1>
      %29 = arith.mulf %22, %22 : vector<2x8xf32>
      %cst_19 = arith.constant 0.000000e+00 : f32
      %30 = vector.broadcast %cst_19 : f32 to vector<2x8xf32>
      %31 = arith.select %28, %29, %30 : vector<2x8xi1>, vector<2x8xf32>
      %cst_20 = arith.constant dense<0.000000e+00> : vector<2xf32>
      %32 = vector.multi_reduction <add>, %31, %cst_20 [1] : vector<2x8xf32> to vector<2xf32>
      %33 = vector.shape_cast %32 : vector<2xf32> to vector<2x1xf32>
      %34 = math.sqrt %33 : vector<2x1xf32>
      %cst_21 = arith.constant 9.99999996E-13 : f32
      %35 = vector.broadcast %cst_21 : f32 to vector<2x1xf32>
      %36 = arith.maximumf %34, %35 : vector<2x1xf32>
      %cst_22 = arith.constant 1.000000e+00 : f32
      %37 = vector.broadcast %cst_22 : f32 to vector<2x1xf32>
      %38 = arith.divf %37, %36 : vector<2x1xf32>
      %39 = vector.broadcast %38 : vector<2x1xf32> to vector<2x8xf32>
      %40 = arith.mulf %22, %39 : vector<2x8xf32>
      %41 = arith.select %28, %40, %22 : vector<2x8xi1>, vector<2x8xf32>
      %c0_23 = arith.constant 0 : index
      %c0_24 = arith.constant 0 : index
      %42 = vector.load %arg9[%c0_23, %c0_24] : memref<2x8xf32, #tpu.memory_space<vmem>>, vector<2x8xf32>
      tpu.vector_store %arg9[%c0_23, %c0_24], %41 {strides = array<i32>} : memref<2x8xf32, #tpu.memory_space<vmem>>, vector<2x8xf32>,
    } else {
    }
    return
  }
  func.func @transform_0(%arg0: i32) -> (i32, i32) {
    %c0_i32 = arith.constant 0 : i32
    %c0_i32_0 = arith.constant 0 : i32
    %c0_i32_1 = arith.constant 0 : i32
    return %c0_i32, %c0_i32_0 : i32, i32
  }
  func.func @transform_1(%arg0: i32) -> (i32, i32) {
    %c0_i32 = arith.constant 0 : i32
    %c0_i32_0 = arith.constant 0 : i32
    %c0_i32_1 = arith.constant 0 : i32
    return %c0_i32, %c0_i32_0 : i32, i32
  }
  func.func @transform_2(%arg0: i32) -> (i32, i32) {
    %c0_i32 = arith.constant 0 : i32
    %c0_i32_0 = arith.constant 0 : i32
    %c0_i32_1 = arith.constant 0 : i32
    return %c0_i32, %c0_i32_0 : i32, i32
  }
  func.func @transform_3(%arg0: i32) -> (i32, i32) {
    %c0_i32 = arith.constant 0 : i32
    %c0_i32_0 = arith.constant 0 : i32
    %c0_i32_1 = arith.constant 0 : i32
    return %c0_i32, %c0_i32_0 : i32, i32
  }
  func.func @transform_4(%arg0: i32) -> (i32, i32) {
    %c0_i32 = arith.constant 0 : i32
    %c0_i32_0 = arith.constant 0 : i32
    return %c0_i32, %arg0 : i32, i32
  }
  func.func @transform_5(%arg0: i32) -> (i32, i32) {
    %c0_i32 = arith.constant 0 : i32
    %c0_i32_0 = arith.constant 0 : i32
    return %c0_i32, %arg0 : i32, i32
  }
  func.func @transform_6(%arg0: i32) -> (i32, i32) {
    %c0_i32 = arith.constant 0 : i32
    %c0_i32_0 = arith.constant 0 : i32
    return %arg0, %c0_i32 : i32, i32
  }
  func.func @transform_7(%arg0: i32) -> (i32, i32) {
    %c0_i32 = arith.constant 0 : i32
    %c0_i32_0 = arith.constant 0 : i32
    %c0_i32_1 = arith.constant 0 : i32
    return %c0_i32, %c0_i32_0 : i32, i32
  }
  func.func @transform_8(%arg0: i32) -> (i32, i32) {
    %c0_i32 = arith.constant 0 : i32
    %c0_i32_0 = arith.constant 0 : i32
    %c0_i32_1 = arith.constant 0 : i32
    return %c0_i32, %c0_i32_0 : i32, i32
  }
}

</mosaic_0001>

<llo_original>
// kernel: regression_forward.1
$region0: #{regression_forward.1}
  #allocation0 [shape = 'u32[]', space=smem, size = 0x4, offset = 0x4, fixed_abs, tag = 'smem constant byte address 0x4 - core index']
  #allocation1 [shape = 'u32[144,128]{1,0:T(1,128)}', space=vmem, size = 0x12000, scoped, tag = 'internal scratch']
  #allocation2 [shape = 'bf16[2,2048]{1,0:T(2,128)(2,1)}', space=vmem, size = 0x2000, scoped, tag = 'scratch operand']
  %s0 = inlined_call_operand.vmem [shape: f32[1024,196], index: 0, kind: input, shape index: {}]
  %s1 = inlined_call_operand.vmem [shape: f32[16,196], index: 1, kind: input, shape index: {}]
  %s2 = inlined_call_operand.vmem [shape: bf16[512,128], index: 2, kind: input, shape index: {}]
  %s3 = inlined_call_operand.vmem [shape: f32[1,128], index: 3, kind: input, shape index: {}]
  %s4 = inlined_call_operand.vmem [shape: bf16[2048,1024], index: 4, kind: input, shape index: {}]
  %s5 = inlined_call_operand.vmem [shape: f32[1,1024], index: 5, kind: input, shape index: {}]
  %s6 = inlined_call_operand.vmem [shape: f32[1024,8], index: 6, kind: input, shape index: {}]
  %s7 = inlined_call_operand.vmem [shape: f32[1,8], index: 7, kind: input, shape index: {}]
  %s8 = inlined_call_operand.vmem [shape: f32[2,8], index: 8, kind: output, shape index: {}]
  %s9 = sld [smem:[#allocation0]]
  $region96: #{regression_forward.1} parent=0
    _
  %s11 = ssub.s32 1, %s9
  %s12 = scalar_select 0, %s11, %s9
  $region1: #{regression_forward.1} parent=0
    #allocation3 [shape = 'u8[4194304]{0}', space=vmem, size = 0x400000, scoped, tag = 'input window, operand 4']
    loop: start=0, step=1, limit=4
    $region2: #{regression_forward.1} parent=1 // loop_pre_header
      _
    $region3: #{regression_forward.1} parent=1 // loop_header
      %s14 = sphi 0, %s18
      %p15 = scmp.ge.s32.totalorder %s14, 4
      %s22 = sphi 0, %s22
      %s24 = sphi 0, %s22
      %s25 = sphi 0, %s24
      %s39 = sphi 0, %s25
      %s43 = sphi 0, %s43
      %s45 = sphi 0, %s43
      %s46 = sphi 0, %s45
      %s60 = sphi 0, %s46
      %s64 = sphi 0, %s64
      %s66 = sphi 0, %s64
      %s67 = sphi 0, %s66
      %s81 = sphi 0, %s67
      %s85 = sphi 0, %s85
      %s87 = sphi 0, %s85
      %s88 = sphi 0, %s87
      %s102 = sphi 0, %s88
      %s108 = sphi 0, %s110
      %s111 = sphi 0, %s108
      %s112 = sphi 0, %s111
      %s128 = sphi 0, %s112
      %s134 = sphi 0, %s136
      %s137 = sphi 0, %s134
      %s138 = sphi 0, %s137
      %s154 = sphi 0, %s138
      %s160 = sphi 0, %s162
      %s163 = sphi 0, %s160
      %s164 = sphi 0, %s163
      %s180 = sphi 0, %s164
      %s184 = sphi 0, %s184
      %s186 = sphi 0, %s184
      %s187 = sphi 0, %s186
      %s201 = sphi 0, %s187
      %s205 = sphi 0, %s205
      %s207 = sphi 0, %s205
      %s208 = sphi 0, %s207
      %s222 = sphi 0, %s208
    $region4: #{regression_forward.1} parent=1 // loop_header_branch
      %17 = sbr.rel (%p15) target = $region8
    $region5: #{regression_forward.1} parent=1 // loop_body
      %s19 = ssub.s32 %s14, 1
      %s20 = ssub.s32 %s14, 2
      %s21 = sadd.s32 %s14, 1
      %s23 = sadd.s32 %s22, 1
      %p26 = scmp.eq.s32.totalorder %s14, 1
      %p27 = scmp.ne.s32.totalorder %s22, %s24
      %p28 = scmp.eq.s32.totalorder %s14, 0
      %p29 = por %p27, %p28
      %p30 = scmp.ne.s32.totalorder %s22, %s24
      %p31 = scmp.eq.s32.totalorder %s19, 1
      %p32 = por %p30, %p31
      %p33 = scmp.ne.s32.totalorder %s24, %s25
      %p34 = scmp.eq.s32.totalorder %s19, 0
      %p35 = por %p33, %p34
      %p36 = scmp.ne.s32.totalorder %s24, %s25
      %p37 = scmp.eq.s32.totalorder %s20, 1
      %p38 = por %p36, %p37
      %p40 = scmp.ne.s32.totalorder %s25, %s39
      %p41 = scmp.eq.s32.totalorder %s20, 0
      %p42 = por %p40, %p41
      %s44 = sadd.s32 %s43, 1
      %p47 = scmp.eq.s32.totalorder %s14, 1
      %p48 = scmp.ne.s32.totalorder %s43, %s45
      %p49 = scmp.eq.s32.totalorder %s14, 0
      %p50 = por %p48, %p49
      %p51 = scmp.ne.s32.totalorder %s43, %s45
      %p52 = scmp.eq.s32.totalorder %s19, 1
      %p53 = por %p51, %p52
      %p54 = scmp.ne.s32.totalorder %s45, %s46
      %p55 = scmp.eq.s32.totalorder %s19, 0
      %p56 = por %p54, %p55
      %p57 = scmp.ne.s32.totalorder %s45, %s46
      %p58 = scmp.eq.s32.totalorder %s20, 1
      %p59 = por %p57, %p58
      %p61 = scmp.ne.s32.totalorder %s46, %s60
      %p62 = scmp.eq.s32.totalorder %s20, 0
      %p63 = por %p61, %p62
      %s65 = sadd.s32 %s64, 1
      %p68 = scmp.eq.s32.totalorder %s14, 1
      %p69 = scmp.ne.s32.totalorder %s64, %s66
      %p70 = scmp.eq.s32.totalorder %s14, 0
      %p71 = por %p69, %p70
      %p72 = scmp.ne.s32.totalorder %s64, %s66
      %p73 = scmp.eq.s32.totalorder %s19, 1
      %p74 = por %p72, %p73
      %p75 = scmp.ne.s32.totalorder %s66, %s67
      %p76 = scmp.eq.s32.totalorder %s19, 0
      %p77 = por %p75, %p76
      %p78 = scmp.ne.s32.totalorder %s66, %s67
      %p79 = scmp.eq.s32.totalorder %s20, 1
      %p80 = por %p78, %p79
      %p82 = scmp.ne.s32.totalorder %s67, %s81
      %p83 = scmp.eq.s32.totalorder %s20, 0
      %p84 = por %p82, %p83
      %s86 = sadd.s32 %s85, 1
      %p89 = scmp.eq.s32.totalorder %s14, 1
      %p90 = scmp.ne.s32.totalorder %s85, %s87
      %p91 = scmp.eq.s32.totalorder %s14, 0
      %p92 = por %p90, %p91
      %p93 = scmp.ne.s32.totalorder %s85, %s87
      %p94 = scmp.eq.s32.totalorder %s19, 1
      %p95 = por %p93, %p94
      %p96 = scmp.ne.s32.totalorder %s87, %s88
      %p97 = scmp.eq.s32.totalorder %s19, 0
      %p98 = por %p96, %p97
      %p99 = scmp.ne.s32.totalorder %s87, %s88
      %p100 = scmp.eq.s32.totalorder %s20, 1
      %p101 = por %p99, %p100
      %p103 = scmp.ne.s32.totalorder %s88, %s102
      %p104 = scmp.eq.s32.totalorder %s20, 0
      %p105 = por %p103, %p104
      %s106 = ssub.s32 %s14, %s21
      %p107 = scmp.eq.s32.totalorder %s106, 0
      %s109 = sadd.s32 %s108, 1
      %s110 = scalar_select %p107, %s108, %s109
      %p113 = pneg %p107
      %p114 = scmp.eq.s32.totalorder %s14, 1
      %p115 = por %p113, %p114
      %p116 = scmp.ne.s32.totalorder %s108, %s111
      %p117 = scmp.eq.s32.totalorder %s14, 0
      %p118 = por %p116, %p117
      %p119 = scmp.ne.s32.totalorder %s108, %s111
      %p120 = scmp.eq.s32.totalorder %s19, 1
      %p121 = por %p119, %p120
      %p122 = scmp.ne.s32.totalorder %s111, %s112
      %p123 = scmp.eq.s32.totalorder %s19, 0
      %p124 = por %p122, %p123
      %p125 = scmp.ne.s32.totalorder %s111, %s112
      %p126 = scmp.eq.s32.totalorder %s20, 1
      %p127 = por %p125, %p126
      %p129 = scmp.ne.s32.totalorder %s112, %s128
      %p130 = scmp.eq.s32.totalorder %s20, 0
      %p131 = por %p129, %p130
      %s132 = ssub.s32 %s14, %s21
      %p133 = scmp.eq.s32.totalorder %s132, 0
      %s135 = sadd.s32 %s134, 1
      %s136 = scalar_select %p133, %s134, %s135
      %p139 = pneg %p133
      %p140 = scmp.eq.s32.totalorder %s14, 1
      %p141 = por %p139, %p140
      %p142 = scmp.ne.s32.totalorder %s134, %s137
      %p143 = scmp.eq.s32.totalorder %s14, 0
      %p144 = por %p142, %p143
      %p145 = scmp.ne.s32.totalorder %s134, %s137
      %p146 = scmp.eq.s32.totalorder %s19, 1
      %p147 = por %p145, %p146
      %p148 = scmp.ne.s32.totalorder %s137, %s138
      %p149 = scmp.eq.s32.totalorder %s19, 0
      %p150 = por %p148, %p149
      %p151 = scmp.ne.s32.totalorder %s137, %s138
      %p152 = scmp.eq.s32.totalorder %s20, 1
      %p153 = por %p151, %p152
      %p155 = scmp.ne.s32.totalorder %s138, %s154
      %p156 = scmp.eq.s32.totalorder %s20, 0
      %p157 = por %p155, %p156
      %s158 = ssub.s32 %s14, %s21
      %p159 = scmp.eq.s32.totalorder %s158, 0
      %s161 = sadd.s32 %s160, 1
      %s162 = scalar_select %p159, %s160, %s161
      %p165 = pneg %p159
      %p166 = scmp.eq.s32.totalorder %s14, 1
      %p167 = por %p165, %p166
      %p168 = scmp.ne.s32.totalorder %s160, %s163
      %p169 = scmp.eq.s32.totalorder %s14, 0
      %p170 = por %p168, %p169
      %p171 = scmp.ne.s32.totalorder %s160, %s163
      %p172 = scmp.eq.s32.totalorder %s19, 1
      %p173 = por %p171, %p172
      %p174 = scmp.ne.s32.totalorder %s163, %s164
      %p175 = scmp.eq.s32.totalorder %s19, 0
      %p176 = por %p174, %p175
      %p177 = scmp.ne.s32.totalorder %s163, %s164
      %p178 = scmp.eq.s32.totalorder %s20, 1
      %p179 = por %p177, %p178
      %p181 = scmp.ne.s32.totalorder %s164, %s180
      %p182 = scmp.eq.s32.totalorder %s20, 0
      %p183 = por %p181, %p182
      %s185 = sadd.s32 %s184, 1
      %p188 = scmp.eq.s32.totalorder %s14, 1
      %p189 = scmp.ne.s32.totalorder %s184, %s186
      %p190 = scmp.eq.s32.totalorder %s14, 0
      %p191 = por %p189, %p190
      %p192 = scmp.ne.s32.totalorder %s184, %s186
      %p193 = scmp.eq.s32.totalorder %s19, 1
      %p194 = por %p192, %p193
      %p195 = scmp.ne.s32.totalorder %s186, %s187
      %p196 = scmp.eq.s32.totalorder %s19, 0
      %p197 = por %p195, %p196
      %p198 = scmp.ne.s32.totalorder %s186, %s187
      %p199 = scmp.eq.s32.totalorder %s20, 1
      %p200 = por %p198, %p199
      %p202 = scmp.ne.s32.totalorder %s187, %s201
      %p203 = scmp.eq.s32.totalorder %s20, 0
      %p204 = por %p202, %p203
      %s206 = sadd.s32 %s205, 1
      %p209 = scmp.eq.s32.totalorder %s14, 1
      %p210 = scmp.ne.s32.totalorder %s205, %s207
      %p211 = scmp.eq.s32.totalorder %s14, 0
      %p212 = por %p210, %p211
      %p213 = scmp.ne.s32.totalorder %s205, %s207
      %p214 = scmp.eq.s32.totalorder %s19, 1
      %p215 = por %p213, %p214
      %p216 = scmp.ne.s32.totalorder %s207, %s208
      %p217 = scmp.eq.s32.totalorder %s19, 0
      %p218 = por %p216, %p217
      %p219 = scmp.ne.s32.totalorder %s207, %s208
      %p220 = scmp.eq.s32.totalorder %s20, 1
      %p221 = por %p219, %p220
      %p223 = scmp.ne.s32.totalorder %s208, %s222
      %p224 = scmp.eq.s32.totalorder %s20, 0
      %p225 = por %p223, %p224
      %p226 = scmp.le.s32.totalorder 1, %s14
      %p227 = scmp.lt.s32.totalorder %s14, 3
      %p228 = pnand %p226, %p227
      %p229 = pneg %p228
      // Predicated region
      $region9: #{regression_forward.1} parent=5 // pred_check
        _
      $region10: #{regression_forward.1} parent=5 // pred_check_branch
        %231 = sbr.rel (%p228) target = $region12
      $region11: #{regression_forward.1} parent=5 // pred_region
        %s232 = ssub.s32 %s14, 1
        // Predicated region
        $region13: #{regression_forward.1} parent=11 // pred_check
          %p233 = pneg %p35
        $region14: #{regression_forward.1} parent=11 // pred_check_branch
          %235 = sbr.rel (%p233) target = $region16
        $region15: #{regression_forward.1} parent=11 // pred_region
          _
        $region16: #{regression_forward.1} parent=11 // pred_fallthru
          _
        // Predicated region
        $region17: #{regression_forward.1} parent=11 // pred_check
          %p236 = pneg %p56
        $region18: #{regression_forward.1} parent=11 // pred_check_branch
          %238 = sbr.rel (%p236) target = $region20
        $region19: #{regression_forward.1} parent=11 // pred_region
          _
        $region20: #{regression_forward.1} parent=11 // pred_fallthru
          _
        // Predicated region
        $region21: #{regression_forward.1} parent=11 // pred_check
          %p239 = pneg %p77
        $region22: #{regression_forward.1} parent=11 // pred_check_branch
          %241 = sbr.rel (%p239) target = $region24
        $region23: #{regression_forward.1} parent=11 // pred_region
          _
        $region24: #{regression_forward.1} parent=11 // pred_fallthru
          _
        // Predicated region
        $region25: #{regression_forward.1} parent=11 // pred_check
          %p242 = pneg %p98
        $region26: #{regression_forward.1} parent=11 // pred_check_branch
          %244 = sbr.rel (%p242) target = $region28
        $region27: #{regression_forward.1} parent=11 // pred_region
          _
        $region28: #{regression_forward.1} parent=11 // pred_fallthru
          _
        // Predicated region
        $region29: #{regression_forward.1} parent=11 // pred_check
          %p245 = pneg %p197
        $region30: #{regression_forward.1} parent=11 // pred_check_branch
          %247 = sbr.rel (%p245) target = $region32
        $region31: #{regression_forward.1} parent=11 // pred_region
          _
        $region32: #{regression_forward.1} parent=11 // pred_fallthru
          _
      $region12: #{regression_forward.1} parent=5 // pred_fallthru
        _
      %p248 = scmp.lt.s32.totalorder %s14, 2
      // Predicated region
      $region33: #{regression_forward.1} parent=5 // pred_check
        %p249 = pneg %p248
      $region34: #{regression_forward.1} parent=5 // pred_check_branch
        %251 = sbr.rel (%p249) target = $region36
      $region35: #{regression_forward.1} parent=5 // pred_region
        // Predicated region
        $region37: #{regression_forward.1} parent=35 // pred_check
          %p252 = pneg %p118
        $region38: #{regression_forward.1} parent=35 // pred_check_branch
          %254 = sbr.rel (%p252) target = $region40
        $region39: #{regression_forward.1} parent=35 // pred_region
          %s255 = sand.u32 %s108, 1
          %s256 = sand.u32 %s108, 1
          %s257 = smul.addr %s256, 4096
          %s258 = scalar_lea.vmem [#allocation3], %s257
          %s259 = smul.u32 4, %s14
          %s260 = smul.addr %s259, 4
          %s261 = scalar_lea.vmem %s4, %s260
          // Predicated region
          $region41: #{regression_forward.1} parent=39 // pred_check
            _
          $region42: #{regression_forward.1} parent=39 // pred_check_branch
            %263 = sbr.rel (0) target = $region44
          $region43: #{regression_forward.1} parent=39 // pred_region
            // Predicated region
            $region45: #{regression_forward.1} parent=43 // pred_check
              _
            $region46: #{regression_forward.1} parent=43 // pred_check_branch
              %265 = sbr.rel (0) target = $region48
            $region47: #{regression_forward.1} parent=43 // pred_region
              loop: start=0, step=1, limit=1
              $region49: #{regression_forward.1} parent=47 // loop_pre_header
                _
              $region50: #{regression_forward.1} parent=47 // loop_header
                %s267 = sphi 0, %s271
                %p268 = scmp.ge.s32.totalorder %s267, 1
                %s272 = sphi %s261, %s261
                %s273 = sphi %s258, %s258
              $region51: #{regression_forward.1} parent=47 // loop_header_branch
                %270 = sbr.rel (%p268) target = $region55
              $region52: #{regression_forward.1} parent=47 // loop_body
                %v274 = vld [vmem:[%s272] sm:$0xff]
                %275 = vst [vmem:[%s273] sm:$0xff] %v274
                %v276 = vld [vmem:[%s272 + $0x8] sm:$0xff]
                %277 = vst [vmem:[%s273 + $0x8] sm:$0xff] %v276
                %v278 = vld [vmem:[%s272 + $0x20] sm:$0xff]
                %279 = vst [vmem:[%s273 + $0x10] sm:$0xff] %v278
                %v280 = vld [vmem:[%s272 + $0x28] sm:$0xff]
                %281 = vst [vmem:[%s273 + $0x18] sm:$0xff] %v280
                %v282 = vld [vmem:[%s272 + $0x40] sm:$0xff]
                %283 = vst [vmem:[%s273 + $0x20] sm:$0xff] %v282
                %v284 = vld [vmem:[%s272 + $0x48] sm:$0xff]
                %285 = vst [vmem:[%s273 + $0x28] sm:$0xff] %v284
                %v286 = vld [vmem:[%s272 + $0x60] sm:$0xff]
                %287 = vst [vmem:[%s273 + $0x30] sm:$0xff] %v286
                %v288 = vld [vmem:[%s272 + $0x68] sm:$0xff]
                %289 = vst [vmem:[%s273 + $0x38] sm:$0xff] %v288
                %v290 = vld [vmem:[%s272 + $0x80] sm:$0xff]
                %291 = vst [vmem:[%s273 + $0x40] sm:$0xff] %v290
                %v292 = vld [vmem:[%s272 + $0x88] sm:$0xff]
                %293 = vst [vmem:[%s273 + $0x48] sm:$0xff] %v292
                %v294 = vld [vmem:[%s272 + $0xa0] sm:$0xff]
                %295 = vst [vmem:[%s273 + $0x50] sm:$0xff] %v294
                %v296 = vld [vmem:[%s272 + $0xa8] sm:$0xff]
                %297 = vst [vmem:[%s273 + $0x58] sm:$0xff] %v296
                %v298 = vld [vmem:[%s272 + $0xc0] sm:$0xff]
                %299 = vst [vmem:[%s273 + $0x60] sm:$0xff] %v298
                %v300 = vld [vmem:[%s272 + $0xc8] sm:$0xff]
                %301 = vst [vmem:[%s273 + $0x68] sm:$0xff] %v300
                %v302 = vld [vmem:[%s272 + $0xe0] sm:$0xff]
                %303 = vst [vmem:[%s273 + $0x70] sm:$0xff] %v302
                %v304 = vld [vmem:[%s272 + $0xe8] sm:$0xff]
                %305 = vst [vmem:[%s273 + $0x78] sm:$0xff] %v304
                %v306 = vld [vmem:[%s272 + $0x100] sm:$0xff]
                %307 = vst [vmem:[%s273 + $0x80] sm:$0xff] %v306
                %v308 = vld [vmem:[%s272 + $0x108] sm:$0xff]
                %309 = vst [vmem:[%s273 + $0x88] sm:$0xff] %v308
                %v310 = vld [vmem:[%s272 + $0x120] sm:$0xff]
                %311 = vst [vmem:[%s273 + $0x90] sm:$0xff] %v310
                %v312 = vld [vmem:[%s272 + $0x128] sm:$0xff]
                %313 = vst [vmem:[%s273 + $0x98] sm:$0xff] %v312
                %v314 = vld [vmem:[%s272 + $0x140] sm:$0xff]
                %315 = vst [vmem:[%s273 + $0xa0] sm:$0xff] %v314
                %v316 = vld [vmem:[%s272 + $0x148] sm:$0xff]
                %317 = vst [vmem:[%s273 + $0xa8] sm:$0xff] %v316
                %v318 = vld [vmem:[%s272 + $0x160] sm:$0xff]
                %319 = vst [vmem:[%s273 + $0xb0] sm:$0xff] %v318
                %v320 = vld [vmem:[%s272 + $0x168] sm:$0xff]
                %321 = vst [vmem:[%s273 + $0xb8] sm:$0xff] %v320
                %v322 = vld [vmem:[%s272 + $0x180] sm:$0xff]
                %323 = vst [vmem:[%s273 + $0xc0] sm:$0xff] %v322
                %v324 = vld [vmem:[%s272 + $0x188] sm:$0xff]
                %325 = vst [vmem:[%s273 + $0xc8] sm:$0xff] %v324
                %v326 = vld [vmem:[%s272 + $0x1a0] sm:$0xff]
                %327 = vst [vmem:[%s273 + $0xd0] sm:$0xff] %v326
                %v328 = vld [vmem:[%s272 + $0x1a8] sm:$0xff]
                %329 = vst [vmem:[%s273 + $0xd8] sm:$0xff] %v328
                %v330 = vld [vmem:[%s272 + $0x1c0] sm:$0xff]
                %331 = vst [vmem:[%s273 + $0xe0] sm:$0xff] %v330
                %v332 = vld [vmem:[%s272 + $0x1c8] sm:$0xff]
                %333 = vst [vmem:[%s273 + $0xe8] sm:$0xff] %v332
                %v334 = vld [vmem:[%s272 + $0x1e0] sm:$0xff]
                %335 = vst [vmem:[%s273 + $0xf0] sm:$0xff] %v334
                %v336 = vld [vmem:[%s272 + $0x1e8] sm:$0xff]
                %337 = vst [vmem:[%s273 + $0xf8] sm:$0xff] %v336
                %v338 = vld [vmem:[%s272 + $0x200] sm:$0xff]
                %339 = vst [vmem:[%s273 + $0x100] sm:$0xff] %v338
                %v340 = vld [vmem:[%s272 + $0x208] sm:$0xff]
                %341 = vst [vmem:[%s273 + $0x108] sm:$0xff] %v340
                %v342 = vld [vmem:[%s272 + $0x220] sm:$0xff]
                %343 = vst [vmem:[%s273 + $0x110] sm:$0xff] %v342
                %v344 = vld [vmem:[%s272 + $0x228] sm:$0xff]
                %345 = vst [vmem:[%s273 + $0x118] sm:$0xff] %v344
                %v346 = vld [vmem:[%s272 + $0x240] sm:$0xff]
                %347 = vst [vmem:[%s273 + $0x120] sm:$0xff] %v346
                %v348 = vld [vmem:[%s272 + $0x248] sm:$0xff]
                %349 = vst [vmem:[%s273 + $0x128] sm:$0xff] %v348
                %v350 = vld [vmem:[%s272 + $0x260] sm:$0xff]
                %351 = vst [vmem:[%s273 + $0x130] sm:$0xff] %v350
                %v352 = vld [vmem:[%s272 + $0x268] sm:$0xff]
                %353 = vst [vmem:[%s273 + $0x138] sm:$0xff] %v352
                %v354 = vld [vmem:[%s272 + $0x280] sm:$0xff]
                %355 = vst [vmem:[%s273 + $0x140] sm:$0xff] %v354
                %v356 = vld [vmem:[%s272 + $0x288] sm:$0xff]
                %357 = vst [vmem:[%s273 + $0x148] sm:$0xff] %v356
                %v358 = vld [vmem:[%s272 + $0x2a0] sm:$0xff]
                %359 = vst [vmem:[%s273 + $0x150] sm:$0xff] %v358
                %v360 = vld [vmem:[%s272 + $0x2a8] sm:$0xff]
                %361 = vst [vmem:[%s273 + $0x158] sm:$0xff] %v360
                %v362 = vld [vmem:[%s272 + $0x2c0] sm:$0xff]
                %363 = vst [vmem:[%s273 + $0x160] sm:$0xff] %v362
                %v364 = vld [vmem:[%s272 + $0x2c8] sm:$0xff]
                %365 = vst [vmem:[%s273 + $0x168] sm:$0xff] %v364
                %v366 = vld [vmem:[%s272 + $0x2e0] sm:$0xff]
                %367 = vst [vmem:[%s273 + $0x170] sm:$0xff] %v366
                %v368 = vld [vmem:[%s272 + $0x2e8] sm:$0xff]
                %369 = vst [vmem:[%s273 + $0x178] sm:$0xff] %v368
                %v370 = vld [vmem:[%s272 + $0x300] sm:$0xff]
                %371 = vst [vmem:[%s273 + $0x180] sm:$0xff] %v370
                %v372 = vld [vmem:[%s272 + $0x308] sm:$0xff]
                %373 = vst [vmem:[%s273 + $0x188] sm:$0xff] %v372
                %v374 = vld [vmem:[%s272 + $0x320] sm:$0xff]
                %375 = vst [vmem:[%s273 + $0x190] sm:$0xff] %v374
                %v376 = vld [vmem:[%s272 + $0x328] sm:$0xff]
                %377 = vst [vmem:[%s273 + $0x198] sm:$0xff] %v376
                %v378 = vld [vmem:[%s272 + $0x340] sm:$0xff]
                %379 = vst [vmem:[%s273 + $0x1a0] sm:$0xff] %v378
                %v380 = vld [vmem:[%s272 + $0x348] sm:$0xff]
                %381 = vst [vmem:[%s273 + $0x1a8] sm:$0xff] %v380
                %v382 = vld [vmem:[%s272 + $0x360] sm:$0xff]
                %383 = vst [vmem:[%s273 + $0x1b0] sm:$0xff] %v382
                %v384 = vld [vmem:[%s272 + $0x368] sm:$0xff]
                %385 = vst [vmem:[%s273 + $0x1b8] sm:$0xff] %v384
                %v386 = vld [vmem:[%s272 + $0x380] sm:$0xff]
                %387 = vst [vmem:[%s273 + $0x1c0] sm:$0xff] %v386
                %v388 = vld [vmem:[%s272 + $0x388] sm:$0xff]
                %389 = vst [vmem:[%s273 + $0x1c8] sm:$0xff] %v388
                %v390 = vld [vmem:[%s272 + $0x3a0] sm:$0xff]
                %391 = vst [vmem:[%s273 + $0x1d0] sm:$0xff] %v390
                %v392 = vld [vmem:[%s272 + $0x3a8] sm:$0xff]
                %393 = vst [vmem:[%s273 + $0x1d8] sm:$0xff] %v392
                %v394 = vld [vmem:[%s272 + $0x3c0] sm:$0xff]
                %395 = vst [vmem:[%s273 + $0x1e0] sm:$0xff] %v394
                %v396 = vld [vmem:[%s272 + $0x3c8] sm:$0xff]
                %397 = vst [vmem:[%s273 + $0x1e8] sm:$0xff] %v396
                %v398 = vld [vmem:[%s272 + $0x3e0] sm:$0xff]
                %399 = vst [vmem:[%s273 + $0x1f0] sm:$0xff] %v398
                %v400 = vld [vmem:[%s272 + $0x3e8] sm:$0xff]
                %401 = vst [vmem:[%s273 + $0x1f8] sm:$0xff] %v400
                %v402 = vld [vmem:[%s272 + $0x400] sm:$0xff]
                %403 = vst [vmem:[%s273 + $0x200] sm:$0xff] %v402
                %v404 = vld [vmem:[%s272 + $0x408] sm:$0xff]
                %405 = vst [vmem:[%s273 + $0x208] sm:$0xff] %v404
                %v406 = vld [vmem:[%s272 + $0x420] sm:$0xff]
                %407 = vst [vmem:[%s273 + $0x210] sm:$0xff] %v406
                %v408 = vld [vmem:[%s272 + $0x428] sm:$0xff]
                %409 = vst [vmem:[%s273 + $0x218] sm:$0xff] %v408
                %v410 = vld [vmem:[%s272 + $0x440] sm:$0xff]
                %411 = vst [vmem:[%s273 + $0x220] sm:$0xff] %v410
                %v412 = vld [vmem:[%s272 + $0x448] sm:$0xff]
                %413 = vst [vmem:[%s273 + $0x228] sm:$0xff] %v412
                %v414 = vld [vmem:[%s272 + $0x460] sm:$0xff]
                %415 = vst [vmem:[%s273 + $0x230] sm:$0xff] %v414
                %v416 = vld [vmem:[%s272 + $0x468] sm:$0xff]
                %417 = vst [vmem:[%s273 + $0x238] sm:$0xff] %v416
                %v418 = vld [vmem:[%s272 + $0x480] sm:$0xff]
                %419 = vst [vmem:[%s273 + $0x240] sm:$0xff] %v418
                %v420 = vld [vmem:[%s272 + $0x488] sm:$0xff]
                %421 = vst [vmem:[%s273 + $0x248] sm:$0xff] %v420
                %v422 = vld [vmem:[%s272 + $0x4a0] sm:$0xff]
                %423 = vst [vmem:[%s273 + $0x250] sm:$0xff] %v422
                %v424 = vld [vmem:[%s272 + $0x4a8] sm:$0xff]
                %425 = vst [vmem:[%s273 + $0x258] sm:$0xff] %v424
                %v426 = vld [vmem:[%s272 + $0x4c0] sm:$0xff]
                %427 = vst [vmem:[%s273 + $0x260] sm:$0xff] %v426
                %v428 = vld [vmem:[%s272 + $0x4c8] sm:$0xff]
                %429 = vst [vmem:[%s273 + $0x268] sm:$0xff] %v428
                %v430 = vld [vmem:[%s272 + $0x4e0] sm:$0xff]
                %431 = vst [vmem:[%s273 + $0x270] sm:$0xff] %v430
                %v432 = vld [vmem:[%s272 + $0x4e8] sm:$0xff]
                %433 = vst [vmem:[%s273 + $0x278] sm:$0xff] %v432
                %v434 = vld [vmem:[%s272 + $0x500] sm:$0xff]
                %435 = vst [vmem:[%s273 + $0x280] sm:$0xff] %v434
                %v436 = vld [vmem:[%s272 + $0x508] sm:$0xff]
                %437 = vst [vmem:[%s273 + $0x288] sm:$0xff] %v436
                %v438 = vld [vmem:[%s272 + $0x520] sm:$0xff]
                %439 = vst [vmem:[%s273 + $0x290] sm:$0xff] %v438
                %v440 = vld [vmem:[%s272 + $0x528] sm:$0xff]
                %441 = vst [vmem:[%s273 + $0x298] sm:$0xff] %v440
                %v442 = vld [vmem:[%s272 + $0x540] sm:$0xff]
                %443 = vst [vmem:[%s273 + $0x2a0] sm:$0xff] %v442
                %v444 = vld [vmem:[%s272 + $0x548] sm:$0xff]
                %445 = vst [vmem:[%s273 + $0x2a8] sm:$0xff] %v444
                %v446 = vld [vmem:[%s272 + $0x560] sm:$0xff]
                %447 = vst [vmem:[%s273 + $0x2b0] sm:$0xff] %v446
                %v448 = vld [vmem:[%s272 + $0x568] sm:$0xff]
                %449 = vst [vmem:[%s273 + $0x2b8] sm:$0xff] %v448
                %v450 = vld [vmem:[%s272 + $0x580] sm:$0xff]
                %451 = vst [vmem:[%s273 + $0x2c0] sm:$0xff] %v450
                %v452 = vld [vmem:[%s272 + $0x588] sm:$0xff]
                %453 = vst [vmem:[%s273 + $0x2c8] sm:$0xff] %v452
                %v454 = vld [vmem:[%s272 + $0x5a0] sm:$0xff]
                %455 = vst [vmem:[%s273 + $0x2d0] sm:$0xff] %v454
                %v456 = vld [vmem:[%s272 + $0x5a8] sm:$0xff]
                %457 = vst [vmem:[%s273 + $0x2d8] sm:$0xff] %v456
                %v458 = vld [vmem:[%s272 + $0x5c0] sm:$0xff]
                %459 = vst [vmem:[%s273 + $0x2e0] sm:$0xff] %v458
                %v460 = vld [vmem:[%s272 + $0x5c8] sm:$0xff]
                %461 = vst [vmem:[%s273 + $0x2e8] sm:$0xff] %v460
                %v462 = vld [vmem:[%s272 + $0x5e0] sm:$0xff]
                %463 = vst [vmem:[%s273 + $0x2f0] sm:$0xff] %v462
                %v464 = vld [vmem:[%s272 + $0x5e8] sm:$0xff]
                %465 = vst [vmem:[%s273 + $0x2f8] sm:$0xff] %v464
                %v466 = vld [vmem:[%s272 + $0x600] sm:$0xff]
                %467 = vst [vmem:[%s273 + $0x300] sm:$0xff] %v466
                %v468 = vld [vmem:[%s272 + $0x608] sm:$0xff]
                %469 = vst [vmem:[%s273 + $0x308] sm:$0xff] %v468
                %v470 = vld [vmem:[%s272 + $0x620] sm:$0xff]
                %471 = vst [vmem:[%s273 + $0x310] sm:$0xff] %v470
                %v472 = vld [vmem:[%s272 + $0x628] sm:$0xff]
                %473 = vst [vmem:[%s273 + $0x318] sm:$0xff] %v472
                %v474 = vld [vmem:[%s272 + $0x640] sm:$0xff]
                %475 = vst [vmem:[%s273 + $0x320] sm:$0xff] %v474
                %v476 = vld [vmem:[%s272 + $0x648] sm:$0xff]
                %477 = vst [vmem:[%s273 + $0x328] sm:$0xff] %v476
                %v478 = vld [vmem:[%s272 + $0x660] sm:$0xff]
                %479 = vst [vmem:[%s273 + $0x330] sm:$0xff] %v478
                %v480 = vld [vmem:[%s272 + $0x668] sm:$0xff]
                %481 = vst [vmem:[%s273 + $0x338] sm:$0xff] %v480
                %v482 = vld [vmem:[%s272 + $0x680] sm:$0xff]
                %483 = vst [vmem:[%s273 + $0x340] sm:$0xff] %v482
                %v484 = vld [vmem:[%s272 + $0x688] sm:$0xff]
                %485 = vst [vmem:[%s273 + $0x348] sm:$0xff] %v484
                %v486 = vld [vmem:[%s272 + $0x6a0] sm:$0xff]
                %487 = vst [vmem:[%s273 + $0x350] sm:$0xff] %v486
                %v488 = vld [vmem:[%s272 + $0x6a8] sm:$0xff]
                %489 = vst [vmem:[%s273 + $0x358] sm:$0xff] %v488
                %v490 = vld [vmem:[%s272 + $0x6c0] sm:$0xff]
                %491 = vst [vmem:[%s273 + $0x360] sm:$0xff] %v490
                %v492 = vld [vmem:[%s272 + $0x6c8] sm:$0xff]
                %493 = vst [vmem:[%s273 + $0x368] sm:$0xff] %v492
                %v494 = vld [vmem:[%s272 + $0x6e0] sm:$0xff]
                %495 = vst [vmem:[%s273 + $0x370] sm:$0xff] %v494
                %v496 = vld [vmem:[%s272 + $0x6e8] sm:$0xff]
                %497 = vst [vmem:[%s273 + $0x378] sm:$0xff] %v496
                %v498 = vld [vmem:[%s272 + $0x700] sm:$0xff]
                %499 = vst [vmem:[%s273 + $0x380] sm:$0xff] %v498
                %v500 = vld [vmem:[%s272 + $0x708] sm:$0xff]
                %501 = vst [vmem:[%s273 + $0x388] sm:$0xff] %v500
                %v502 = vld [vmem:[%s272 + $0x720] sm:$0xff]
                %503 = vst [vmem:[%s273 + $0x390] sm:$0xff] %v502
                %v504 = vld [vmem:[%s272 + $0x728] sm:$0xff]
                %505 = vst [vmem:[%s273 + $0x398] sm:$0xff] %v504
                %v506 = vld [vmem:[%s272 + $0x740] sm:$0xff]
                %507 = vst [vmem:[%s273 + $0x3a0] sm:$0xff] %v506
                %v508 = vld [vmem:[%s272 + $0x748] sm:$0xff]
                %509 = vst [vmem:[%s273 + $0x3a8] sm:$0xff] %v508
                %v510 = vld [vmem:[%s272 + $0x760] sm:$0xff]
                %511 = vst [vmem:[%s273 + $0x3b0] sm:$0xff] %v510
                %v512 = vld [vmem:[%s272 + $0x768] sm:$0xff]
                %513 = vst [vmem:[%s273 + $0x3b8] sm:$0xff] %v512
                %v514 = vld [vmem:[%s272 + $0x780] sm:$0xff]
                %515 = vst [vmem:[%s273 + $0x3c0] sm:$0xff] %v514
                %v516 = vld [vmem:[%s272 + $0x788] sm:$0xff]
                %517 = vst [vmem:[%s273 + $0x3c8] sm:$0xff] %v516
                %v518 = vld [vmem:[%s272 + $0x7a0] sm:$0xff]
                %519 = vst [vmem:[%s273 + $0x3d0] sm:$0xff] %v518
                %v520 = vld [vmem:[%s272 + $0x7a8] sm:$0xff]
                %521 = vst [vmem:[%s273 + $0x3d8] sm:$0xff] %v520
                %v522 = vld [vmem:[%s272 + $0x7c0] sm:$0xff]
                %523 = vst [vmem:[%s273 + $0x3e0] sm:$0xff] %v522
                %v524 = vld [vmem:[%s272 + $0x7c8] sm:$0xff]
                %525 = vst [vmem:[%s273 + $0x3e8] sm:$0xff] %v524
                %v526 = vld [vmem:[%s272 + $0x7e0] sm:$0xff]
                %527 = vst [vmem:[%s273 + $0x3f0] sm:$0xff] %v526
                %v528 = vld [vmem:[%s272 + $0x7e8] sm:$0xff]
                %529 = vst [vmem:[%s273 + $0x3f8] sm:$0xff] %v528
                %v530 = vld [vmem:[%s272 + $0x800] sm:$0xff]
                %531 = vst [vmem:[%s273 + $0x400] sm:$0xff] %v530
                %v532 = vld [vmem:[%s272 + $0x808] sm:$0xff]
                %533 = vst [vmem:[%s273 + $0x408] sm:$0xff] %v532
                %v534 = vld [vmem:[%s272 + $0x820] sm:$0xff]
                %535 = vst [vmem:[%s273 + $0x410] sm:$0xff] %v534
                %v536 = vld [vmem:[%s272 + $0x828] sm:$0xff]
                %537 = vst [vmem:[%s273 + $0x418] sm:$0xff] %v536
                %v538 = vld [vmem:[%s272 + $0x840] sm:$0xff]
                %539 = vst [vmem:[%s273 + $0x420] sm:$0xff] %v538
                %v540 = vld [vmem:[%s272 + $0x848] sm:$0xff]
                %541 = vst [vmem:[%s273 + $0x428] sm:$0xff] %v540
                %v542 = vld [vmem:[%s272 + $0x860] sm:$0xff]
                %543 = vst [vmem:[%s273 + $0x430] sm:$0xff] %v542
                %v544 = vld [vmem:[%s272 + $0x868] sm:$0xff]
                %545 = vst [vmem:[%s273 + $0x438] sm:$0xff] %v544
                %v546 = vld [vmem:[%s272 + $0x880] sm:$0xff]
                %547 = vst [vmem:[%s273 + $0x440] sm:$0xff] %v546
                %v548 = vld [vmem:[%s272 + $0x888] sm:$0xff]
                %549 = vst [vmem:[%s273 + $0x448] sm:$0xff] %v548
                %v550 = vld [vmem:[%s272 + $0x8a0] sm:$0xff]
                %551 = vst [vmem:[%s273 + $0x450] sm:$0xff] %v550
                %v552 = vld [vmem:[%s272 + $0x8a8] sm:$0xff]
                %553 = vst [vmem:[%s273 + $0x458] sm:$0xff] %v552
                %v554 = vld [vmem:[%s272 + $0x8c0] sm:$0xff]
                %555 = vst [vmem:[%s273 + $0x460] sm:$0xff] %v554
                %v556 = vld [vmem:[%s272 + $0x8c8] sm:$0xff]
                %557 = vst [vmem:[%s273 + $0x468] sm:$0xff] %v556
                %v558 = vld [vmem:[%s272 + $0x8e0] sm:$0xff]
                %559 = vst [vmem:[%s273 + $0x470] sm:$0xff] %v558
                %v560 = vld [vmem:[%s272 + $0x8e8] sm:$0xff]
                %561 = vst [vmem:[%s273 + $0x478] sm:$0xff] %v560
                %v562 = vld [vmem:[%s272 + $0x900] sm:$0xff]
                %563 = vst [vmem:[%s273 + $0x480] sm:$0xff] %v562
                %v564 = vld [vmem:[%s272 + $0x908] sm:$0xff]
                %565 = vst [vmem:[%s273 + $0x488] sm:$0xff] %v564
                %v566 = vld [vmem:[%s272 + $0x920] sm:$0xff]
                %567 = vst [vmem:[%s273 + $0x490] sm:$0xff] %v566
                %v568 = vld [vmem:[%s272 + $0x928] sm:$0xff]
                %569 = vst [vmem:[%s273 + $0x498] sm:$0xff] %v568
                %v570 = vld [vmem:[%s272 + $0x940] sm:$0xff]
                %571 = vst [vmem:[%s273 + $0x4a0] sm:$0xff] %v570
                %v572 = vld [vmem:[%s272 + $0x948] sm:$0xff]
                %573 = vst [vmem:[%s273 + $0x4a8] sm:$0xff] %v572
                %v574 = vld [vmem:[%s272 + $0x960] sm:$0xff]
                %575 = vst [vmem:[%s273 + $0x4b0] sm:$0xff] %v574
                %v576 = vld [vmem:[%s272 + $0x968] sm:$0xff]
                %577 = vst [vmem:[%s273 + $0x4b8] sm:$0xff] %v576
                %v578 = vld [vmem:[%s272 + $0x980] sm:$0xff]
                %579 = vst [vmem:[%s273 + $0x4c0] sm:$0xff] %v578
                %v580 = vld [vmem:[%s272 + $0x988] sm:$0xff]
                %581 = vst [vmem:[%s273 + $0x4c8] sm:$0xff] %v580
                %v582 = vld [vmem:[%s272 + $0x9a0] sm:$0xff]
                %583 = vst [vmem:[%s273 + $0x4d0] sm:$0xff] %v582
                %v584 = vld [vmem:[%s272 + $0x9a8] sm:$0xff]
                %585 = vst [vmem:[%s273 + $0x4d8] sm:$0xff] %v584
                %v586 = vld [vmem:[%s272 + $0x9c0] sm:$0xff]
                %587 = vst [vmem:[%s273 + $0x4e0] sm:$0xff] %v586
                %v588 = vld [vmem:[%s272 + $0x9c8] sm:$0xff]
                %589 = vst [vmem:[%s273 + $0x4e8] sm:$0xff] %v588
                %v590 = vld [vmem:[%s272 + $0x9e0] sm:$0xff]
                %591 = vst [vmem:[%s273 + $0x4f0] sm:$0xff] %v590
                %v592 = vld [vmem:[%s272 + $0x9e8] sm:$0xff]
                %593 = vst [vmem:[%s273 + $0x4f8] sm:$0xff] %v592
                %v594 = vld [vmem:[%s272 + $0xa00] sm:$0xff]
                %595 = vst [vmem:[%s273 + $0x500] sm:$0xff] %v594
                %v596 = vld [vmem:[%s272 + $0xa08] sm:$0xff]
                %597 = vst [vmem:[%s273 + $0x508] sm:$0xff] %v596
                %v598 = vld [vmem:[%s272 + $0xa20] sm:$0xff]
                %599 = vst [vmem:[%s273 + $0x510] sm:$0xff] %v598
                %v600 = vld [vmem:[%s272 + $0xa28] sm:$0xff]
                %601 = vst [vmem:[%s273 + $0x518] sm:$0xff] %v600
                %v602 = vld [vmem:[%s272 + $0xa40] sm:$0xff]
                %603 = vst [vmem:[%s273 + $0x520] sm:$0xff] %v602
                %v604 = vld [vmem:[%s272 + $0xa48] sm:$0xff]
                %605 = vst [vmem:[%s273 + $0x528] sm:$0xff] %v604
                %v606 = vld [vmem:[%s272 + $0xa60] sm:$0xff]
                %607 = vst [vmem:[%s273 + $0x530] sm:$0xff] %v606
                %v608 = vld [vmem:[%s272 + $0xa68] sm:$0xff]
                %609 = vst [vmem:[%s273 + $0x538] sm:$0xff] %v608
                %v610 = vld [vmem:[%s272 + $0xa80] sm:$0xff]
                %611 = vst [vmem:[%s273 + $0x540] sm:$0xff] %v610
                %v612 = vld [vmem:[%s272 + $0xa88] sm:$0xff]
                %613 = vst [vmem:[%s273 + $0x548] sm:$0xff] %v612
                %v614 = vld [vmem:[%s272 + $0xaa0] sm:$0xff]
                %615 = vst [vmem:[%s273 + $0x550] sm:$0xff] %v614
                %v616 = vld [vmem:[%s272 + $0xaa8] sm:$0xff]
                %617 = vst [vmem:[%s273 + $0x558] sm:$0xff] %v616
                %v618 = vld [vmem:[%s272 + $0xac0] sm:$0xff]
                %619 = vst [vmem:[%s273 + $0x560] sm:$0xff] %v618
                %v620 = vld [vmem:[%s272 + $0xac8] sm:$0xff]
                %621 = vst [vmem:[%s273 + $0x568] sm:$0xff] %v620
                %v622 = vld [vmem:[%s272 + $0xae0] sm:$0xff]
                %623 = vst [vmem:[%s273 + $0x570] sm:$0xff] %v622
                %v624 = vld [vmem:[%s272 + $0xae8] sm:$0xff]
                %625 = vst [vmem:[%s273 + $0x578] sm:$0xff] %v624
                %v626 = vld [vmem:[%s272 + $0xb00] sm:$0xff]
                %627 = vst [vmem:[%s273 + $0x580] sm:$0xff] %v626
                %v628 = vld [vmem:[%s272 + $0xb08] sm:$0xff]
                %629 = vst [vmem:[%s273 + $0x588] sm:$0xff] %v628
                %v630 = vld [vmem:[%s272 + $0xb20] sm:$0xff]
                %631 = vst [vmem:[%s273 + $0x590] sm:$0xff] %v630
                %v632 = vld [vmem:[%s272 + $0xb28] sm:$0xff]
                %633 = vst [vmem:[%s273 + $0x598] sm:$0xff] %v632
                %v634 = vld [vmem:[%s272 + $0xb40] sm:$0xff]
                %635 = vst [vmem:[%s273 + $0x5a0] sm:$0xff] %v634
                %v636 = vld [vmem:[%s272 + $0xb48] sm:$0xff]
                %637 = vst [vmem:[%s273 + $0x5a8] sm:$0xff] %v636
                %v638 = vld [vmem:[%s272 + $0xb60] sm:$0xff]
                %639 = vst [vmem:[%s273 + $0x5b0] sm:$0xff] %v638
                %v640 = vld [vmem:[%s272 + $0xb68] sm:$0xff]
                %641 = vst [vmem:[%s273 + $0x5b8] sm:$0xff] %v640
                %v642 = vld [vmem:[%s272 + $0xb80] sm:$0xff]
                %643 = vst [vmem:[%s273 + $0x5c0] sm:$0xff] %v642
                %v644 = vld [vmem:[%s272 + $0xb88] sm:$0xff]
                %645 = vst [vmem:[%s273 + $0x5c8] sm:$0xff] %v644
                %v646 = vld [vmem:[%s272 + $0xba0] sm:$0xff]
                %647 = vst [vmem:[%s273 + $0x5d0] sm:$0xff] %v646
                %v648 = vld [vmem:[%s272 + $0xba8] sm:$0xff]
                %649 = vst [vmem:[%s273 + $0x5d8] sm:$0xff] %v648
                %v650 = vld [vmem:[%s272 + $0xbc0] sm:$0xff]
                %651 = vst [vmem:[%s273 + $0x5e0] sm:$0xff] %v650
                %v652 = vld [vmem:[%s272 + $0xbc8] sm:$0xff]
                %653 = vst [vmem:[%s273 + $0x5e8] sm:$0xff] %v652
                %v654 = vld [vmem:[%s272 + $0xbe0] sm:$0xff]
                %655 = vst [vmem:[%s273 + $0x5f0] sm:$0xff] %v654
                %v656 = vld [vmem:[%s272 + $0xbe8] sm:$0xff]
                %657 = vst [vmem:[%s273 + $0x5f8] sm:$0xff] %v656
                %v658 = vld [vmem:[%s272 + $0xc00] sm:$0xff]
                %659 = vst [vmem:[%s273 + $0x600] sm:$0xff] %v658
                %v660 = vld [vmem:[%s272 + $0xc08] sm:$0xff]
                %661 = vst [vmem:[%s273 + $0x608] sm:$0xff] %v660
                %v662 = vld [vmem:[%s272 + $0xc20] sm:$0xff]
                %663 = vst [vmem:[%s273 + $0x610] sm:$0xff] %v662
                %v664 = vld [vmem:[%s272 + $0xc28] sm:$0xff]
                %665 = vst [vmem:[%s273 + $0x618] sm:$0xff] %v664
                %v666 = vld [vmem:[%s272 + $0xc40] sm:$0xff]
                %667 = vst [vmem:[%s273 + $0x620] sm:$0xff] %v666
                %v668 = vld [vmem:[%s272 + $0xc48] sm:$0xff]
                %669 = vst [vmem:[%s273 + $0x628] sm:$0xff] %v668
                %v670 = vld [vmem:[%s272 + $0xc60] sm:$0xff]
                %671 = vst [vmem:[%s273 + $0x630] sm:$0xff] %v670
                %v672 = vld [vmem:[%s272 + $0xc68] sm:$0xff]
                %673 = vst [vmem:[%s273 + $0x638] sm:$0xff] %v672
                %v674 = vld [vmem:[%s272 + $0xc80] sm:$0xff]
                %675 = vst [vmem:[%s273 + $0x640] sm:$0xff] %v674
                %v676 = vld [vmem:[%s272 + $0xc88] sm:$0xff]
                %677 = vst [vmem:[%s273 + $0x648] sm:$0xff] %v676
                %v678 = vld [vmem:[%s272 + $0xca0] sm:$0xff]
                %679 = vst [vmem:[%s273 + $0x650] sm:$0xff] %v678
                %v680 = vld [vmem:[%s272 + $0xca8] sm:$0xff]
                %681 = vst [vmem:[%s273 + $0x658] sm:$0xff] %v680
                %v682 = vld [vmem:[%s272 + $0xcc0] sm:$0xff]
                %683 = vst [vmem:[%s273 + $0x660] sm:$0xff] %v682
                %v684 = vld [vmem:[%s272 + $0xcc8] sm:$0xff]
                %685 = vst [vmem:[%s273 + $0x668] sm:$0xff] %v684
                %v686 = vld [vmem:[%s272 + $0xce0] sm:$0xff]
                %687 = vst [vmem:[%s273 + $0x670] sm:$0xff] %v686
                %v688 = vld [vmem:[%s272 + $0xce8] sm:$0xff]
                %689 = vst [vmem:[%s273 + $0x678] sm:$0xff] %v688
                %v690 = vld [vmem:[%s272 + $0xd00] sm:$0xff]
                %691 = vst [vmem:[%s273 + $0x680] sm:$0xff] %v690
                %v692 = vld [vmem:[%s272 + $0xd08] sm:$0xff]
                %693 = vst [vmem:[%s273 + $0x688] sm:$0xff] %v692
                %v694 = vld [vmem:[%s272 + $0xd20] sm:$0xff]
                %695 = vst [vmem:[%s273 + $0x690] sm:$0xff] %v694
                %v696 = vld [vmem:[%s272 + $0xd28] sm:$0xff]
                %697 = vst [vmem:[%s273 + $0x698] sm:$0xff] %v696
                %v698 = vld [vmem:[%s272 + $0xd40] sm:$0xff]
                %699 = vst [vmem:[%s273 + $0x6a0] sm:$0xff] %v698
                %v700 = vld [vmem:[%s272 + $0xd48] sm:$0xff]
                %701 = vst [vmem:[%s273 + $0x6a8] sm:$0xff] %v700
                %v702 = vld [vmem:[%s272 + $0xd60] sm:$0xff]
                %703 = vst [vmem:[%s273 + $0x6b0] sm:$0xff] %v702
                %v704 = vld [vmem:[%s272 + $0xd68] sm:$0xff]
                %705 = vst [vmem:[%s273 + $0x6b8] sm:$0xff] %v704
                %v706 = vld [vmem:[%s272 + $0xd80] sm:$0xff]
                %707 = vst [vmem:[%s273 + $0x6c0] sm:$0xff] %v706
                %v708 = vld [vmem:[%s272 + $0xd88] sm:$0xff]
                %709 = vst [vmem:[%s273 + $0x6c8] sm:$0xff] %v708
                %v710 = vld [vmem:[%s272 + $0xda0] sm:$0xff]
                %711 = vst [vmem:[%s273 + $0x6d0] sm:$0xff] %v710
                %v712 = vld [vmem:[%s272 + $0xda8] sm:$0xff]
                %713 = vst [vmem:[%s273 + $0x6d8] sm:$0xff] %v712
                %v714 = vld [vmem:[%s272 + $0xdc0] sm:$0xff]
                %715 = vst [vmem:[%s273 + $0x6e0] sm:$0xff] %v714
                %v716 = vld [vmem:[%s272 + $0xdc8] sm:$0xff]
                %717 = vst [vmem:[%s273 + $0x6e8] sm:$0xff] %v716
                %v718 = vld [vmem:[%s272 + $0xde0] sm:$0xff]
                %719 = vst [vmem:[%s273 + $0x6f0] sm:$0xff] %v718
                %v720 = vld [vmem:[%s272 + $0xde8] sm:$0xff]
                %721 = vst [vmem:[%s273 + $0x6f8] sm:$0xff] %v720
                %v722 = vld [vmem:[%s272 + $0xe00] sm:$0xff]
                %723 = vst [vmem:[%s273 + $0x700] sm:$0xff] %v722
                %v724 = vld [vmem:[%s272 + $0xe08] sm:$0xff]
                %725 = vst [vmem:[%s273 + $0x708] sm:$0xff] %v724
                %v726 = vld [vmem:[%s272 + $0xe20] sm:$0xff]
                %727 = vst [vmem:[%s273 + $0x710] sm:$0xff] %v726
                %v728 = vld [vmem:[%s272 + $0xe28] sm:$0xff]
                %729 = vst [vmem:[%s273 + $0x718] sm:$0xff] %v728
                %v730 = vld [vmem:[%s272 + $0xe40] sm:$0xff]
                %731 = vst [vmem:[%s273 + $0x720] sm:$0xff] %v730
                %v732 = vld [vmem:[%s272 + $0xe48] sm:$0xff]
                %733 = vst [vmem:[%s273 + $0x728] sm:$0xff] %v732
                %v734 = vld [vmem:[%s272 + $0xe60] sm:$0xff]
                %735 = vst [vmem:[%s273 + $0x730] sm:$0xff] %v734
                %v736 = vld [vmem:[%s272 + $0xe68] sm:$0xff]
                %737 = vst [vmem:[%s273 + $0x738] sm:$0xff] %v736
                %v738 = vld [vmem:[%s272 + $0xe80] sm:$0xff]
                %739 = vst [vmem:[%s273 + $0x740] sm:$0xff] %v738
                %v740 = vld [vmem:[%s272 + $0xe88] sm:$0xff]
                %741 = vst [vmem:[%s273 + $0x748] sm:$0xff] %v740
                %v742 = vld [vmem:[%s272 + $0xea0] sm:$0xff]
                %743 = vst [vmem:[%s273 + $0x750] sm:$0xff] %v742
                %v744 = vld [vmem:[%s272 + $0xea8] sm:$0xff]
                %745 = vst [vmem:[%s273 + $0x758] sm:$0xff] %v744
                %v746 = vld [vmem:[%s272 + $0xec0] sm:$0xff]
                %747 = vst [vmem:[%s273 + $0x760] sm:$0xff] %v746
                %v748 = vld [vmem:[%s272 + $0xec8] sm:$0xff]
                %749 = vst [vmem:[%s273 + $0x768] sm:$0xff] %v748
                %v750 = vld [vmem:[%s272 + $0xee0] sm:$0xff]
                %751 = vst [vmem:[%s273 + $0x770] sm:$0xff] %v750
                %v752 = vld [vmem:[%s272 + $0xee8] sm:$0xff]
                %753 = vst [vmem:[%s273 + $0x778] sm:$0xff] %v752
                %v754 = vld [vmem:[%s272 + $0xf00] sm:$0xff]
                %755 = vst [vmem:[%s273 + $0x780] sm:$0xff] %v754
                %v756 = vld [vmem:[%s272 + $0xf08] sm:$0xff]
                %757 = vst [vmem:[%s273 + $0x788] sm:$0xff] %v756
                %v758 = vld [vmem:[%s272 + $0xf20] sm:$0xff]
                %759 = vst [vmem:[%s273 + $0x790] sm:$0xff] %v758
                %v760 = vld [vmem:[%s272 + $0xf28] sm:$0xff]
                %761 = vst [vmem:[%s273 + $0x798] sm:$0xff] %v760
                %v762 = vld [vmem:[%s272 + $0xf40] sm:$0xff]
                %763 = vst [vmem:[%s273 + $0x7a0] sm:$0xff] %v762
                %v764 = vld [vmem:[%s272 + $0xf48] sm:$0xff]
                %765 = vst [vmem:[%s273 + $0x7a8] sm:$0xff] %v764
                %v766 = vld [vmem:[%s272 + $0xf60] sm:$0xff]
                %767 = vst [vmem:[%s273 + $0x7b0] sm:$0xff] %v766
                %v768 = vld [vmem:[%s272 + $0xf68] sm:$0xff]
                %769 = vst [vmem:[%s273 + $0x7b8] sm:$0xff] %v768
                %v770 = vld [vmem:[%s272 + $0xf80] sm:$0xff]
                %771 = vst [vmem:[%s273 + $0x7c0] sm:$0xff] %v770
                %v772 = vld [vmem:[%s272 + $0xf88] sm:$0xff]
                %773 = vst [vmem:[%s273 + $0x7c8] sm:$0xff] %v772
                %v774 = vld [vmem:[%s272 + $0xfa0] sm:$0xff]
                %775 = vst [vmem:[%s273 + $0x7d0] sm:$0xff] %v774
                %v776 = vld [vmem:[%s272 + $0xfa8] sm:$0xff]
                %777 = vst [vmem:[%s273 + $0x7d8] sm:$0xff] %v776
                %v778 = vld [vmem:[%s272 + $0xfc0] sm:$0xff]
                %779 = vst [vmem:[%s273 + $0x7e0] sm:$0xff] %v778
                %v780 = vld [vmem:[%s272 + $0xfc8] sm:$0xff]
                %781 = vst [vmem:[%s273 + $0x7e8] sm:$0xff] %v780
                %v782 = vld [vmem:[%s272 + $0xfe0] sm:$0xff]
                %783 = vst [vmem:[%s273 + $0x7f0] sm:$0xff] %v782
                %v784 = vld [vmem:[%s272 + $0xfe8] sm:$0xff]
                %785 = vst [vmem:[%s273 + $0x7f8] sm:$0xff] %v784
                %v786 = vld [vmem:[%s272 + $0x1000] sm:$0xff]
                %787 = vst [vmem:[%s273 + $0x800] sm:$0xff] %v786
                %v788 = vld [vmem:[%s272 + $0x1008] sm:$0xff]
                %789 = vst [vmem:[%s273 + $0x808] sm:$0xff] %v788
                %v790 = vld [vmem:[%s272 + $0x1020] sm:$0xff]
                %791 = vst [vmem:[%s273 + $0x810] sm:$0xff] %v790
                %v792 = vld [vmem:[%s272 + $0x1028] sm:$0xff]
                %793 = vst [vmem:[%s273 + $0x818] sm:$0xff] %v792
                %v794 = vld [vmem:[%s272 + $0x1040] sm:$0xff]
                %795 = vst [vmem:[%s273 + $0x820] sm:$0xff] %v794
                %v796 = vld [vmem:[%s272 + $0x1048] sm:$0xff]
                %797 = vst [vmem:[%s273 + $0x828] sm:$0xff] %v796
                %v798 = vld [vmem:[%s272 + $0x1060] sm:$0xff]
                %799 = vst [vmem:[%s273 + $0x830] sm:$0xff] %v798
                %v800 = vld [vmem:[%s272 + $0x1068] sm:$0xff]
                %801 = vst [vmem:[%s273 + $0x838] sm:$0xff] %v800
                %v802 = vld [vmem:[%s272 + $0x1080] sm:$0xff]
                %803 = vst [vmem:[%s273 + $0x840] sm:$0xff] %v802
                %v804 = vld [vmem:[%s272 + $0x1088] sm:$0xff]
                %805 = vst [vmem:[%s273 + $0x848] sm:$0xff] %v804
                %v806 = vld [vmem:[%s272 + $0x10a0] sm:$0xff]
                %807 = vst [vmem:[%s273 + $0x850] sm:$0xff] %v806
                %v808 = vld [vmem:[%s272 + $0x10a8] sm:$0xff]
                %809 = vst [vmem:[%s273 + $0x858] sm:$0xff] %v808
                %v810 = vld [vmem:[%s272 + $0x10c0] sm:$0xff]
                %811 = vst [vmem:[%s273 + $0x860] sm:$0xff] %v810
                %v812 = vld [vmem:[%s272 + $0x10c8] sm:$0xff]
                %813 = vst [vmem:[%s273 + $0x868] sm:$0xff] %v812
                %v814 = vld [vmem:[%s272 + $0x10e0] sm:$0xff]
                %815 = vst [vmem:[%s273 + $0x870] sm:$0xff] %v814
                %v816 = vld [vmem:[%s272 + $0x10e8] sm:$0xff]
                %817 = vst [vmem:[%s273 + $0x878] sm:$0xff] %v816
                %v818 = vld [vmem:[%s272 + $0x1100] sm:$0xff]
                %819 = vst [vmem:[%s273 + $0x880] sm:$0xff] %v818
                %v820 = vld [vmem:[%s272 + $0x1108] sm:$0xff]
                %821 = vst [vmem:[%s273 + $0x888] sm:$0xff] %v820
                %v822 = vld [vmem:[%s272 + $0x1120] sm:$0xff]
                %823 = vst [vmem:[%s273 + $0x890] sm:$0xff] %v822
                %v824 = vld [vmem:[%s272 + $0x1128] sm:$0xff]
                %825 = vst [vmem:[%s273 + $0x898] sm:$0xff] %v824
                %v826 = vld [vmem:[%s272 + $0x1140] sm:$0xff]
                %827 = vst [vmem:[%s273 + $0x8a0] sm:$0xff] %v826
                %v828 = vld [vmem:[%s272 + $0x1148] sm:$0xff]
                %829 = vst [vmem:[%s273 + $0x8a8] sm:$0xff] %v828
                %v830 = vld [vmem:[%s272 + $0x1160] sm:$0xff]
                %831 = vst [vmem:[%s273 + $0x8b0] sm:$0xff] %v830
                %v832 = vld [vmem:[%s272 + $0x1168] sm:$0xff]
                %833 = vst [vmem:[%s273 + $0x8b8] sm:$0xff] %v832
                %v834 = vld [vmem:[%s272 + $0x1180] sm:$0xff]
                %835 = vst [vmem:[%s273 + $0x8c0] sm:$0xff] %v834
                %v836 = vld [vmem:[%s272 + $0x1188] sm:$0xff]
                %837 = vst [vmem:[%s273 + $0x8c8] sm:$0xff] %v836
                %v838 = vld [vmem:[%s272 + $0x11a0] sm:$0xff]
                %839 = vst [vmem:[%s273 + $0x8d0] sm:$0xff] %v838
                %v840 = vld [vmem:[%s272 + $0x11a8] sm:$0xff]
                %841 = vst [vmem:[%s273 + $0x8d8] sm:$0xff] %v840
                %v842 = vld [vmem:[%s272 + $0x11c0] sm:$0xff]
                %843 = vst [vmem:[%s273 + $0x8e0] sm:$0xff] %v842
                %v844 = vld [vmem:[%s272 + $0x11c8] sm:$0xff]
                %845 = vst [vmem:[%s273 + $0x8e8] sm:$0xff] %v844
                %v846 = vld [vmem:[%s272 + $0x11e0] sm:$0xff]
                %847 = vst [vmem:[%s273 + $0x8f0] sm:$0xff] %v846
                %v848 = vld [vmem:[%s272 + $0x11e8] sm:$0xff]
                %849 = vst [vmem:[%s273 + $0x8f8] sm:$0xff] %v848
                %v850 = vld [vmem:[%s272 + $0x1200] sm:$0xff]
                %851 = vst [vmem:[%s273 + $0x900] sm:$0xff] %v850
                %v852 = vld [vmem:[%s272 + $0x1208] sm:$0xff]
                %853 = vst [vmem:[%s273 + $0x908] sm:$0xff] %v852
                %v854 = vld [vmem:[%s272 + $0x1220] sm:$0xff]
                %855 = vst [vmem:[%s273 + $0x910] sm:$0xff] %v854
                %v856 = vld [vmem:[%s272 + $0x1228] sm:$0xff]
                %857 = vst [vmem:[%s273 + $0x918] sm:$0xff] %v856
                %v858 = vld [vmem:[%s272 + $0x1240] sm:$0xff]
                %859 = vst [vmem:[%s273 + $0x920] sm:$0xff] %v858
                %v860 = vld [vmem:[%s272 + $0x1248] sm:$0xff]
                %861 = vst [vmem:[%s273 + $0x928] sm:$0xff] %v860
                %v862 = vld [vmem:[%s272 + $0x1260] sm:$0xff]
                %863 = vst [vmem:[%s273 + $0x930] sm:$0xff] %v862
                %v864 = vld [vmem:[%s272 + $0x1268] sm:$0xff]
                %865 = vst [vmem:[%s273 + $0x938] sm:$0xff] %v864
                %v866 = vld [vmem:[%s272 + $0x1280] sm:$0xff]
                %867 = vst [vmem:[%s273 + $0x940] sm:$0xff] %v866
                %v868 = vld [vmem:[%s272 + $0x1288] sm:$0xff]
                %869 = vst [vmem:[%s273 + $0x948] sm:$0xff] %v868
                %v870 = vld [vmem:[%s272 + $0x12a0] sm:$0xff]
                %871 = vst [vmem:[%s273 + $0x950] sm:$0xff] %v870
                %v872 = vld [vmem:[%s272 + $0x12a8] sm:$0xff]
                %873 = vst [vmem:[%s273 + $0x958] sm:$0xff] %v872
                %v874 = vld [vmem:[%s272 + $0x12c0] sm:$0xff]
                %875 = vst [vmem:[%s273 + $0x960] sm:$0xff] %v874
                %v876 = vld [vmem:[%s272 + $0x12c8] sm:$0xff]
                %877 = vst [vmem:[%s273 + $0x968] sm:$0xff] %v876
                %v878 = vld [vmem:[%s272 + $0x12e0] sm:$0xff]
                %879 = vst [vmem:[%s273 + $0x970] sm:$0xff] %v878
                %v880 = vld [vmem:[%s272 + $0x12e8] sm:$0xff]
                %881 = vst [vmem:[%s273 + $0x978] sm:$0xff] %v880
                %v882 = vld [vmem:[%s272 + $0x1300] sm:$0xff]
                %883 = vst [vmem:[%s273 + $0x980] sm:$0xff] %v882
                %v884 = vld [vmem:[%s272 + $0x1308] sm:$0xff]
                %885 = vst [vmem:[%s273 + $0x988] sm:$0xff] %v884
                %v886 = vld [vmem:[%s272 + $0x1320] sm:$0xff]
                %887 = vst [vmem:[%s273 + $0x990] sm:$0xff] %v886
                %v888 = vld [vmem:[%s272 + $0x1328] sm:$0xff]
                %889 = vst [vmem:[%s273 + $0x998] sm:$0xff] %v888
                %v890 = vld [vmem:[%s272 + $0x1340] sm:$0xff]
                %891 = vst [vmem:[%s273 + $0x9a0] sm:$0xff] %v890
                %v892 = vld [vmem:[%s272 + $0x1348] sm:$0xff]
                %893 = vst [vmem:[%s273 + $0x9a8] sm:$0xff] %v892
                %v894 = vld [vmem:[%s272 + $0x1360] sm:$0xff]
                %895 = vst [vmem:[%s273 + $0x9b0] sm:$0xff] %v894
                %v896 = vld [vmem:[%s272 + $0x1368] sm:$0xff]
                %897 = vst [vmem:[%s273 + $0x9b8] sm:$0xff] %v896
                %v898 = vld [vmem:[%s272 + $0x1380] sm:$0xff]
                %899 = vst [vmem:[%s273 + $0x9c0] sm:$0xff] %v898
                %v900 = vld [vmem:[%s272 + $0x1388] sm:$0xff]
                %901 = vst [vmem:[%s273 + $0x9c8] sm:$0xff] %v900
                %v902 = vld [vmem:[%s272 + $0x13a0] sm:$0xff]
                %903 = vst [vmem:[%s273 + $0x9d0] sm:$0xff] %v902
                %v904 = vld [vmem:[%s272 + $0x13a8] sm:$0xff]
                %905 = vst [vmem:[%s273 + $0x9d8] sm:$0xff] %v904
                %v906 = vld [vmem:[%s272 + $0x13c0] sm:$0xff]
                %907 = vst [vmem:[%s273 + $0x9e0] sm:$0xff] %v906
                %v908 = vld [vmem:[%s272 + $0x13c8] sm:$0xff]
                %909 = vst [vmem:[%s273 + $0x9e8] sm:$0xff] %v908
                %v910 = vld [vmem:[%s272 + $0x13e0] sm:$0xff]
                %911 = vst [vmem:[%s273 + $0x9f0] sm:$0xff] %v910
                %v912 = vld [vmem:[%s272 + $0x13e8] sm:$0xff]
                %913 = vst [vmem:[%s273 + $0x9f8] sm:$0xff] %v912
                %v914 = vld [vmem:[%s272 + $0x1400] sm:$0xff]
                %915 = vst [vmem:[%s273 + $0xa00] sm:$0xff] %v914
                %v916 = vld [vmem:[%s272 + $0x1408] sm:$0xff]
                %917 = vst [vmem:[%s273 + $0xa08] sm:$0xff] %v916
                %v918 = vld [vmem:[%s272 + $0x1420] sm:$0xff]
                %919 = vst [vmem:[%s273 + $0xa10] sm:$0xff] %v918
                %v920 = vld [vmem:[%s272 + $0x1428] sm:$0xff]
                %921 = vst [vmem:[%s273 + $0xa18] sm:$0xff] %v920
                %v922 = vld [vmem:[%s272 + $0x1440] sm:$0xff]
                %923 = vst [vmem:[%s273 + $0xa20] sm:$0xff] %v922
                %v924 = vld [vmem:[%s272 + $0x1448] sm:$0xff]
                %925 = vst [vmem:[%s273 + $0xa28] sm:$0xff] %v924
                %v926 = vld [vmem:[%s272 + $0x1460] sm:$0xff]
                %927 = vst [vmem:[%s273 + $0xa30] sm:$0xff] %v926
                %v928 = vld [vmem:[%s272 + $0x1468] sm:$0xff]
                %929 = vst [vmem:[%s273 + $0xa38] sm:$0xff] %v928
                %v930 = vld [vmem:[%s272 + $0x1480] sm:$0xff]
                %931 = vst [vmem:[%s273 + $0xa40] sm:$0xff] %v930
                %v932 = vld [vmem:[%s272 + $0x1488] sm:$0xff]
                %933 = vst [vmem:[%s273 + $0xa48] sm:$0xff] %v932
                %v934 = vld [vmem:[%s272 + $0x14a0] sm:$0xff]
                %935 = vst [vmem:[%s273 + $0xa50] sm:$0xff] %v934
                %v936 = vld [vmem:[%s272 + $0x14a8] sm:$0xff]
                %937 = vst [vmem:[%s273 + $0xa58] sm:$0xff] %v936
                %v938 = vld [vmem:[%s272 + $0x14c0] sm:$0xff]
                %939 = vst [vmem:[%s273 + $0xa60] sm:$0xff] %v938
                %v940 = vld [vmem:[%s272 + $0x14c8] sm:$0xff]
                %941 = vst [vmem:[%s273 + $0xa68] sm:$0xff] %v940
                %v942 = vld [vmem:[%s272 + $0x14e0] sm:$0xff]
                %943 = vst [vmem:[%s273 + $0xa70] sm:$0xff] %v942
                %v944 = vld [vmem:[%s272 + $0x14e8] sm:$0xff]
                %945 = vst [vmem:[%s273 + $0xa78] sm:$0xff] %v944
                %v946 = vld [vmem:[%s272 + $0x1500] sm:$0xff]
                %947 = vst [vmem:[%s273 + $0xa80] sm:$0xff] %v946
                %v948 = vld [vmem:[%s272 + $0x1508] sm:$0xff]
                %949 = vst [vmem:[%s273 + $0xa88] sm:$0xff] %v948
                %v950 = vld [vmem:[%s272 + $0x1520] sm:$0xff]
                %951 = vst [vmem:[%s273 + $0xa90] sm:$0xff] %v950
                %v952 = vld [vmem:[%s272 + $0x1528] sm:$0xff]
                %953 = vst [vmem:[%s273 + $0xa98] sm:$0xff] %v952
                %v954 = vld [vmem:[%s272 + $0x1540] sm:$0xff]
                %955 = vst [vmem:[%s273 + $0xaa0] sm:$0xff] %v954
                %v956 = vld [vmem:[%s272 + $0x1548] sm:$0xff]
                %957 = vst [vmem:[%s273 + $0xaa8] sm:$0xff] %v956
                %v958 = vld [vmem:[%s272 + $0x1560] sm:$0xff]
                %959 = vst [vmem:[%s273 + $0xab0] sm:$0xff] %v958
                %v960 = vld [vmem:[%s272 + $0x1568] sm:$0xff]
                %961 = vst [vmem:[%s273 + $0xab8] sm:$0xff] %v960
                %v962 = vld [vmem:[%s272 + $0x1580] sm:$0xff]
                %963 = vst [vmem:[%s273 + $0xac0] sm:$0xff] %v962
                %v964 = vld [vmem:[%s272 + $0x1588] sm:$0xff]
                %965 = vst [vmem:[%s273 + $0xac8] sm:$0xff] %v964
                %v966 = vld [vmem:[%s272 + $0x15a0] sm:$0xff]
                %967 = vst [vmem:[%s273 + $0xad0] sm:$0xff] %v966
                %v968 = vld [vmem:[%s272 + $0x15a8] sm:$0xff]
                %969 = vst [vmem:[%s273 + $0xad8] sm:$0xff] %v968
                %v970 = vld [vmem:[%s272 + $0x15c0] sm:$0xff]
                %971 = vst [vmem:[%s273 + $0xae0] sm:$0xff] %v970
                %v972 = vld [vmem:[%s272 + $0x15c8] sm:$0xff]
                %973 = vst [vmem:[%s273 + $0xae8] sm:$0xff] %v972
                %v974 = vld [vmem:[%s272 + $0x15e0] sm:$0xff]
                %975 = vst [vmem:[%s273 + $0xaf0] sm:$0xff] %v974
                %v976 = vld [vmem:[%s272 + $0x15e8] sm:$0xff]
                %977 = vst [vmem:[%s273 + $0xaf8] sm:$0xff] %v976
                %v978 = vld [vmem:[%s272 + $0x1600] sm:$0xff]
                %979 = vst [vmem:[%s273 + $0xb00] sm:$0xff] %v978
                %v980 = vld [vmem:[%s272 + $0x1608] sm:$0xff]
                %981 = vst [vmem:[%s273 + $0xb08] sm:$0xff] %v980
                %v982 = vld [vmem:[%s272 + $0x1620] sm:$0xff]
                %983 = vst [vmem:[%s273 + $0xb10] sm:$0xff] %v982
                %v984 = vld [vmem:[%s272 + $0x1628] sm:$0xff]
                %985 = vst [vmem:[%s273 + $0xb18] sm:$0xff] %v984
                %v986 = vld [vmem:[%s272 + $0x1640] sm:$0xff]
                %987 = vst [vmem:[%s273 + $0xb20] sm:$0xff] %v986
                %v988 = vld [vmem:[%s272 + $0x1648] sm:$0xff]
                %989 = vst [vmem:[%s273 + $0xb28] sm:$0xff] %v988
                %v990 = vld [vmem:[%s272 + $0x1660] sm:$0xff]
                %991 = vst [vmem:[%s273 + $0xb30] sm:$0xff] %v990
                %v992 = vld [vmem:[%s272 + $0x1668] sm:$0xff]
                %993 = vst [vmem:[%s273 + $0xb38] sm:$0xff] %v992
                %v994 = vld [vmem:[%s272 + $0x1680] sm:$0xff]
                %995 = vst [vmem:[%s273 + $0xb40] sm:$0xff] %v994
                %v996 = vld [vmem:[%s272 + $0x1688] sm:$0xff]
                %997 = vst [vmem:[%s273 + $0xb48] sm:$0xff] %v996
                %v998 = vld [vmem:[%s272 + $0x16a0] sm:$0xff]
                %999 = vst [vmem:[%s273 + $0xb50] sm:$0xff] %v998
                %v1000 = vld [vmem:[%s272 + $0x16a8] sm:$0xff]
                %1001 = vst [vmem:[%s273 + $0xb58] sm:$0xff] %v1000
                %v1002 = vld [vmem:[%s272 + $0x16c0] sm:$0xff]
                %1003 = vst [vmem:[%s273 + $0xb60] sm:$0xff] %v1002
                %v1004 = vld [vmem:[%s272 + $0x16c8] sm:$0xff]
                %1005 = vst [vmem:[%s273 + $0xb68] sm:$0xff] %v1004
                %v1006 = vld [vmem:[%s272 + $0x16e0] sm:$0xff]
                %1007 = vst [vmem:[%s273 + $0xb70] sm:$0xff] %v1006
                %v1008 = vld [vmem:[%s272 + $0x16e8] sm:$0xff]
                %1009 = vst [vmem:[%s273 + $0xb78] sm:$0xff] %v1008
                %v1010 = vld [vmem:[%s272 + $0x1700] sm:$0xff]
                %1011 = vst [vmem:[%s273 + $0xb80] sm:$0xff] %v1010
                %v1012 = vld [vmem:[%s272 + $0x1708] sm:$0xff]
                %1013 = vst [vmem:[%s273 + $0xb88] sm:$0xff] %v1012
                %v1014 = vld [vmem:[%s272 + $0x1720] sm:$0xff]
                %1015 = vst [vmem:[%s273 + $0xb90] sm:$0xff] %v1014
                %v1016 = vld [vmem:[%s272 + $0x1728] sm:$0xff]
                %1017 = vst [vmem:[%s273 + $0xb98] sm:$0xff] %v1016
                %v1018 = vld [vmem:[%s272 + $0x1740] sm:$0xff]
                %1019 = vst [vmem:[%s273 + $0xba0] sm:$0xff] %v1018
                %v1020 = vld [vmem:[%s272 + $0x1748] sm:$0xff]
                %1021 = vst [vmem:[%s273 + $0xba8] sm:$0xff] %v1020
                %v1022 = vld [vmem:[%s272 + $0x1760] sm:$0xff]
                %1023 = vst [vmem:[%s273 + $0xbb0] sm:$0xff] %v1022
                %v1024 = vld [vmem:[%s272 + $0x1768] sm:$0xff]
                %1025 = vst [vmem:[%s273 + $0xbb8] sm:$0xff] %v1024
                %v1026 = vld [vmem:[%s272 + $0x1780] sm:$0xff]
                %1027 = vst [vmem:[%s273 + $0xbc0] sm:$0xff] %v1026
                %v1028 = vld [vmem:[%s272 + $0x1788] sm:$0xff]
                %1029 = vst [vmem:[%s273 + $0xbc8] sm:$0xff] %v1028
                %v1030 = vld [vmem:[%s272 + $0x17a0] sm:$0xff]
                %1031 = vst [vmem:[%s273 + $0xbd0] sm:$0xff] %v1030
                %v1032 = vld [vmem:[%s272 + $0x17a8] sm:$0xff]
                %1033 = vst [vmem:[%s273 + $0xbd8] sm:$0xff] %v1032
                %v1034 = vld [vmem:[%s272 + $0x17c0] sm:$0xff]
                %1035 = vst [vmem:[%s273 + $0xbe0] sm:$0xff] %v1034
                %v1036 = vld [vmem:[%s272 + $0x17c8] sm:$0xff]
                %1037 = vst [vmem:[%s273 + $0xbe8] sm:$0xff] %v1036
                %v1038 = vld [vmem:[%s272 + $0x17e0] sm:$0xff]
                %1039 = vst [vmem:[%s273 + $0xbf0] sm:$0xff] %v1038
                %v1040 = vld [vmem:[%s272 + $0x17e8] sm:$0xff]
                %1041 = vst [vmem:[%s273 + $0xbf8] sm:$0xff] %v1040
                %v1042 = vld [vmem:[%s272 + $0x1800] sm:$0xff]
                %1043 = vst [vmem:[%s273 + $0xc00] sm:$0xff] %v1042
                %v1044 = vld [vmem:[%s272 + $0x1808] sm:$0xff]
                %1045 = vst [vmem:[%s273 + $0xc08] sm:$0xff] %v1044
                %v1046 = vld [vmem:[%s272 + $0x1820] sm:$0xff]
                %1047 = vst [vmem:[%s273 + $0xc10] sm:$0xff] %v1046
                %v1048 = vld [vmem:[%s272 + $0x1828] sm:$0xff]
                %1049 = vst [vmem:[%s273 + $0xc18] sm:$0xff] %v1048
                %v1050 = vld [vmem:[%s272 + $0x1840] sm:$0xff]
                %1051 = vst [vmem:[%s273 + $0xc20] sm:$0xff] %v1050
                %v1052 = vld [vmem:[%s272 + $0x1848] sm:$0xff]
                %1053 = vst [vmem:[%s273 + $0xc28] sm:$0xff] %v1052
                %v1054 = vld [vmem:[%s272 + $0x1860] sm:$0xff]
                %1055 = vst [vmem:[%s273 + $0xc30] sm:$0xff] %v1054
                %v1056 = vld [vmem:[%s272 + $0x1868] sm:$0xff]
                %1057 = vst [vmem:[%s273 + $0xc38] sm:$0xff] %v1056
                %v1058 = vld [vmem:[%s272 + $0x1880] sm:$0xff]
                %1059 = vst [vmem:[%s273 + $0xc40] sm:$0xff] %v1058
                %v1060 = vld [vmem:[%s272 + $0x1888] sm:$0xff]
                %1061 = vst [vmem:[%s273 + $0xc48] sm:$0xff] %v1060
                %v1062 = vld [vmem:[%s272 + $0x18a0] sm:$0xff]
                %1063 = vst [vmem:[%s273 + $0xc50] sm:$0xff] %v1062
                %v1064 = vld [vmem:[%s272 + $0x18a8] sm:$0xff]
                %1065 = vst [vmem:[%s273 + $0xc58] sm:$0xff] %v1064
                %v1066 = vld [vmem:[%s272 + $0x18c0] sm:$0xff]
                %1067 = vst [vmem:[%s273 + $0xc60] sm:$0xff] %v1066
                %v1068 = vld [vmem:[%s272 + $0x18c8] sm:$0xff]
                %1069 = vst [vmem:[%s273 + $0xc68] sm:$0xff] %v1068
                %v1070 = vld [vmem:[%s272 + $0x18e0] sm:$0xff]
                %1071 = vst [vmem:[%s273 + $0xc70] sm:$0xff] %v1070
                %v1072 = vld [vmem:[%s272 + $0x18e8] sm:$0xff]
                %1073 = vst [vmem:[%s273 + $0xc78] sm:$0xff] %v1072
                %v1074 = vld [vmem:[%s272 + $0x1900] sm:$0xff]
                %1075 = vst [vmem:[%s273 + $0xc80] sm:$0xff] %v1074
                %v1076 = vld [vmem:[%s272 + $0x1908] sm:$0xff]
                %1077 = vst [vmem:[%s273 + $0xc88] sm:$0xff] %v1076
                %v1078 = vld [vmem:[%s272 + $0x1920] sm:$0xff]
                %1079 = vst [vmem:[%s273 + $0xc90] sm:$0xff] %v1078
                %v1080 = vld [vmem:[%s272 + $0x1928] sm:$0xff]
                %1081 = vst [vmem:[%s273 + $0xc98] sm:$0xff] %v1080
                %v1082 = vld [vmem:[%s272 + $0x1940] sm:$0xff]
                %1083 = vst [vmem:[%s273 + $0xca0] sm:$0xff] %v1082
                %v1084 = vld [vmem:[%s272 + $0x1948] sm:$0xff]
                %1085 = vst [vmem:[%s273 + $0xca8] sm:$0xff] %v1084
                %v1086 = vld [vmem:[%s272 + $0x1960] sm:$0xff]
                %1087 = vst [vmem:[%s273 + $0xcb0] sm:$0xff] %v1086
                %v1088 = vld [vmem:[%s272 + $0x1968] sm:$0xff]
                %1089 = vst [vmem:[%s273 + $0xcb8] sm:$0xff] %v1088
                %v1090 = vld [vmem:[%s272 + $0x1980] sm:$0xff]
                %1091 = vst [vmem:[%s273 + $0xcc0] sm:$0xff] %v1090
                %v1092 = vld [vmem:[%s272 + $0x1988] sm:$0xff]
                %1093 = vst [vmem:[%s273 + $0xcc8] sm:$0xff] %v1092
                %v1094 = vld [vmem:[%s272 + $0x19a0] sm:$0xff]
                %1095 = vst [vmem:[%s273 + $0xcd0] sm:$0xff] %v1094
                %v1096 = vld [vmem:[%s272 + $0x19a8] sm:$0xff]
                %1097 = vst [vmem:[%s273 + $0xcd8] sm:$0xff] %v1096
                %v1098 = vld [vmem:[%s272 + $0x19c0] sm:$0xff]
                %1099 = vst [vmem:[%s273 + $0xce0] sm:$0xff] %v1098
                %v1100 = vld [vmem:[%s272 + $0x19c8] sm:$0xff]
                %1101 = vst [vmem:[%s273 + $0xce8] sm:$0xff] %v1100
                %v1102 = vld [vmem:[%s272 + $0x19e0] sm:$0xff]
                %1103 = vst [vmem:[%s273 + $0xcf0] sm:$0xff] %v1102
                %v1104 = vld [vmem:[%s272 + $0x19e8] sm:$0xff]
                %1105 = vst [vmem:[%s273 + $0xcf8] sm:$0xff] %v1104
                %v1106 = vld [vmem:[%s272 + $0x1a00] sm:$0xff]
                %1107 = vst [vmem:[%s273 + $0xd00] sm:$0xff] %v1106
                %v1108 = vld [vmem:[%s272 + $0x1a08] sm:$0xff]
                %1109 = vst [vmem:[%s273 + $0xd08] sm:$0xff] %v1108
                %v1110 = vld [vmem:[%s272 + $0x1a20] sm:$0xff]
                %1111 = vst [vmem:[%s273 + $0xd10] sm:$0xff] %v1110
                %v1112 = vld [vmem:[%s272 + $0x1a28] sm:$0xff]
                %1113 = vst [vmem:[%s273 + $0xd18] sm:$0xff] %v1112
                %v1114 = vld [vmem:[%s272 + $0x1a40] sm:$0xff]
                %1115 = vst [vmem:[%s273 + $0xd20] sm:$0xff] %v1114
                %v1116 = vld [vmem:[%s272 + $0x1a48] sm:$0xff]
                %1117 = vst [vmem:[%s273 + $0xd28] sm:$0xff] %v1116
                %v1118 = vld [vmem:[%s272 + $0x1a60] sm:$0xff]
                %1119 = vst [vmem:[%s273 + $0xd30] sm:$0xff] %v1118
                %v1120 = vld [vmem:[%s272 + $0x1a68] sm:$0xff]
                %1121 = vst [vmem:[%s273 + $0xd38] sm:$0xff] %v1120
                %v1122 = vld [vmem:[%s272 + $0x1a80] sm:$0xff]
                %1123 = vst [vmem:[%s273 + $0xd40] sm:$0xff] %v1122
                %v1124 = vld [vmem:[%s272 + $0x1a88] sm:$0xff]
                %1125 = vst [vmem:[%s273 + $0xd48] sm:$0xff] %v1124
                %v1126 = vld [vmem:[%s272 + $0x1aa0] sm:$0xff]
                %1127 = vst [vmem:[%s273 + $0xd50] sm:$0xff] %v1126
                %v1128 = vld [vmem:[%s272 + $0x1aa8] sm:$0xff]
                %1129 = vst [vmem:[%s273 + $0xd58] sm:$0xff] %v1128
                %v1130 = vld [vmem:[%s272 + $0x1ac0] sm:$0xff]
                %1131 = vst [vmem:[%s273 + $0xd60] sm:$0xff] %v1130
                %v1132 = vld [vmem:[%s272 + $0x1ac8] sm:$0xff]
                %1133 = vst [vmem:[%s273 + $0xd68] sm:$0xff] %v1132
                %v1134 = vld [vmem:[%s272 + $0x1ae0] sm:$0xff]
                %1135 = vst [vmem:[%s273 + $0xd70] sm:$0xff] %v1134
                %v1136 = vld [vmem:[%s272 + $0x1ae8] sm:$0xff]
                %1137 = vst [vmem:[%s273 + $0xd78] sm:$0xff] %v1136
                %v1138 = vld [vmem:[%s272 + $0x1b00] sm:$0xff]
                %1139 = vst [vmem:[%s273 + $0xd80] sm:$0xff] %v1138
                %v1140 = vld [vmem:[%s272 + $0x1b08] sm:$0xff]
                %1141 = vst [vmem:[%s273 + $0xd88] sm:$0xff] %v1140
                %v1142 = vld [vmem:[%s272 + $0x1b20] sm:$0xff]
                %1143 = vst [vmem:[%s273 + $0xd90] sm:$0xff] %v1142
                %v1144 = vld [vmem:[%s272 + $0x1b28] sm:$0xff]
                %1145 = vst [vmem:[%s273 + $0xd98] sm:$0xff] %v1144
                %v1146 = vld [vmem:[%s272 + $0x1b40] sm:$0xff]
                %1147 = vst [vmem:[%s273 + $0xda0] sm:$0xff] %v1146
                %v1148 = vld [vmem:[%s272 + $0x1b48] sm:$0xff]
                %1149 = vst [vmem:[%s273 + $0xda8] sm:$0xff] %v1148
                %v1150 = vld [vmem:[%s272 + $0x1b60] sm:$0xff]
                %1151 = vst [vmem:[%s273 + $0xdb0] sm:$0xff] %v1150
                %v1152 = vld [vmem:[%s272 + $0x1b68] sm:$0xff]
                %1153 = vst [vmem:[%s273 + $0xdb8] sm:$0xff] %v1152
                %v1154 = vld [vmem:[%s272 + $0x1b80] sm:$0xff]
                %1155 = vst [vmem:[%s273 + $0xdc0] sm:$0xff] %v1154
                %v1156 = vld [vmem:[%s272 + $0x1b88] sm:$0xff]
                %1157 = vst [vmem:[%s273 + $0xdc8] sm:$0xff] %v1156
                %v1158 = vld [vmem:[%s272 + $0x1ba0] sm:$0xff]
                %1159 = vst [vmem:[%s273 + $0xdd0] sm:$0xff] %v1158
                %v1160 = vld [vmem:[%s272 + $0x1ba8] sm:$0xff]
                %1161 = vst [vmem:[%s273 + $0xdd8] sm:$0xff] %v1160
                %v1162 = vld [vmem:[%s272 + $0x1bc0] sm:$0xff]
                %1163 = vst [vmem:[%s273 + $0xde0] sm:$0xff] %v1162
                %v1164 = vld [vmem:[%s272 + $0x1bc8] sm:$0xff]
                %1165 = vst [vmem:[%s273 + $0xde8] sm:$0xff] %v1164
                %v1166 = vld [vmem:[%s272 + $0x1be0] sm:$0xff]
                %1167 = vst [vmem:[%s273 + $0xdf0] sm:$0xff] %v1166
                %v1168 = vld [vmem:[%s272 + $0x1be8] sm:$0xff]
                %1169 = vst [vmem:[%s273 + $0xdf8] sm:$0xff] %v1168
                %v1170 = vld [vmem:[%s272 + $0x1c00] sm:$0xff]
                %1171 = vst [vmem:[%s273 + $0xe00] sm:$0xff] %v1170
                %v1172 = vld [vmem:[%s272 + $0x1c08] sm:$0xff]
                %1173 = vst [vmem:[%s273 + $0xe08] sm:$0xff] %v1172
                %v1174 = vld [vmem:[%s272 + $0x1c20] sm:$0xff]
                %1175 = vst [vmem:[%s273 + $0xe10] sm:$0xff] %v1174
                %v1176 = vld [vmem:[%s272 + $0x1c28] sm:$0xff]
                %1177 = vst [vmem:[%s273 + $0xe18] sm:$0xff] %v1176
                %v1178 = vld [vmem:[%s272 + $0x1c40] sm:$0xff]
                %1179 = vst [vmem:[%s273 + $0xe20] sm:$0xff] %v1178
                %v1180 = vld [vmem:[%s272 + $0x1c48] sm:$0xff]
                %1181 = vst [vmem:[%s273 + $0xe28] sm:$0xff] %v1180
                %v1182 = vld [vmem:[%s272 + $0x1c60] sm:$0xff]
                %1183 = vst [vmem:[%s273 + $0xe30] sm:$0xff] %v1182
                %v1184 = vld [vmem:[%s272 + $0x1c68] sm:$0xff]
                %1185 = vst [vmem:[%s273 + $0xe38] sm:$0xff] %v1184
                %v1186 = vld [vmem:[%s272 + $0x1c80] sm:$0xff]
                %1187 = vst [vmem:[%s273 + $0xe40] sm:$0xff] %v1186
                %v1188 = vld [vmem:[%s272 + $0x1c88] sm:$0xff]
                %1189 = vst [vmem:[%s273 + $0xe48] sm:$0xff] %v1188
                %v1190 = vld [vmem:[%s272 + $0x1ca0] sm:$0xff]
                %1191 = vst [vmem:[%s273 + $0xe50] sm:$0xff] %v1190
                %v1192 = vld [vmem:[%s272 + $0x1ca8] sm:$0xff]
                %1193 = vst [vmem:[%s273 + $0xe58] sm:$0xff] %v1192
                %v1194 = vld [vmem:[%s272 + $0x1cc0] sm:$0xff]
                %1195 = vst [vmem:[%s273 + $0xe60] sm:$0xff] %v1194
                %v1196 = vld [vmem:[%s272 + $0x1cc8] sm:$0xff]
                %1197 = vst [vmem:[%s273 + $0xe68] sm:$0xff] %v1196
                %v1198 = vld [vmem:[%s272 + $0x1ce0] sm:$0xff]
                %1199 = vst [vmem:[%s273 + $0xe70] sm:$0xff] %v1198
                %v1200 = vld [vmem:[%s272 + $0x1ce8] sm:$0xff]
                %1201 = vst [vmem:[%s273 + $0xe78] sm:$0xff] %v1200
                %v1202 = vld [vmem:[%s272 + $0x1d00] sm:$0xff]
                %1203 = vst [vmem:[%s273 + $0xe80] sm:$0xff] %v1202
                %v1204 = vld [vmem:[%s272 + $0x1d08] sm:$0xff]
                %1205 = vst [vmem:[%s273 + $0xe88] sm:$0xff] %v1204
                %v1206 = vld [vmem:[%s272 + $0x1d20] sm:$0xff]
                %1207 = vst [vmem:[%s273 + $0xe90] sm:$0xff] %v1206
                %v1208 = vld [vmem:[%s272 + $0x1d28] sm:$0xff]
                %1209 = vst [vmem:[%s273 + $0xe98] sm:$0xff] %v1208
                %v1210 = vld [vmem:[%s272 + $0x1d40] sm:$0xff]
                %1211 = vst [vmem:[%s273 + $0xea0] sm:$0xff] %v1210
                %v1212 = vld [vmem:[%s272 + $0x1d48] sm:$0xff]
                %1213 = vst [vmem:[%s273 + $0xea8] sm:$0xff] %v1212
                %v1214 = vld [vmem:[%s272 + $0x1d60] sm:$0xff]
                %1215 = vst [vmem:[%s273 + $0xeb0] sm:$0xff] %v1214
                %v1216 = vld [vmem:[%s272 + $0x1d68] sm:$0xff]
                %1217 = vst [vmem:[%s273 + $0xeb8] sm:$0xff] %v1216
                %v1218 = vld [vmem:[%s272 + $0x1d80] sm:$0xff]
                %1219 = vst [vmem:[%s273 + $0xec0] sm:$0xff] %v1218
                %v1220 = vld [vmem:[%s272 + $0x1d88] sm:$0xff]
                %1221 = vst [vmem:[%s273 + $0xec8] sm:$0xff] %v1220
                %v1222 = vld [vmem:[%s272 + $0x1da0] sm:$0xff]
                %1223 = vst [vmem:[%s273 + $0xed0] sm:$0xff] %v1222
                %v1224 = vld [vmem:[%s272 + $0x1da8] sm:$0xff]
                %1225 = vst [vmem:[%s273 + $0xed8] sm:$0xff] %v1224
                %v1226 = vld [vmem:[%s272 + $0x1dc0] sm:$0xff]
                %1227 = vst [vmem:[%s273 + $0xee0] sm:$0xff] %v1226
                %v1228 = vld [vmem:[%s272 + $0x1dc8] sm:$0xff]
                %1229 = vst [vmem:[%s273 + $0xee8] sm:$0xff] %v1228
                %v1230 = vld [vmem:[%s272 + $0x1de0] sm:$0xff]
                %1231 = vst [vmem:[%s273 + $0xef0] sm:$0xff] %v1230
                %v1232 = vld [vmem:[%s272 + $0x1de8] sm:$0xff]
                %1233 = vst [vmem:[%s273 + $0xef8] sm:$0xff] %v1232
                %v1234 = vld [vmem:[%s272 + $0x1e00] sm:$0xff]
                %1235 = vst [vmem:[%s273 + $0xf00] sm:$0xff] %v1234
                %v1236 = vld [vmem:[%s272 + $0x1e08] sm:$0xff]
                %1237 = vst [vmem:[%s273 + $0xf08] sm:$0xff] %v1236
                %v1238 = vld [vmem:[%s272 + $0x1e20] sm:$0xff]
                %1239 = vst [vmem:[%s273 + $0xf10] sm:$0xff] %v1238
                %v1240 = vld [vmem:[%s272 + $0x1e28] sm:$0xff]
                %1241 = vst [vmem:[%s273 + $0xf18] sm:$0xff] %v1240
                %v1242 = vld [vmem:[%s272 + $0x1e40] sm:$0xff]
                %1243 = vst [vmem:[%s273 + $0xf20] sm:$0xff] %v1242
                %v1244 = vld [vmem:[%s272 + $0x1e48] sm:$0xff]
                %1245 = vst [vmem:[%s273 + $0xf28] sm:$0xff] %v1244
                %v1246 = vld [vmem:[%s272 + $0x1e60] sm:$0xff]
                %1247 = vst [vmem:[%s273 + $0xf30] sm:$0xff] %v1246
                %v1248 = vld [vmem:[%s272 + $0x1e68] sm:$0xff]
                %1249 = vst [vmem:[%s273 + $0xf38] sm:$0xff] %v1248
                %v1250 = vld [vmem:[%s272 + $0x1e80] sm:$0xff]
                %1251 = vst [vmem:[%s273 + $0xf40] sm:$0xff] %v1250
                %v1252 = vld [vmem:[%s272 + $0x1e88] sm:$0xff]
                %1253 = vst [vmem:[%s273 + $0xf48] sm:$0xff] %v1252
                %v1254 = vld [vmem:[%s272 + $0x1ea0] sm:$0xff]
                %1255 = vst [vmem:[%s273 + $0xf50] sm:$0xff] %v1254
                %v1256 = vld [vmem:[%s272 + $0x1ea8] sm:$0xff]
                %1257 = vst [vmem:[%s273 + $0xf58] sm:$0xff] %v1256
                %v1258 = vld [vmem:[%s272 + $0x1ec0] sm:$0xff]
                %1259 = vst [vmem:[%s273 + $0xf60] sm:$0xff] %v1258
                %v1260 = vld [vmem:[%s272 + $0x1ec8] sm:$0xff]
                %1261 = vst [vmem:[%s273 + $0xf68] sm:$0xff] %v1260
                %v1262 = vld [vmem:[%s272 + $0x1ee0] sm:$0xff]
                %1263 = vst [vmem:[%s273 + $0xf70] sm:$0xff] %v1262
                %v1264 = vld [vmem:[%s272 + $0x1ee8] sm:$0xff]
                %1265 = vst [vmem:[%s273 + $0xf78] sm:$0xff] %v1264
                %v1266 = vld [vmem:[%s272 + $0x1f00] sm:$0xff]
                %1267 = vst [vmem:[%s273 + $0xf80] sm:$0xff] %v1266
                %v1268 = vld [vmem:[%s272 + $0x1f08] sm:$0xff]
                %1269 = vst [vmem:[%s273 + $0xf88] sm:$0xff] %v1268
                %v1270 = vld [vmem:[%s272 + $0x1f20] sm:$0xff]
                %1271 = vst [vmem:[%s273 + $0xf90] sm:$0xff] %v1270
                %v1272 = vld [vmem:[%s272 + $0x1f28] sm:$0xff]
                %1273 = vst [vmem:[%s273 + $0xf98] sm:$0xff] %v1272
                %v1274 = vld [vmem:[%s272 + $0x1f40] sm:$0xff]
                %1275 = vst [vmem:[%s273 + $0xfa0] sm:$0xff] %v1274
                %v1276 = vld [vmem:[%s272 + $0x1f48] sm:$0xff]
                %1277 = vst [vmem:[%s273 + $0xfa8] sm:$0xff] %v1276
                %v1278 = vld [vmem:[%s272 + $0x1f60] sm:$0xff]
                %1279 = vst [vmem:[%s273 + $0xfb0] sm:$0xff] %v1278
                %v1280 = vld [vmem:[%s272 + $0x1f68] sm:$0xff]
                %1281 = vst [vmem:[%s273 + $0xfb8] sm:$0xff] %v1280
                %v1282 = vld [vmem:[%s272 + $0x1f80] sm:$0xff]
                %1283 = vst [vmem:[%s273 + $0xfc0] sm:$0xff] %v1282
                %v1284 = vld [vmem:[%s272 + $0x1f88] sm:$0xff]
                %1285 = vst [vmem:[%s273 + $0xfc8] sm:$0xff] %v1284
                %v1286 = vld [vmem:[%s272 + $0x1fa0] sm:$0xff]
                %1287 = vst [vmem:[%s273 + $0xfd0] sm:$0xff] %v1286
                %v1288 = vld [vmem:[%s272 + $0x1fa8] sm:$0xff]
                %1289 = vst [vmem:[%s273 + $0xfd8] sm:$0xff] %v1288
                %v1290 = vld [vmem:[%s272 + $0x1fc0] sm:$0xff]
                %1291 = vst [vmem:[%s273 + $0xfe0] sm:$0xff] %v1290
                %v1292 = vld [vmem:[%s272 + $0x1fc8] sm:$0xff]
                %1293 = vst [vmem:[%s273 + $0xfe8] sm:$0xff] %v1292
                %v1294 = vld [vmem:[%s272 + $0x1fe0] sm:$0xff]
                %1295 = vst [vmem:[%s273 + $0xff0] sm:$0xff] %v1294
                %v1296 = vld [vmem:[%s272 + $0x1fe8] sm:$0xff]
                %1297 = vst [vmem:[%s273 + $0xff8] sm:$0xff] %v1296
              $region53: #{regression_forward.1} parent=47 // loop_footer
                %s271 = sadd.s32 1, %s267
              $region54: #{regression_forward.1} parent=47 // loop_footer_branch
                %266 = sbr.rel target = $region50
              $region55: #{regression_forward.1} parent=47 // loop_exit
                _
            $region48: #{regression_forward.1} parent=43 // pred_fallthru
              _
            // Predicated region
            $region56: #{regression_forward.1} parent=43 // pred_check
              _
            $region57: #{regression_forward.1} parent=43 // pred_check_branch
              %1299 = sbr.rel target = $region59
            $region58: #{regression_forward.1} parent=43 // pred_region
              _
            $region59: #{regression_forward.1} parent=43 // pred_fallthru
              _
          $region44: #{regression_forward.1} parent=39 // pred_fallthru
            _
          %1300 = vnop
        $region40: #{regression_forward.1} parent=35 // pred_fallthru
          _
        // Predicated region
        $region60: #{regression_forward.1} parent=35 // pred_check
          %p1301 = pneg %p144
        $region61: #{regression_forward.1} parent=35 // pred_check_branch
          %1303 = sbr.rel (%p1301) target = $region63
        $region62: #{regression_forward.1} parent=35 // pred_region
          %s1304 = smul.u32 4, %s14
          %p1305 = scmp.lt.s32.totalorder %s1304, 7
          %s1306 = scalar_select %p1305, %s1304, 7
          %s1307 = scalar_lea.vmem %s5, %s1306
          %s1308 = smul.u32 4, %s14
        $region63: #{regression_forward.1} parent=35 // pred_fallthru
          _
        // Predicated region
        $region64: #{regression_forward.1} parent=35 // pred_check
          %p1309 = pneg %p170
        $region65: #{regression_forward.1} parent=35 // pred_check_branch
          %1311 = sbr.rel (%p1309) target = $region67
        $region66: #{regression_forward.1} parent=35 // pred_region
          %s1312 = smul.u32 64, %s14
          %p1313 = scmp.lt.s32.totalorder %s1312, 127
          %s1314 = scalar_select %p1313, %s1312, 127
          %s1315 = smul.addr %s1314, 8
          %s1316 = scalar_lea.vmem %s6, %s1315
          %s1317 = smul.u32 64, %s14
        $region67: #{regression_forward.1} parent=35 // pred_fallthru
          _
      $region36: #{regression_forward.1} parent=5 // pred_fallthru
        _
      %p1318 = scmp.le.s32.totalorder 1, %s14
      %p1319 = scmp.lt.s32.totalorder %s14, 3
      %p1320 = pnand %p1318, %p1319
      %p1321 = pneg %p1320
      // Predicated region
      $region68: #{regression_forward.1} parent=5 // pred_check
        _
      $region69: #{regression_forward.1} parent=5 // pred_check_branch
        %1323 = sbr.rel (%p1320) target = $region71
      $region70: #{regression_forward.1} parent=5 // pred_region
        %s1324 = ssub.s32 %s14, 1
        %s1325 = sand.u32 %s111, 1
        %s1326 = sand.u32 %s111, 1
        %s1327 = smul.addr %s1326, 4096
        %s1328 = scalar_lea.vmem [#allocation3], %s1327
        // Predicated region
        $region72: #{regression_forward.1} parent=70 // pred_check
          %p1329 = pneg %p124
        $region73: #{regression_forward.1} parent=70 // pred_check_branch
          %1331 = sbr.rel (%p1329) target = $region75
        $region74: #{regression_forward.1} parent=70 // pred_region
          _
        $region75: #{regression_forward.1} parent=70 // pred_fallthru
          _
        %p1332 = pneg %p35
        %p1333 = pneg %p32
        %p1334 = pneg %p56
        %p1335 = pneg %p53
        %p1336 = pneg %p77
        %p1337 = pneg %p74
        %p1338 = pneg %p98
        %p1339 = pneg %p95
        %s1340 = sand.u32 %s111, 1
        %s1341 = sand.u32 %s111, 1
        %s1342 = smul.addr %s1341, 4096
        %s1343 = scalar_lea.vmem [#allocation3], %s1342
        %p1344 = pneg %p124
        %p1345 = pneg %p121
        %s1346 = smul.u32 4, %s19
        %p1347 = scmp.lt.s32.totalorder %s1346, 7
        %s1348 = scalar_select %p1347, %s1346, 7
        %s1349 = scalar_lea.vmem %s5, %s1348
        %p1350 = pneg %p150
        %p1351 = pneg %p147
        %s1352 = smul.u32 64, %s19
        %p1353 = scmp.lt.s32.totalorder %s1352, 127
        %s1354 = scalar_select %p1353, %s1352, 127
        %s1355 = smul.addr %s1354, 8
        %s1356 = scalar_lea.vmem %s6, %s1355
        %p1357 = pneg %p176
        %p1358 = pneg %p173
        %p1359 = pneg %p197
        %p1360 = pneg %p194
        %p1361 = pneg %p218
        %p1362 = pneg %p215
        %s1363 = smul.u32 4, %s19
        %s1364 = smul.u32 4, %s19
        %p1365 = scmp.lt.s32.totalorder %s1364, 7
        %s1366 = scalar_select %p1365, %s1364, 7
        %s1367 = scalar_lea.vmem %s5, %s1366
        %s1368 = smul.u32 4, %s19
        %s1369 = smul.u32 64, %s19
        %p1370 = scmp.lt.s32.totalorder %s1369, 127
        %s1371 = scalar_select %p1370, %s1369, 127
        %s1372 = smul.addr %s1371, 8
        %s1373 = scalar_lea.vmem %s6, %s1372
        %s1374 = smul.u32 64, %s19
        %p1376 = scmp.eq.s32.totalorder %s19, 0
        // Predicated region
        $region76: #{regression_forward.1} parent=70 // pred_check
          %p1377 = pneg %p1376
        $region77: #{regression_forward.1} parent=70 // pred_check_branch
          %1379 = sbr.rel (%p1377) target = $region79
        $region78: #{regression_forward.1} parent=70 // pred_region
          %v1380 = vld [vmem:[%s1] sm:$0xff]
          %v1381 = vld [vmem:[%s1 + $0x8] sm:$0xff]
          %v1382 = vld [vmem:[%s1 + $0x10] sm:$0xff]
          %v1383 = vld [vmem:[%s1 + $0x18] sm:$0xff]
          %v1384 = vld [vmem:[%s0] sm:$0xff]
          %v1385 = vld [vmem:[%s0 + $0x8] sm:$0xff]
          %v1386 = vld [vmem:[%s0 + $0x10] sm:$0xff]
          %v1387 = vld [vmem:[%s0 + $0x18] sm:$0xff]
          %v1388 = vld [vmem:[%s0 + $0x20] sm:$0xff]
          %v1389 = vld [vmem:[%s0 + $0x28] sm:$0xff]
          %v1390 = vld [vmem:[%s0 + $0x30] sm:$0xff]
          %v1391 = vld [vmem:[%s0 + $0x38] sm:$0xff]
          %v1392 = vld [vmem:[%s0 + $0x40] sm:$0xff]
          %v1393 = vld [vmem:[%s0 + $0x48] sm:$0xff]
          %v1394 = vld [vmem:[%s0 + $0x50] sm:$0xff]
          %v1395 = vld [vmem:[%s0 + $0x58] sm:$0xff]
          %v1396 = vld [vmem:[%s0 + $0x60] sm:$0xff]
          %v1397 = vld [vmem:[%s0 + $0x68] sm:$0xff]
          %v1398 = vld [vmem:[%s0 + $0x70] sm:$0xff]
          %v1399 = vld [vmem:[%s0 + $0x78] sm:$0xff]
          %v1400 = vld [vmem:[%s0 + $0x80] sm:$0xff]
          %v1401 = vld [vmem:[%s0 + $0x88] sm:$0xff]
          %v1402 = vld [vmem:[%s0 + $0x90] sm:$0xff]
          %v1403 = vld [vmem:[%s0 + $0x98] sm:$0xff]
          %v1404 = vld [vmem:[%s0 + $0xa0] sm:$0xff]
          %v1405 = vld [vmem:[%s0 + $0xa8] sm:$0xff]
          %v1406 = vld [vmem:[%s0 + $0xb0] sm:$0xff]
          %v1407 = vld [vmem:[%s0 + $0xb8] sm:$0xff]
          %v1408 = vld [vmem:[%s0 + $0xc0] sm:$0xff]
          %v1409 = vld [vmem:[%s0 + $0xc8] sm:$0xff]
          %v1410 = vld [vmem:[%s0 + $0xd0] sm:$0xff]
          %v1411 = vld [vmem:[%s0 + $0xd8] sm:$0xff]
          %v1412 = vld [vmem:[%s0 + $0xe0] sm:$0xff]
          %v1413 = vld [vmem:[%s0 + $0xe8] sm:$0xff]
          %v1414 = vld [vmem:[%s0 + $0xf0] sm:$0xff]
          %v1415 = vld [vmem:[%s0 + $0xf8] sm:$0xff]
          %v1416 = vld [vmem:[%s0 + $0x100] sm:$0xff]
          %v1417 = vld [vmem:[%s0 + $0x108] sm:$0xff]
          %v1418 = vld [vmem:[%s0 + $0x110] sm:$0xff]
          %v1419 = vld [vmem:[%s0 + $0x118] sm:$0xff]
          %v1420 = vld [vmem:[%s0 + $0x120] sm:$0xff]
          %v1421 = vld [vmem:[%s0 + $0x128] sm:$0xff]
          %v1422 = vld [vmem:[%s0 + $0x130] sm:$0xff]
          %v1423 = vld [vmem:[%s0 + $0x138] sm:$0xff]
          %v1424 = vld [vmem:[%s0 + $0x140] sm:$0xff]
          %v1425 = vld [vmem:[%s0 + $0x148] sm:$0xff]
          %v1426 = vld [vmem:[%s0 + $0x150] sm:$0xff]
          %v1427 = vld [vmem:[%s0 + $0x158] sm:$0xff]
          %v1428 = vld [vmem:[%s0 + $0x160] sm:$0xff]
          %v1429 = vld [vmem:[%s0 + $0x168] sm:$0xff]
          %v1430 = vld [vmem:[%s0 + $0x170] sm:$0xff]
          %v1431 = vld [vmem:[%s0 + $0x178] sm:$0xff]
          %v1432 = vld [vmem:[%s0 + $0x180] sm:$0xff]
          %v1433 = vld [vmem:[%s0 + $0x188] sm:$0xff]
          %v1434 = vld [vmem:[%s0 + $0x190] sm:$0xff]
          %v1435 = vld [vmem:[%s0 + $0x198] sm:$0xff]
          %v1436 = vld [vmem:[%s0 + $0x1a0] sm:$0xff]
          %v1437 = vld [vmem:[%s0 + $0x1a8] sm:$0xff]
          %v1438 = vld [vmem:[%s0 + $0x1b0] sm:$0xff]
          %v1439 = vld [vmem:[%s0 + $0x1b8] sm:$0xff]
          %v1440 = vld [vmem:[%s0 + $0x1c0] sm:$0xff]
          %v1441 = vld [vmem:[%s0 + $0x1c8] sm:$0xff]
          %v1442 = vld [vmem:[%s0 + $0x1d0] sm:$0xff]
          %v1443 = vld [vmem:[%s0 + $0x1d8] sm:$0xff]
          %v1444 = vld [vmem:[%s0 + $0x1e0] sm:$0xff]
          %v1445 = vld [vmem:[%s0 + $0x1e8] sm:$0xff]
          %v1446 = vld [vmem:[%s0 + $0x1f0] sm:$0xff]
          %v1447 = vld [vmem:[%s0 + $0x1f8] sm:$0xff]
          %v1448 = vld [vmem:[%s0 + $0x200] sm:$0xff]
          %v1449 = vld [vmem:[%s0 + $0x208] sm:$0xff]
          %v1450 = vld [vmem:[%s0 + $0x210] sm:$0xff]
          %v1451 = vld [vmem:[%s0 + $0x218] sm:$0xff]
          %v1452 = vld [vmem:[%s0 + $0x220] sm:$0xff]
          %v1453 = vld [vmem:[%s0 + $0x228] sm:$0xff]
          %v1454 = vld [vmem:[%s0 + $0x230] sm:$0xff]
          %v1455 = vld [vmem:[%s0 + $0x238] sm:$0xff]
          %v1456 = vld [vmem:[%s0 + $0x240] sm:$0xff]
          %v1457 = vld [vmem:[%s0 + $0x248] sm:$0xff]
          %v1458 = vld [vmem:[%s0 + $0x250] sm:$0xff]
          %v1459 = vld [vmem:[%s0 + $0x258] sm:$0xff]
          %v1460 = vld [vmem:[%s0 + $0x260] sm:$0xff]
          %v1461 = vld [vmem:[%s0 + $0x268] sm:$0xff]
          %v1462 = vld [vmem:[%s0 + $0x270] sm:$0xff]
          %v1463 = vld [vmem:[%s0 + $0x278] sm:$0xff]
          %v1464 = vld [vmem:[%s0 + $0x280] sm:$0xff]
          %v1465 = vld [vmem:[%s0 + $0x288] sm:$0xff]
          %v1466 = vld [vmem:[%s0 + $0x290] sm:$0xff]
          %v1467 = vld [vmem:[%s0 + $0x298] sm:$0xff]
          %v1468 = vld [vmem:[%s0 + $0x2a0] sm:$0xff]
          %v1469 = vld [vmem:[%s0 + $0x2a8] sm:$0xff]
          %v1470 = vld [vmem:[%s0 + $0x2b0] sm:$0xff]
          %v1471 = vld [vmem:[%s0 + $0x2b8] sm:$0xff]
          %v1472 = vld [vmem:[%s0 + $0x2c0] sm:$0xff]
          %v1473 = vld [vmem:[%s0 + $0x2c8] sm:$0xff]
          %v1474 = vld [vmem:[%s0 + $0x2d0] sm:$0xff]
          %v1475 = vld [vmem:[%s0 + $0x2d8] sm:$0xff]
          %v1476 = vld [vmem:[%s0 + $0x2e0] sm:$0xff]
          %v1477 = vld [vmem:[%s0 + $0x2e8] sm:$0xff]
          %v1478 = vld [vmem:[%s0 + $0x2f0] sm:$0xff]
          %v1479 = vld [vmem:[%s0 + $0x2f8] sm:$0xff]
          %v1480 = vld [vmem:[%s0 + $0x300] sm:$0xff]
          %v1481 = vld [vmem:[%s0 + $0x308] sm:$0xff]
          %v1482 = vld [vmem:[%s0 + $0x310] sm:$0xff]
          %v1483 = vld [vmem:[%s0 + $0x318] sm:$0xff]
          %v1484 = vld [vmem:[%s0 + $0x320] sm:$0xff]
          %v1485 = vld [vmem:[%s0 + $0x328] sm:$0xff]
          %v1486 = vld [vmem:[%s0 + $0x330] sm:$0xff]
          %v1487 = vld [vmem:[%s0 + $0x338] sm:$0xff]
          %v1488 = vld [vmem:[%s0 + $0x340] sm:$0xff]
          %v1489 = vld [vmem:[%s0 + $0x348] sm:$0xff]
          %v1490 = vld [vmem:[%s0 + $0x350] sm:$0xff]
          %v1491 = vld [vmem:[%s0 + $0x358] sm:$0xff]
          %v1492 = vld [vmem:[%s0 + $0x360] sm:$0xff]
          %v1493 = vld [vmem:[%s0 + $0x368] sm:$0xff]
          %v1494 = vld [vmem:[%s0 + $0x370] sm:$0xff]
          %v1495 = vld [vmem:[%s0 + $0x378] sm:$0xff]
          %v1496 = vld [vmem:[%s0 + $0x380] sm:$0xff]
          %v1497 = vld [vmem:[%s0 + $0x388] sm:$0xff]
          %v1498 = vld [vmem:[%s0 + $0x390] sm:$0xff]
          %v1499 = vld [vmem:[%s0 + $0x398] sm:$0xff]
          %v1500 = vld [vmem:[%s0 + $0x3a0] sm:$0xff]
          %v1501 = vld [vmem:[%s0 + $0x3a8] sm:$0xff]
          %v1502 = vld [vmem:[%s0 + $0x3b0] sm:$0xff]
          %v1503 = vld [vmem:[%s0 + $0x3b8] sm:$0xff]
          %v1504 = vld [vmem:[%s0 + $0x3c0] sm:$0xff]
          %v1505 = vld [vmem:[%s0 + $0x3c8] sm:$0xff]
          %v1506 = vld [vmem:[%s0 + $0x3d0] sm:$0xff]
          %v1507 = vld [vmem:[%s0 + $0x3d8] sm:$0xff]
          %v1508 = vld [vmem:[%s0 + $0x3e0] sm:$0xff]
          %v1509 = vld [vmem:[%s0 + $0x3e8] sm:$0xff]
          %v1510 = vld [vmem:[%s0 + $0x3f0] sm:$0xff]
          %v1511 = vld [vmem:[%s0 + $0x3f8] sm:$0xff]
          %vm1512 = vcmask 556032
          %v1514 = vsel %vm1512, %v1381, 0
          %v1517 = vsel %vm1512, %v1383, 0
          %v1520 = vsel %vm1512, %v1385, 0
          %v1523 = vsel %vm1512, %v1387, 0
          %v1526 = vsel %vm1512, %v1389, 0
          %v1529 = vsel %vm1512, %v1391, 0
          %v1532 = vsel %vm1512, %v1393, 0
          %v1535 = vsel %vm1512, %v1395, 0
          %v1538 = vsel %vm1512, %v1397, 0
          %v1541 = vsel %vm1512, %v1399, 0
          %v1544 = vsel %vm1512, %v1401, 0
          %v1547 = vsel %vm1512, %v1403, 0
          %v1550 = vsel %vm1512, %v1405, 0
          %v1553 = vsel %vm1512, %v1407, 0
          %v1556 = vsel %vm1512, %v1409, 0
          %v1559 = vsel %vm1512, %v1411, 0
          %v1562 = vsel %vm1512, %v1413, 0
          %v1565 = vsel %vm1512, %v1415, 0
          %v1568 = vsel %vm1512, %v1417, 0
          %v1571 = vsel %vm1512, %v1419, 0
          %v1574 = vsel %vm1512, %v1421, 0
          %v1577 = vsel %vm1512, %v1423, 0
          %v1580 = vsel %vm1512, %v1425, 0
          %v1583 = vsel %vm1512, %v1427, 0
          %v1586 = vsel %vm1512, %v1429, 0
          %v1589 = vsel %vm1512, %v1431, 0
          %v1592 = vsel %vm1512, %v1433, 0
          %v1595 = vsel %vm1512, %v1435, 0
          %v1598 = vsel %vm1512, %v1437, 0
          %v1601 = vsel %vm1512, %v1439, 0
          %v1604 = vsel %vm1512, %v1441, 0
          %v1607 = vsel %vm1512, %v1443, 0
          %v1610 = vsel %vm1512, %v1445, 0
          %v1613 = vsel %vm1512, %v1447, 0
          %v1616 = vsel %vm1512, %v1449, 0
          %v1619 = vsel %vm1512, %v1451, 0
          %v1622 = vsel %vm1512, %v1453, 0
          %v1625 = vsel %vm1512, %v1455, 0
          %v1628 = vsel %vm1512, %v1457, 0
          %v1631 = vsel %vm1512, %v1459, 0
          %v1634 = vsel %vm1512, %v1461, 0
          %v1637 = vsel %vm1512, %v1463, 0
          %v1640 = vsel %vm1512, %v1465, 0
          %v1643 = vsel %vm1512, %v1467, 0
          %v1646 = vsel %vm1512, %v1469, 0
          %v1649 = vsel %vm1512, %v1471, 0
          %v1652 = vsel %vm1512, %v1473, 0
          %v1655 = vsel %vm1512, %v1475, 0
          %v1658 = vsel %vm1512, %v1477, 0
          %v1661 = vsel %vm1512, %v1479, 0
          %v1664 = vsel %vm1512, %v1481, 0
          %v1667 = vsel %vm1512, %v1483, 0
          %v1670 = vsel %vm1512, %v1485, 0
          %v1673 = vsel %vm1512, %v1487, 0
          %v1676 = vsel %vm1512, %v1489, 0
          %v1679 = vsel %vm1512, %v1491, 0
          %v1682 = vsel %vm1512, %v1493, 0
          %v1685 = vsel %vm1512, %v1495, 0
          %v1688 = vsel %vm1512, %v1497, 0
          %v1691 = vsel %vm1512, %v1499, 0
          %v1694 = vsel %vm1512, %v1501, 0
          %v1697 = vsel %vm1512, %v1503, 0
          %v1700 = vsel %vm1512, %v1505, 0
          %v1703 = vsel %vm1512, %v1507, 0
          %v1706 = vsel %vm1512, %v1509, 0
          %v1709 = vsel %vm1512, %v1511, 0
          %1711 = vmatprep.subr.mxu0 %v1520
          %1712 = vmatpush1.xpose.msra.mxu0 %v1384
          %1713 = vmatprep.subr.mxu0 %v1523
          %1714 = vmatpush1.xpose.msra.mxu0 %v1386
          %1715 = vmatprep.subr.mxu0 %v1526
          %1716 = vmatpush1.xpose.msra.mxu0 %v1388
          %1717 = vmatprep.subr.mxu0 %v1529
          %1718 = vmatpush1.xpose.msra.mxu0 %v1390
          %1719 = vmatprep.subr.mxu0 %v1532
          %1720 = vmatpush1.xpose.msra.mxu0 %v1392
          %1721 = vmatprep.subr.mxu0 %v1535
          %1722 = vmatpush1.xpose.msra.mxu0 %v1394
          %1723 = vmatprep.subr.mxu0 %v1538
          %1724 = vmatpush1.xpose.msra.mxu0 %v1396
          %1725 = vmatprep.subr.mxu0 %v1541
          %1726 = vmatpush1.xpose.msra.mxu0 %v1398
          %1727 = vmatprep.subr.mxu0 %v1544
          %1728 = vmatpush1.xpose.msra.mxu0 %v1400
          %1729 = vmatprep.subr.mxu0 %v1547
          %1730 = vmatpush1.xpose.msra.mxu0 %v1402
          %1731 = vmatprep.subr.mxu0 %v1550
          %1732 = vmatpush1.xpose.msra.mxu0 %v1404
          %1733 = vmatprep.subr.mxu0 %v1553
          %1734 = vmatpush1.xpose.msra.mxu0 %v1406
          %1735 = vmatprep.subr.mxu0 %v1556
          %1736 = vmatpush1.xpose.msra.mxu0 %v1408
          %1737 = vmatprep.subr.mxu0 %v1559
          %1738 = vmatpush1.xpose.msra.mxu0 %v1410
          %1739 = vmatprep.subr.mxu0 %v1562
          %1740 = vmatpush1.xpose.msra.mxu0 %v1412
          %1741 = vmatprep.subr.mxu0 %v1565
          %1742 = vmatpush1.xpose.msra.mxu0 %v1414
          %1743 = vmatprep.subr.mxu0 %v1568
          %1744 = vmatpush1.xpose.msra.mxu0 %v1416
          %1745 = vmatprep.subr.mxu0 %v1571
          %1746 = vmatpush1.xpose.msra.mxu0 %v1418
          %1747 = vmatprep.subr.mxu0 %v1574
          %1748 = vmatpush1.xpose.msra.mxu0 %v1420
          %1749 = vmatprep.subr.mxu0 %v1577
          %1750 = vmatpush1.xpose.msra.mxu0 %v1422
          %1751 = vmatprep.subr.mxu0 %v1580
          %1752 = vmatpush1.xpose.msra.mxu0 %v1424
          %1753 = vmatprep.subr.mxu0 %v1583
          %1754 = vmatpush1.xpose.msra.mxu0 %v1426
          %1755 = vmatprep.subr.mxu0 %v1586
          %1756 = vmatpush1.xpose.msra.mxu0 %v1428
          %1757 = vmatprep.subr.mxu0 %v1589
          %1758 = vmatpush1.xpose.msra.mxu0 %v1430
          %1759 = vmatprep.subr.mxu0 %v1592
          %1760 = vmatpush1.xpose.msra.mxu0 %v1432
          %1761 = vmatprep.subr.mxu0 %v1595
          %1762 = vmatpush1.xpose.msra.mxu0 %v1434
          %1763 = vmatprep.subr.mxu0 %v1598
          %1764 = vmatpush1.xpose.msra.mxu0 %v1436
          %1765 = vmatprep.subr.mxu0 %v1601
          %1766 = vmatpush1.xpose.msra.mxu0 %v1438
          %1767 = vmatprep.subr.mxu0 %v1604
          %1768 = vmatpush1.xpose.msra.mxu0 %v1440
          %1769 = vmatprep.subr.mxu0 %v1607
          %1770 = vmatpush1.xpose.msra.mxu0 %v1442
          %1771 = vmatprep.subr.mxu0 %v1610
          %1772 = vmatpush1.xpose.msra.mxu0 %v1444
          %1773 = vmatprep.subr.mxu0 %v1613
          %1774 = vmatpush1.xpose.msra.mxu0 %v1446
          %1775 = vmatprep.mubr.f32.mxu0 %v1514
          %1776 = vmatmul.mubr.f32.gmra.mrb[0].mxu0 %v1380
          %v1777 = vpop.f32.mrb[0].mxu0
          %v1778 = vadd.f32 0.0, %v1777
          %v1779 = vpop.f32.mrb[0].mxu0
          %v1780 = vadd.f32 0.0, %v1779
          %1781 = vmatprep.mubr.f32.mxu0 %v1517
          %1782 = vmatmul.mubr.f32.gmra.mrb[0].mxu0 %v1382
          %v1783 = vpop.f32.mrb[0].mxu0
          %v1784 = vadd.f32 0.0, %v1783
          %v1785 = vpop.f32.mrb[0].mxu0
          %v1786 = vadd.f32 0.0, %v1785
          %1787 = vdwg.mxu0
          %1788 = vmatprep.subr.mxu0 %v1616
          %1789 = vmatpush1.xpose.msra.mxu0 %v1448
          %1790 = vmatprep.subr.mxu0 %v1619
          %1791 = vmatpush1.xpose.msra.mxu0 %v1450
          %1792 = vmatprep.subr.mxu0 %v1622
          %1793 = vmatpush1.xpose.msra.mxu0 %v1452
          %1794 = vmatprep.subr.mxu0 %v1625
          %1795 = vmatpush1.xpose.msra.mxu0 %v1454
          %1796 = vmatprep.subr.mxu0 %v1628
          %1797 = vmatpush1.xpose.msra.mxu0 %v1456
          %1798 = vmatprep.subr.mxu0 %v1631
          %1799 = vmatpush1.xpose.msra.mxu0 %v1458
          %1800 = vmatprep.subr.mxu0 %v1634
          %1801 = vmatpush1.xpose.msra.mxu0 %v1460
          %1802 = vmatprep.subr.mxu0 %v1637
          %1803 = vmatpush1.xpose.msra.mxu0 %v1462
          %1804 = vmatprep.subr.mxu0 %v1640
          %1805 = vmatpush1.xpose.msra.mxu0 %v1464
          %1806 = vmatprep.subr.mxu0 %v1643
          %1807 = vmatpush1.xpose.msra.mxu0 %v1466
          %1808 = vmatprep.subr.mxu0 %v1646
          %1809 = vmatpush1.xpose.msra.mxu0 %v1468
          %1810 = vmatprep.subr.mxu0 %v1649
          %1811 = vmatpush1.xpose.msra.mxu0 %v1470
          %1812 = vmatprep.subr.mxu0 %v1652
          %1813 = vmatpush1.xpose.msra.mxu0 %v1472
          %1814 = vmatprep.subr.mxu0 %v1655
          %1815 = vmatpush1.xpose.msra.mxu0 %v1474
          %1816 = vmatprep.subr.mxu0 %v1658
          %1817 = vmatpush1.xpose.msra.mxu0 %v1476
          %1818 = vmatprep.subr.mxu0 %v1661
          %1819 = vmatpush1.xpose.msra.mxu0 %v1478
          %1820 = vmatprep.subr.mxu0 %v1664
          %1821 = vmatpush1.xpose.msra.mxu0 %v1480
          %1822 = vmatprep.subr.mxu0 %v1667
          %1823 = vmatpush1.xpose.msra.mxu0 %v1482
          %1824 = vmatprep.subr.mxu0 %v1670
          %1825 = vmatpush1.xpose.msra.mxu0 %v1484
          %1826 = vmatprep.subr.mxu0 %v1673
          %1827 = vmatpush1.xpose.msra.mxu0 %v1486
          %1828 = vmatprep.subr.mxu0 %v1676
          %1829 = vmatpush1.xpose.msra.mxu0 %v1488
          %1830 = vmatprep.subr.mxu0 %v1679
          %1831 = vmatpush1.xpose.msra.mxu0 %v1490
          %1832 = vmatprep.subr.mxu0 %v1682
          %1833 = vmatpush1.xpose.msra.mxu0 %v1492
          %1834 = vmatprep.subr.mxu0 %v1685
          %1835 = vmatpush1.xpose.msra.mxu0 %v1494
          %1836 = vmatprep.subr.mxu0 %v1688
          %1837 = vmatpush1.xpose.msra.mxu0 %v1496
          %1838 = vmatprep.subr.mxu0 %v1691
          %1839 = vmatpush1.xpose.msra.mxu0 %v1498
          %1840 = vmatprep.subr.mxu0 %v1694
          %1841 = vmatpush1.xpose.msra.mxu0 %v1500
          %1842 = vmatprep.subr.mxu0 %v1697
          %1843 = vmatpush1.xpose.msra.mxu0 %v1502
          %1844 = vmatprep.subr.mxu0 %v1700
          %1845 = vmatpush1.xpose.msra.mxu0 %v1504
          %1846 = vmatprep.subr.mxu0 %v1703
          %1847 = vmatpush1.xpose.msra.mxu0 %v1506
          %1848 = vmatprep.subr.mxu0 %v1706
          %1849 = vmatpush1.xpose.msra.mxu0 %v1508
          %1850 = vmatprep.subr.mxu0 %v1709
          %1851 = vmatpush1.xpose.msra.mxu0 %v1510
          %1852 = vmatprep.mubr.f32.mxu0 %v1514
          %1853 = vmatmul.mubr.f32.gmra.mrb[0].mxu0 %v1380
          %v1854 = vpop.f32.mrb[0].mxu0
          %v1855 = vadd.f32 0.0, %v1854
          %v1856 = vpop.f32.mrb[0].mxu0
          %v1857 = vadd.f32 0.0, %v1856
          %1858 = vmatprep.mubr.f32.mxu0 %v1517
          %1859 = vmatmul.mubr.f32.gmra.mrb[0].mxu0 %v1382
          %v1860 = vpop.f32.mrb[0].mxu0
          %v1861 = vadd.f32 0.0, %v1860
          %v1862 = vpop.f32.mrb[0].mxu0
          %v1863 = vadd.f32 0.0, %v1862
          %1864 = vdwg.mxu0
          %v1865 = vpack.c.bf16 %v1784, %v1778
          %v1866 = vpack.c.bf16 %v1786, %v1780
          %v1867 = vpack.c.bf16 %v1861, %v1855
          %v1868 = vpack.c.bf16 %v1863, %v1857
          %v1869 = vld [vmem:[%s2] sm:$0xf]
          %v1870 = vld [vmem:[%s2 + $0x4] sm:$0xf]
          %v1871 = vld [vmem:[%s2 + $0x8] sm:$0xf]
          %v1872 = vld [vmem:[%s2 + $0xc] sm:$0xf]
          %v1873 = vld [vmem:[%s2 + $0x10] sm:$0xf]
          %v1874 = vld [vmem:[%s2 + $0x14] sm:$0xf]
          %v1875 = vld [vmem:[%s2 + $0x18] sm:$0xf]
          %v1876 = vld [vmem:[%s2 + $0x1c] sm:$0xf]
          %v1877 = vld [vmem:[%s2 + $0x20] sm:$0xf]
          %v1878 = vld [vmem:[%s2 + $0x24] sm:$0xf]
          %v1879 = vld [vmem:[%s2 + $0x28] sm:$0xf]
          %v1880 = vld [vmem:[%s2 + $0x2c] sm:$0xf]
          %v1881 = vld [vmem:[%s2 + $0x30] sm:$0xf]
          %v1882 = vld [vmem:[%s2 + $0x34] sm:$0xf]
          %v1883 = vld [vmem:[%s2 + $0x38] sm:$0xf]
          %v1884 = vld [vmem:[%s2 + $0x3c] sm:$0xf]
          %v1885 = vld [vmem:[%s2 + $0x40] sm:$0xf]
          %v1886 = vld [vmem:[%s2 + $0x44] sm:$0xf]
          %v1887 = vld [vmem:[%s2 + $0x48] sm:$0xf]
          %v1888 = vld [vmem:[%s2 + $0x4c] sm:$0xf]
          %v1889 = vld [vmem:[%s2 + $0x50] sm:$0xf]
          %v1890 = vld [vmem:[%s2 + $0x54] sm:$0xf]
          %v1891 = vld [vmem:[%s2 + $0x58] sm:$0xf]
          %v1892 = vld [vmem:[%s2 + $0x5c] sm:$0xf]
          %v1893 = vld [vmem:[%s2 + $0x60] sm:$0xf]
          %v1894 = vld [vmem:[%s2 + $0x64] sm:$0xf]
          %v1895 = vld [vmem:[%s2 + $0x68] sm:$0xf]
          %v1896 = vld [vmem:[%s2 + $0x6c] sm:$0xf]
          %v1897 = vld [vmem:[%s2 + $0x70] sm:$0xf]
          %v1898 = vld [vmem:[%s2 + $0x74] sm:$0xf]
          %v1899 = vld [vmem:[%s2 + $0x78] sm:$0xf]
          %v1900 = vld [vmem:[%s2 + $0x7c] sm:$0xf]
          %v1901 = vld [vmem:[%s2 + $0x80] sm:$0xf]
          %v1902 = vld [vmem:[%s2 + $0x84] sm:$0xf]
          %v1903 = vld [vmem:[%s2 + $0x88] sm:$0xf]
          %v1904 = vld [vmem:[%s2 + $0x8c] sm:$0xf]
          %v1905 = vld [vmem:[%s2 + $0x90] sm:$0xf]
          %v1906 = vld [vmem:[%s2 + $0x94] sm:$0xf]
          %v1907 = vld [vmem:[%s2 + $0x98] sm:$0xf]
          %v1908 = vld [vmem:[%s2 + $0x9c] sm:$0xf]
          %v1909 = vld [vmem:[%s2 + $0xa0] sm:$0xf]
          %v1910 = vld [vmem:[%s2 + $0xa4] sm:$0xf]
          %v1911 = vld [vmem:[%s2 + $0xa8] sm:$0xf]
          %v1912 = vld [vmem:[%s2 + $0xac] sm:$0xf]
          %v1913 = vld [vmem:[%s2 + $0xb0] sm:$0xf]
          %v1914 = vld [vmem:[%s2 + $0xb4] sm:$0xf]
          %v1915 = vld [vmem:[%s2 + $0xb8] sm:$0xf]
          %v1916 = vld [vmem:[%s2 + $0xbc] sm:$0xf]
          %v1917 = vld [vmem:[%s2 + $0xc0] sm:$0xf]
          %v1918 = vld [vmem:[%s2 + $0xc4] sm:$0xf]
          %v1919 = vld [vmem:[%s2 + $0xc8] sm:$0xf]
          %v1920 = vld [vmem:[%s2 + $0xcc] sm:$0xf]
          %v1921 = vld [vmem:[%s2 + $0xd0] sm:$0xf]
          %v1922 = vld [vmem:[%s2 + $0xd4] sm:$0xf]
          %v1923 = vld [vmem:[%s2 + $0xd8] sm:$0xf]
          %v1924 = vld [vmem:[%s2 + $0xdc] sm:$0xf]
          %v1925 = vld [vmem:[%s2 + $0xe0] sm:$0xf]
          %v1926 = vld [vmem:[%s2 + $0xe4] sm:$0xf]
          %v1927 = vld [vmem:[%s2 + $0xe8] sm:$0xf]
          %v1928 = vld [vmem:[%s2 + $0xec] sm:$0xf]
          %v1929 = vld [vmem:[%s2 + $0xf0] sm:$0xf]
          %v1930 = vld [vmem:[%s2 + $0xf4] sm:$0xf]
          %v1931 = vld [vmem:[%s2 + $0xf8] sm:$0xf]
          %v1932 = vld [vmem:[%s2 + $0xfc] sm:$0xf]
          %v1933 = vld [vmem:[%s3] sm:$0x1]
          %v1935 = vlaneseq
          %v1936 = vshrl.u32 %v1935, 7
          %v1937 = vsub.s32 0, %v1936
          %v1938 = vrot.slane %v1933, %v1937
          %v2004 = vunpack.c.l.b16 %v1869
          %v2005 = vunpack.c.l.b16 %v1870
          %v2006 = vunpack.c.l.b16 %v1871
          %v2007 = vunpack.c.l.b16 %v1872
          %v2008 = vunpack.c.l.b16 %v1873
          %v2009 = vunpack.c.l.b16 %v1874
          %v2010 = vunpack.c.l.b16 %v1875
          %v2011 = vunpack.c.l.b16 %v1876
          %v2012 = vunpack.c.l.b16 %v1877
          %v2013 = vunpack.c.l.b16 %v1878
          %v2014 = vunpack.c.l.b16 %v1879
          %v2015 = vunpack.c.l.b16 %v1880
          %v2016 = vunpack.c.l.b16 %v1881
          %v2017 = vunpack.c.l.b16 %v1882
          %v2018 = vunpack.c.l.b16 %v1883
          %v2019 = vunpack.c.l.b16 %v1884
          %v2020 = vunpack.c.l.b16 %v1885
          %v2021 = vunpack.c.l.b16 %v1886
          %v2022 = vunpack.c.l.b16 %v1887
          %v2023 = vunpack.c.l.b16 %v1888
          %v2024 = vunpack.c.l.b16 %v1889
          %v2025 = vunpack.c.l.b16 %v1890
          %v2026 = vunpack.c.l.b16 %v1891
          %v2027 = vunpack.c.l.b16 %v1892
          %v2028 = vunpack.c.l.b16 %v1893
          %v2029 = vunpack.c.l.b16 %v1894
          %v2030 = vunpack.c.l.b16 %v1895
          %v2031 = vunpack.c.l.b16 %v1896
          %v2032 = vunpack.c.l.b16 %v1897
          %v2033 = vunpack.c.l.b16 %v1898
          %v2034 = vunpack.c.l.b16 %v1899
          %v2035 = vunpack.c.l.b16 %v1900
          %v2036 = vunpack.c.l.b16 %v1901
          %v2037 = vunpack.c.l.b16 %v1902
          %v2038 = vunpack.c.l.b16 %v1903
          %v2039 = vunpack.c.l.b16 %v1904
          %v2040 = vunpack.c.l.b16 %v1905
          %v2041 = vunpack.c.l.b16 %v1906
          %v2042 = vunpack.c.l.b16 %v1907
          %v2043 = vunpack.c.l.b16 %v1908
          %v2044 = vunpack.c.l.b16 %v1909
          %v2045 = vunpack.c.l.b16 %v1910
          %v2046 = vunpack.c.l.b16 %v1911
          %v2047 = vunpack.c.l.b16 %v1912
          %v2048 = vunpack.c.l.b16 %v1913
          %v2049 = vunpack.c.l.b16 %v1914
          %v2050 = vunpack.c.l.b16 %v1915
          %v2051 = vunpack.c.l.b16 %v1916
          %v2052 = vunpack.c.l.b16 %v1917
          %v2053 = vunpack.c.l.b16 %v1918
          %v2054 = vunpack.c.l.b16 %v1919
          %v2055 = vunpack.c.l.b16 %v1920
          %v2056 = vunpack.c.l.b16 %v1921
          %v2057 = vunpack.c.l.b16 %v1922
          %v2058 = vunpack.c.l.b16 %v1923
          %v2059 = vunpack.c.l.b16 %v1924
          %v2060 = vunpack.c.l.b16 %v1925
          %v2061 = vunpack.c.l.b16 %v1926
          %v2062 = vunpack.c.l.b16 %v1927
          %v2063 = vunpack.c.l.b16 %v1928
          %v2064 = vunpack.c.l.b16 %v1929
          %v2065 = vunpack.c.l.b16 %v1930
          %v2066 = vunpack.c.l.b16 %v1931
          %v2067 = vunpack.c.l.b16 %v1932
          %v2068 = vpack.c.b16 %v2005, %v2004
          %v2069 = vpack.c.b16 %v2007, %v2006
          %v2070 = vpack.c.b16 %v2009, %v2008
          %v2071 = vpack.c.b16 %v2011, %v2010
          %v2072 = vpack.c.b16 %v2013, %v2012
          %v2073 = vpack.c.b16 %v2015, %v2014
          %v2074 = vpack.c.b16 %v2017, %v2016
          %v2075 = vpack.c.b16 %v2019, %v2018
          %v2076 = vpack.c.b16 %v2021, %v2020
          %v2077 = vpack.c.b16 %v2023, %v2022
          %v2078 = vpack.c.b16 %v2025, %v2024
          %v2079 = vpack.c.b16 %v2027, %v2026
          %v2080 = vpack.c.b16 %v2029, %v2028
          %v2081 = vpack.c.b16 %v2031, %v2030
          %v2082 = vpack.c.b16 %v2033, %v2032
          %v2083 = vpack.c.b16 %v2035, %v2034
          %v2084 = vpack.c.b16 %v2037, %v2036
          %v2085 = vpack.c.b16 %v2039, %v2038
          %v2086 = vpack.c.b16 %v2041, %v2040
          %v2087 = vpack.c.b16 %v2043, %v2042
          %v2088 = vpack.c.b16 %v2045, %v2044
          %v2089 = vpack.c.b16 %v2047, %v2046
          %v2090 = vpack.c.b16 %v2049, %v2048
          %v2091 = vpack.c.b16 %v2051, %v2050
          %v2092 = vpack.c.b16 %v2053, %v2052
          %v2093 = vpack.c.b16 %v2055, %v2054
          %v2094 = vpack.c.b16 %v2057, %v2056
          %v2095 = vpack.c.b16 %v2059, %v2058
          %v2096 = vpack.c.b16 %v2061, %v2060
          %v2097 = vpack.c.b16 %v2063, %v2062
          %v2098 = vpack.c.b16 %v2065, %v2064
          %v2099 = vpack.c.b16 %v2067, %v2066
          %2132 = vmatprep.subr.bf16.mxu0 0
          %2133 = vmatpush1.bf16.msra.mxu0 %v2068
          %2134 = vmatprep.subr.bf16.mxu0 0
          %2135 = vmatpush1.bf16.msra.mxu0 %v2069
          %2136 = vmatprep.subr.bf16.mxu0 0
          %2137 = vmatpush1.bf16.msra.mxu0 %v2070
          %2138 = vmatprep.subr.bf16.mxu0 0
          %2139 = vmatpush1.bf16.msra.mxu0 %v2071
          %2140 = vmatprep.subr.bf16.mxu0 0
          %2141 = vmatpush1.bf16.msra.mxu0 %v2072
          %2142 = vmatprep.subr.bf16.mxu0 0
          %2143 = vmatpush1.bf16.msra.mxu0 %v2073
          %2144 = vmatprep.subr.bf16.mxu0 0
          %2145 = vmatpush1.bf16.msra.mxu0 %v2074
          %2146 = vmatprep.subr.bf16.mxu0 0
          %2147 = vmatpush1.bf16.msra.mxu0 %v2075
          %2148 = vmatprep.subr.bf16.mxu0 0
          %2149 = vmatpush1.bf16.msra.mxu0 %v2076
          %2150 = vmatprep.subr.bf16.mxu0 0
          %2151 = vmatpush1.bf16.msra.mxu0 %v2077
          %2152 = vmatprep.subr.bf16.mxu0 0
          %2153 = vmatpush1.bf16.msra.mxu0 %v2078
          %2154 = vmatprep.subr.bf16.mxu0 0
          %2155 = vmatpush1.bf16.msra.mxu0 %v2079
          %2156 = vmatprep.subr.bf16.mxu0 0
          %2157 = vmatpush1.bf16.msra.mxu0 %v2080
          %2158 = vmatprep.subr.bf16.mxu0 0
          %2159 = vmatpush1.bf16.msra.mxu0 %v2081
          %2160 = vmatprep.subr.bf16.mxu0 0
          %2161 = vmatpush1.bf16.msra.mxu0 %v2082
          %2162 = vmatprep.subr.bf16.mxu0 0
          %2163 = vmatpush1.bf16.msra.mxu0 %v2083
          %2164 = vmatprep.mubr.bf16.mxu0 %v1866
          %2165 = vmatmul.mubr.bf16.gmra.mrb[0].mxu0 %v1865
          %v2166 = vpop.f32.mrb[0].mxu0
          %v2167 = vadd.f32 %v1938, %v2166
          %v2168 = vpop.f32.mrb[0].mxu0
          %v2169 = vpop.f32.mrb[0].mxu0
          %v2170 = vadd.f32 %v1938, %v2169
          %v2171 = vpop.f32.mrb[0].mxu0
          %2172 = vdwg.mxu0
          %2173 = vmatprep.subr.bf16.mxu0 0
          %2174 = vmatpush1.bf16.msra.mxu0 %v2084
          %2175 = vmatprep.subr.bf16.mxu0 0
          %2176 = vmatpush1.bf16.msra.mxu0 %v2085
          %2177 = vmatprep.subr.bf16.mxu0 0
          %2178 = vmatpush1.bf16.msra.mxu0 %v2086
          %2179 = vmatprep.subr.bf16.mxu0 0
          %2180 = vmatpush1.bf16.msra.mxu0 %v2087
          %2181 = vmatprep.subr.bf16.mxu0 0
          %2182 = vmatpush1.bf16.msra.mxu0 %v2088
          %2183 = vmatprep.subr.bf16.mxu0 0
          %2184 = vmatpush1.bf16.msra.mxu0 %v2089
          %2185 = vmatprep.subr.bf16.mxu0 0
          %2186 = vmatpush1.bf16.msra.mxu0 %v2090
          %2187 = vmatprep.subr.bf16.mxu0 0
          %2188 = vmatpush1.bf16.msra.mxu0 %v2091
          %2189 = vmatprep.subr.bf16.mxu0 0
          %2190 = vmatpush1.bf16.msra.mxu0 %v2092
          %2191 = vmatprep.subr.bf16.mxu0 0
          %2192 = vmatpush1.bf16.msra.mxu0 %v2093
          %2193 = vmatprep.subr.bf16.mxu0 0
          %2194 = vmatpush1.bf16.msra.mxu0 %v2094
          %2195 = vmatprep.subr.bf16.mxu0 0
          %2196 = vmatpush1.bf16.msra.mxu0 %v2095
          %2197 = vmatprep.subr.bf16.mxu0 0
          %2198 = vmatpush1.bf16.msra.mxu0 %v2096
          %2199 = vmatprep.subr.bf16.mxu0 0
          %2200 = vmatpush1.bf16.msra.mxu0 %v2097
          %2201 = vmatprep.subr.bf16.mxu0 0
          %2202 = vmatpush1.bf16.msra.mxu0 %v2098
          %2203 = vmatprep.subr.bf16.mxu0 0
          %2204 = vmatpush1.bf16.msra.mxu0 %v2099
          %2205 = vmatprep.mubr.bf16.mxu0 %v1868
          %2206 = vmatmul.mubr.bf16.gmra.mrb[0].mxu0 %v1867
          %v2207 = vpop.f32.mrb[0].mxu0
          %v2208 = vadd.f32 %v2167, %v2207
          %v2209 = vpop.f32.mrb[0].mxu0
          %v2210 = vpop.f32.mrb[0].mxu0
          %v2211 = vadd.f32 %v2170, %v2210
          %v2212 = vpop.f32.mrb[0].mxu0
          %2213 = vdwg.mxu0
          %v2214 = vmax.f32 %v2208, 0.0
          %v2215 = vmax.f32 %v2211, 0.0
          %v2216 = vpack.c.bf16 %v2215, %v2214
          %vm2217 = vcmask 1040384
          %vm2218 = vsmask.f32 256
          %vm2219 = vmand %vm2217, %vm2218
          %v2220 = vld [vmem:[#allocation2] sm:$0x1]
          %v2221 = vsel %vm2219, %v2216, %v2220
          %2222 = vst [vmem:[#allocation2] sm:$0x1] %v2221
          %v2225 = vunpack.c.l.s4 1966171168
          %v2226 = vunpack.c.0.s8 %v2225
          %v2227 = vlaneseq
          %v2228 = vshrl.u32 %v2227, 7
          %v2229 = vsub.s32 %v2226, %v2228
          %v2230 = vrot.slane %v2216, %v2229
          %v2232 = vunpack.c.l.s4 1966171168
          %v2233 = vunpack.c.0.s8 %v2232
          %v2234 = vlaneseq
          %v2235 = vshrl.u32 %v2234, 7
          %v2236 = vsub.s32 %v2233, %v2235
          %v2237 = vrot.slane %v2230, %v2236
          %v2239 = vshrl.u32 %v2237, 16
          %v2241 = vrot.slane %v2239, 7
          %v2242 = vrot.slane %v2241, 1
          %v2244 = vld [vmem:[#allocation2 + $0x1] sm:$0x1]
          %v2245 = vsel %vm2219, %v2242, %v2244
          %2246 = vst [vmem:[#allocation2 + $0x1] sm:$0x1] %v2245
          %v2247 = vcombine.high %v2230, %v2230
          %v2249 = vunpack.c.l.s4 1966171168
          %v2250 = vunpack.c.0.s8 %v2249
          %v2251 = vlaneseq
          %v2252 = vshrl.u32 %v2251, 7
          %v2253 = vsub.s32 %v2250, %v2252
          %v2254 = vrot.slane %v2247, %v2253
          %v2256 = vld [vmem:[#allocation2 + $0x2] sm:$0x1]
          %v2257 = vsel %vm2219, %v2254, %v2256
          %2258 = vst [vmem:[#allocation2 + $0x2] sm:$0x1] %v2257
          %v2260 = vshrl.u32 %v2254, 16
          %v2262 = vrot.slane %v2260, 7
          %v2263 = vrot.slane %v2262, 1
          %v2265 = vld [vmem:[#allocation2 + $0x3] sm:$0x1]
          %v2266 = vsel %vm2219, %v2263, %v2265
          %2267 = vst [vmem:[#allocation2 + $0x3] sm:$0x1] %v2266
          %v2268 = vcombine.high %v2237, %v2237
          %v2270 = vld [vmem:[#allocation2 + $0x4] sm:$0x1]
          %v2271 = vsel %vm2219, %v2268, %v2270
          %2272 = vst [vmem:[#allocation2 + $0x4] sm:$0x1] %v2271
          %v2274 = vshrl.u32 %v2268, 16
          %v2276 = vrot.slane %v2274, 7
          %v2277 = vrot.slane %v2276, 1
          %v2279 = vld [vmem:[#allocation2 + $0x5] sm:$0x1]
          %v2280 = vsel %vm2219, %v2277, %v2279
          %2281 = vst [vmem:[#allocation2 + $0x5] sm:$0x1] %v2280
          %v2282 = vcombine.high %v2254, %v2254
          %v2284 = vld [vmem:[#allocation2 + $0x6] sm:$0x1]
          %v2285 = vsel %vm2219, %v2282, %v2284
          %2286 = vst [vmem:[#allocation2 + $0x6] sm:$0x1] %v2285
          %v2288 = vshrl.u32 %v2282, 16
          %v2290 = vrot.slane %v2288, 7
          %v2291 = vrot.slane %v2290, 1
          %v2293 = vld [vmem:[#allocation2 + $0x7] sm:$0x1]
          %v2294 = vsel %vm2219, %v2291, %v2293
          %2295 = vst [vmem:[#allocation2 + $0x7] sm:$0x1] %v2294
          %v2296 = vcombine.high %v2216, %v2216
          %v2298 = vunpack.c.l.s4 1966171168
          %v2299 = vunpack.c.0.s8 %v2298
          %v2300 = vlaneseq
          %v2301 = vshrl.u32 %v2300, 7
          %v2302 = vsub.s32 %v2299, %v2301
          %v2303 = vrot.slane %v2296, %v2302
          %v2305 = vunpack.c.l.s4 1966171168
          %v2306 = vunpack.c.0.s8 %v2305
          %v2307 = vlaneseq
          %v2308 = vshrl.u32 %v2307, 7
          %v2309 = vsub.s32 %v2306, %v2308
          %v2310 = vrot.slane %v2303, %v2309
          %v2312 = vld [vmem:[#allocation2 + $0x8] sm:$0x1]
          %v2313 = vsel %vm2219, %v2310, %v2312
          %2314 = vst [vmem:[#allocation2 + $0x8] sm:$0x1] %v2313
          %v2316 = vshrl.u32 %v2310, 16
          %v2318 = vrot.slane %v2316, 7
          %v2319 = vrot.slane %v2318, 1
          %v2321 = vld [vmem:[#allocation2 + $0x9] sm:$0x1]
          %v2322 = vsel %vm2219, %v2319, %v2321
          %2323 = vst [vmem:[#allocation2 + $0x9] sm:$0x1] %v2322
          %v2324 = vcombine.high %v2303, %v2303
          %v2326 = vunpack.c.l.s4 1966171168
          %v2327 = vunpack.c.0.s8 %v2326
          %v2328 = vlaneseq
          %v2329 = vshrl.u32 %v2328, 7
          %v2330 = vsub.s32 %v2327, %v2329
          %v2331 = vrot.slane %v2324, %v2330
          %v2333 = vld [vmem:[#allocation2 + $0xa] sm:$0x1]
          %v2334 = vsel %vm2219, %v2331, %v2333
          %2335 = vst [vmem:[#allocation2 + $0xa] sm:$0x1] %v2334
          %v2337 = vshrl.u32 %v2331, 16
          %v2339 = vrot.slane %v2337, 7
          %v2340 = vrot.slane %v2339, 1
          %v2342 = vld [vmem:[#allocation2 + $0xb] sm:$0x1]
          %v2343 = vsel %vm2219, %v2340, %v2342
          %2344 = vst [vmem:[#allocation2 + $0xb] sm:$0x1] %v2343
          %v2345 = vcombine.high %v2310, %v2310
          %v2347 = vld [vmem:[#allocation2 + $0xc] sm:$0x1]
          %v2348 = vsel %vm2219, %v2345, %v2347
          %2349 = vst [vmem:[#allocation2 + $0xc] sm:$0x1] %v2348
          %v2351 = vshrl.u32 %v2345, 16
          %v2353 = vrot.slane %v2351, 7
          %v2354 = vrot.slane %v2353, 1
          %v2356 = vld [vmem:[#allocation2 + $0xd] sm:$0x1]
          %v2357 = vsel %vm2219, %v2354, %v2356
          %2358 = vst [vmem:[#allocation2 + $0xd] sm:$0x1] %v2357
          %v2359 = vcombine.high %v2331, %v2331
          %v2361 = vld [vmem:[#allocation2 + $0xe] sm:$0x1]
          %v2362 = vsel %vm2219, %v2359, %v2361
          %2363 = vst [vmem:[#allocation2 + $0xe] sm:$0x1] %v2362
          %v2365 = vshrl.u32 %v2359, 16
          %v2367 = vrot.slane %v2365, 7
          %v2368 = vrot.slane %v2367, 1
          %v2370 = vld [vmem:[#allocation2 + $0xf] sm:$0x1]
          %v2371 = vsel %vm2219, %v2368, %v2370
          %2372 = vst [vmem:[#allocation2 + $0xf] sm:$0x1] %v2371
          %v2373 = vld [vmem:[%s0 + $0x400] sm:$0xff]
          %v2374 = vld [vmem:[%s0 + $0x408] sm:$0xff]
          %v2375 = vld [vmem:[%s0 + $0x410] sm:$0xff]
          %v2376 = vld [vmem:[%s0 + $0x418] sm:$0xff]
          %v2377 = vld [vmem:[%s0 + $0x420] sm:$0xff]
          %v2378 = vld [vmem:[%s0 + $0x428] sm:$0xff]
          %v2379 = vld [vmem:[%s0 + $0x430] sm:$0xff]
          %v2380 = vld [vmem:[%s0 + $0x438] sm:$0xff]
          %v2381 = vld [vmem:[%s0 + $0x440] sm:$0xff]
          %v2382 = vld [vmem:[%s0 + $0x448] sm:$0xff]
          %v2383 = vld [vmem:[%s0 + $0x450] sm:$0xff]
          %v2384 = vld [vmem:[%s0 + $0x458] sm:$0xff]
          %v2385 = vld [vmem:[%s0 + $0x460] sm:$0xff]
          %v2386 = vld [vmem:[%s0 + $0x468] sm:$0xff]
          %v2387 = vld [vmem:[%s0 + $0x470] sm:$0xff]
          %v2388 = vld [vmem:[%s0 + $0x478] sm:$0xff]
          %v2389 = vld [vmem:[%s0 + $0x480] sm:$0xff]
          %v2390 = vld [vmem:[%s0 + $0x488] sm:$0xff]
          %v2391 = vld [vmem:[%s0 + $0x490] sm:$0xff]
          %v2392 = vld [vmem:[%s0 + $0x498] sm:$0xff]
          %v2393 = vld [vmem:[%s0 + $0x4a0] sm:$0xff]
          %v2394 = vld [vmem:[%s0 + $0x4a8] sm:$0xff]
          %v2395 = vld [vmem:[%s0 + $0x4b0] sm:$0xff]
          %v2396 = vld [vmem:[%s0 + $0x4b8] sm:$0xff]
          %v2397 = vld [vmem:[%s0 + $0x4c0] sm:$0xff]
          %v2398 = vld [vmem:[%s0 + $0x4c8] sm:$0xff]
          %v2399 = vld [vmem:[%s0 + $0x4d0] sm:$0xff]
          %v2400 = vld [vmem:[%s0 + $0x4d8] sm:$0xff]
          %v2401 = vld [vmem:[%s0 + $0x4e0] sm:$0xff]
          %v2402 = vld [vmem:[%s0 + $0x4e8] sm:$0xff]
          %v2403 = vld [vmem:[%s0 + $0x4f0] sm:$0xff]
          %v2404 = vld [vmem:[%s0 + $0x4f8] sm:$0xff]
          %v2405 = vld [vmem:[%s0 + $0x500] sm:$0xff]
          %v2406 = vld [vmem:[%s0 + $0x508] sm:$0xff]
          %v2407 = vld [vmem:[%s0 + $0x510] sm:$0xff]
          %v2408 = vld [vmem:[%s0 + $0x518] sm:$0xff]
          %v2409 = vld [vmem:[%s0 + $0x520] sm:$0xff]
          %v2410 = vld [vmem:[%s0 + $0x528] sm:$0xff]
          %v2411 = vld [vmem:[%s0 + $0x530] sm:$0xff]
          %v2412 = vld [vmem:[%s0 + $0x538] sm:$0xff]
          %v2413 = vld [vmem:[%s0 + $0x540] sm:$0xff]
          %v2414 = vld [vmem:[%s0 + $0x548] sm:$0xff]
          %v2415 = vld [vmem:[%s0 + $0x550] sm:$0xff]
          %v2416 = vld [vmem:[%s0 + $0x558] sm:$0xff]
          %v2417 = vld [vmem:[%s0 + $0x560] sm:$0xff]
          %v2418 = vld [vmem:[%s0 + $0x568] sm:$0xff]
          %v2419 = vld [vmem:[%s0 + $0x570] sm:$0xff]
          %v2420 = vld [vmem:[%s0 + $0x578] sm:$0xff]
          %v2421 = vld [vmem:[%s0 + $0x580] sm:$0xff]
          %v2422 = vld [vmem:[%s0 + $0x588] sm:$0xff]
          %v2423 = vld [vmem:[%s0 + $0x590] sm:$0xff]
          %v2424 = vld [vmem:[%s0 + $0x598] sm:$0xff]
          %v2425 = vld [vmem:[%s0 + $0x5a0] sm:$0xff]
          %v2426 = vld [vmem:[%s0 + $0x5a8] sm:$0xff]
          %v2427 = vld [vmem:[%s0 + $0x5b0] sm:$0xff]
          %v2428 = vld [vmem:[%s0 + $0x5b8] sm:$0xff]
          %v2429 = vld [vmem:[%s0 + $0x5c0] sm:$0xff]
          %v2430 = vld [vmem:[%s0 + $0x5c8] sm:$0xff]
          %v2431 = vld [vmem:[%s0 + $0x5d0] sm:$0xff]
          %v2432 = vld [vmem:[%s0 + $0x5d8] sm:$0xff]
          %v2433 = vld [vmem:[%s0 + $0x5e0] sm:$0xff]
          %v2434 = vld [vmem:[%s0 + $0x5e8] sm:$0xff]
          %v2435 = vld [vmem:[%s0 + $0x5f0] sm:$0xff]
          %v2436 = vld [vmem:[%s0 + $0x5f8] sm:$0xff]
          %v2437 = vld [vmem:[%s0 + $0x600] sm:$0xff]
          %v2438 = vld [vmem:[%s0 + $0x608] sm:$0xff]
          %v2439 = vld [vmem:[%s0 + $0x610] sm:$0xff]
          %v2440 = vld [vmem:[%s0 + $0x618] sm:$0xff]
          %v2441 = vld [vmem:[%s0 + $0x620] sm:$0xff]
          %v2442 = vld [vmem:[%s0 + $0x628] sm:$0xff]
          %v2443 = vld [vmem:[%s0 + $0x630] sm:$0xff]
          %v2444 = vld [vmem:[%s0 + $0x638] sm:$0xff]
          %v2445 = vld [vmem:[%s0 + $0x640] sm:$0xff]
          %v2446 = vld [vmem:[%s0 + $0x648] sm:$0xff]
          %v2447 = vld [vmem:[%s0 + $0x650] sm:$0xff]
          %v2448 = vld [vmem:[%s0 + $0x658] sm:$0xff]
          %v2449 = vld [vmem:[%s0 + $0x660] sm:$0xff]
          %v2450 = vld [vmem:[%s0 + $0x668] sm:$0xff]
          %v2451 = vld [vmem:[%s0 + $0x670] sm:$0xff]
          %v2452 = vld [vmem:[%s0 + $0x678] sm:$0xff]
          %v2453 = vld [vmem:[%s0 + $0x680] sm:$0xff]
          %v2454 = vld [vmem:[%s0 + $0x688] sm:$0xff]
          %v2455 = vld [vmem:[%s0 + $0x690] sm:$0xff]
          %v2456 = vld [vmem:[%s0 + $0x698] sm:$0xff]
          %v2457 = vld [vmem:[%s0 + $0x6a0] sm:$0xff]
          %v2458 = vld [vmem:[%s0 + $0x6a8] sm:$0xff]
          %v2459 = vld [vmem:[%s0 + $0x6b0] sm:$0xff]
          %v2460 = vld [vmem:[%s0 + $0x6b8] sm:$0xff]
          %v2461 = vld [vmem:[%s0 + $0x6c0] sm:$0xff]
          %v2462 = vld [vmem:[%s0 + $0x6c8] sm:$0xff]
          %v2463 = vld [vmem:[%s0 + $0x6d0] sm:$0xff]
          %v2464 = vld [vmem:[%s0 + $0x6d8] sm:$0xff]
          %v2465 = vld [vmem:[%s0 + $0x6e0] sm:$0xff]
          %v2466 = vld [vmem:[%s0 + $0x6e8] sm:$0xff]
          %v2467 = vld [vmem:[%s0 + $0x6f0] sm:$0xff]
          %v2468 = vld [vmem:[%s0 + $0x6f8] sm:$0xff]
          %v2469 = vld [vmem:[%s0 + $0x700] sm:$0xff]
          %v2470 = vld [vmem:[%s0 + $0x708] sm:$0xff]
          %v2471 = vld [vmem:[%s0 + $0x710] sm:$0xff]
          %v2472 = vld [vmem:[%s0 + $0x718] sm:$0xff]
          %v2473 = vld [vmem:[%s0 + $0x720] sm:$0xff]
          %v2474 = vld [vmem:[%s0 + $0x728] sm:$0xff]
          %v2475 = vld [vmem:[%s0 + $0x730] sm:$0xff]
          %v2476 = vld [vmem:[%s0 + $0x738] sm:$0xff]
          %v2477 = vld [vmem:[%s0 + $0x740] sm:$0xff]
          %v2478 = vld [vmem:[%s0 + $0x748] sm:$0xff]
          %v2479 = vld [vmem:[%s0 + $0x750] sm:$0xff]
          %v2480 = vld [vmem:[%s0 + $0x758] sm:$0xff]
          %v2481 = vld [vmem:[%s0 + $0x760] sm:$0xff]
          %v2482 = vld [vmem:[%s0 + $0x768] sm:$0xff]
          %v2483 = vld [vmem:[%s0 + $0x770] sm:$0xff]
          %v2484 = vld [vmem:[%s0 + $0x778] sm:$0xff]
          %v2485 = vld [vmem:[%s0 + $0x780] sm:$0xff]
          %v2486 = vld [vmem:[%s0 + $0x788] sm:$0xff]
          %v2487 = vld [vmem:[%s0 + $0x790] sm:$0xff]
          %v2488 = vld [vmem:[%s0 + $0x798] sm:$0xff]
          %v2489 = vld [vmem:[%s0 + $0x7a0] sm:$0xff]
          %v2490 = vld [vmem:[%s0 + $0x7a8] sm:$0xff]
          %v2491 = vld [vmem:[%s0 + $0x7b0] sm:$0xff]
          %v2492 = vld [vmem:[%s0 + $0x7b8] sm:$0xff]
          %v2493 = vld [vmem:[%s0 + $0x7c0] sm:$0xff]
          %v2494 = vld [vmem:[%s0 + $0x7c8] sm:$0xff]
          %v2495 = vld [vmem:[%s0 + $0x7d0] sm:$0xff]
          %v2496 = vld [vmem:[%s0 + $0x7d8] sm:$0xff]
          %v2497 = vld [vmem:[%s0 + $0x7e0] sm:$0xff]
          %v2498 = vld [vmem:[%s0 + $0x7e8] sm:$0xff]
          %v2499 = vld [vmem:[%s0 + $0x7f0] sm:$0xff]
          %v2500 = vld [vmem:[%s0 + $0x7f8] sm:$0xff]
          %v2502 = vsel %vm1512, %v2374, 0
          %v2505 = vsel %vm1512, %v2376, 0
          %v2508 = vsel %vm1512, %v2378, 0
          %v2511 = vsel %vm1512, %v2380, 0
          %v2514 = vsel %vm1512, %v2382, 0
          %v2517 = vsel %vm1512, %v2384, 0
          %v2520 = vsel %vm1512, %v2386, 0
          %v2523 = vsel %vm1512, %v2388, 0
          %v2526 = vsel %vm1512, %v2390, 0
          %v2529 = vsel %vm1512, %v2392, 0
          %v2532 = vsel %vm1512, %v2394, 0
          %v2535 = vsel %vm1512, %v2396, 0
          %v2538 = vsel %vm1512, %v2398, 0
          %v2541 = vsel %vm1512, %v2400, 0
          %v2544 = vsel %vm1512, %v2402, 0
          %v2547 = vsel %vm1512, %v2404, 0
          %v2550 = vsel %vm1512, %v2406, 0
          %v2553 = vsel %vm1512, %v2408, 0
          %v2556 = vsel %vm1512, %v2410, 0
          %v2559 = vsel %vm1512, %v2412, 0
          %v2562 = vsel %vm1512, %v2414, 0
          %v2565 = vsel %vm1512, %v2416, 0
          %v2568 = vsel %vm1512, %v2418, 0
          %v2571 = vsel %vm1512, %v2420, 0
          %v2574 = vsel %vm1512, %v2422, 0
          %v2577 = vsel %vm1512, %v2424, 0
          %v2580 = vsel %vm1512, %v2426, 0
          %v2583 = vsel %vm1512, %v2428, 0
          %v2586 = vsel %vm1512, %v2430, 0
          %v2589 = vsel %vm1512, %v2432, 0
          %v2592 = vsel %vm1512, %v2434, 0
          %v2595 = vsel %vm1512, %v2436, 0
          %v2598 = vsel %vm1512, %v2438, 0
          %v2601 = vsel %vm1512, %v2440, 0
          %v2604 = vsel %vm1512, %v2442, 0
          %v2607 = vsel %vm1512, %v2444, 0
          %v2610 = vsel %vm1512, %v2446, 0
          %v2613 = vsel %vm1512, %v2448, 0
          %v2616 = vsel %vm1512, %v2450, 0
          %v2619 = vsel %vm1512, %v2452, 0
          %v2622 = vsel %vm1512, %v2454, 0
          %v2625 = vsel %vm1512, %v2456, 0
          %v2628 = vsel %vm1512, %v2458, 0
          %v2631 = vsel %vm1512, %v2460, 0
          %v2634 = vsel %vm1512, %v2462, 0
          %v2637 = vsel %vm1512, %v2464, 0
          %v2640 = vsel %vm1512, %v2466, 0
          %v2643 = vsel %vm1512, %v2468, 0
          %v2646 = vsel %vm1512, %v2470, 0
          %v2649 = vsel %vm1512, %v2472, 0
          %v2652 = vsel %vm1512, %v2474, 0
          %v2655 = vsel %vm1512, %v2476, 0
          %v2658 = vsel %vm1512, %v2478, 0
          %v2661 = vsel %vm1512, %v2480, 0
          %v2664 = vsel %vm1512, %v2482, 0
          %v2667 = vsel %vm1512, %v2484, 0
          %v2670 = vsel %vm1512, %v2486, 0
          %v2673 = vsel %vm1512, %v2488, 0
          %v2676 = vsel %vm1512, %v2490, 0
          %v2679 = vsel %vm1512, %v2492, 0
          %v2682 = vsel %vm1512, %v2494, 0
          %v2685 = vsel %vm1512, %v2496, 0
          %v2688 = vsel %vm1512, %v2498, 0
          %v2691 = vsel %vm1512, %v2500, 0
          %2693 = vmatprep.subr.mxu0 %v2502
          %2694 = vmatpush1.xpose.msra.mxu0 %v2373
          %2695 = vmatprep.subr.mxu0 %v2505
          %2696 = vmatpush1.xpose.msra.mxu0 %v2375
          %2697 = vmatprep.subr.mxu0 %v2508
          %2698 = vmatpush1.xpose.msra.mxu0 %v2377
          %2699 = vmatprep.subr.mxu0 %v2511
          %2700 = vmatpush1.xpose.msra.mxu0 %v2379
          %2701 = vmatprep.subr.mxu0 %v2514
          %2702 = vmatpush1.xpose.msra.mxu0 %v2381
          %2703 = vmatprep.subr.mxu0 %v2517
          %2704 = vmatpush1.xpose.msra.mxu0 %v2383
          %2705 = vmatprep.subr.mxu0 %v2520
          %2706 = vmatpush1.xpose.msra.mxu0 %v2385
          %2707 = vmatprep.subr.mxu0 %v2523
          %2708 = vmatpush1.xpose.msra.mxu0 %v2387
          %2709 = vmatprep.subr.mxu0 %v2526
          %2710 = vmatpush1.xpose.msra.mxu0 %v2389
          %2711 = vmatprep.subr.mxu0 %v2529
          %2712 = vmatpush1.xpose.msra.mxu0 %v2391
          %2713 = vmatprep.subr.mxu0 %v2532
          %2714 = vmatpush1.xpose.msra.mxu0 %v2393
          %2715 = vmatprep.subr.mxu0 %v2535
          %2716 = vmatpush1.xpose.msra.mxu0 %v2395
          %2717 = vmatprep.subr.mxu0 %v2538
          %2718 = vmatpush1.xpose.msra.mxu0 %v2397
          %2719 = vmatprep.subr.mxu0 %v2541
          %2720 = vmatpush1.xpose.msra.mxu0 %v2399
          %2721 = vmatprep.subr.mxu0 %v2544
          %2722 = vmatpush1.xpose.msra.mxu0 %v2401
          %2723 = vmatprep.subr.mxu0 %v2547
          %2724 = vmatpush1.xpose.msra.mxu0 %v2403
          %2725 = vmatprep.subr.mxu0 %v2550
          %2726 = vmatpush1.xpose.msra.mxu0 %v2405
          %2727 = vmatprep.subr.mxu0 %v2553
          %2728 = vmatpush1.xpose.msra.mxu0 %v2407
          %2729 = vmatprep.subr.mxu0 %v2556
          %2730 = vmatpush1.xpose.msra.mxu0 %v2409
          %2731 = vmatprep.subr.mxu0 %v2559
          %2732 = vmatpush1.xpose.msra.mxu0 %v2411
          %2733 = vmatprep.subr.mxu0 %v2562
          %2734 = vmatpush1.xpose.msra.mxu0 %v2413
          %2735 = vmatprep.subr.mxu0 %v2565
          %2736 = vmatpush1.xpose.msra.mxu0 %v2415
          %2737 = vmatprep.subr.mxu0 %v2568
          %2738 = vmatpush1.xpose.msra.mxu0 %v2417
          %2739 = vmatprep.subr.mxu0 %v2571
          %2740 = vmatpush1.xpose.msra.mxu0 %v2419
          %2741 = vmatprep.subr.mxu0 %v2574
          %2742 = vmatpush1.xpose.msra.mxu0 %v2421
          %2743 = vmatprep.subr.mxu0 %v2577
          %2744 = vmatpush1.xpose.msra.mxu0 %v2423
          %2745 = vmatprep.subr.mxu0 %v2580
          %2746 = vmatpush1.xpose.msra.mxu0 %v2425
          %2747 = vmatprep.subr.mxu0 %v2583
          %2748 = vmatpush1.xpose.msra.mxu0 %v2427
          %2749 = vmatprep.subr.mxu0 %v2586
          %2750 = vmatpush1.xpose.msra.mxu0 %v2429
          %2751 = vmatprep.subr.mxu0 %v2589
          %2752 = vmatpush1.xpose.msra.mxu0 %v2431
          %2753 = vmatprep.subr.mxu0 %v2592
          %2754 = vmatpush1.xpose.msra.mxu0 %v2433
          %2755 = vmatprep.subr.mxu0 %v2595
          %2756 = vmatpush1.xpose.msra.mxu0 %v2435
          %2757 = vmatprep.mubr.f32.mxu0 %v1514
          %2758 = vmatmul.mubr.f32.gmra.mrb[0].mxu0 %v1380
          %v2759 = vpop.f32.mrb[0].mxu0
          %v2760 = vadd.f32 0.0, %v2759
          %v2761 = vpop.f32.mrb[0].mxu0
          %v2762 = vadd.f32 0.0, %v2761
          %2763 = vmatprep.mubr.f32.mxu0 %v1517
          %2764 = vmatmul.mubr.f32.gmra.mrb[0].mxu0 %v1382
          %v2765 = vpop.f32.mrb[0].mxu0
          %v2766 = vadd.f32 0.0, %v2765
          %v2767 = vpop.f32.mrb[0].mxu0
          %v2768 = vadd.f32 0.0, %v2767
          %2769 = vdwg.mxu0
          %2770 = vmatprep.subr.mxu0 %v2598
          %2771 = vmatpush1.xpose.msra.mxu0 %v2437
          %2772 = vmatprep.subr.mxu0 %v2601
          %2773 = vmatpush1.xpose.msra.mxu0 %v2439
          %2774 = vmatprep.subr.mxu0 %v2604
          %2775 = vmatpush1.xpose.msra.mxu0 %v2441
          %2776 = vmatprep.subr.mxu0 %v2607
          %2777 = vmatpush1.xpose.msra.mxu0 %v2443
          %2778 = vmatprep.subr.mxu0 %v2610
          %2779 = vmatpush1.xpose.msra.mxu0 %v2445
          %2780 = vmatprep.subr.mxu0 %v2613
          %2781 = vmatpush1.xpose.msra.mxu0 %v2447
          %2782 = vmatprep.subr.mxu0 %v2616
          %2783 = vmatpush1.xpose.msra.mxu0 %v2449
          %2784 = vmatprep.subr.mxu0 %v2619
          %2785 = vmatpush1.xpose.msra.mxu0 %v2451
          %2786 = vmatprep.subr.mxu0 %v2622
          %2787 = vmatpush1.xpose.msra.mxu0 %v2453
          %2788 = vmatprep.subr.mxu0 %v2625
          %2789 = vmatpush1.xpose.msra.mxu0 %v2455
          %2790 = vmatprep.subr.mxu0 %v2628
          %2791 = vmatpush1.xpose.msra.mxu0 %v2457
          %2792 = vmatprep.subr.mxu0 %v2631
          %2793 = vmatpush1.xpose.msra.mxu0 %v2459
          %2794 = vmatprep.subr.mxu0 %v2634
          %2795 = vmatpush1.xpose.msra.mxu0 %v2461
          %2796 = vmatprep.subr.mxu0 %v2637
          %2797 = vmatpush1.xpose.msra.mxu0 %v2463
          %2798 = vmatprep.subr.mxu0 %v2640
          %2799 = vmatpush1.xpose.msra.mxu0 %v2465
          %2800 = vmatprep.subr.mxu0 %v2643
          %2801 = vmatpush1.xpose.msra.mxu0 %v2467
          %2802 = vmatprep.subr.mxu0 %v2646
          %2803 = vmatpush1.xpose.msra.mxu0 %v2469
          %2804 = vmatprep.subr.mxu0 %v2649
          %2805 = vmatpush1.xpose.msra.mxu0 %v2471
          %2806 = vmatprep.subr.mxu0 %v2652
          %2807 = vmatpush1.xpose.msra.mxu0 %v2473
          %2808 = vmatprep.subr.mxu0 %v2655
          %2809 = vmatpush1.xpose.msra.mxu0 %v2475
          %2810 = vmatprep.subr.mxu0 %v2658
          %2811 = vmatpush1.xpose.msra.mxu0 %v2477
          %2812 = vmatprep.subr.mxu0 %v2661
          %2813 = vmatpush1.xpose.msra.mxu0 %v2479
          %2814 = vmatprep.subr.mxu0 %v2664
          %2815 = vmatpush1.xpose.msra.mxu0 %v2481
          %2816 = vmatprep.subr.mxu0 %v2667
          %2817 = vmatpush1.xpose.msra.mxu0 %v2483
          %2818 = vmatprep.subr.mxu0 %v2670
          %2819 = vmatpush1.xpose.msra.mxu0 %v2485
          %2820 = vmatprep.subr.mxu0 %v2673
          %2821 = vmatpush1.xpose.msra.mxu0 %v2487
          %2822 = vmatprep.subr.mxu0 %v2676
          %2823 = vmatpush1.xpose.msra.mxu0 %v2489
          %2824 = vmatprep.subr.mxu0 %v2679
          %2825 = vmatpush1.xpose.msra.mxu0 %v2491
          %2826 = vmatprep.subr.mxu0 %v2682
          %2827 = vmatpush1.xpose.msra.mxu0 %v2493
          %2828 = vmatprep.subr.mxu0 %v2685
          %2829 = vmatpush1.xpose.msra.mxu0 %v2495
          %2830 = vmatprep.subr.mxu0 %v2688
          %2831 = vmatpush1.xpose.msra.mxu0 %v2497
          %2832 = vmatprep.subr.mxu0 %v2691
          %2833 = vmatpush1.xpose.msra.mxu0 %v2499
          %2834 = vmatprep.mubr.f32.mxu0 %v1514
          %2835 = vmatmul.mubr.f32.gmra.mrb[0].mxu0 %v1380
          %v2836 = vpop.f32.mrb[0].mxu0
          %v2837 = vadd.f32 0.0, %v2836
          %v2838 = vpop.f32.mrb[0].mxu0
          %v2839 = vadd.f32 0.0, %v2838
          %2840 = vmatprep.mubr.f32.mxu0 %v1517
          %2841 = vmatmul.mubr.f32.gmra.mrb[0].mxu0 %v1382
          %v2842 = vpop.f32.mrb[0].mxu0
          %v2843 = vadd.f32 0.0, %v2842
          %v2844 = vpop.f32.mrb[0].mxu0
          %v2845 = vadd.f32 0.0, %v2844
          %2846 = vdwg.mxu0
          %v2847 = vpack.c.bf16 %v2766, %v2760
          %v2848 = vpack.c.bf16 %v2768, %v2762
          %v2849 = vpack.c.bf16 %v2843, %v2837
          %v2850 = vpack.c.bf16 %v2845, %v2839
          %v2851 = vld [vmem:[%s2] sm:$0xf]
          %v2852 = vld [vmem:[%s2 + $0x4] sm:$0xf]
          %v2853 = vld [vmem:[%s2 + $0x8] sm:$0xf]
          %v2854 = vld [vmem:[%s2 + $0xc] sm:$0xf]
          %v2855 = vld [vmem:[%s2 + $0x10] sm:$0xf]
          %v2856 = vld [vmem:[%s2 + $0x14] sm:$0xf]
          %v2857 = vld [vmem:[%s2 + $0x18] sm:$0xf]
          %v2858 = vld [vmem:[%s2 + $0x1c] sm:$0xf]
          %v2859 = vld [vmem:[%s2 + $0x20] sm:$0xf]
          %v2860 = vld [vmem:[%s2 + $0x24] sm:$0xf]
          %v2861 = vld [vmem:[%s2 + $0x28] sm:$0xf]
          %v2862 = vld [vmem:[%s2 + $0x2c] sm:$0xf]
          %v2863 = vld [vmem:[%s2 + $0x30] sm:$0xf]
          %v2864 = vld [vmem:[%s2 + $0x34] sm:$0xf]
          %v2865 = vld [vmem:[%s2 + $0x38] sm:$0xf]
          %v2866 = vld [vmem:[%s2 + $0x3c] sm:$0xf]
          %v2867 = vld [vmem:[%s2 + $0x40] sm:$0xf]
          %v2868 = vld [vmem:[%s2 + $0x44] sm:$0xf]
          %v2869 = vld [vmem:[%s2 + $0x48] sm:$0xf]
          %v2870 = vld [vmem:[%s2 + $0x4c] sm:$0xf]
          %v2871 = vld [vmem:[%s2 + $0x50] sm:$0xf]
          %v2872 = vld [vmem:[%s2 + $0x54] sm:$0xf]
          %v2873 = vld [vmem:[%s2 + $0x58] sm:$0xf]
          %v2874 = vld [vmem:[%s2 + $0x5c] sm:$0xf]
          %v2875 = vld [vmem:[%s2 + $0x60] sm:$0xf]
          %v2876 = vld [vmem:[%s2 + $0x64] sm:$0xf]
          %v2877 = vld [vmem:[%s2 + $0x68] sm:$0xf]
          %v2878 = vld [vmem:[%s2 + $0x6c] sm:$0xf]
          %v2879 = vld [vmem:[%s2 + $0x70] sm:$0xf]
          %v2880 = vld [vmem:[%s2 + $0x74] sm:$0xf]
          %v2881 = vld [vmem:[%s2 + $0x78] sm:$0xf]
          %v2882 = vld [vmem:[%s2 + $0x7c] sm:$0xf]
          %v2883 = vld [vmem:[%s2 + $0x80] sm:$0xf]
          %v2884 = vld [vmem:[%s2 + $0x84] sm:$0xf]
          %v2885 = vld [vmem:[%s2 + $0x88] sm:$0xf]
          %v2886 = vld [vmem:[%s2 + $0x8c] sm:$0xf]
          %v2887 = vld [vmem:[%s2 + $0x90] sm:$0xf]
          %v2888 = vld [vmem:[%s2 + $0x94] sm:$0xf]
          %v2889 = vld [vmem:[%s2 + $0x98] sm:$0xf]
          %v2890 = vld [vmem:[%s2 + $0x9c] sm:$0xf]
          %v2891 = vld [vmem:[%s2 + $0xa0] sm:$0xf]
          %v2892 = vld [vmem:[%s2 + $0xa4] sm:$0xf]
          %v2893 = vld [vmem:[%s2 + $0xa8] sm:$0xf]
          %v2894 = vld [vmem:[%s2 + $0xac] sm:$0xf]
          %v2895 = vld [vmem:[%s2 + $0xb0] sm:$0xf]
          %v2896 = vld [vmem:[%s2 + $0xb4] sm:$0xf]
          %v2897 = vld [vmem:[%s2 + $0xb8] sm:$0xf]
          %v2898 = vld [vmem:[%s2 + $0xbc] sm:$0xf]
          %v2899 = vld [vmem:[%s2 + $0xc0] sm:$0xf]
          %v2900 = vld [vmem:[%s2 + $0xc4] sm:$0xf]
          %v2901 = vld [vmem:[%s2 + $0xc8] sm:$0xf]
          %v2902 = vld [vmem:[%s2 + $0xcc] sm:$0xf]
          %v2903 = vld [vmem:[%s2 + $0xd0] sm:$0xf]
          %v2904 = vld [vmem:[%s2 + $0xd4] sm:$0xf]
          %v2905 = vld [vmem:[%s2 + $0xd8] sm:$0xf]
          %v2906 = vld [vmem:[%s2 + $0xdc] sm:$0xf]
          %v2907 = vld [vmem:[%s2 + $0xe0] sm:$0xf]
          %v2908 = vld [vmem:[%s2 + $0xe4] sm:$0xf]
          %v2909 = vld [vmem:[%s2 + $0xe8] sm:$0xf]
          %v2910 = vld [vmem:[%s2 + $0xec] sm:$0xf]
          %v2911 = vld [vmem:[%s2 + $0xf0] sm:$0xf]
          %v2912 = vld [vmem:[%s2 + $0xf4] sm:$0xf]
          %v2913 = vld [vmem:[%s2 + $0xf8] sm:$0xf]
          %v2914 = vld [vmem:[%s2 + $0xfc] sm:$0xf]
          %v2915 = vld [vmem:[%s3] sm:$0x1]
          %v2917 = vlaneseq
          %v2918 = vshrl.u32 %v2917, 7
          %v2919 = vsub.s32 0, %v2918
          %v2920 = vrot.slane %v2915, %v2919
          %v2986 = vunpack.c.l.b16 %v2851
          %v2987 = vunpack.c.l.b16 %v2852
          %v2988 = vunpack.c.l.b16 %v2853
          %v2989 = vunpack.c.l.b16 %v2854
          %v2990 = vunpack.c.l.b16 %v2855
          %v2991 = vunpack.c.l.b16 %v2856
          %v2992 = vunpack.c.l.b16 %v2857
          %v2993 = vunpack.c.l.b16 %v2858
          %v2994 = vunpack.c.l.b16 %v2859
          %v2995 = vunpack.c.l.b16 %v2860
          %v2996 = vunpack.c.l.b16 %v2861
          %v2997 = vunpack.c.l.b16 %v2862
          %v2998 = vunpack.c.l.b16 %v2863
          %v2999 = vunpack.c.l.b16 %v2864
          %v3000 = vunpack.c.l.b16 %v2865
          %v3001 = vunpack.c.l.b16 %v2866
          %v3002 = vunpack.c.l.b16 %v2867
          %v3003 = vunpack.c.l.b16 %v2868
          %v3004 = vunpack.c.l.b16 %v2869
          %v3005 = vunpack.c.l.b16 %v2870
          %v3006 = vunpack.c.l.b16 %v2871
          %v3007 = vunpack.c.l.b16 %v2872
          %v3008 = vunpack.c.l.b16 %v2873
          %v3009 = vunpack.c.l.b16 %v2874
          %v3010 = vunpack.c.l.b16 %v2875
          %v3011 = vunpack.c.l.b16 %v2876
          %v3012 = vunpack.c.l.b16 %v2877
          %v3013 = vunpack.c.l.b16 %v2878
          %v3014 = vunpack.c.l.b16 %v2879
          %v3015 = vunpack.c.l.b16 %v2880
          %v3016 = vunpack.c.l.b16 %v2881
          %v3017 = vunpack.c.l.b16 %v2882
          %v3018 = vunpack.c.l.b16 %v2883
          %v3019 = vunpack.c.l.b16 %v2884
          %v3020 = vunpack.c.l.b16 %v2885
          %v3021 = vunpack.c.l.b16 %v2886
          %v3022 = vunpack.c.l.b16 %v2887
          %v3023 = vunpack.c.l.b16 %v2888
          %v3024 = vunpack.c.l.b16 %v2889
          %v3025 = vunpack.c.l.b16 %v2890
          %v3026 = vunpack.c.l.b16 %v2891
          %v3027 = vunpack.c.l.b16 %v2892
          %v3028 = vunpack.c.l.b16 %v2893
          %v3029 = vunpack.c.l.b16 %v2894
          %v3030 = vunpack.c.l.b16 %v2895
          %v3031 = vunpack.c.l.b16 %v2896
          %v3032 = vunpack.c.l.b16 %v2897
          %v3033 = vunpack.c.l.b16 %v2898
          %v3034 = vunpack.c.l.b16 %v2899
          %v3035 = vunpack.c.l.b16 %v2900
          %v3036 = vunpack.c.l.b16 %v2901
          %v3037 = vunpack.c.l.b16 %v2902
          %v3038 = vunpack.c.l.b16 %v2903
          %v3039 = vunpack.c.l.b16 %v2904
          %v3040 = vunpack.c.l.b16 %v2905
          %v3041 = vunpack.c.l.b16 %v2906
          %v3042 = vunpack.c.l.b16 %v2907
          %v3043 = vunpack.c.l.b16 %v2908
          %v3044 = vunpack.c.l.b16 %v2909
          %v3045 = vunpack.c.l.b16 %v2910
          %v3046 = vunpack.c.l.b16 %v2911
          %v3047 = vunpack.c.l.b16 %v2912
          %v3048 = vunpack.c.l.b16 %v2913
          %v3049 = vunpack.c.l.b16 %v2914
          %v3050 = vpack.c.b16 %v2987, %v2986
          %v3051 = vpack.c.b16 %v2989, %v2988
          %v3052 = vpack.c.b16 %v2991, %v2990
          %v3053 = vpack.c.b16 %v2993, %v2992
          %v3054 = vpack.c.b16 %v2995, %v2994
          %v3055 = vpack.c.b16 %v2997, %v2996
          %v3056 = vpack.c.b16 %v2999, %v2998
          %v3057 = vpack.c.b16 %v3001, %v3000
          %v3058 = vpack.c.b16 %v3003, %v3002
          %v3059 = vpack.c.b16 %v3005, %v3004
          %v3060 = vpack.c.b16 %v3007, %v3006
          %v3061 = vpack.c.b16 %v3009, %v3008
          %v3062 = vpack.c.b16 %v3011, %v3010
          %v3063 = vpack.c.b16 %v3013, %v3012
          %v3064 = vpack.c.b16 %v3015, %v3014
          %v3065 = vpack.c.b16 %v3017, %v3016
          %v3066 = vpack.c.b16 %v3019, %v3018
          %v3067 = vpack.c.b16 %v3021, %v3020
          %v3068 = vpack.c.b16 %v3023, %v3022
          %v3069 = vpack.c.b16 %v3025, %v3024
          %v3070 = vpack.c.b16 %v3027, %v3026
          %v3071 = vpack.c.b16 %v3029, %v3028
          %v3072 = vpack.c.b16 %v3031, %v3030
          %v3073 = vpack.c.b16 %v3033, %v3032
          %v3074 = vpack.c.b16 %v3035, %v3034
          %v3075 = vpack.c.b16 %v3037, %v3036
          %v3076 = vpack.c.b16 %v3039, %v3038
          %v3077 = vpack.c.b16 %v3041, %v3040
          %v3078 = vpack.c.b16 %v3043, %v3042
          %v3079 = vpack.c.b16 %v3045, %v3044
          %v3080 = vpack.c.b16 %v3047, %v3046
          %v3081 = vpack.c.b16 %v3049, %v3048
          %3114 = vmatprep.subr.bf16.mxu0 0
          %3115 = vmatpush1.bf16.msra.mxu0 %v3050
          %3116 = vmatprep.subr.bf16.mxu0 0
          %3117 = vmatpush1.bf16.msra.mxu0 %v3051
          %3118 = vmatprep.subr.bf16.mxu0 0
          %3119 = vmatpush1.bf16.msra.mxu0 %v3052
          %3120 = vmatprep.subr.bf16.mxu0 0
          %3121 = vmatpush1.bf16.msra.mxu0 %v3053
          %3122 = vmatprep.subr.bf16.mxu0 0
          %3123 = vmatpush1.bf16.msra.mxu0 %v3054
          %3124 = vmatprep.subr.bf16.mxu0 0
          %3125 = vmatpush1.bf16.msra.mxu0 %v3055
          %3126 = vmatprep.subr.bf16.mxu0 0
          %3127 = vmatpush1.bf16.msra.mxu0 %v3056
          %3128 = vmatprep.subr.bf16.mxu0 0
          %3129 = vmatpush1.bf16.msra.mxu0 %v3057
          %3130 = vmatprep.subr.bf16.mxu0 0
          %3131 = vmatpush1.bf16.msra.mxu0 %v3058
          %3132 = vmatprep.subr.bf16.mxu0 0
          %3133 = vmatpush1.bf16.msra.mxu0 %v3059
          %3134 = vmatprep.subr.bf16.mxu0 0
          %3135 = vmatpush1.bf16.msra.mxu0 %v3060
          %3136 = vmatprep.subr.bf16.mxu0 0
          %3137 = vmatpush1.bf16.msra.mxu0 %v3061
          %3138 = vmatprep.subr.bf16.mxu0 0
          %3139 = vmatpush1.bf16.msra.mxu0 %v3062
          %3140 = vmatprep.subr.bf16.mxu0 0
          %3141 = vmatpush1.bf16.msra.mxu0 %v3063
          %3142 = vmatprep.subr.bf16.mxu0 0
          %3143 = vmatpush1.bf16.msra.mxu0 %v3064
          %3144 = vmatprep.subr.bf16.mxu0 0
          %3145 = vmatpush1.bf16.msra.mxu0 %v3065
          %3146 = vmatprep.mubr.bf16.mxu0 %v2848
          %3147 = vmatmul.mubr.bf16.gmra.mrb[0].mxu0 %v2847
          %v3148 = vpop.f32.mrb[0].mxu0
          %v3149 = vadd.f32 %v2920, %v3148
          %v3150 = vpop.f32.mrb[0].mxu0
          %v3151 = vpop.f32.mrb[0].mxu0
          %v3152 = vadd.f32 %v2920, %v3151
          %v3153 = vpop.f32.mrb[0].mxu0
          %3154 = vdwg.mxu0
          %3155 = vmatprep.subr.bf16.mxu0 0
          %3156 = vmatpush1.bf16.msra.mxu0 %v3066
          %3157 = vmatprep.subr.bf16.mxu0 0
          %3158 = vmatpush1.bf16.msra.mxu0 %v3067
          %3159 = vmatprep.subr.bf16.mxu0 0
          %3160 = vmatpush1.bf16.msra.mxu0 %v3068
          %3161 = vmatprep.subr.bf16.mxu0 0
          %3162 = vmatpush1.bf16.msra.mxu0 %v3069
          %3163 = vmatprep.subr.bf16.mxu0 0
          %3164 = vmatpush1.bf16.msra.mxu0 %v3070
          %3165 = vmatprep.subr.bf16.mxu0 0
          %3166 = vmatpush1.bf16.msra.mxu0 %v3071
          %3167 = vmatprep.subr.bf16.mxu0 0
          %3168 = vmatpush1.bf16.msra.mxu0 %v3072
          %3169 = vmatprep.subr.bf16.mxu0 0
          %3170 = vmatpush1.bf16.msra.mxu0 %v3073
          %3171 = vmatprep.subr.bf16.mxu0 0
          %3172 = vmatpush1.bf16.msra.mxu0 %v3074
          %3173 = vmatprep.subr.bf16.mxu0 0
          %3174 = vmatpush1.bf16.msra.mxu0 %v3075
          %3175 = vmatprep.subr.bf16.mxu0 0
          %3176 = vmatpush1.bf16.msra.mxu0 %v3076
          %3177 = vmatprep.subr.bf16.mxu0 0
          %3178 = vmatpush1.bf16.msra.mxu0 %v3077
          %3179 = vmatprep.subr.bf16.mxu0 0
          %3180 = vmatpush1.bf16.msra.mxu0 %v3078
          %3181 = vmatprep.subr.bf16.mxu0 0
          %3182 = vmatpush1.bf16.msra.mxu0 %v3079
          %3183 = vmatprep.subr.bf16.mxu0 0
          %3184 = vmatpush1.bf16.msra.mxu0 %v3080
          %3185 = vmatprep.subr.bf16.mxu0 0
          %3186 = vmatpush1.bf16.msra.mxu0 %v3081
          %3187 = vmatprep.mubr.bf16.mxu0 %v2850
          %3188 = vmatmul.mubr.bf16.gmra.mrb[0].mxu0 %v2849
          %v3189 = vpop.f32.mrb[0].mxu0
          %v3190 = vadd.f32 %v3149, %v3189
          %v3191 = vpop.f32.mrb[0].mxu0
          %v3192 = vpop.f32.mrb[0].mxu0
          %v3193 = vadd.f32 %v3152, %v3192
          %v3194 = vpop.f32.mrb[0].mxu0
          %3195 = vdwg.mxu0
          %v3196 = vmax.f32 %v3190, 0.0
          %v3197 = vmax.f32 %v3193, 0.0
          %v3198 = vpack.c.bf16 %v3197, %v3196
          %v3201 = vunpack.c.l.s4 1966171168
          %v3202 = vunpack.c.0.s8 %v3201
          %v3203 = vlaneseq
          %v3204 = vshrl.u32 %v3203, 7
          %v3205 = vsub.s32 %v3202, %v3204
          %v3206 = vrot.slane %v3198, %v3205
          %v3208 = vunpack.c.l.s4 1966171168
          %v3209 = vunpack.c.0.s8 %v3208
          %v3210 = vlaneseq
          %v3211 = vshrl.u32 %v3210, 7
          %v3212 = vsub.s32 %v3209, %v3211
          %v3213 = vrot.slane %v3206, %v3212
          %v3215 = vshll.u32 %v3213, 16
          %vm3218 = vsmask.f32 7938
          %vm3219 = vmand %vm2217, %vm3218
          %v3220 = vld [vmem:[#allocation2] sm:$0x1]
          %v3221 = vsel %vm3219, %v3215, %v3220
          %3222 = vst [vmem:[#allocation2] sm:$0x1] %v3221
          %v3223 = vld [vmem:[#allocation2 + $0x1] sm:$0x1]
          %v3224 = vsel %vm3219, %v3198, %v3223
          %3225 = vst [vmem:[#allocation2 + $0x1] sm:$0x1] %v3224
          %v3226 = vcombine.high %v3206, %v3206
          %v3228 = vunpack.c.l.s4 1966171168
          %v3229 = vunpack.c.0.s8 %v3228
          %v3230 = vlaneseq
          %v3231 = vshrl.u32 %v3230, 7
          %v3232 = vsub.s32 %v3229, %v3231
          %v3233 = vrot.slane %v3226, %v3232
          %v3235 = vshll.u32 %v3233, 16
          %v3238 = vld [vmem:[#allocation2 + $0x2] sm:$0x1]
          %v3239 = vsel %vm3219, %v3235, %v3238
          %3240 = vst [vmem:[#allocation2 + $0x2] sm:$0x1] %v3239
          %v3242 = vld [vmem:[#allocation2 + $0x3] sm:$0x1]
          %v3243 = vsel %vm3219, %v3233, %v3242
          %3244 = vst [vmem:[#allocation2 + $0x3] sm:$0x1] %v3243
          %v3245 = vcombine.high %v3213, %v3213
          %v3247 = vshll.u32 %v3245, 16
          %v3250 = vld [vmem:[#allocation2 + $0x4] sm:$0x1]
          %v3251 = vsel %vm3219, %v3247, %v3250
          %3252 = vst [vmem:[#allocation2 + $0x4] sm:$0x1] %v3251
          %v3254 = vld [vmem:[#allocation2 + $0x5] sm:$0x1]
          %v3255 = vsel %vm3219, %v3245, %v3254
          %3256 = vst [vmem:[#allocation2 + $0x5] sm:$0x1] %v3255
          %v3257 = vcombine.high %v3233, %v3233
          %v3259 = vshll.u32 %v3257, 16
          %v3262 = vld [vmem:[#allocation2 + $0x6] sm:$0x1]
          %v3263 = vsel %vm3219, %v3259, %v3262
          %3264 = vst [vmem:[#allocation2 + $0x6] sm:$0x1] %v3263
          %v3266 = vld [vmem:[#allocation2 + $0x7] sm:$0x1]
          %v3267 = vsel %vm3219, %v3257, %v3266
          %3268 = vst [vmem:[#allocation2 + $0x7] sm:$0x1] %v3267
          %v3269 = vcombine.high %v3198, %v3198
          %v3271 = vunpack.c.l.s4 1966171168
          %v3272 = vunpack.c.0.s8 %v3271
          %v3273 = vlaneseq
          %v3274 = vshrl.u32 %v3273, 7
          %v3275 = vsub.s32 %v3272, %v3274
          %v3276 = vrot.slane %v3269, %v3275
          %v3278 = vunpack.c.l.s4 1966171168
          %v3279 = vunpack.c.0.s8 %v3278
          %v3280 = vlaneseq
          %v3281 = vshrl.u32 %v3280, 7
          %v3282 = vsub.s32 %v3279, %v3281
          %v3283 = vrot.slane %v3276, %v3282
          %v3285 = vshll.u32 %v3283, 16
          %v3288 = vld [vmem:[#allocation2 + $0x8] sm:$0x1]
          %v3289 = vsel %vm3219, %v3285, %v3288
          %3290 = vst [vmem:[#allocation2 + $0x8] sm:$0x1] %v3289
          %v3292 = vld [vmem:[#allocation2 + $0x9] sm:$0x1]
          %v3293 = vsel %vm3219, %v3283, %v3292
          %3294 = vst [vmem:[#allocation2 + $0x9] sm:$0x1] %v3293
          %v3295 = vcombine.high %v3276, %v3276
          %v3297 = vunpack.c.l.s4 1966171168
          %v3298 = vunpack.c.0.s8 %v3297
          %v3299 = vlaneseq
          %v3300 = vshrl.u32 %v3299, 7
          %v3301 = vsub.s32 %v3298, %v3300
          %v3302 = vrot.slane %v3295, %v3301
          %v3304 = vshll.u32 %v3302, 16
          %v3307 = vld [vmem:[#allocation2 + $0xa] sm:$0x1]
          %v3308 = vsel %vm3219, %v3304, %v3307
          %3309 = vst [vmem:[#allocation2 + $0xa] sm:$0x1] %v3308
          %v3311 = vld [vmem:[#allocation2 + $0xb] sm:$0x1]
          %v3312 = vsel %vm3219, %v3302, %v3311
          %3313 = vst [vmem:[#allocation2 + $0xb] sm:$0x1] %v3312
          %v3314 = vcombine.high %v3283, %v3283
          %v3316 = vshll.u32 %v3314, 16
          %v3319 = vld [vmem:[#allocation2 + $0xc] sm:$0x1]
          %v3320 = vsel %vm3219, %v3316, %v3319
          %3321 = vst [vmem:[#allocation2 + $0xc] sm:$0x1] %v3320
          %v3323 = vld [vmem:[#allocation2 + $0xd] sm:$0x1]
          %v3324 = vsel %vm3219, %v3314, %v3323
          %3325 = vst [vmem:[#allocation2 + $0xd] sm:$0x1] %v3324
          %v3326 = vcombine.high %v3302, %v3302
          %v3328 = vshll.u32 %v3326, 16
          %v3331 = vld [vmem:[#allocation2 + $0xe] sm:$0x1]
          %v3332 = vsel %vm3219, %v3328, %v3331
          %3333 = vst [vmem:[#allocation2 + $0xe] sm:$0x1] %v3332
          %v3335 = vld [vmem:[#allocation2 + $0xf] sm:$0x1]
          %v3336 = vsel %vm3219, %v3326, %v3335
          %3337 = vst [vmem:[#allocation2 + $0xf] sm:$0x1] %v3336
          %vm3338 = vcmask 58368
          %3339 = vst.msk [vmem:[%s8] sm:$0x3] %vm3338, 0.0
        $region79: #{regression_forward.1} parent=70 // pred_fallthru
          _
        %v3340 = vld [vmem:[#allocation2] sm:$0xff]
        %v3341 = vld [vmem:[#allocation2 + $0x8] sm:$0xff]
        %v3342 = vld [vmem:[%s1328] sm:$0xff]
        %v3343 = vld [vmem:[%s1328 + $0x8] sm:$0xff]
        %v3344 = vld [vmem:[%s1328 + $0x10] sm:$0xff]
        %v3345 = vld [vmem:[%s1328 + $0x18] sm:$0xff]
        %v3346 = vld [vmem:[%s1328 + $0x20] sm:$0xff]
        %v3347 = vld [vmem:[%s1328 + $0x28] sm:$0xff]
        %v3348 = vld [vmem:[%s1328 + $0x30] sm:$0xff]
        %v3349 = vld [vmem:[%s1328 + $0x38] sm:$0xff]
        %v3350 = vld [vmem:[%s1328 + $0x40] sm:$0xff]
        %v3351 = vld [vmem:[%s1328 + $0x48] sm:$0xff]
        %v3352 = vld [vmem:[%s1328 + $0x50] sm:$0xff]
        %v3353 = vld [vmem:[%s1328 + $0x58] sm:$0xff]
        %v3354 = vld [vmem:[%s1328 + $0x60] sm:$0xff]
        %v3355 = vld [vmem:[%s1328 + $0x68] sm:$0xff]
        %v3356 = vld [vmem:[%s1328 + $0x70] sm:$0xff]
        %v3357 = vld [vmem:[%s1328 + $0x78] sm:$0xff]
        %v3358 = vld [vmem:[%s1328 + $0x80] sm:$0xff]
        %v3359 = vld [vmem:[%s1328 + $0x88] sm:$0xff]
        %v3360 = vld [vmem:[%s1328 + $0x90] sm:$0xff]
        %v3361 = vld [vmem:[%s1328 + $0x98] sm:$0xff]
        %v3362 = vld [vmem:[%s1328 + $0xa0] sm:$0xff]
        %v3363 = vld [vmem:[%s1328 + $0xa8] sm:$0xff]
        %v3364 = vld [vmem:[%s1328 + $0xb0] sm:$0xff]
        %v3365 = vld [vmem:[%s1328 + $0xb8] sm:$0xff]
        %v3366 = vld [vmem:[%s1328 + $0xc0] sm:$0xff]
        %v3367 = vld [vmem:[%s1328 + $0xc8] sm:$0xff]
        %v3368 = vld [vmem:[%s1328 + $0xd0] sm:$0xff]
        %v3369 = vld [vmem:[%s1328 + $0xd8] sm:$0xff]
        %v3370 = vld [vmem:[%s1328 + $0xe0] sm:$0xff]
        %v3371 = vld [vmem:[%s1328 + $0xe8] sm:$0xff]
        %v3372 = vld [vmem:[%s1328 + $0xf0] sm:$0xff]
        %v3373 = vld [vmem:[%s1328 + $0xf8] sm:$0xff]
        %v3374 = vld [vmem:[%s1328 + $0x100] sm:$0xff]
        %v3375 = vld [vmem:[%s1328 + $0x108] sm:$0xff]
        %v3376 = vld [vmem:[%s1328 + $0x110] sm:$0xff]
        %v3377 = vld [vmem:[%s1328 + $0x118] sm:$0xff]
        %v3378 = vld [vmem:[%s1328 + $0x120] sm:$0xff]
        %v3379 = vld [vmem:[%s1328 + $0x128] sm:$0xff]
        %v3380 = vld [vmem:[%s1328 + $0x130] sm:$0xff]
        %v3381 = vld [vmem:[%s1328 + $0x138] sm:$0xff]
        %v3382 = vld [vmem:[%s1328 + $0x140] sm:$0xff]
        %v3383 = vld [vmem:[%s1328 + $0x148] sm:$0xff]
        %v3384 = vld [vmem:[%s1328 + $0x150] sm:$0xff]
        %v3385 = vld [vmem:[%s1328 + $0x158] sm:$0xff]
        %v3386 = vld [vmem:[%s1328 + $0x160] sm:$0xff]
        %v3387 = vld [vmem:[%s1328 + $0x168] sm:$0xff]
        %v3388 = vld [vmem:[%s1328 + $0x170] sm:$0xff]
        %v3389 = vld [vmem:[%s1328 + $0x178] sm:$0xff]
        %v3390 = vld [vmem:[%s1328 + $0x180] sm:$0xff]
        %v3391 = vld [vmem:[%s1328 + $0x188] sm:$0xff]
        %v3392 = vld [vmem:[%s1328 + $0x190] sm:$0xff]
        %v3393 = vld [vmem:[%s1328 + $0x198] sm:$0xff]
        %v3394 = vld [vmem:[%s1328 + $0x1a0] sm:$0xff]
        %v3395 = vld [vmem:[%s1328 + $0x1a8] sm:$0xff]
        %v3396 = vld [vmem:[%s1328 + $0x1b0] sm:$0xff]
        %v3397 = vld [vmem:[%s1328 + $0x1b8] sm:$0xff]
        %v3398 = vld [vmem:[%s1328 + $0x1c0] sm:$0xff]
        %v3399 = vld [vmem:[%s1328 + $0x1c8] sm:$0xff]
        %v3400 = vld [vmem:[%s1328 + $0x1d0] sm:$0xff]
        %v3401 = vld [vmem:[%s1328 + $0x1d8] sm:$0xff]
        %v3402 = vld [vmem:[%s1328 + $0x1e0] sm:$0xff]
        %v3403 = vld [vmem:[%s1328 + $0x1e8] sm:$0xff]
        %v3404 = vld [vmem:[%s1328 + $0x1f0] sm:$0xff]
        %v3405 = vld [vmem:[%s1328 + $0x1f8] sm:$0xff]
        %v3406 = vld [vmem:[%s1328 + $0x200] sm:$0xff]
        %v3407 = vld [vmem:[%s1328 + $0x208] sm:$0xff]
        %v3408 = vld [vmem:[%s1328 + $0x210] sm:$0xff]
        %v3409 = vld [vmem:[%s1328 + $0x218] sm:$0xff]
        %v3410 = vld [vmem:[%s1328 + $0x220] sm:$0xff]
        %v3411 = vld [vmem:[%s1328 + $0x228] sm:$0xff]
        %v3412 = vld [vmem:[%s1328 + $0x230] sm:$0xff]
        %v3413 = vld [vmem:[%s1328 + $0x238] sm:$0xff]
        %v3414 = vld [vmem:[%s1328 + $0x240] sm:$0xff]
        %v3415 = vld [vmem:[%s1328 + $0x248] sm:$0xff]
        %v3416 = vld [vmem:[%s1328 + $0x250] sm:$0xff]
        %v3417 = vld [vmem:[%s1328 + $0x258] sm:$0xff]
        %v3418 = vld [vmem:[%s1328 + $0x260] sm:$0xff]
        %v3419 = vld [vmem:[%s1328 + $0x268] sm:$0xff]
        %v3420 = vld [vmem:[%s1328 + $0x270] sm:$0xff]
        %v3421 = vld [vmem:[%s1328 + $0x278] sm:$0xff]
        %v3422 = vld [vmem:[%s1328 + $0x280] sm:$0xff]
        %v3423 = vld [vmem:[%s1328 + $0x288] sm:$0xff]
        %v3424 = vld [vmem:[%s1328 + $0x290] sm:$0xff]
        %v3425 = vld [vmem:[%s1328 + $0x298] sm:$0xff]
        %v3426 = vld [vmem:[%s1328 + $0x2a0] sm:$0xff]
        %v3427 = vld [vmem:[%s1328 + $0x2a8] sm:$0xff]
        %v3428 = vld [vmem:[%s1328 + $0x2b0] sm:$0xff]
        %v3429 = vld [vmem:[%s1328 + $0x2b8] sm:$0xff]
        %v3430 = vld [vmem:[%s1328 + $0x2c0] sm:$0xff]
        %v3431 = vld [vmem:[%s1328 + $0x2c8] sm:$0xff]
        %v3432 = vld [vmem:[%s1328 + $0x2d0] sm:$0xff]
        %v3433 = vld [vmem:[%s1328 + $0x2d8] sm:$0xff]
        %v3434 = vld [vmem:[%s1328 + $0x2e0] sm:$0xff]
        %v3435 = vld [vmem:[%s1328 + $0x2e8] sm:$0xff]
        %v3436 = vld [vmem:[%s1328 + $0x2f0] sm:$0xff]
        %v3437 = vld [vmem:[%s1328 + $0x2f8] sm:$0xff]
        %v3438 = vld [vmem:[%s1328 + $0x300] sm:$0xff]
        %v3439 = vld [vmem:[%s1328 + $0x308] sm:$0xff]
        %v3440 = vld [vmem:[%s1328 + $0x310] sm:$0xff]
        %v3441 = vld [vmem:[%s1328 + $0x318] sm:$0xff]
        %v3442 = vld [vmem:[%s1328 + $0x320] sm:$0xff]
        %v3443 = vld [vmem:[%s1328 + $0x328] sm:$0xff]
        %v3444 = vld [vmem:[%s1328 + $0x330] sm:$0xff]
        %v3445 = vld [vmem:[%s1328 + $0x338] sm:$0xff]
        %v3446 = vld [vmem:[%s1328 + $0x340] sm:$0xff]
        %v3447 = vld [vmem:[%s1328 + $0x348] sm:$0xff]
        %v3448 = vld [vmem:[%s1328 + $0x350] sm:$0xff]
        %v3449 = vld [vmem:[%s1328 + $0x358] sm:$0xff]
        %v3450 = vld [vmem:[%s1328 + $0x360] sm:$0xff]
        %v3451 = vld [vmem:[%s1328 + $0x368] sm:$0xff]
        %v3452 = vld [vmem:[%s1328 + $0x370] sm:$0xff]
        %v3453 = vld [vmem:[%s1328 + $0x378] sm:$0xff]
        %v3454 = vld [vmem:[%s1328 + $0x380] sm:$0xff]
        %v3455 = vld [vmem:[%s1328 + $0x388] sm:$0xff]
        %v3456 = vld [vmem:[%s1328 + $0x390] sm:$0xff]
        %v3457 = vld [vmem:[%s1328 + $0x398] sm:$0xff]
        %v3458 = vld [vmem:[%s1328 + $0x3a0] sm:$0xff]
        %v3459 = vld [vmem:[%s1328 + $0x3a8] sm:$0xff]
        %v3460 = vld [vmem:[%s1328 + $0x3b0] sm:$0xff]
        %v3461 = vld [vmem:[%s1328 + $0x3b8] sm:$0xff]
        %v3462 = vld [vmem:[%s1328 + $0x3c0] sm:$0xff]
        %v3463 = vld [vmem:[%s1328 + $0x3c8] sm:$0xff]
        %v3464 = vld [vmem:[%s1328 + $0x3d0] sm:$0xff]
        %v3465 = vld [vmem:[%s1328 + $0x3d8] sm:$0xff]
        %v3466 = vld [vmem:[%s1328 + $0x3e0] sm:$0xff]
        %v3467 = vld [vmem:[%s1328 + $0x3e8] sm:$0xff]
        %v3468 = vld [vmem:[%s1328 + $0x3f0] sm:$0xff]
        %v3469 = vld [vmem:[%s1328 + $0x3f8] sm:$0xff]
        %v3470 = vld [vmem:[%s1328 + $0x400] sm:$0xff]
        %v3471 = vld [vmem:[%s1328 + $0x408] sm:$0xff]
        %v3472 = vld [vmem:[%s1328 + $0x410] sm:$0xff]
        %v3473 = vld [vmem:[%s1328 + $0x418] sm:$0xff]
        %v3474 = vld [vmem:[%s1328 + $0x420] sm:$0xff]
        %v3475 = vld [vmem:[%s1328 + $0x428] sm:$0xff]
        %v3476 = vld [vmem:[%s1328 + $0x430] sm:$0xff]
        %v3477 = vld [vmem:[%s1328 + $0x438] sm:$0xff]
        %v3478 = vld [vmem:[%s1328 + $0x440] sm:$0xff]
        %v3479 = vld [vmem:[%s1328 + $0x448] sm:$0xff]
        %v3480 = vld [vmem:[%s1328 + $0x450] sm:$0xff]
        %v3481 = vld [vmem:[%s1328 + $0x458] sm:$0xff]
        %v3482 = vld [vmem:[%s1328 + $0x460] sm:$0xff]
        %v3483 = vld [vmem:[%s1328 + $0x468] sm:$0xff]
        %v3484 = vld [vmem:[%s1328 + $0x470] sm:$0xff]
        %v3485 = vld [vmem:[%s1328 + $0x478] sm:$0xff]
        %v3486 = vld [vmem:[%s1328 + $0x480] sm:$0xff]
        %v3487 = vld [vmem:[%s1328 + $0x488] sm:$0xff]
        %v3488 = vld [vmem:[%s1328 + $0x490] sm:$0xff]
        %v3489 = vld [vmem:[%s1328 + $0x498] sm:$0xff]
        %v3490 = vld [vmem:[%s1328 + $0x4a0] sm:$0xff]
        %v3491 = vld [vmem:[%s1328 + $0x4a8] sm:$0xff]
        %v3492 = vld [vmem:[%s1328 + $0x4b0] sm:$0xff]
        %v3493 = vld [vmem:[%s1328 + $0x4b8] sm:$0xff]
        %v3494 = vld [vmem:[%s1328 + $0x4c0] sm:$0xff]
        %v3495 = vld [vmem:[%s1328 + $0x4c8] sm:$0xff]
        %v3496 = vld [vmem:[%s1328 + $0x4d0] sm:$0xff]
        %v3497 = vld [vmem:[%s1328 + $0x4d8] sm:$0xff]
        %v3498 = vld [vmem:[%s1328 + $0x4e0] sm:$0xff]
        %v3499 = vld [vmem:[%s1328 + $0x4e8] sm:$0xff]
        %v3500 = vld [vmem:[%s1328 + $0x4f0] sm:$0xff]
        %v3501 = vld [vmem:[%s1328 + $0x4f8] sm:$0xff]
        %v3502 = vld [vmem:[%s1328 + $0x500] sm:$0xff]
        %v3503 = vld [vmem:[%s1328 + $0x508] sm:$0xff]
        %v3504 = vld [vmem:[%s1328 + $0x510] sm:$0xff]
        %v3505 = vld [vmem:[%s1328 + $0x518] sm:$0xff]
        %v3506 = vld [vmem:[%s1328 + $0x520] sm:$0xff]
        %v3507 = vld [vmem:[%s1328 + $0x528] sm:$0xff]
        %v3508 = vld [vmem:[%s1328 + $0x530] sm:$0xff]
        %v3509 = vld [vmem:[%s1328 + $0x538] sm:$0xff]
        %v3510 = vld [vmem:[%s1328 + $0x540] sm:$0xff]
        %v3511 = vld [vmem:[%s1328 + $0x548] sm:$0xff]
        %v3512 = vld [vmem:[%s1328 + $0x550] sm:$0xff]
        %v3513 = vld [vmem:[%s1328 + $0x558] sm:$0xff]
        %v3514 = vld [vmem:[%s1328 + $0x560] sm:$0xff]
        %v3515 = vld [vmem:[%s1328 + $0x568] sm:$0xff]
        %v3516 = vld [vmem:[%s1328 + $0x570] sm:$0xff]
        %v3517 = vld [vmem:[%s1328 + $0x578] sm:$0xff]
        %v3518 = vld [vmem:[%s1328 + $0x580] sm:$0xff]
        %v3519 = vld [vmem:[%s1328 + $0x588] sm:$0xff]
        %v3520 = vld [vmem:[%s1328 + $0x590] sm:$0xff]
        %v3521 = vld [vmem:[%s1328 + $0x598] sm:$0xff]
        %v3522 = vld [vmem:[%s1328 + $0x5a0] sm:$0xff]
        %v3523 = vld [vmem:[%s1328 + $0x5a8] sm:$0xff]
        %v3524 = vld [vmem:[%s1328 + $0x5b0] sm:$0xff]
        %v3525 = vld [vmem:[%s1328 + $0x5b8] sm:$0xff]
        %v3526 = vld [vmem:[%s1328 + $0x5c0] sm:$0xff]
        %v3527 = vld [vmem:[%s1328 + $0x5c8] sm:$0xff]
        %v3528 = vld [vmem:[%s1328 + $0x5d0] sm:$0xff]
        %v3529 = vld [vmem:[%s1328 + $0x5d8] sm:$0xff]
        %v3530 = vld [vmem:[%s1328 + $0x5e0] sm:$0xff]
        %v3531 = vld [vmem:[%s1328 + $0x5e8] sm:$0xff]
        %v3532 = vld [vmem:[%s1328 + $0x5f0] sm:$0xff]
        %v3533 = vld [vmem:[%s1328 + $0x5f8] sm:$0xff]
        %v3534 = vld [vmem:[%s1328 + $0x600] sm:$0xff]
        %v3535 = vld [vmem:[%s1328 + $0x608] sm:$0xff]
        %v3536 = vld [vmem:[%s1328 + $0x610] sm:$0xff]
        %v3537 = vld [vmem:[%s1328 + $0x618] sm:$0xff]
        %v3538 = vld [vmem:[%s1328 + $0x620] sm:$0xff]
        %v3539 = vld [vmem:[%s1328 + $0x628] sm:$0xff]
        %v3540 = vld [vmem:[%s1328 + $0x630] sm:$0xff]
        %v3541 = vld [vmem:[%s1328 + $0x638] sm:$0xff]
        %v3542 = vld [vmem:[%s1328 + $0x640] sm:$0xff]
        %v3543 = vld [vmem:[%s1328 + $0x648] sm:$0xff]
        %v3544 = vld [vmem:[%s1328 + $0x650] sm:$0xff]
        %v3545 = vld [vmem:[%s1328 + $0x658] sm:$0xff]
        %v3546 = vld [vmem:[%s1328 + $0x660] sm:$0xff]
        %v3547 = vld [vmem:[%s1328 + $0x668] sm:$0xff]
        %v3548 = vld [vmem:[%s1328 + $0x670] sm:$0xff]
        %v3549 = vld [vmem:[%s1328 + $0x678] sm:$0xff]
        %v3550 = vld [vmem:[%s1328 + $0x680] sm:$0xff]
        %v3551 = vld [vmem:[%s1328 + $0x688] sm:$0xff]
        %v3552 = vld [vmem:[%s1328 + $0x690] sm:$0xff]
        %v3553 = vld [vmem:[%s1328 + $0x698] sm:$0xff]
        %v3554 = vld [vmem:[%s1328 + $0x6a0] sm:$0xff]
        %v3555 = vld [vmem:[%s1328 + $0x6a8] sm:$0xff]
        %v3556 = vld [vmem:[%s1328 + $0x6b0] sm:$0xff]
        %v3557 = vld [vmem:[%s1328 + $0x6b8] sm:$0xff]
        %v3558 = vld [vmem:[%s1328 + $0x6c0] sm:$0xff]
        %v3559 = vld [vmem:[%s1328 + $0x6c8] sm:$0xff]
        %v3560 = vld [vmem:[%s1328 + $0x6d0] sm:$0xff]
        %v3561 = vld [vmem:[%s1328 + $0x6d8] sm:$0xff]
        %v3562 = vld [vmem:[%s1328 + $0x6e0] sm:$0xff]
        %v3563 = vld [vmem:[%s1328 + $0x6e8] sm:$0xff]
        %v3564 = vld [vmem:[%s1328 + $0x6f0] sm:$0xff]
        %v3565 = vld [vmem:[%s1328 + $0x6f8] sm:$0xff]
        %v3566 = vld [vmem:[%s1328 + $0x700] sm:$0xff]
        %v3567 = vld [vmem:[%s1328 + $0x708] sm:$0xff]
        %v3568 = vld [vmem:[%s1328 + $0x710] sm:$0xff]
        %v3569 = vld [vmem:[%s1328 + $0x718] sm:$0xff]
        %v3570 = vld [vmem:[%s1328 + $0x720] sm:$0xff]
        %v3571 = vld [vmem:[%s1328 + $0x728] sm:$0xff]
        %v3572 = vld [vmem:[%s1328 + $0x730] sm:$0xff]
        %v3573 = vld [vmem:[%s1328 + $0x738] sm:$0xff]
        %v3574 = vld [vmem:[%s1328 + $0x740] sm:$0xff]
        %v3575 = vld [vmem:[%s1328 + $0x748] sm:$0xff]
        %v3576 = vld [vmem:[%s1328 + $0x750] sm:$0xff]
        %v3577 = vld [vmem:[%s1328 + $0x758] sm:$0xff]
        %v3578 = vld [vmem:[%s1328 + $0x760] sm:$0xff]
        %v3579 = vld [vmem:[%s1328 + $0x768] sm:$0xff]
        %v3580 = vld [vmem:[%s1328 + $0x770] sm:$0xff]
        %v3581 = vld [vmem:[%s1328 + $0x778] sm:$0xff]
        %v3582 = vld [vmem:[%s1328 + $0x780] sm:$0xff]
        %v3583 = vld [vmem:[%s1328 + $0x788] sm:$0xff]
        %v3584 = vld [vmem:[%s1328 + $0x790] sm:$0xff]
        %v3585 = vld [vmem:[%s1328 + $0x798] sm:$0xff]
        %v3586 = vld [vmem:[%s1328 + $0x7a0] sm:$0xff]
        %v3587 = vld [vmem:[%s1328 + $0x7a8] sm:$0xff]
        %v3588 = vld [vmem:[%s1328 + $0x7b0] sm:$0xff]
        %v3589 = vld [vmem:[%s1328 + $0x7b8] sm:$0xff]
        %v3590 = vld [vmem:[%s1328 + $0x7c0] sm:$0xff]
        %v3591 = vld [vmem:[%s1328 + $0x7c8] sm:$0xff]
        %v3592 = vld [vmem:[%s1328 + $0x7d0] sm:$0xff]
        %v3593 = vld [vmem:[%s1328 + $0x7d8] sm:$0xff]
        %v3594 = vld [vmem:[%s1328 + $0x7e0] sm:$0xff]
        %v3595 = vld [vmem:[%s1328 + $0x7e8] sm:$0xff]
        %v3596 = vld [vmem:[%s1328 + $0x7f0] sm:$0xff]
        %v3597 = vld [vmem:[%s1328 + $0x7f8] sm:$0xff]
        %v3598 = vld [vmem:[%s1328 + $0x800] sm:$0xff]
        %v3599 = vld [vmem:[%s1328 + $0x808] sm:$0xff]
        %v3600 = vld [vmem:[%s1328 + $0x810] sm:$0xff]
        %v3601 = vld [vmem:[%s1328 + $0x818] sm:$0xff]
        %v3602 = vld [vmem:[%s1328 + $0x820] sm:$0xff]
        %v3603 = vld [vmem:[%s1328 + $0x828] sm:$0xff]
        %v3604 = vld [vmem:[%s1328 + $0x830] sm:$0xff]
        %v3605 = vld [vmem:[%s1328 + $0x838] sm:$0xff]
        %v3606 = vld [vmem:[%s1328 + $0x840] sm:$0xff]
        %v3607 = vld [vmem:[%s1328 + $0x848] sm:$0xff]
        %v3608 = vld [vmem:[%s1328 + $0x850] sm:$0xff]
        %v3609 = vld [vmem:[%s1328 + $0x858] sm:$0xff]
        %v3610 = vld [vmem:[%s1328 + $0x860] sm:$0xff]
        %v3611 = vld [vmem:[%s1328 + $0x868] sm:$0xff]
        %v3612 = vld [vmem:[%s1328 + $0x870] sm:$0xff]
        %v3613 = vld [vmem:[%s1328 + $0x878] sm:$0xff]
        %v3614 = vld [vmem:[%s1328 + $0x880] sm:$0xff]
        %v3615 = vld [vmem:[%s1328 + $0x888] sm:$0xff]
        %v3616 = vld [vmem:[%s1328 + $0x890] sm:$0xff]
        %v3617 = vld [vmem:[%s1328 + $0x898] sm:$0xff]
        %v3618 = vld [vmem:[%s1328 + $0x8a0] sm:$0xff]
        %v3619 = vld [vmem:[%s1328 + $0x8a8] sm:$0xff]
        %v3620 = vld [vmem:[%s1328 + $0x8b0] sm:$0xff]
        %v3621 = vld [vmem:[%s1328 + $0x8b8] sm:$0xff]
        %v3622 = vld [vmem:[%s1328 + $0x8c0] sm:$0xff]
        %v3623 = vld [vmem:[%s1328 + $0x8c8] sm:$0xff]
        %v3624 = vld [vmem:[%s1328 + $0x8d0] sm:$0xff]
        %v3625 = vld [vmem:[%s1328 + $0x8d8] sm:$0xff]
        %v3626 = vld [vmem:[%s1328 + $0x8e0] sm:$0xff]
        %v3627 = vld [vmem:[%s1328 + $0x8e8] sm:$0xff]
        %v3628 = vld [vmem:[%s1328 + $0x8f0] sm:$0xff]
        %v3629 = vld [vmem:[%s1328 + $0x8f8] sm:$0xff]
        %v3630 = vld [vmem:[%s1328 + $0x900] sm:$0xff]
        %v3631 = vld [vmem:[%s1328 + $0x908] sm:$0xff]
        %v3632 = vld [vmem:[%s1328 + $0x910] sm:$0xff]
        %v3633 = vld [vmem:[%s1328 + $0x918] sm:$0xff]
        %v3634 = vld [vmem:[%s1328 + $0x920] sm:$0xff]
        %v3635 = vld [vmem:[%s1328 + $0x928] sm:$0xff]
        %v3636 = vld [vmem:[%s1328 + $0x930] sm:$0xff]
        %v3637 = vld [vmem:[%s1328 + $0x938] sm:$0xff]
        %v3638 = vld [vmem:[%s1328 + $0x940] sm:$0xff]
        %v3639 = vld [vmem:[%s1328 + $0x948] sm:$0xff]
        %v3640 = vld [vmem:[%s1328 + $0x950] sm:$0xff]
        %v3641 = vld [vmem:[%s1328 + $0x958] sm:$0xff]
        %v3642 = vld [vmem:[%s1328 + $0x960] sm:$0xff]
        %v3643 = vld [vmem:[%s1328 + $0x968] sm:$0xff]
        %v3644 = vld [vmem:[%s1328 + $0x970] sm:$0xff]
        %v3645 = vld [vmem:[%s1328 + $0x978] sm:$0xff]
        %v3646 = vld [vmem:[%s1328 + $0x980] sm:$0xff]
        %v3647 = vld [vmem:[%s1328 + $0x988] sm:$0xff]
        %v3648 = vld [vmem:[%s1328 + $0x990] sm:$0xff]
        %v3649 = vld [vmem:[%s1328 + $0x998] sm:$0xff]
        %v3650 = vld [vmem:[%s1328 + $0x9a0] sm:$0xff]
        %v3651 = vld [vmem:[%s1328 + $0x9a8] sm:$0xff]
        %v3652 = vld [vmem:[%s1328 + $0x9b0] sm:$0xff]
        %v3653 = vld [vmem:[%s1328 + $0x9b8] sm:$0xff]
        %v3654 = vld [vmem:[%s1328 + $0x9c0] sm:$0xff]
        %v3655 = vld [vmem:[%s1328 + $0x9c8] sm:$0xff]
        %v3656 = vld [vmem:[%s1328 + $0x9d0] sm:$0xff]
        %v3657 = vld [vmem:[%s1328 + $0x9d8] sm:$0xff]
        %v3658 = vld [vmem:[%s1328 + $0x9e0] sm:$0xff]
        %v3659 = vld [vmem:[%s1328 + $0x9e8] sm:$0xff]
        %v3660 = vld [vmem:[%s1328 + $0x9f0] sm:$0xff]
        %v3661 = vld [vmem:[%s1328 + $0x9f8] sm:$0xff]
        %v3662 = vld [vmem:[%s1328 + $0xa00] sm:$0xff]
        %v3663 = vld [vmem:[%s1328 + $0xa08] sm:$0xff]
        %v3664 = vld [vmem:[%s1328 + $0xa10] sm:$0xff]
        %v3665 = vld [vmem:[%s1328 + $0xa18] sm:$0xff]
        %v3666 = vld [vmem:[%s1328 + $0xa20] sm:$0xff]
        %v3667 = vld [vmem:[%s1328 + $0xa28] sm:$0xff]
        %v3668 = vld [vmem:[%s1328 + $0xa30] sm:$0xff]
        %v3669 = vld [vmem:[%s1328 + $0xa38] sm:$0xff]
        %v3670 = vld [vmem:[%s1328 + $0xa40] sm:$0xff]
        %v3671 = vld [vmem:[%s1328 + $0xa48] sm:$0xff]
        %v3672 = vld [vmem:[%s1328 + $0xa50] sm:$0xff]
        %v3673 = vld [vmem:[%s1328 + $0xa58] sm:$0xff]
        %v3674 = vld [vmem:[%s1328 + $0xa60] sm:$0xff]
        %v3675 = vld [vmem:[%s1328 + $0xa68] sm:$0xff]
        %v3676 = vld [vmem:[%s1328 + $0xa70] sm:$0xff]
        %v3677 = vld [vmem:[%s1328 + $0xa78] sm:$0xff]
        %v3678 = vld [vmem:[%s1328 + $0xa80] sm:$0xff]
        %v3679 = vld [vmem:[%s1328 + $0xa88] sm:$0xff]
        %v3680 = vld [vmem:[%s1328 + $0xa90] sm:$0xff]
        %v3681 = vld [vmem:[%s1328 + $0xa98] sm:$0xff]
        %v3682 = vld [vmem:[%s1328 + $0xaa0] sm:$0xff]
        %v3683 = vld [vmem:[%s1328 + $0xaa8] sm:$0xff]
        %v3684 = vld [vmem:[%s1328 + $0xab0] sm:$0xff]
        %v3685 = vld [vmem:[%s1328 + $0xab8] sm:$0xff]
        %v3686 = vld [vmem:[%s1328 + $0xac0] sm:$0xff]
        %v3687 = vld [vmem:[%s1328 + $0xac8] sm:$0xff]
        %v3688 = vld [vmem:[%s1328 + $0xad0] sm:$0xff]
        %v3689 = vld [vmem:[%s1328 + $0xad8] sm:$0xff]
        %v3690 = vld [vmem:[%s1328 + $0xae0] sm:$0xff]
        %v3691 = vld [vmem:[%s1328 + $0xae8] sm:$0xff]
        %v3692 = vld [vmem:[%s1328 + $0xaf0] sm:$0xff]
        %v3693 = vld [vmem:[%s1328 + $0xaf8] sm:$0xff]
        %v3694 = vld [vmem:[%s1328 + $0xb00] sm:$0xff]
        %v3695 = vld [vmem:[%s1328 + $0xb08] sm:$0xff]
        %v3696 = vld [vmem:[%s1328 + $0xb10] sm:$0xff]
        %v3697 = vld [vmem:[%s1328 + $0xb18] sm:$0xff]
        %v3698 = vld [vmem:[%s1328 + $0xb20] sm:$0xff]
        %v3699 = vld [vmem:[%s1328 + $0xb28] sm:$0xff]
        %v3700 = vld [vmem:[%s1328 + $0xb30] sm:$0xff]
        %v3701 = vld [vmem:[%s1328 + $0xb38] sm:$0xff]
        %v3702 = vld [vmem:[%s1328 + $0xb40] sm:$0xff]
        %v3703 = vld [vmem:[%s1328 + $0xb48] sm:$0xff]
        %v3704 = vld [vmem:[%s1328 + $0xb50] sm:$0xff]
        %v3705 = vld [vmem:[%s1328 + $0xb58] sm:$0xff]
        %v3706 = vld [vmem:[%s1328 + $0xb60] sm:$0xff]
        %v3707 = vld [vmem:[%s1328 + $0xb68] sm:$0xff]
        %v3708 = vld [vmem:[%s1328 + $0xb70] sm:$0xff]
        %v3709 = vld [vmem:[%s1328 + $0xb78] sm:$0xff]
        %v3710 = vld [vmem:[%s1328 + $0xb80] sm:$0xff]
        %v3711 = vld [vmem:[%s1328 + $0xb88] sm:$0xff]
        %v3712 = vld [vmem:[%s1328 + $0xb90] sm:$0xff]
        %v3713 = vld [vmem:[%s1328 + $0xb98] sm:$0xff]
        %v3714 = vld [vmem:[%s1328 + $0xba0] sm:$0xff]
        %v3715 = vld [vmem:[%s1328 + $0xba8] sm:$0xff]
        %v3716 = vld [vmem:[%s1328 + $0xbb0] sm:$0xff]
        %v3717 = vld [vmem:[%s1328 + $0xbb8] sm:$0xff]
        %v3718 = vld [vmem:[%s1328 + $0xbc0] sm:$0xff]
        %v3719 = vld [vmem:[%s1328 + $0xbc8] sm:$0xff]
        %v3720 = vld [vmem:[%s1328 + $0xbd0] sm:$0xff]
        %v3721 = vld [vmem:[%s1328 + $0xbd8] sm:$0xff]
        %v3722 = vld [vmem:[%s1328 + $0xbe0] sm:$0xff]
        %v3723 = vld [vmem:[%s1328 + $0xbe8] sm:$0xff]
        %v3724 = vld [vmem:[%s1328 + $0xbf0] sm:$0xff]
        %v3725 = vld [vmem:[%s1328 + $0xbf8] sm:$0xff]
        %v3726 = vld [vmem:[%s1328 + $0xc00] sm:$0xff]
        %v3727 = vld [vmem:[%s1328 + $0xc08] sm:$0xff]
        %v3728 = vld [vmem:[%s1328 + $0xc10] sm:$0xff]
        %v3729 = vld [vmem:[%s1328 + $0xc18] sm:$0xff]
        %v3730 = vld [vmem:[%s1328 + $0xc20] sm:$0xff]
        %v3731 = vld [vmem:[%s1328 + $0xc28] sm:$0xff]
        %v3732 = vld [vmem:[%s1328 + $0xc30] sm:$0xff]
        %v3733 = vld [vmem:[%s1328 + $0xc38] sm:$0xff]
        %v3734 = vld [vmem:[%s1328 + $0xc40] sm:$0xff]
        %v3735 = vld [vmem:[%s1328 + $0xc48] sm:$0xff]
        %v3736 = vld [vmem:[%s1328 + $0xc50] sm:$0xff]
        %v3737 = vld [vmem:[%s1328 + $0xc58] sm:$0xff]
        %v3738 = vld [vmem:[%s1328 + $0xc60] sm:$0xff]
        %v3739 = vld [vmem:[%s1328 + $0xc68] sm:$0xff]
        %v3740 = vld [vmem:[%s1328 + $0xc70] sm:$0xff]
        %v3741 = vld [vmem:[%s1328 + $0xc78] sm:$0xff]
        %v3742 = vld [vmem:[%s1328 + $0xc80] sm:$0xff]
        %v3743 = vld [vmem:[%s1328 + $0xc88] sm:$0xff]
        %v3744 = vld [vmem:[%s1328 + $0xc90] sm:$0xff]
        %v3745 = vld [vmem:[%s1328 + $0xc98] sm:$0xff]
        %v3746 = vld [vmem:[%s1328 + $0xca0] sm:$0xff]
        %v3747 = vld [vmem:[%s1328 + $0xca8] sm:$0xff]
        %v3748 = vld [vmem:[%s1328 + $0xcb0] sm:$0xff]
        %v3749 = vld [vmem:[%s1328 + $0xcb8] sm:$0xff]
        %v3750 = vld [vmem:[%s1328 + $0xcc0] sm:$0xff]
        %v3751 = vld [vmem:[%s1328 + $0xcc8] sm:$0xff]
        %v3752 = vld [vmem:[%s1328 + $0xcd0] sm:$0xff]
        %v3753 = vld [vmem:[%s1328 + $0xcd8] sm:$0xff]
        %v3754 = vld [vmem:[%s1328 + $0xce0] sm:$0xff]
        %v3755 = vld [vmem:[%s1328 + $0xce8] sm:$0xff]
        %v3756 = vld [vmem:[%s1328 + $0xcf0] sm:$0xff]
        %v3757 = vld [vmem:[%s1328 + $0xcf8] sm:$0xff]
        %v3758 = vld [vmem:[%s1328 + $0xd00] sm:$0xff]
        %v3759 = vld [vmem:[%s1328 + $0xd08] sm:$0xff]
        %v3760 = vld [vmem:[%s1328 + $0xd10] sm:$0xff]
        %v3761 = vld [vmem:[%s1328 + $0xd18] sm:$0xff]
        %v3762 = vld [vmem:[%s1328 + $0xd20] sm:$0xff]
        %v3763 = vld [vmem:[%s1328 + $0xd28] sm:$0xff]
        %v3764 = vld [vmem:[%s1328 + $0xd30] sm:$0xff]
        %v3765 = vld [vmem:[%s1328 + $0xd38] sm:$0xff]
        %v3766 = vld [vmem:[%s1328 + $0xd40] sm:$0xff]
        %v3767 = vld [vmem:[%s1328 + $0xd48] sm:$0xff]
        %v3768 = vld [vmem:[%s1328 + $0xd50] sm:$0xff]
        %v3769 = vld [vmem:[%s1328 + $0xd58] sm:$0xff]
        %v3770 = vld [vmem:[%s1328 + $0xd60] sm:$0xff]
        %v3771 = vld [vmem:[%s1328 + $0xd68] sm:$0xff]
        %v3772 = vld [vmem:[%s1328 + $0xd70] sm:$0xff]
        %v3773 = vld [vmem:[%s1328 + $0xd78] sm:$0xff]
        %v3774 = vld [vmem:[%s1328 + $0xd80] sm:$0xff]
        %v3775 = vld [vmem:[%s1328 + $0xd88] sm:$0xff]
        %v3776 = vld [vmem:[%s1328 + $0xd90] sm:$0xff]
        %v3777 = vld [vmem:[%s1328 + $0xd98] sm:$0xff]
        %v3778 = vld [vmem:[%s1328 + $0xda0] sm:$0xff]
        %v3779 = vld [vmem:[%s1328 + $0xda8] sm:$0xff]
        %v3780 = vld [vmem:[%s1328 + $0xdb0] sm:$0xff]
        %v3781 = vld [vmem:[%s1328 + $0xdb8] sm:$0xff]
        %v3782 = vld [vmem:[%s1328 + $0xdc0] sm:$0xff]
        %v3783 = vld [vmem:[%s1328 + $0xdc8] sm:$0xff]
        %v3784 = vld [vmem:[%s1328 + $0xdd0] sm:$0xff]
        %v3785 = vld [vmem:[%s1328 + $0xdd8] sm:$0xff]
        %v3786 = vld [vmem:[%s1328 + $0xde0] sm:$0xff]
        %v3787 = vld [vmem:[%s1328 + $0xde8] sm:$0xff]
        %v3788 = vld [vmem:[%s1328 + $0xdf0] sm:$0xff]
        %v3789 = vld [vmem:[%s1328 + $0xdf8] sm:$0xff]
        %v3790 = vld [vmem:[%s1328 + $0xe00] sm:$0xff]
        %v3791 = vld [vmem:[%s1328 + $0xe08] sm:$0xff]
        %v3792 = vld [vmem:[%s1328 + $0xe10] sm:$0xff]
        %v3793 = vld [vmem:[%s1328 + $0xe18] sm:$0xff]
        %v3794 = vld [vmem:[%s1328 + $0xe20] sm:$0xff]
        %v3795 = vld [vmem:[%s1328 + $0xe28] sm:$0xff]
        %v3796 = vld [vmem:[%s1328 + $0xe30] sm:$0xff]
        %v3797 = vld [vmem:[%s1328 + $0xe38] sm:$0xff]
        %v3798 = vld [vmem:[%s1328 + $0xe40] sm:$0xff]
        %v3799 = vld [vmem:[%s1328 + $0xe48] sm:$0xff]
        %v3800 = vld [vmem:[%s1328 + $0xe50] sm:$0xff]
        %v3801 = vld [vmem:[%s1328 + $0xe58] sm:$0xff]
        %v3802 = vld [vmem:[%s1328 + $0xe60] sm:$0xff]
        %v3803 = vld [vmem:[%s1328 + $0xe68] sm:$0xff]
        %v3804 = vld [vmem:[%s1328 + $0xe70] sm:$0xff]
        %v3805 = vld [vmem:[%s1328 + $0xe78] sm:$0xff]
        %v3806 = vld [vmem:[%s1328 + $0xe80] sm:$0xff]
        %v3807 = vld [vmem:[%s1328 + $0xe88] sm:$0xff]
        %v3808 = vld [vmem:[%s1328 + $0xe90] sm:$0xff]
        %v3809 = vld [vmem:[%s1328 + $0xe98] sm:$0xff]
        %v3810 = vld [vmem:[%s1328 + $0xea0] sm:$0xff]
        %v3811 = vld [vmem:[%s1328 + $0xea8] sm:$0xff]
        %v3812 = vld [vmem:[%s1328 + $0xeb0] sm:$0xff]
        %v3813 = vld [vmem:[%s1328 + $0xeb8] sm:$0xff]
        %v3814 = vld [vmem:[%s1328 + $0xec0] sm:$0xff]
        %v3815 = vld [vmem:[%s1328 + $0xec8] sm:$0xff]
        %v3816 = vld [vmem:[%s1328 + $0xed0] sm:$0xff]
        %v3817 = vld [vmem:[%s1328 + $0xed8] sm:$0xff]
        %v3818 = vld [vmem:[%s1328 + $0xee0] sm:$0xff]
        %v3819 = vld [vmem:[%s1328 + $0xee8] sm:$0xff]
        %v3820 = vld [vmem:[%s1328 + $0xef0] sm:$0xff]
        %v3821 = vld [vmem:[%s1328 + $0xef8] sm:$0xff]
        %v3822 = vld [vmem:[%s1328 + $0xf00] sm:$0xff]
        %v3823 = vld [vmem:[%s1328 + $0xf08] sm:$0xff]
        %v3824 = vld [vmem:[%s1328 + $0xf10] sm:$0xff]
        %v3825 = vld [vmem:[%s1328 + $0xf18] sm:$0xff]
        %v3826 = vld [vmem:[%s1328 + $0xf20] sm:$0xff]
        %v3827 = vld [vmem:[%s1328 + $0xf28] sm:$0xff]
        %v3828 = vld [vmem:[%s1328 + $0xf30] sm:$0xff]
        %v3829 = vld [vmem:[%s1328 + $0xf38] sm:$0xff]
        %v3830 = vld [vmem:[%s1328 + $0xf40] sm:$0xff]
        %v3831 = vld [vmem:[%s1328 + $0xf48] sm:$0xff]
        %v3832 = vld [vmem:[%s1328 + $0xf50] sm:$0xff]
        %v3833 = vld [vmem:[%s1328 + $0xf58] sm:$0xff]
        %v3834 = vld [vmem:[%s1328 + $0xf60] sm:$0xff]
        %v3835 = vld [vmem:[%s1328 + $0xf68] sm:$0xff]
        %v3836 = vld [vmem:[%s1328 + $0xf70] sm:$0xff]
        %v3837 = vld [vmem:[%s1328 + $0xf78] sm:$0xff]
        %v3838 = vld [vmem:[%s1328 + $0xf80] sm:$0xff]
        %v3839 = vld [vmem:[%s1328 + $0xf88] sm:$0xff]
        %v3840 = vld [vmem:[%s1328 + $0xf90] sm:$0xff]
        %v3841 = vld [vmem:[%s1328 + $0xf98] sm:$0xff]
        %v3842 = vld [vmem:[%s1328 + $0xfa0] sm:$0xff]
        %v3843 = vld [vmem:[%s1328 + $0xfa8] sm:$0xff]
        %v3844 = vld [vmem:[%s1328 + $0xfb0] sm:$0xff]
        %v3845 = vld [vmem:[%s1328 + $0xfb8] sm:$0xff]
        %v3846 = vld [vmem:[%s1328 + $0xfc0] sm:$0xff]
        %v3847 = vld [vmem:[%s1328 + $0xfc8] sm:$0xff]
        %v3848 = vld [vmem:[%s1328 + $0xfd0] sm:$0xff]
        %v3849 = vld [vmem:[%s1328 + $0xfd8] sm:$0xff]
        %v3850 = vld [vmem:[%s1328 + $0xfe0] sm:$0xff]
        %v3851 = vld [vmem:[%s1328 + $0xfe8] sm:$0xff]
        %v3852 = vld [vmem:[%s1328 + $0xff0] sm:$0xff]
        %v3853 = vld [vmem:[%s1328 + $0xff8] sm:$0xff]
        %v3854 = vld [vmem:[%s1367] sm:$0xf]
        %v3856 = vlaneseq
        %v3857 = vshrl.u32 %v3856, 7
        %v3858 = vsub.s32 0, %v3857
        %v3859 = vrot.slane %v3854, %v3858
        %v3860 = vlaneseq
        %v3861 = vshrl.u32 %v3860, 7
        %v3862 = vsub.s32 1, %v3861
        %v3863 = vrot.slane %v3854, %v3862
        %v3864 = vlaneseq
        %v3865 = vshrl.u32 %v3864, 7
        %v3866 = vsub.s32 2, %v3865
        %v3867 = vrot.slane %v3854, %v3866
        %v3868 = vlaneseq
        %v3869 = vshrl.u32 %v3868, 7
        %v3870 = vsub.s32 3, %v3869
        %v3871 = vrot.slane %v3854, %v3870
        %v3878 = vcombine.high %v3340, %v3340
        %v3880 = vunpack.c.l.s4 1966171168
        %v3881 = vunpack.c.0.s8 %v3880
        %v3882 = vlaneseq
        %v3883 = vshrl.u32 %v3882, 7
        %v3884 = vsub.s32 %v3881, %v3883
        %v3885 = vrot.slane %v3340, %v3884
        %v3887 = vunpack.c.l.s4 1966171168
        %v3888 = vunpack.c.0.s8 %v3887
        %v3889 = vlaneseq
        %v3890 = vshrl.u32 %v3889, 7
        %v3891 = vsub.s32 %v3888, %v3890
        %v3892 = vrot.slane %v3878, %v3891
        %v3893 = vcombine.high %v3885, %v3885
        %v3894 = vcombine.high %v3892, %v3892
        %v3896 = vunpack.c.l.s4 1966171168
        %v3897 = vunpack.c.0.s8 %v3896
        %v3898 = vlaneseq
        %v3899 = vshrl.u32 %v3898, 7
        %v3900 = vsub.s32 %v3897, %v3899
        %v3901 = vrot.slane %v3885, %v3900
        %v3903 = vunpack.c.l.s4 1966171168
        %v3904 = vunpack.c.0.s8 %v3903
        %v3905 = vlaneseq
        %v3906 = vshrl.u32 %v3905, 7
        %v3907 = vsub.s32 %v3904, %v3906
        %v3908 = vrot.slane %v3892, %v3907
        %v3910 = vunpack.c.l.s4 1966171168
        %v3911 = vunpack.c.0.s8 %v3910
        %v3912 = vlaneseq
        %v3913 = vshrl.u32 %v3912, 7
        %v3914 = vsub.s32 %v3911, %v3913
        %v3915 = vrot.slane %v3893, %v3914
        %v3917 = vunpack.c.l.s4 1966171168
        %v3918 = vunpack.c.0.s8 %v3917
        %v3919 = vlaneseq
        %v3920 = vshrl.u32 %v3919, 7
        %v3921 = vsub.s32 %v3918, %v3920
        %v3922 = vrot.slane %v3894, %v3921
        %v3923 = vcombine.high %v3901, %v3901
        %v3924 = vcombine.high %v3908, %v3908
        %v3925 = vcombine.high %v3915, %v3915
        %v3926 = vcombine.high %v3922, %v3922
        %v3927 = vcombine.high %v3341, %v3341
        %v3929 = vunpack.c.l.s4 1966171168
        %v3930 = vunpack.c.0.s8 %v3929
        %v3931 = vlaneseq
        %v3932 = vshrl.u32 %v3931, 7
        %v3933 = vsub.s32 %v3930, %v3932
        %v3934 = vrot.slane %v3341, %v3933
        %v3936 = vunpack.c.l.s4 1966171168
        %v3937 = vunpack.c.0.s8 %v3936
        %v3938 = vlaneseq
        %v3939 = vshrl.u32 %v3938, 7
        %v3940 = vsub.s32 %v3937, %v3939
        %v3941 = vrot.slane %v3927, %v3940
        %v3942 = vcombine.high %v3934, %v3934
        %v3943 = vcombine.high %v3941, %v3941
        %v3945 = vunpack.c.l.s4 1966171168
        %v3946 = vunpack.c.0.s8 %v3945
        %v3947 = vlaneseq
        %v3948 = vshrl.u32 %v3947, 7
        %v3949 = vsub.s32 %v3946, %v3948
        %v3950 = vrot.slane %v3934, %v3949
        %v3952 = vunpack.c.l.s4 1966171168
        %v3953 = vunpack.c.0.s8 %v3952
        %v3954 = vlaneseq
        %v3955 = vshrl.u32 %v3954, 7
        %v3956 = vsub.s32 %v3953, %v3955
        %v3957 = vrot.slane %v3941, %v3956
        %v3959 = vunpack.c.l.s4 1966171168
        %v3960 = vunpack.c.0.s8 %v3959
        %v3961 = vlaneseq
        %v3962 = vshrl.u32 %v3961, 7
        %v3963 = vsub.s32 %v3960, %v3962
        %v3964 = vrot.slane %v3942, %v3963
        %v3966 = vunpack.c.l.s4 1966171168
        %v3967 = vunpack.c.0.s8 %v3966
        %v3968 = vlaneseq
        %v3969 = vshrl.u32 %v3968, 7
        %v3970 = vsub.s32 %v3967, %v3969
        %v3971 = vrot.slane %v3943, %v3970
        %v3972 = vcombine.high %v3950, %v3950
        %v3973 = vcombine.high %v3957, %v3957
        %v3974 = vcombine.high %v3964, %v3964
        %v3975 = vcombine.high %v3971, %v3971
        %v4504 = vunpack.c.l.b16 %v3342
        %v4505 = vunpack.c.h.b16 %v3342
        %v4506 = vunpack.c.l.b16 %v3343
        %v4507 = vunpack.c.h.b16 %v3343
        %v4508 = vunpack.c.l.b16 %v3344
        %v4509 = vunpack.c.h.b16 %v3344
        %v4510 = vunpack.c.l.b16 %v3345
        %v4511 = vunpack.c.h.b16 %v3345
        %v4512 = vunpack.c.l.b16 %v3346
        %v4513 = vunpack.c.h.b16 %v3346
        %v4514 = vunpack.c.l.b16 %v3347
        %v4515 = vunpack.c.h.b16 %v3347
        %v4516 = vunpack.c.l.b16 %v3348
        %v4517 = vunpack.c.h.b16 %v3348
        %v4518 = vunpack.c.l.b16 %v3349
        %v4519 = vunpack.c.h.b16 %v3349
        %v4520 = vunpack.c.l.b16 %v3350
        %v4521 = vunpack.c.h.b16 %v3350
        %v4522 = vunpack.c.l.b16 %v3351
        %v4523 = vunpack.c.h.b16 %v3351
        %v4524 = vunpack.c.l.b16 %v3352
        %v4525 = vunpack.c.h.b16 %v3352
        %v4526 = vunpack.c.l.b16 %v3353
        %v4527 = vunpack.c.h.b16 %v3353
        %v4528 = vunpack.c.l.b16 %v3354
        %v4529 = vunpack.c.h.b16 %v3354
        %v4530 = vunpack.c.l.b16 %v3355
        %v4531 = vunpack.c.h.b16 %v3355
        %v4532 = vunpack.c.l.b16 %v3356
        %v4533 = vunpack.c.h.b16 %v3356
        %v4534 = vunpack.c.l.b16 %v3357
        %v4535 = vunpack.c.h.b16 %v3357
        %v4536 = vunpack.c.l.b16 %v3358
        %v4537 = vunpack.c.h.b16 %v3358
        %v4538 = vunpack.c.l.b16 %v3359
        %v4539 = vunpack.c.h.b16 %v3359
        %v4540 = vunpack.c.l.b16 %v3360
        %v4541 = vunpack.c.h.b16 %v3360
        %v4542 = vunpack.c.l.b16 %v3361
        %v4543 = vunpack.c.h.b16 %v3361
        %v4544 = vunpack.c.l.b16 %v3362
        %v4545 = vunpack.c.h.b16 %v3362
        %v4546 = vunpack.c.l.b16 %v3363
        %v4547 = vunpack.c.h.b16 %v3363
        %v4548 = vunpack.c.l.b16 %v3364
        %v4549 = vunpack.c.h.b16 %v3364
        %v4550 = vunpack.c.l.b16 %v3365
        %v4551 = vunpack.c.h.b16 %v3365
        %v4552 = vunpack.c.l.b16 %v3366
        %v4553 = vunpack.c.h.b16 %v3366
        %v4554 = vunpack.c.l.b16 %v3367
        %v4555 = vunpack.c.h.b16 %v3367
        %v4556 = vunpack.c.l.b16 %v3368
        %v4557 = vunpack.c.h.b16 %v3368
        %v4558 = vunpack.c.l.b16 %v3369
        %v4559 = vunpack.c.h.b16 %v3369
        %v4560 = vunpack.c.l.b16 %v3370
        %v4561 = vunpack.c.h.b16 %v3370
        %v4562 = vunpack.c.l.b16 %v3371
        %v4563 = vunpack.c.h.b16 %v3371
        %v4564 = vunpack.c.l.b16 %v3372
        %v4565 = vunpack.c.h.b16 %v3372
        %v4566 = vunpack.c.l.b16 %v3373
        %v4567 = vunpack.c.h.b16 %v3373
        %v4568 = vunpack.c.l.b16 %v3374
        %v4569 = vunpack.c.h.b16 %v3374
        %v4570 = vunpack.c.l.b16 %v3375
        %v4571 = vunpack.c.h.b16 %v3375
        %v4572 = vunpack.c.l.b16 %v3376
        %v4573 = vunpack.c.h.b16 %v3376
        %v4574 = vunpack.c.l.b16 %v3377
        %v4575 = vunpack.c.h.b16 %v3377
        %v4576 = vunpack.c.l.b16 %v3378
        %v4577 = vunpack.c.h.b16 %v3378
        %v4578 = vunpack.c.l.b16 %v3379
        %v4579 = vunpack.c.h.b16 %v3379
        %v4580 = vunpack.c.l.b16 %v3380
        %v4581 = vunpack.c.h.b16 %v3380
        %v4582 = vunpack.c.l.b16 %v3381
        %v4583 = vunpack.c.h.b16 %v3381
        %v4584 = vunpack.c.l.b16 %v3382
        %v4585 = vunpack.c.h.b16 %v3382
        %v4586 = vunpack.c.l.b16 %v3383
        %v4587 = vunpack.c.h.b16 %v3383
        %v4588 = vunpack.c.l.b16 %v3384
        %v4589 = vunpack.c.h.b16 %v3384
        %v4590 = vunpack.c.l.b16 %v3385
        %v4591 = vunpack.c.h.b16 %v3385
        %v4592 = vunpack.c.l.b16 %v3386
        %v4593 = vunpack.c.h.b16 %v3386
        %v4594 = vunpack.c.l.b16 %v3387
        %v4595 = vunpack.c.h.b16 %v3387
        %v4596 = vunpack.c.l.b16 %v3388
        %v4597 = vunpack.c.h.b16 %v3388
        %v4598 = vunpack.c.l.b16 %v3389
        %v4599 = vunpack.c.h.b16 %v3389
        %v4600 = vunpack.c.l.b16 %v3390
        %v4601 = vunpack.c.h.b16 %v3390
        %v4602 = vunpack.c.l.b16 %v3391
        %v4603 = vunpack.c.h.b16 %v3391
        %v4604 = vunpack.c.l.b16 %v3392
        %v4605 = vunpack.c.h.b16 %v3392
        %v4606 = vunpack.c.l.b16 %v3393
        %v4607 = vunpack.c.h.b16 %v3393
        %v4608 = vunpack.c.l.b16 %v3394
        %v4609 = vunpack.c.h.b16 %v3394
        %v4610 = vunpack.c.l.b16 %v3395
        %v4611 = vunpack.c.h.b16 %v3395
        %v4612 = vunpack.c.l.b16 %v3396
        %v4613 = vunpack.c.h.b16 %v3396
        %v4614 = vunpack.c.l.b16 %v3397
        %v4615 = vunpack.c.h.b16 %v3397
        %v4616 = vunpack.c.l.b16 %v3398
        %v4617 = vunpack.c.h.b16 %v3398
        %v4618 = vunpack.c.l.b16 %v3399
        %v4619 = vunpack.c.h.b16 %v3399
        %v4620 = vunpack.c.l.b16 %v3400
        %v4621 = vunpack.c.h.b16 %v3400
        %v4622 = vunpack.c.l.b16 %v3401
        %v4623 = vunpack.c.h.b16 %v3401
        %v4624 = vunpack.c.l.b16 %v3402
        %v4625 = vunpack.c.h.b16 %v3402
        %v4626 = vunpack.c.l.b16 %v3403
        %v4627 = vunpack.c.h.b16 %v3403
        %v4628 = vunpack.c.l.b16 %v3404
        %v4629 = vunpack.c.h.b16 %v3404
        %v4630 = vunpack.c.l.b16 %v3405
        %v4631 = vunpack.c.h.b16 %v3405
        %v4632 = vunpack.c.l.b16 %v3406
        %v4633 = vunpack.c.h.b16 %v3406
        %v4634 = vunpack.c.l.b16 %v3407
        %v4635 = vunpack.c.h.b16 %v3407
        %v4636 = vunpack.c.l.b16 %v3408
        %v4637 = vunpack.c.h.b16 %v3408
        %v4638 = vunpack.c.l.b16 %v3409
        %v4639 = vunpack.c.h.b16 %v3409
        %v4640 = vunpack.c.l.b16 %v3410
        %v4641 = vunpack.c.h.b16 %v3410
        %v4642 = vunpack.c.l.b16 %v3411
        %v4643 = vunpack.c.h.b16 %v3411
        %v4644 = vunpack.c.l.b16 %v3412
        %v4645 = vunpack.c.h.b16 %v3412
        %v4646 = vunpack.c.l.b16 %v3413
        %v4647 = vunpack.c.h.b16 %v3413
        %v4648 = vunpack.c.l.b16 %v3414
        %v4649 = vunpack.c.h.b16 %v3414
        %v4650 = vunpack.c.l.b16 %v3415
        %v4651 = vunpack.c.h.b16 %v3415
        %v4652 = vunpack.c.l.b16 %v3416
        %v4653 = vunpack.c.h.b16 %v3416
        %v4654 = vunpack.c.l.b16 %v3417
        %v4655 = vunpack.c.h.b16 %v3417
        %v4656 = vunpack.c.l.b16 %v3418
        %v4657 = vunpack.c.h.b16 %v3418
        %v4658 = vunpack.c.l.b16 %v3419
        %v4659 = vunpack.c.h.b16 %v3419
        %v4660 = vunpack.c.l.b16 %v3420
        %v4661 = vunpack.c.h.b16 %v3420
        %v4662 = vunpack.c.l.b16 %v3421
        %v4663 = vunpack.c.h.b16 %v3421
        %v4664 = vunpack.c.l.b16 %v3422
        %v4665 = vunpack.c.h.b16 %v3422
        %v4666 = vunpack.c.l.b16 %v3423
        %v4667 = vunpack.c.h.b16 %v3423
        %v4668 = vunpack.c.l.b16 %v3424
        %v4669 = vunpack.c.h.b16 %v3424
        %v4670 = vunpack.c.l.b16 %v3425
        %v4671 = vunpack.c.h.b16 %v3425
        %v4672 = vunpack.c.l.b16 %v3426
        %v4673 = vunpack.c.h.b16 %v3426
        %v4674 = vunpack.c.l.b16 %v3427
        %v4675 = vunpack.c.h.b16 %v3427
        %v4676 = vunpack.c.l.b16 %v3428
        %v4677 = vunpack.c.h.b16 %v3428
        %v4678 = vunpack.c.l.b16 %v3429
        %v4679 = vunpack.c.h.b16 %v3429
        %v4680 = vunpack.c.l.b16 %v3430
        %v4681 = vunpack.c.h.b16 %v3430
        %v4682 = vunpack.c.l.b16 %v3431
        %v4683 = vunpack.c.h.b16 %v3431
        %v4684 = vunpack.c.l.b16 %v3432
        %v4685 = vunpack.c.h.b16 %v3432
        %v4686 = vunpack.c.l.b16 %v3433
        %v4687 = vunpack.c.h.b16 %v3433
        %v4688 = vunpack.c.l.b16 %v3434
        %v4689 = vunpack.c.h.b16 %v3434
        %v4690 = vunpack.c.l.b16 %v3435
        %v4691 = vunpack.c.h.b16 %v3435
        %v4692 = vunpack.c.l.b16 %v3436
        %v4693 = vunpack.c.h.b16 %v3436
        %v4694 = vunpack.c.l.b16 %v3437
        %v4695 = vunpack.c.h.b16 %v3437
        %v4696 = vunpack.c.l.b16 %v3438
        %v4697 = vunpack.c.h.b16 %v3438
        %v4698 = vunpack.c.l.b16 %v3439
        %v4699 = vunpack.c.h.b16 %v3439
        %v4700 = vunpack.c.l.b16 %v3440
        %v4701 = vunpack.c.h.b16 %v3440
        %v4702 = vunpack.c.l.b16 %v3441
        %v4703 = vunpack.c.h.b16 %v3441
        %v4704 = vunpack.c.l.b16 %v3442
        %v4705 = vunpack.c.h.b16 %v3442
        %v4706 = vunpack.c.l.b16 %v3443
        %v4707 = vunpack.c.h.b16 %v3443
        %v4708 = vunpack.c.l.b16 %v3444
        %v4709 = vunpack.c.h.b16 %v3444
        %v4710 = vunpack.c.l.b16 %v3445
        %v4711 = vunpack.c.h.b16 %v3445
        %v4712 = vunpack.c.l.b16 %v3446
        %v4713 = vunpack.c.h.b16 %v3446
        %v4714 = vunpack.c.l.b16 %v3447
        %v4715 = vunpack.c.h.b16 %v3447
        %v4716 = vunpack.c.l.b16 %v3448
        %v4717 = vunpack.c.h.b16 %v3448
        %v4718 = vunpack.c.l.b16 %v3449
        %v4719 = vunpack.c.h.b16 %v3449
        %v4720 = vunpack.c.l.b16 %v3450
        %v4721 = vunpack.c.h.b16 %v3450
        %v4722 = vunpack.c.l.b16 %v3451
        %v4723 = vunpack.c.h.b16 %v3451
        %v4724 = vunpack.c.l.b16 %v3452
        %v4725 = vunpack.c.h.b16 %v3452
        %v4726 = vunpack.c.l.b16 %v3453
        %v4727 = vunpack.c.h.b16 %v3453
        %v4728 = vunpack.c.l.b16 %v3454
        %v4729 = vunpack.c.h.b16 %v3454
        %v4730 = vunpack.c.l.b16 %v3455
        %v4731 = vunpack.c.h.b16 %v3455
        %v4732 = vunpack.c.l.b16 %v3456
        %v4733 = vunpack.c.h.b16 %v3456
        %v4734 = vunpack.c.l.b16 %v3457
        %v4735 = vunpack.c.h.b16 %v3457
        %v4736 = vunpack.c.l.b16 %v3458
        %v4737 = vunpack.c.h.b16 %v3458
        %v4738 = vunpack.c.l.b16 %v3459
        %v4739 = vunpack.c.h.b16 %v3459
        %v4740 = vunpack.c.l.b16 %v3460
        %v4741 = vunpack.c.h.b16 %v3460
        %v4742 = vunpack.c.l.b16 %v3461
        %v4743 = vunpack.c.h.b16 %v3461
        %v4744 = vunpack.c.l.b16 %v3462
        %v4745 = vunpack.c.h.b16 %v3462
        %v4746 = vunpack.c.l.b16 %v3463
        %v4747 = vunpack.c.h.b16 %v3463
        %v4748 = vunpack.c.l.b16 %v3464
        %v4749 = vunpack.c.h.b16 %v3464
        %v4750 = vunpack.c.l.b16 %v3465
        %v4751 = vunpack.c.h.b16 %v3465
        %v4752 = vunpack.c.l.b16 %v3466
        %v4753 = vunpack.c.h.b16 %v3466
        %v4754 = vunpack.c.l.b16 %v3467
        %v4755 = vunpack.c.h.b16 %v3467
        %v4756 = vunpack.c.l.b16 %v3468
        %v4757 = vunpack.c.h.b16 %v3468
        %v4758 = vunpack.c.l.b16 %v3469
        %v4759 = vunpack.c.h.b16 %v3469
        %v4760 = vunpack.c.l.b16 %v3470
        %v4761 = vunpack.c.h.b16 %v3470
        %v4762 = vunpack.c.l.b16 %v3471
        %v4763 = vunpack.c.h.b16 %v3471
        %v4764 = vunpack.c.l.b16 %v3472
        %v4765 = vunpack.c.h.b16 %v3472
        %v4766 = vunpack.c.l.b16 %v3473
        %v4767 = vunpack.c.h.b16 %v3473
        %v4768 = vunpack.c.l.b16 %v3474
        %v4769 = vunpack.c.h.b16 %v3474
        %v4770 = vunpack.c.l.b16 %v3475
        %v4771 = vunpack.c.h.b16 %v3475
        %v4772 = vunpack.c.l.b16 %v3476
        %v4773 = vunpack.c.h.b16 %v3476
        %v4774 = vunpack.c.l.b16 %v3477
        %v4775 = vunpack.c.h.b16 %v3477
        %v4776 = vunpack.c.l.b16 %v3478
        %v4777 = vunpack.c.h.b16 %v3478
        %v4778 = vunpack.c.l.b16 %v3479
        %v4779 = vunpack.c.h.b16 %v3479
        %v4780 = vunpack.c.l.b16 %v3480
        %v4781 = vunpack.c.h.b16 %v3480
        %v4782 = vunpack.c.l.b16 %v3481
        %v4783 = vunpack.c.h.b16 %v3481
        %v4784 = vunpack.c.l.b16 %v3482
        %v4785 = vunpack.c.h.b16 %v3482
        %v4786 = vunpack.c.l.b16 %v3483
        %v4787 = vunpack.c.h.b16 %v3483
        %v4788 = vunpack.c.l.b16 %v3484
        %v4789 = vunpack.c.h.b16 %v3484
        %v4790 = vunpack.c.l.b16 %v3485
        %v4791 = vunpack.c.h.b16 %v3485
        %v4792 = vunpack.c.l.b16 %v3486
        %v4793 = vunpack.c.h.b16 %v3486
        %v4794 = vunpack.c.l.b16 %v3487
        %v4795 = vunpack.c.h.b16 %v3487
        %v4796 = vunpack.c.l.b16 %v3488
        %v4797 = vunpack.c.h.b16 %v3488
        %v4798 = vunpack.c.l.b16 %v3489
        %v4799 = vunpack.c.h.b16 %v3489
        %v4800 = vunpack.c.l.b16 %v3490
        %v4801 = vunpack.c.h.b16 %v3490
        %v4802 = vunpack.c.l.b16 %v3491
        %v4803 = vunpack.c.h.b16 %v3491
        %v4804 = vunpack.c.l.b16 %v3492
        %v4805 = vunpack.c.h.b16 %v3492
        %v4806 = vunpack.c.l.b16 %v3493
        %v4807 = vunpack.c.h.b16 %v3493
        %v4808 = vunpack.c.l.b16 %v3494
        %v4809 = vunpack.c.h.b16 %v3494
        %v4810 = vunpack.c.l.b16 %v3495
        %v4811 = vunpack.c.h.b16 %v3495
        %v4812 = vunpack.c.l.b16 %v3496
        %v4813 = vunpack.c.h.b16 %v3496
        %v4814 = vunpack.c.l.b16 %v3497
        %v4815 = vunpack.c.h.b16 %v3497
        %v4816 = vunpack.c.l.b16 %v3498
        %v4817 = vunpack.c.h.b16 %v3498
        %v4818 = vunpack.c.l.b16 %v3499
        %v4819 = vunpack.c.h.b16 %v3499
        %v4820 = vunpack.c.l.b16 %v3500
        %v4821 = vunpack.c.h.b16 %v3500
        %v4822 = vunpack.c.l.b16 %v3501
        %v4823 = vunpack.c.h.b16 %v3501
        %v4824 = vunpack.c.l.b16 %v3502
        %v4825 = vunpack.c.h.b16 %v3502
        %v4826 = vunpack.c.l.b16 %v3503
        %v4827 = vunpack.c.h.b16 %v3503
        %v4828 = vunpack.c.l.b16 %v3504
        %v4829 = vunpack.c.h.b16 %v3504
        %v4830 = vunpack.c.l.b16 %v3505
        %v4831 = vunpack.c.h.b16 %v3505
        %v4832 = vunpack.c.l.b16 %v3506
        %v4833 = vunpack.c.h.b16 %v3506
        %v4834 = vunpack.c.l.b16 %v3507
        %v4835 = vunpack.c.h.b16 %v3507
        %v4836 = vunpack.c.l.b16 %v3508
        %v4837 = vunpack.c.h.b16 %v3508
        %v4838 = vunpack.c.l.b16 %v3509
        %v4839 = vunpack.c.h.b16 %v3509
        %v4840 = vunpack.c.l.b16 %v3510
        %v4841 = vunpack.c.h.b16 %v3510
        %v4842 = vunpack.c.l.b16 %v3511
        %v4843 = vunpack.c.h.b16 %v3511
        %v4844 = vunpack.c.l.b16 %v3512
        %v4845 = vunpack.c.h.b16 %v3512
        %v4846 = vunpack.c.l.b16 %v3513
        %v4847 = vunpack.c.h.b16 %v3513
        %v4848 = vunpack.c.l.b16 %v3514
        %v4849 = vunpack.c.h.b16 %v3514
        %v4850 = vunpack.c.l.b16 %v3515
        %v4851 = vunpack.c.h.b16 %v3515
        %v4852 = vunpack.c.l.b16 %v3516
        %v4853 = vunpack.c.h.b16 %v3516
        %v4854 = vunpack.c.l.b16 %v3517
        %v4855 = vunpack.c.h.b16 %v3517
        %v4856 = vunpack.c.l.b16 %v3518
        %v4857 = vunpack.c.h.b16 %v3518
        %v4858 = vunpack.c.l.b16 %v3519
        %v4859 = vunpack.c.h.b16 %v3519
        %v4860 = vunpack.c.l.b16 %v3520
        %v4861 = vunpack.c.h.b16 %v3520
        %v4862 = vunpack.c.l.b16 %v3521
        %v4863 = vunpack.c.h.b16 %v3521
        %v4864 = vunpack.c.l.b16 %v3522
        %v4865 = vunpack.c.h.b16 %v3522
        %v4866 = vunpack.c.l.b16 %v3523
        %v4867 = vunpack.c.h.b16 %v3523
        %v4868 = vunpack.c.l.b16 %v3524
        %v4869 = vunpack.c.h.b16 %v3524
        %v4870 = vunpack.c.l.b16 %v3525
        %v4871 = vunpack.c.h.b16 %v3525
        %v4872 = vunpack.c.l.b16 %v3526
        %v4873 = vunpack.c.h.b16 %v3526
        %v4874 = vunpack.c.l.b16 %v3527
        %v4875 = vunpack.c.h.b16 %v3527
        %v4876 = vunpack.c.l.b16 %v3528
        %v4877 = vunpack.c.h.b16 %v3528
        %v4878 = vunpack.c.l.b16 %v3529
        %v4879 = vunpack.c.h.b16 %v3529
        %v4880 = vunpack.c.l.b16 %v3530
        %v4881 = vunpack.c.h.b16 %v3530
        %v4882 = vunpack.c.l.b16 %v3531
        %v4883 = vunpack.c.h.b16 %v3531
        %v4884 = vunpack.c.l.b16 %v3532
        %v4885 = vunpack.c.h.b16 %v3532
        %v4886 = vunpack.c.l.b16 %v3533
        %v4887 = vunpack.c.h.b16 %v3533
        %v4888 = vunpack.c.l.b16 %v3534
        %v4889 = vunpack.c.h.b16 %v3534
        %v4890 = vunpack.c.l.b16 %v3535
        %v4891 = vunpack.c.h.b16 %v3535
        %v4892 = vunpack.c.l.b16 %v3536
        %v4893 = vunpack.c.h.b16 %v3536
        %v4894 = vunpack.c.l.b16 %v3537
        %v4895 = vunpack.c.h.b16 %v3537
        %v4896 = vunpack.c.l.b16 %v3538
        %v4897 = vunpack.c.h.b16 %v3538
        %v4898 = vunpack.c.l.b16 %v3539
        %v4899 = vunpack.c.h.b16 %v3539
        %v4900 = vunpack.c.l.b16 %v3540
        %v4901 = vunpack.c.h.b16 %v3540
        %v4902 = vunpack.c.l.b16 %v3541
        %v4903 = vunpack.c.h.b16 %v3541
        %v4904 = vunpack.c.l.b16 %v3542
        %v4905 = vunpack.c.h.b16 %v3542
        %v4906 = vunpack.c.l.b16 %v3543
        %v4907 = vunpack.c.h.b16 %v3543
        %v4908 = vunpack.c.l.b16 %v3544
        %v4909 = vunpack.c.h.b16 %v3544
        %v4910 = vunpack.c.l.b16 %v3545
        %v4911 = vunpack.c.h.b16 %v3545
        %v4912 = vunpack.c.l.b16 %v3546
        %v4913 = vunpack.c.h.b16 %v3546
        %v4914 = vunpack.c.l.b16 %v3547
        %v4915 = vunpack.c.h.b16 %v3547
        %v4916 = vunpack.c.l.b16 %v3548
        %v4917 = vunpack.c.h.b16 %v3548
        %v4918 = vunpack.c.l.b16 %v3549
        %v4919 = vunpack.c.h.b16 %v3549
        %v4920 = vunpack.c.l.b16 %v3550
        %v4921 = vunpack.c.h.b16 %v3550
        %v4922 = vunpack.c.l.b16 %v3551
        %v4923 = vunpack.c.h.b16 %v3551
        %v4924 = vunpack.c.l.b16 %v3552
        %v4925 = vunpack.c.h.b16 %v3552
        %v4926 = vunpack.c.l.b16 %v3553
        %v4927 = vunpack.c.h.b16 %v3553
        %v4928 = vunpack.c.l.b16 %v3554
        %v4929 = vunpack.c.h.b16 %v3554
        %v4930 = vunpack.c.l.b16 %v3555
        %v4931 = vunpack.c.h.b16 %v3555
        %v4932 = vunpack.c.l.b16 %v3556
        %v4933 = vunpack.c.h.b16 %v3556
        %v4934 = vunpack.c.l.b16 %v3557
        %v4935 = vunpack.c.h.b16 %v3557
        %v4936 = vunpack.c.l.b16 %v3558
        %v4937 = vunpack.c.h.b16 %v3558
        %v4938 = vunpack.c.l.b16 %v3559
        %v4939 = vunpack.c.h.b16 %v3559
        %v4940 = vunpack.c.l.b16 %v3560
        %v4941 = vunpack.c.h.b16 %v3560
        %v4942 = vunpack.c.l.b16 %v3561
        %v4943 = vunpack.c.h.b16 %v3561
        %v4944 = vunpack.c.l.b16 %v3562
        %v4945 = vunpack.c.h.b16 %v3562
        %v4946 = vunpack.c.l.b16 %v3563
        %v4947 = vunpack.c.h.b16 %v3563
        %v4948 = vunpack.c.l.b16 %v3564
        %v4949 = vunpack.c.h.b16 %v3564
        %v4950 = vunpack.c.l.b16 %v3565
        %v4951 = vunpack.c.h.b16 %v3565
        %v4952 = vunpack.c.l.b16 %v3566
        %v4953 = vunpack.c.h.b16 %v3566
        %v4954 = vunpack.c.l.b16 %v3567
        %v4955 = vunpack.c.h.b16 %v3567
        %v4956 = vunpack.c.l.b16 %v3568
        %v4957 = vunpack.c.h.b16 %v3568
        %v4958 = vunpack.c.l.b16 %v3569
        %v4959 = vunpack.c.h.b16 %v3569
        %v4960 = vunpack.c.l.b16 %v3570
        %v4961 = vunpack.c.h.b16 %v3570
        %v4962 = vunpack.c.l.b16 %v3571
        %v4963 = vunpack.c.h.b16 %v3571
        %v4964 = vunpack.c.l.b16 %v3572
        %v4965 = vunpack.c.h.b16 %v3572
        %v4966 = vunpack.c.l.b16 %v3573
        %v4967 = vunpack.c.h.b16 %v3573
        %v4968 = vunpack.c.l.b16 %v3574
        %v4969 = vunpack.c.h.b16 %v3574
        %v4970 = vunpack.c.l.b16 %v3575
        %v4971 = vunpack.c.h.b16 %v3575
        %v4972 = vunpack.c.l.b16 %v3576
        %v4973 = vunpack.c.h.b16 %v3576
        %v4974 = vunpack.c.l.b16 %v3577
        %v4975 = vunpack.c.h.b16 %v3577
        %v4976 = vunpack.c.l.b16 %v3578
        %v4977 = vunpack.c.h.b16 %v3578
        %v4978 = vunpack.c.l.b16 %v3579
        %v4979 = vunpack.c.h.b16 %v3579
        %v4980 = vunpack.c.l.b16 %v3580
        %v4981 = vunpack.c.h.b16 %v3580
        %v4982 = vunpack.c.l.b16 %v3581
        %v4983 = vunpack.c.h.b16 %v3581
        %v4984 = vunpack.c.l.b16 %v3582
        %v4985 = vunpack.c.h.b16 %v3582
        %v4986 = vunpack.c.l.b16 %v3583
        %v4987 = vunpack.c.h.b16 %v3583
        %v4988 = vunpack.c.l.b16 %v3584
        %v4989 = vunpack.c.h.b16 %v3584
        %v4990 = vunpack.c.l.b16 %v3585
        %v4991 = vunpack.c.h.b16 %v3585
        %v4992 = vunpack.c.l.b16 %v3586
        %v4993 = vunpack.c.h.b16 %v3586
        %v4994 = vunpack.c.l.b16 %v3587
        %v4995 = vunpack.c.h.b16 %v3587
        %v4996 = vunpack.c.l.b16 %v3588
        %v4997 = vunpack.c.h.b16 %v3588
        %v4998 = vunpack.c.l.b16 %v3589
        %v4999 = vunpack.c.h.b16 %v3589
        %v5000 = vunpack.c.l.b16 %v3590
        %v5001 = vunpack.c.h.b16 %v3590
        %v5002 = vunpack.c.l.b16 %v3591
        %v5003 = vunpack.c.h.b16 %v3591
        %v5004 = vunpack.c.l.b16 %v3592
        %v5005 = vunpack.c.h.b16 %v3592
        %v5006 = vunpack.c.l.b16 %v3593
        %v5007 = vunpack.c.h.b16 %v3593
        %v5008 = vunpack.c.l.b16 %v3594
        %v5009 = vunpack.c.h.b16 %v3594
        %v5010 = vunpack.c.l.b16 %v3595
        %v5011 = vunpack.c.h.b16 %v3595
        %v5012 = vunpack.c.l.b16 %v3596
        %v5013 = vunpack.c.h.b16 %v3596
        %v5014 = vunpack.c.l.b16 %v3597
        %v5015 = vunpack.c.h.b16 %v3597
        %v5016 = vunpack.c.l.b16 %v3598
        %v5017 = vunpack.c.h.b16 %v3598
        %v5018 = vunpack.c.l.b16 %v3599
        %v5019 = vunpack.c.h.b16 %v3599
        %v5020 = vunpack.c.l.b16 %v3600
        %v5021 = vunpack.c.h.b16 %v3600
        %v5022 = vunpack.c.l.b16 %v3601
        %v5023 = vunpack.c.h.b16 %v3601
        %v5024 = vunpack.c.l.b16 %v3602
        %v5025 = vunpack.c.h.b16 %v3602
        %v5026 = vunpack.c.l.b16 %v3603
        %v5027 = vunpack.c.h.b16 %v3603
        %v5028 = vunpack.c.l.b16 %v3604
        %v5029 = vunpack.c.h.b16 %v3604
        %v5030 = vunpack.c.l.b16 %v3605
        %v5031 = vunpack.c.h.b16 %v3605
        %v5032 = vunpack.c.l.b16 %v3606
        %v5033 = vunpack.c.h.b16 %v3606
        %v5034 = vunpack.c.l.b16 %v3607
        %v5035 = vunpack.c.h.b16 %v3607
        %v5036 = vunpack.c.l.b16 %v3608
        %v5037 = vunpack.c.h.b16 %v3608
        %v5038 = vunpack.c.l.b16 %v3609
        %v5039 = vunpack.c.h.b16 %v3609
        %v5040 = vunpack.c.l.b16 %v3610
        %v5041 = vunpack.c.h.b16 %v3610
        %v5042 = vunpack.c.l.b16 %v3611
        %v5043 = vunpack.c.h.b16 %v3611
        %v5044 = vunpack.c.l.b16 %v3612
        %v5045 = vunpack.c.h.b16 %v3612
        %v5046 = vunpack.c.l.b16 %v3613
        %v5047 = vunpack.c.h.b16 %v3613
        %v5048 = vunpack.c.l.b16 %v3614
        %v5049 = vunpack.c.h.b16 %v3614
        %v5050 = vunpack.c.l.b16 %v3615
        %v5051 = vunpack.c.h.b16 %v3615
        %v5052 = vunpack.c.l.b16 %v3616
        %v5053 = vunpack.c.h.b16 %v3616
        %v5054 = vunpack.c.l.b16 %v3617
        %v5055 = vunpack.c.h.b16 %v3617
        %v5056 = vunpack.c.l.b16 %v3618
        %v5057 = vunpack.c.h.b16 %v3618
        %v5058 = vunpack.c.l.b16 %v3619
        %v5059 = vunpack.c.h.b16 %v3619
        %v5060 = vunpack.c.l.b16 %v3620
        %v5061 = vunpack.c.h.b16 %v3620
        %v5062 = vunpack.c.l.b16 %v3621
        %v5063 = vunpack.c.h.b16 %v3621
        %v5064 = vunpack.c.l.b16 %v3622
        %v5065 = vunpack.c.h.b16 %v3622
        %v5066 = vunpack.c.l.b16 %v3623
        %v5067 = vunpack.c.h.b16 %v3623
        %v5068 = vunpack.c.l.b16 %v3624
        %v5069 = vunpack.c.h.b16 %v3624
        %v5070 = vunpack.c.l.b16 %v3625
        %v5071 = vunpack.c.h.b16 %v3625
        %v5072 = vunpack.c.l.b16 %v3626
        %v5073 = vunpack.c.h.b16 %v3626
        %v5074 = vunpack.c.l.b16 %v3627
        %v5075 = vunpack.c.h.b16 %v3627
        %v5076 = vunpack.c.l.b16 %v3628
        %v5077 = vunpack.c.h.b16 %v3628
        %v5078 = vunpack.c.l.b16 %v3629
        %v5079 = vunpack.c.h.b16 %v3629
        %v5080 = vunpack.c.l.b16 %v3630
        %v5081 = vunpack.c.h.b16 %v3630
        %v5082 = vunpack.c.l.b16 %v3631
        %v5083 = vunpack.c.h.b16 %v3631
        %v5084 = vunpack.c.l.b16 %v3632
        %v5085 = vunpack.c.h.b16 %v3632
        %v5086 = vunpack.c.l.b16 %v3633
        %v5087 = vunpack.c.h.b16 %v3633
        %v5088 = vunpack.c.l.b16 %v3634
        %v5089 = vunpack.c.h.b16 %v3634
        %v5090 = vunpack.c.l.b16 %v3635
        %v5091 = vunpack.c.h.b16 %v3635
        %v5092 = vunpack.c.l.b16 %v3636
        %v5093 = vunpack.c.h.b16 %v3636
        %v5094 = vunpack.c.l.b16 %v3637
        %v5095 = vunpack.c.h.b16 %v3637
        %v5096 = vunpack.c.l.b16 %v3638
        %v5097 = vunpack.c.h.b16 %v3638
        %v5098 = vunpack.c.l.b16 %v3639
        %v5099 = vunpack.c.h.b16 %v3639
        %v5100 = vunpack.c.l.b16 %v3640
        %v5101 = vunpack.c.h.b16 %v3640
        %v5102 = vunpack.c.l.b16 %v3641
        %v5103 = vunpack.c.h.b16 %v3641
        %v5104 = vunpack.c.l.b16 %v3642
        %v5105 = vunpack.c.h.b16 %v3642
        %v5106 = vunpack.c.l.b16 %v3643
        %v5107 = vunpack.c.h.b16 %v3643
        %v5108 = vunpack.c.l.b16 %v3644
        %v5109 = vunpack.c.h.b16 %v3644
        %v5110 = vunpack.c.l.b16 %v3645
        %v5111 = vunpack.c.h.b16 %v3645
        %v5112 = vunpack.c.l.b16 %v3646
        %v5113 = vunpack.c.h.b16 %v3646
        %v5114 = vunpack.c.l.b16 %v3647
        %v5115 = vunpack.c.h.b16 %v3647
        %v5116 = vunpack.c.l.b16 %v3648
        %v5117 = vunpack.c.h.b16 %v3648
        %v5118 = vunpack.c.l.b16 %v3649
        %v5119 = vunpack.c.h.b16 %v3649
        %v5120 = vunpack.c.l.b16 %v3650
        %v5121 = vunpack.c.h.b16 %v3650
        %v5122 = vunpack.c.l.b16 %v3651
        %v5123 = vunpack.c.h.b16 %v3651
        %v5124 = vunpack.c.l.b16 %v3652
        %v5125 = vunpack.c.h.b16 %v3652
        %v5126 = vunpack.c.l.b16 %v3653
        %v5127 = vunpack.c.h.b16 %v3653
        %v5128 = vunpack.c.l.b16 %v3654
        %v5129 = vunpack.c.h.b16 %v3654
        %v5130 = vunpack.c.l.b16 %v3655
        %v5131 = vunpack.c.h.b16 %v3655
        %v5132 = vunpack.c.l.b16 %v3656
        %v5133 = vunpack.c.h.b16 %v3656
        %v5134 = vunpack.c.l.b16 %v3657
        %v5135 = vunpack.c.h.b16 %v3657
        %v5136 = vunpack.c.l.b16 %v3658
        %v5137 = vunpack.c.h.b16 %v3658
        %v5138 = vunpack.c.l.b16 %v3659
        %v5139 = vunpack.c.h.b16 %v3659
        %v5140 = vunpack.c.l.b16 %v3660
        %v5141 = vunpack.c.h.b16 %v3660
        %v5142 = vunpack.c.l.b16 %v3661
        %v5143 = vunpack.c.h.b16 %v3661
        %v5144 = vunpack.c.l.b16 %v3662
        %v5145 = vunpack.c.h.b16 %v3662
        %v5146 = vunpack.c.l.b16 %v3663
        %v5147 = vunpack.c.h.b16 %v3663
        %v5148 = vunpack.c.l.b16 %v3664
        %v5149 = vunpack.c.h.b16 %v3664
        %v5150 = vunpack.c.l.b16 %v3665
        %v5151 = vunpack.c.h.b16 %v3665
        %v5152 = vunpack.c.l.b16 %v3666
        %v5153 = vunpack.c.h.b16 %v3666
        %v5154 = vunpack.c.l.b16 %v3667
        %v5155 = vunpack.c.h.b16 %v3667
        %v5156 = vunpack.c.l.b16 %v3668
        %v5157 = vunpack.c.h.b16 %v3668
        %v5158 = vunpack.c.l.b16 %v3669
        %v5159 = vunpack.c.h.b16 %v3669
        %v5160 = vunpack.c.l.b16 %v3670
        %v5161 = vunpack.c.h.b16 %v3670
        %v5162 = vunpack.c.l.b16 %v3671
        %v5163 = vunpack.c.h.b16 %v3671
        %v5164 = vunpack.c.l.b16 %v3672
        %v5165 = vunpack.c.h.b16 %v3672
        %v5166 = vunpack.c.l.b16 %v3673
        %v5167 = vunpack.c.h.b16 %v3673
        %v5168 = vunpack.c.l.b16 %v3674
        %v5169 = vunpack.c.h.b16 %v3674
        %v5170 = vunpack.c.l.b16 %v3675
        %v5171 = vunpack.c.h.b16 %v3675
        %v5172 = vunpack.c.l.b16 %v3676
        %v5173 = vunpack.c.h.b16 %v3676
        %v5174 = vunpack.c.l.b16 %v3677
        %v5175 = vunpack.c.h.b16 %v3677
        %v5176 = vunpack.c.l.b16 %v3678
        %v5177 = vunpack.c.h.b16 %v3678
        %v5178 = vunpack.c.l.b16 %v3679
        %v5179 = vunpack.c.h.b16 %v3679
        %v5180 = vunpack.c.l.b16 %v3680
        %v5181 = vunpack.c.h.b16 %v3680
        %v5182 = vunpack.c.l.b16 %v3681
        %v5183 = vunpack.c.h.b16 %v3681
        %v5184 = vunpack.c.l.b16 %v3682
        %v5185 = vunpack.c.h.b16 %v3682
        %v5186 = vunpack.c.l.b16 %v3683
        %v5187 = vunpack.c.h.b16 %v3683
        %v5188 = vunpack.c.l.b16 %v3684
        %v5189 = vunpack.c.h.b16 %v3684
        %v5190 = vunpack.c.l.b16 %v3685
        %v5191 = vunpack.c.h.b16 %v3685
        %v5192 = vunpack.c.l.b16 %v3686
        %v5193 = vunpack.c.h.b16 %v3686
        %v5194 = vunpack.c.l.b16 %v3687
        %v5195 = vunpack.c.h.b16 %v3687
        %v5196 = vunpack.c.l.b16 %v3688
        %v5197 = vunpack.c.h.b16 %v3688
        %v5198 = vunpack.c.l.b16 %v3689
        %v5199 = vunpack.c.h.b16 %v3689
        %v5200 = vunpack.c.l.b16 %v3690
        %v5201 = vunpack.c.h.b16 %v3690
        %v5202 = vunpack.c.l.b16 %v3691
        %v5203 = vunpack.c.h.b16 %v3691
        %v5204 = vunpack.c.l.b16 %v3692
        %v5205 = vunpack.c.h.b16 %v3692
        %v5206 = vunpack.c.l.b16 %v3693
        %v5207 = vunpack.c.h.b16 %v3693
        %v5208 = vunpack.c.l.b16 %v3694
        %v5209 = vunpack.c.h.b16 %v3694
        %v5210 = vunpack.c.l.b16 %v3695
        %v5211 = vunpack.c.h.b16 %v3695
        %v5212 = vunpack.c.l.b16 %v3696
        %v5213 = vunpack.c.h.b16 %v3696
        %v5214 = vunpack.c.l.b16 %v3697
        %v5215 = vunpack.c.h.b16 %v3697
        %v5216 = vunpack.c.l.b16 %v3698
        %v5217 = vunpack.c.h.b16 %v3698
        %v5218 = vunpack.c.l.b16 %v3699
        %v5219 = vunpack.c.h.b16 %v3699
        %v5220 = vunpack.c.l.b16 %v3700
        %v5221 = vunpack.c.h.b16 %v3700
        %v5222 = vunpack.c.l.b16 %v3701
        %v5223 = vunpack.c.h.b16 %v3701
        %v5224 = vunpack.c.l.b16 %v3702
        %v5225 = vunpack.c.h.b16 %v3702
        %v5226 = vunpack.c.l.b16 %v3703
        %v5227 = vunpack.c.h.b16 %v3703
        %v5228 = vunpack.c.l.b16 %v3704
        %v5229 = vunpack.c.h.b16 %v3704
        %v5230 = vunpack.c.l.b16 %v3705
        %v5231 = vunpack.c.h.b16 %v3705
        %v5232 = vunpack.c.l.b16 %v3706
        %v5233 = vunpack.c.h.b16 %v3706
        %v5234 = vunpack.c.l.b16 %v3707
        %v5235 = vunpack.c.h.b16 %v3707
        %v5236 = vunpack.c.l.b16 %v3708
        %v5237 = vunpack.c.h.b16 %v3708
        %v5238 = vunpack.c.l.b16 %v3709
        %v5239 = vunpack.c.h.b16 %v3709
        %v5240 = vunpack.c.l.b16 %v3710
        %v5241 = vunpack.c.h.b16 %v3710
        %v5242 = vunpack.c.l.b16 %v3711
        %v5243 = vunpack.c.h.b16 %v3711
        %v5244 = vunpack.c.l.b16 %v3712
        %v5245 = vunpack.c.h.b16 %v3712
        %v5246 = vunpack.c.l.b16 %v3713
        %v5247 = vunpack.c.h.b16 %v3713
        %v5248 = vunpack.c.l.b16 %v3714
        %v5249 = vunpack.c.h.b16 %v3714
        %v5250 = vunpack.c.l.b16 %v3715
        %v5251 = vunpack.c.h.b16 %v3715
        %v5252 = vunpack.c.l.b16 %v3716
        %v5253 = vunpack.c.h.b16 %v3716
        %v5254 = vunpack.c.l.b16 %v3717
        %v5255 = vunpack.c.h.b16 %v3717
        %v5256 = vunpack.c.l.b16 %v3718
        %v5257 = vunpack.c.h.b16 %v3718
        %v5258 = vunpack.c.l.b16 %v3719
        %v5259 = vunpack.c.h.b16 %v3719
        %v5260 = vunpack.c.l.b16 %v3720
        %v5261 = vunpack.c.h.b16 %v3720
        %v5262 = vunpack.c.l.b16 %v3721
        %v5263 = vunpack.c.h.b16 %v3721
        %v5264 = vunpack.c.l.b16 %v3722
        %v5265 = vunpack.c.h.b16 %v3722
        %v5266 = vunpack.c.l.b16 %v3723
        %v5267 = vunpack.c.h.b16 %v3723
        %v5268 = vunpack.c.l.b16 %v3724
        %v5269 = vunpack.c.h.b16 %v3724
        %v5270 = vunpack.c.l.b16 %v3725
        %v5271 = vunpack.c.h.b16 %v3725
        %v5272 = vunpack.c.l.b16 %v3726
        %v5273 = vunpack.c.h.b16 %v3726
        %v5274 = vunpack.c.l.b16 %v3727
        %v5275 = vunpack.c.h.b16 %v3727
        %v5276 = vunpack.c.l.b16 %v3728
        %v5277 = vunpack.c.h.b16 %v3728
        %v5278 = vunpack.c.l.b16 %v3729
        %v5279 = vunpack.c.h.b16 %v3729
        %v5280 = vunpack.c.l.b16 %v3730
        %v5281 = vunpack.c.h.b16 %v3730
        %v5282 = vunpack.c.l.b16 %v3731
        %v5283 = vunpack.c.h.b16 %v3731
        %v5284 = vunpack.c.l.b16 %v3732
        %v5285 = vunpack.c.h.b16 %v3732
        %v5286 = vunpack.c.l.b16 %v3733
        %v5287 = vunpack.c.h.b16 %v3733
        %v5288 = vunpack.c.l.b16 %v3734
        %v5289 = vunpack.c.h.b16 %v3734
        %v5290 = vunpack.c.l.b16 %v3735
        %v5291 = vunpack.c.h.b16 %v3735
        %v5292 = vunpack.c.l.b16 %v3736
        %v5293 = vunpack.c.h.b16 %v3736
        %v5294 = vunpack.c.l.b16 %v3737
        %v5295 = vunpack.c.h.b16 %v3737
        %v5296 = vunpack.c.l.b16 %v3738
        %v5297 = vunpack.c.h.b16 %v3738
        %v5298 = vunpack.c.l.b16 %v3739
        %v5299 = vunpack.c.h.b16 %v3739
        %v5300 = vunpack.c.l.b16 %v3740
        %v5301 = vunpack.c.h.b16 %v3740
        %v5302 = vunpack.c.l.b16 %v3741
        %v5303 = vunpack.c.h.b16 %v3741
        %v5304 = vunpack.c.l.b16 %v3742
        %v5305 = vunpack.c.h.b16 %v3742
        %v5306 = vunpack.c.l.b16 %v3743
        %v5307 = vunpack.c.h.b16 %v3743
        %v5308 = vunpack.c.l.b16 %v3744
        %v5309 = vunpack.c.h.b16 %v3744
        %v5310 = vunpack.c.l.b16 %v3745
        %v5311 = vunpack.c.h.b16 %v3745
        %v5312 = vunpack.c.l.b16 %v3746
        %v5313 = vunpack.c.h.b16 %v3746
        %v5314 = vunpack.c.l.b16 %v3747
        %v5315 = vunpack.c.h.b16 %v3747
        %v5316 = vunpack.c.l.b16 %v3748
        %v5317 = vunpack.c.h.b16 %v3748
        %v5318 = vunpack.c.l.b16 %v3749
        %v5319 = vunpack.c.h.b16 %v3749
        %v5320 = vunpack.c.l.b16 %v3750
        %v5321 = vunpack.c.h.b16 %v3750
        %v5322 = vunpack.c.l.b16 %v3751
        %v5323 = vunpack.c.h.b16 %v3751
        %v5324 = vunpack.c.l.b16 %v3752
        %v5325 = vunpack.c.h.b16 %v3752
        %v5326 = vunpack.c.l.b16 %v3753
        %v5327 = vunpack.c.h.b16 %v3753
        %v5328 = vunpack.c.l.b16 %v3754
        %v5329 = vunpack.c.h.b16 %v3754
        %v5330 = vunpack.c.l.b16 %v3755
        %v5331 = vunpack.c.h.b16 %v3755
        %v5332 = vunpack.c.l.b16 %v3756
        %v5333 = vunpack.c.h.b16 %v3756
        %v5334 = vunpack.c.l.b16 %v3757
        %v5335 = vunpack.c.h.b16 %v3757
        %v5336 = vunpack.c.l.b16 %v3758
        %v5337 = vunpack.c.h.b16 %v3758
        %v5338 = vunpack.c.l.b16 %v3759
        %v5339 = vunpack.c.h.b16 %v3759
        %v5340 = vunpack.c.l.b16 %v3760
        %v5341 = vunpack.c.h.b16 %v3760
        %v5342 = vunpack.c.l.b16 %v3761
        %v5343 = vunpack.c.h.b16 %v3761
        %v5344 = vunpack.c.l.b16 %v3762
        %v5345 = vunpack.c.h.b16 %v3762
        %v5346 = vunpack.c.l.b16 %v3763
        %v5347 = vunpack.c.h.b16 %v3763
        %v5348 = vunpack.c.l.b16 %v3764
        %v5349 = vunpack.c.h.b16 %v3764
        %v5350 = vunpack.c.l.b16 %v3765
        %v5351 = vunpack.c.h.b16 %v3765
        %v5352 = vunpack.c.l.b16 %v3766
        %v5353 = vunpack.c.h.b16 %v3766
        %v5354 = vunpack.c.l.b16 %v3767
        %v5355 = vunpack.c.h.b16 %v3767
        %v5356 = vunpack.c.l.b16 %v3768
        %v5357 = vunpack.c.h.b16 %v3768
        %v5358 = vunpack.c.l.b16 %v3769
        %v5359 = vunpack.c.h.b16 %v3769
        %v5360 = vunpack.c.l.b16 %v3770
        %v5361 = vunpack.c.h.b16 %v3770
        %v5362 = vunpack.c.l.b16 %v3771
        %v5363 = vunpack.c.h.b16 %v3771
        %v5364 = vunpack.c.l.b16 %v3772
        %v5365 = vunpack.c.h.b16 %v3772
        %v5366 = vunpack.c.l.b16 %v3773
        %v5367 = vunpack.c.h.b16 %v3773
        %v5368 = vunpack.c.l.b16 %v3774
        %v5369 = vunpack.c.h.b16 %v3774
        %v5370 = vunpack.c.l.b16 %v3775
        %v5371 = vunpack.c.h.b16 %v3775
        %v5372 = vunpack.c.l.b16 %v3776
        %v5373 = vunpack.c.h.b16 %v3776
        %v5374 = vunpack.c.l.b16 %v3777
        %v5375 = vunpack.c.h.b16 %v3777
        %v5376 = vunpack.c.l.b16 %v3778
        %v5377 = vunpack.c.h.b16 %v3778
        %v5378 = vunpack.c.l.b16 %v3779
        %v5379 = vunpack.c.h.b16 %v3779
        %v5380 = vunpack.c.l.b16 %v3780
        %v5381 = vunpack.c.h.b16 %v3780
        %v5382 = vunpack.c.l.b16 %v3781
        %v5383 = vunpack.c.h.b16 %v3781
        %v5384 = vunpack.c.l.b16 %v3782
        %v5385 = vunpack.c.h.b16 %v3782
        %v5386 = vunpack.c.l.b16 %v3783
        %v5387 = vunpack.c.h.b16 %v3783
        %v5388 = vunpack.c.l.b16 %v3784
        %v5389 = vunpack.c.h.b16 %v3784
        %v5390 = vunpack.c.l.b16 %v3785
        %v5391 = vunpack.c.h.b16 %v3785
        %v5392 = vunpack.c.l.b16 %v3786
        %v5393 = vunpack.c.h.b16 %v3786
        %v5394 = vunpack.c.l.b16 %v3787
        %v5395 = vunpack.c.h.b16 %v3787
        %v5396 = vunpack.c.l.b16 %v3788
        %v5397 = vunpack.c.h.b16 %v3788
        %v5398 = vunpack.c.l.b16 %v3789
        %v5399 = vunpack.c.h.b16 %v3789
        %v5400 = vunpack.c.l.b16 %v3790
        %v5401 = vunpack.c.h.b16 %v3790
        %v5402 = vunpack.c.l.b16 %v3791
        %v5403 = vunpack.c.h.b16 %v3791
        %v5404 = vunpack.c.l.b16 %v3792
        %v5405 = vunpack.c.h.b16 %v3792
        %v5406 = vunpack.c.l.b16 %v3793
        %v5407 = vunpack.c.h.b16 %v3793
        %v5408 = vunpack.c.l.b16 %v3794
        %v5409 = vunpack.c.h.b16 %v3794
        %v5410 = vunpack.c.l.b16 %v3795
        %v5411 = vunpack.c.h.b16 %v3795
        %v5412 = vunpack.c.l.b16 %v3796
        %v5413 = vunpack.c.h.b16 %v3796
        %v5414 = vunpack.c.l.b16 %v3797
        %v5415 = vunpack.c.h.b16 %v3797
        %v5416 = vunpack.c.l.b16 %v3798
        %v5417 = vunpack.c.h.b16 %v3798
        %v5418 = vunpack.c.l.b16 %v3799
        %v5419 = vunpack.c.h.b16 %v3799
        %v5420 = vunpack.c.l.b16 %v3800
        %v5421 = vunpack.c.h.b16 %v3800
        %v5422 = vunpack.c.l.b16 %v3801
        %v5423 = vunpack.c.h.b16 %v3801
        %v5424 = vunpack.c.l.b16 %v3802
        %v5425 = vunpack.c.h.b16 %v3802
        %v5426 = vunpack.c.l.b16 %v3803
        %v5427 = vunpack.c.h.b16 %v3803
        %v5428 = vunpack.c.l.b16 %v3804
        %v5429 = vunpack.c.h.b16 %v3804
        %v5430 = vunpack.c.l.b16 %v3805
        %v5431 = vunpack.c.h.b16 %v3805
        %v5432 = vunpack.c.l.b16 %v3806
        %v5433 = vunpack.c.h.b16 %v3806
        %v5434 = vunpack.c.l.b16 %v3807
        %v5435 = vunpack.c.h.b16 %v3807
        %v5436 = vunpack.c.l.b16 %v3808
        %v5437 = vunpack.c.h.b16 %v3808
        %v5438 = vunpack.c.l.b16 %v3809
        %v5439 = vunpack.c.h.b16 %v3809
        %v5440 = vunpack.c.l.b16 %v3810
        %v5441 = vunpack.c.h.b16 %v3810
        %v5442 = vunpack.c.l.b16 %v3811
        %v5443 = vunpack.c.h.b16 %v3811
        %v5444 = vunpack.c.l.b16 %v3812
        %v5445 = vunpack.c.h.b16 %v3812
        %v5446 = vunpack.c.l.b16 %v3813
        %v5447 = vunpack.c.h.b16 %v3813
        %v5448 = vunpack.c.l.b16 %v3814
        %v5449 = vunpack.c.h.b16 %v3814
        %v5450 = vunpack.c.l.b16 %v3815
        %v5451 = vunpack.c.h.b16 %v3815
        %v5452 = vunpack.c.l.b16 %v3816
        %v5453 = vunpack.c.h.b16 %v3816
        %v5454 = vunpack.c.l.b16 %v3817
        %v5455 = vunpack.c.h.b16 %v3817
        %v5456 = vunpack.c.l.b16 %v3818
        %v5457 = vunpack.c.h.b16 %v3818
        %v5458 = vunpack.c.l.b16 %v3819
        %v5459 = vunpack.c.h.b16 %v3819
        %v5460 = vunpack.c.l.b16 %v3820
        %v5461 = vunpack.c.h.b16 %v3820
        %v5462 = vunpack.c.l.b16 %v3821
        %v5463 = vunpack.c.h.b16 %v3821
        %v5464 = vunpack.c.l.b16 %v3822
        %v5465 = vunpack.c.h.b16 %v3822
        %v5466 = vunpack.c.l.b16 %v3823
        %v5467 = vunpack.c.h.b16 %v3823
        %v5468 = vunpack.c.l.b16 %v3824
        %v5469 = vunpack.c.h.b16 %v3824
        %v5470 = vunpack.c.l.b16 %v3825
        %v5471 = vunpack.c.h.b16 %v3825
        %v5472 = vunpack.c.l.b16 %v3826
        %v5473 = vunpack.c.h.b16 %v3826
        %v5474 = vunpack.c.l.b16 %v3827
        %v5475 = vunpack.c.h.b16 %v3827
        %v5476 = vunpack.c.l.b16 %v3828
        %v5477 = vunpack.c.h.b16 %v3828
        %v5478 = vunpack.c.l.b16 %v3829
        %v5479 = vunpack.c.h.b16 %v3829
        %v5480 = vunpack.c.l.b16 %v3830
        %v5481 = vunpack.c.h.b16 %v3830
        %v5482 = vunpack.c.l.b16 %v3831
        %v5483 = vunpack.c.h.b16 %v3831
        %v5484 = vunpack.c.l.b16 %v3832
        %v5485 = vunpack.c.h.b16 %v3832
        %v5486 = vunpack.c.l.b16 %v3833
        %v5487 = vunpack.c.h.b16 %v3833
        %v5488 = vunpack.c.l.b16 %v3834
        %v5489 = vunpack.c.h.b16 %v3834
        %v5490 = vunpack.c.l.b16 %v3835
        %v5491 = vunpack.c.h.b16 %v3835
        %v5492 = vunpack.c.l.b16 %v3836
        %v5493 = vunpack.c.h.b16 %v3836
        %v5494 = vunpack.c.l.b16 %v3837
        %v5495 = vunpack.c.h.b16 %v3837
        %v5496 = vunpack.c.l.b16 %v3838
        %v5497 = vunpack.c.h.b16 %v3838
        %v5498 = vunpack.c.l.b16 %v3839
        %v5499 = vunpack.c.h.b16 %v3839
        %v5500 = vunpack.c.l.b16 %v3840
        %v5501 = vunpack.c.h.b16 %v3840
        %v5502 = vunpack.c.l.b16 %v3841
        %v5503 = vunpack.c.h.b16 %v3841
        %v5504 = vunpack.c.l.b16 %v3842
        %v5505 = vunpack.c.h.b16 %v3842
        %v5506 = vunpack.c.l.b16 %v3843
        %v5507 = vunpack.c.h.b16 %v3843
        %v5508 = vunpack.c.l.b16 %v3844
        %v5509 = vunpack.c.h.b16 %v3844
        %v5510 = vunpack.c.l.b16 %v3845
        %v5511 = vunpack.c.h.b16 %v3845
        %v5512 = vunpack.c.l.b16 %v3846
        %v5513 = vunpack.c.h.b16 %v3846
        %v5514 = vunpack.c.l.b16 %v3847
        %v5515 = vunpack.c.h.b16 %v3847
        %v5516 = vunpack.c.l.b16 %v3848
        %v5517 = vunpack.c.h.b16 %v3848
        %v5518 = vunpack.c.l.b16 %v3849
        %v5519 = vunpack.c.h.b16 %v3849
        %v5520 = vunpack.c.l.b16 %v3850
        %v5521 = vunpack.c.h.b16 %v3850
        %v5522 = vunpack.c.l.b16 %v3851
        %v5523 = vunpack.c.h.b16 %v3851
        %v5524 = vunpack.c.l.b16 %v3852
        %v5525 = vunpack.c.h.b16 %v3852
        %v5526 = vunpack.c.l.b16 %v3853
        %v5527 = vunpack.c.h.b16 %v3853
        %v5528 = vpack.c.b16 %v4508, %v4504
        %v5529 = vpack.c.b16 %v4509, %v4505
        %v5530 = vpack.c.b16 %v4510, %v4506
        %v5531 = vpack.c.b16 %v4511, %v4507
        %v5532 = vpack.c.b16 %v4516, %v4512
        %v5533 = vpack.c.b16 %v4517, %v4513
        %v5534 = vpack.c.b16 %v4518, %v4514
        %v5535 = vpack.c.b16 %v4519, %v4515
        %v5536 = vpack.c.b16 %v4524, %v4520
        %v5537 = vpack.c.b16 %v4525, %v4521
        %v5538 = vpack.c.b16 %v4526, %v4522
        %v5539 = vpack.c.b16 %v4527, %v4523
        %v5540 = vpack.c.b16 %v4532, %v4528
        %v5541 = vpack.c.b16 %v4533, %v4529
        %v5542 = vpack.c.b16 %v4534, %v4530
        %v5543 = vpack.c.b16 %v4535, %v4531
        %v5544 = vpack.c.b16 %v4540, %v4536
        %v5545 = vpack.c.b16 %v4541, %v4537
        %v5546 = vpack.c.b16 %v4542, %v4538
        %v5547 = vpack.c.b16 %v4543, %v4539
        %v5548 = vpack.c.b16 %v4548, %v4544
        %v5549 = vpack.c.b16 %v4549, %v4545
        %v5550 = vpack.c.b16 %v4550, %v4546
        %v5551 = vpack.c.b16 %v4551, %v4547
        %v5552 = vpack.c.b16 %v4556, %v4552
        %v5553 = vpack.c.b16 %v4557, %v4553
        %v5554 = vpack.c.b16 %v4558, %v4554
        %v5555 = vpack.c.b16 %v4559, %v4555
        %v5556 = vpack.c.b16 %v4564, %v4560
        %v5557 = vpack.c.b16 %v4565, %v4561
        %v5558 = vpack.c.b16 %v4566, %v4562
        %v5559 = vpack.c.b16 %v4567, %v4563
        %v5560 = vpack.c.b16 %v4572, %v4568
        %v5561 = vpack.c.b16 %v4573, %v4569
        %v5562 = vpack.c.b16 %v4574, %v4570
        %v5563 = vpack.c.b16 %v4575, %v4571
        %v5564 = vpack.c.b16 %v4580, %v4576
        %v5565 = vpack.c.b16 %v4581, %v4577
        %v5566 = vpack.c.b16 %v4582, %v4578
        %v5567 = vpack.c.b16 %v4583, %v4579
        %v5568 = vpack.c.b16 %v4588, %v4584
        %v5569 = vpack.c.b16 %v4589, %v4585
        %v5570 = vpack.c.b16 %v4590, %v4586
        %v5571 = vpack.c.b16 %v4591, %v4587
        %v5572 = vpack.c.b16 %v4596, %v4592
        %v5573 = vpack.c.b16 %v4597, %v4593
        %v5574 = vpack.c.b16 %v4598, %v4594
        %v5575 = vpack.c.b16 %v4599, %v4595
        %v5576 = vpack.c.b16 %v4604, %v4600
        %v5577 = vpack.c.b16 %v4605, %v4601
        %v5578 = vpack.c.b16 %v4606, %v4602
        %v5579 = vpack.c.b16 %v4607, %v4603
        %v5580 = vpack.c.b16 %v4612, %v4608
        %v5581 = vpack.c.b16 %v4613, %v4609
        %v5582 = vpack.c.b16 %v4614, %v4610
        %v5583 = vpack.c.b16 %v4615, %v4611
        %v5584 = vpack.c.b16 %v4620, %v4616
        %v5585 = vpack.c.b16 %v4621, %v4617
        %v5586 = vpack.c.b16 %v4622, %v4618
        %v5587 = vpack.c.b16 %v4623, %v4619
        %v5588 = vpack.c.b16 %v4628, %v4624
        %v5589 = vpack.c.b16 %v4629, %v4625
        %v5590 = vpack.c.b16 %v4630, %v4626
        %v5591 = vpack.c.b16 %v4631, %v4627
        %v5592 = vpack.c.b16 %v4636, %v4632
        %v5593 = vpack.c.b16 %v4637, %v4633
        %v5594 = vpack.c.b16 %v4638, %v4634
        %v5595 = vpack.c.b16 %v4639, %v4635
        %v5596 = vpack.c.b16 %v4644, %v4640
        %v5597 = vpack.c.b16 %v4645, %v4641
        %v5598 = vpack.c.b16 %v4646, %v4642
        %v5599 = vpack.c.b16 %v4647, %v4643
        %v5600 = vpack.c.b16 %v4652, %v4648
        %v5601 = vpack.c.b16 %v4653, %v4649
        %v5602 = vpack.c.b16 %v4654, %v4650
        %v5603 = vpack.c.b16 %v4655, %v4651
        %v5604 = vpack.c.b16 %v4660, %v4656
        %v5605 = vpack.c.b16 %v4661, %v4657
        %v5606 = vpack.c.b16 %v4662, %v4658
        %v5607 = vpack.c.b16 %v4663, %v4659
        %v5608 = vpack.c.b16 %v4668, %v4664
        %v5609 = vpack.c.b16 %v4669, %v4665
        %v5610 = vpack.c.b16 %v4670, %v4666
        %v5611 = vpack.c.b16 %v4671, %v4667
        %v5612 = vpack.c.b16 %v4676, %v4672
        %v5613 = vpack.c.b16 %v4677, %v4673
        %v5614 = vpack.c.b16 %v4678, %v4674
        %v5615 = vpack.c.b16 %v4679, %v4675
        %v5616 = vpack.c.b16 %v4684, %v4680
        %v5617 = vpack.c.b16 %v4685, %v4681
        %v5618 = vpack.c.b16 %v4686, %v4682
        %v5619 = vpack.c.b16 %v4687, %v4683
        %v5620 = vpack.c.b16 %v4692, %v4688
        %v5621 = vpack.c.b16 %v4693, %v4689
        %v5622 = vpack.c.b16 %v4694, %v4690
        %v5623 = vpack.c.b16 %v4695, %v4691
        %v5624 = vpack.c.b16 %v4700, %v4696
        %v5625 = vpack.c.b16 %v4701, %v4697
        %v5626 = vpack.c.b16 %v4702, %v4698
        %v5627 = vpack.c.b16 %v4703, %v4699
        %v5628 = vpack.c.b16 %v4708, %v4704
        %v5629 = vpack.c.b16 %v4709, %v4705
        %v5630 = vpack.c.b16 %v4710, %v4706
        %v5631 = vpack.c.b16 %v4711, %v4707
        %v5632 = vpack.c.b16 %v4716, %v4712
        %v5633 = vpack.c.b16 %v4717, %v4713
        %v5634 = vpack.c.b16 %v4718, %v4714
        %v5635 = vpack.c.b16 %v4719, %v4715
        %v5636 = vpack.c.b16 %v4724, %v4720
        %v5637 = vpack.c.b16 %v4725, %v4721
        %v5638 = vpack.c.b16 %v4726, %v4722
        %v5639 = vpack.c.b16 %v4727, %v4723
        %v5640 = vpack.c.b16 %v4732, %v4728
        %v5641 = vpack.c.b16 %v4733, %v4729
        %v5642 = vpack.c.b16 %v4734, %v4730
        %v5643 = vpack.c.b16 %v4735, %v4731
        %v5644 = vpack.c.b16 %v4740, %v4736
        %v5645 = vpack.c.b16 %v4741, %v4737
        %v5646 = vpack.c.b16 %v4742, %v4738
        %v5647 = vpack.c.b16 %v4743, %v4739
        %v5648 = vpack.c.b16 %v4748, %v4744
        %v5649 = vpack.c.b16 %v4749, %v4745
        %v5650 = vpack.c.b16 %v4750, %v4746
        %v5651 = vpack.c.b16 %v4751, %v4747
        %v5652 = vpack.c.b16 %v4756, %v4752
        %v5653 = vpack.c.b16 %v4757, %v4753
        %v5654 = vpack.c.b16 %v4758, %v4754
        %v5655 = vpack.c.b16 %v4759, %v4755
        %v5656 = vpack.c.b16 %v4764, %v4760
        %v5657 = vpack.c.b16 %v4765, %v4761
        %v5658 = vpack.c.b16 %v4766, %v4762
        %v5659 = vpack.c.b16 %v4767, %v4763
        %v5660 = vpack.c.b16 %v4772, %v4768
        %v5661 = vpack.c.b16 %v4773, %v4769
        %v5662 = vpack.c.b16 %v4774, %v4770
        %v5663 = vpack.c.b16 %v4775, %v4771
        %v5664 = vpack.c.b16 %v4780, %v4776
        %v5665 = vpack.c.b16 %v4781, %v4777
        %v5666 = vpack.c.b16 %v4782, %v4778
        %v5667 = vpack.c.b16 %v4783, %v4779
        %v5668 = vpack.c.b16 %v4788, %v4784
        %v5669 = vpack.c.b16 %v4789, %v4785
        %v5670 = vpack.c.b16 %v4790, %v4786
        %v5671 = vpack.c.b16 %v4791, %v4787
        %v5672 = vpack.c.b16 %v4796, %v4792
        %v5673 = vpack.c.b16 %v4797, %v4793
        %v5674 = vpack.c.b16 %v4798, %v4794
        %v5675 = vpack.c.b16 %v4799, %v4795
        %v5676 = vpack.c.b16 %v4804, %v4800
        %v5677 = vpack.c.b16 %v4805, %v4801
        %v5678 = vpack.c.b16 %v4806, %v4802
        %v5679 = vpack.c.b16 %v4807, %v4803
        %v5680 = vpack.c.b16 %v4812, %v4808
        %v5681 = vpack.c.b16 %v4813, %v4809
        %v5682 = vpack.c.b16 %v4814, %v4810
        %v5683 = vpack.c.b16 %v4815, %v4811
        %v5684 = vpack.c.b16 %v4820, %v4816
        %v5685 = vpack.c.b16 %v4821, %v4817
        %v5686 = vpack.c.b16 %v4822, %v4818
        %v5687 = vpack.c.b16 %v4823, %v4819
        %v5688 = vpack.c.b16 %v4828, %v4824
        %v5689 = vpack.c.b16 %v4829, %v4825
        %v5690 = vpack.c.b16 %v4830, %v4826
        %v5691 = vpack.c.b16 %v4831, %v4827
        %v5692 = vpack.c.b16 %v4836, %v4832
        %v5693 = vpack.c.b16 %v4837, %v4833
        %v5694 = vpack.c.b16 %v4838, %v4834
        %v5695 = vpack.c.b16 %v4839, %v4835
        %v5696 = vpack.c.b16 %v4844, %v4840
        %v5697 = vpack.c.b16 %v4845, %v4841
        %v5698 = vpack.c.b16 %v4846, %v4842
        %v5699 = vpack.c.b16 %v4847, %v4843
        %v5700 = vpack.c.b16 %v4852, %v4848
        %v5701 = vpack.c.b16 %v4853, %v4849
        %v5702 = vpack.c.b16 %v4854, %v4850
        %v5703 = vpack.c.b16 %v4855, %v4851
        %v5704 = vpack.c.b16 %v4860, %v4856
        %v5705 = vpack.c.b16 %v4861, %v4857
        %v5706 = vpack.c.b16 %v4862, %v4858
        %v5707 = vpack.c.b16 %v4863, %v4859
        %v5708 = vpack.c.b16 %v4868, %v4864
        %v5709 = vpack.c.b16 %v4869, %v4865
        %v5710 = vpack.c.b16 %v4870, %v4866
        %v5711 = vpack.c.b16 %v4871, %v4867
        %v5712 = vpack.c.b16 %v4876, %v4872
        %v5713 = vpack.c.b16 %v4877, %v4873
        %v5714 = vpack.c.b16 %v4878, %v4874
        %v5715 = vpack.c.b16 %v4879, %v4875
        %v5716 = vpack.c.b16 %v4884, %v4880
        %v5717 = vpack.c.b16 %v4885, %v4881
        %v5718 = vpack.c.b16 %v4886, %v4882
        %v5719 = vpack.c.b16 %v4887, %v4883
        %v5720 = vpack.c.b16 %v4892, %v4888
        %v5721 = vpack.c.b16 %v4893, %v4889
        %v5722 = vpack.c.b16 %v4894, %v4890
        %v5723 = vpack.c.b16 %v4895, %v4891
        %v5724 = vpack.c.b16 %v4900, %v4896
        %v5725 = vpack.c.b16 %v4901, %v4897
        %v5726 = vpack.c.b16 %v4902, %v4898
        %v5727 = vpack.c.b16 %v4903, %v4899
        %v5728 = vpack.c.b16 %v4908, %v4904
        %v5729 = vpack.c.b16 %v4909, %v4905
        %v5730 = vpack.c.b16 %v4910, %v4906
        %v5731 = vpack.c.b16 %v4911, %v4907
        %v5732 = vpack.c.b16 %v4916, %v4912
        %v5733 = vpack.c.b16 %v4917, %v4913
        %v5734 = vpack.c.b16 %v4918, %v4914
        %v5735 = vpack.c.b16 %v4919, %v4915
        %v5736 = vpack.c.b16 %v4924, %v4920
        %v5737 = vpack.c.b16 %v4925, %v4921
        %v5738 = vpack.c.b16 %v4926, %v4922
        %v5739 = vpack.c.b16 %v4927, %v4923
        %v5740 = vpack.c.b16 %v4932, %v4928
        %v5741 = vpack.c.b16 %v4933, %v4929
        %v5742 = vpack.c.b16 %v4934, %v4930
        %v5743 = vpack.c.b16 %v4935, %v4931
        %v5744 = vpack.c.b16 %v4940, %v4936
        %v5745 = vpack.c.b16 %v4941, %v4937
        %v5746 = vpack.c.b16 %v4942, %v4938
        %v5747 = vpack.c.b16 %v4943, %v4939
        %v5748 = vpack.c.b16 %v4948, %v4944
        %v5749 = vpack.c.b16 %v4949, %v4945
        %v5750 = vpack.c.b16 %v4950, %v4946
        %v5751 = vpack.c.b16 %v4951, %v4947
        %v5752 = vpack.c.b16 %v4956, %v4952
        %v5753 = vpack.c.b16 %v4957, %v4953
        %v5754 = vpack.c.b16 %v4958, %v4954
        %v5755 = vpack.c.b16 %v4959, %v4955
        %v5756 = vpack.c.b16 %v4964, %v4960
        %v5757 = vpack.c.b16 %v4965, %v4961
        %v5758 = vpack.c.b16 %v4966, %v4962
        %v5759 = vpack.c.b16 %v4967, %v4963
        %v5760 = vpack.c.b16 %v4972, %v4968
        %v5761 = vpack.c.b16 %v4973, %v4969
        %v5762 = vpack.c.b16 %v4974, %v4970
        %v5763 = vpack.c.b16 %v4975, %v4971
        %v5764 = vpack.c.b16 %v4980, %v4976
        %v5765 = vpack.c.b16 %v4981, %v4977
        %v5766 = vpack.c.b16 %v4982, %v4978
        %v5767 = vpack.c.b16 %v4983, %v4979
        %v5768 = vpack.c.b16 %v4988, %v4984
        %v5769 = vpack.c.b16 %v4989, %v4985
        %v5770 = vpack.c.b16 %v4990, %v4986
        %v5771 = vpack.c.b16 %v4991, %v4987
        %v5772 = vpack.c.b16 %v4996, %v4992
        %v5773 = vpack.c.b16 %v4997, %v4993
        %v5774 = vpack.c.b16 %v4998, %v4994
        %v5775 = vpack.c.b16 %v4999, %v4995
        %v5776 = vpack.c.b16 %v5004, %v5000
        %v5777 = vpack.c.b16 %v5005, %v5001
        %v5778 = vpack.c.b16 %v5006, %v5002
        %v5779 = vpack.c.b16 %v5007, %v5003
        %v5780 = vpack.c.b16 %v5012, %v5008
        %v5781 = vpack.c.b16 %v5013, %v5009
        %v5782 = vpack.c.b16 %v5014, %v5010
        %v5783 = vpack.c.b16 %v5015, %v5011
        %v5784 = vpack.c.b16 %v5020, %v5016
        %v5785 = vpack.c.b16 %v5021, %v5017
        %v5786 = vpack.c.b16 %v5022, %v5018
        %v5787 = vpack.c.b16 %v5023, %v5019
        %v5788 = vpack.c.b16 %v5028, %v5024
        %v5789 = vpack.c.b16 %v5029, %v5025
        %v5790 = vpack.c.b16 %v5030, %v5026
        %v5791 = vpack.c.b16 %v5031, %v5027
        %v5792 = vpack.c.b16 %v5036, %v5032
        %v5793 = vpack.c.b16 %v5037, %v5033
        %v5794 = vpack.c.b16 %v5038, %v5034
        %v5795 = vpack.c.b16 %v5039, %v5035
        %v5796 = vpack.c.b16 %v5044, %v5040
        %v5797 = vpack.c.b16 %v5045, %v5041
        %v5798 = vpack.c.b16 %v5046, %v5042
        %v5799 = vpack.c.b16 %v5047, %v5043
        %v5800 = vpack.c.b16 %v5052, %v5048
        %v5801 = vpack.c.b16 %v5053, %v5049
        %v5802 = vpack.c.b16 %v5054, %v5050
        %v5803 = vpack.c.b16 %v5055, %v5051
        %v5804 = vpack.c.b16 %v5060, %v5056
        %v5805 = vpack.c.b16 %v5061, %v5057
        %v5806 = vpack.c.b16 %v5062, %v5058
        %v5807 = vpack.c.b16 %v5063, %v5059
        %v5808 = vpack.c.b16 %v5068, %v5064
        %v5809 = vpack.c.b16 %v5069, %v5065
        %v5810 = vpack.c.b16 %v5070, %v5066
        %v5811 = vpack.c.b16 %v5071, %v5067
        %v5812 = vpack.c.b16 %v5076, %v5072
        %v5813 = vpack.c.b16 %v5077, %v5073
        %v5814 = vpack.c.b16 %v5078, %v5074
        %v5815 = vpack.c.b16 %v5079, %v5075
        %v5816 = vpack.c.b16 %v5084, %v5080
        %v5817 = vpack.c.b16 %v5085, %v5081
        %v5818 = vpack.c.b16 %v5086, %v5082
        %v5819 = vpack.c.b16 %v5087, %v5083
        %v5820 = vpack.c.b16 %v5092, %v5088
        %v5821 = vpack.c.b16 %v5093, %v5089
        %v5822 = vpack.c.b16 %v5094, %v5090
        %v5823 = vpack.c.b16 %v5095, %v5091
        %v5824 = vpack.c.b16 %v5100, %v5096
        %v5825 = vpack.c.b16 %v5101, %v5097
        %v5826 = vpack.c.b16 %v5102, %v5098
        %v5827 = vpack.c.b16 %v5103, %v5099
        %v5828 = vpack.c.b16 %v5108, %v5104
        %v5829 = vpack.c.b16 %v5109, %v5105
        %v5830 = vpack.c.b16 %v5110, %v5106
        %v5831 = vpack.c.b16 %v5111, %v5107
        %v5832 = vpack.c.b16 %v5116, %v5112
        %v5833 = vpack.c.b16 %v5117, %v5113
        %v5834 = vpack.c.b16 %v5118, %v5114
        %v5835 = vpack.c.b16 %v5119, %v5115
        %v5836 = vpack.c.b16 %v5124, %v5120
        %v5837 = vpack.c.b16 %v5125, %v5121
        %v5838 = vpack.c.b16 %v5126, %v5122
        %v5839 = vpack.c.b16 %v5127, %v5123
        %v5840 = vpack.c.b16 %v5132, %v5128
        %v5841 = vpack.c.b16 %v5133, %v5129
        %v5842 = vpack.c.b16 %v5134, %v5130
        %v5843 = vpack.c.b16 %v5135, %v5131
        %v5844 = vpack.c.b16 %v5140, %v5136
        %v5845 = vpack.c.b16 %v5141, %v5137
        %v5846 = vpack.c.b16 %v5142, %v5138
        %v5847 = vpack.c.b16 %v5143, %v5139
        %v5848 = vpack.c.b16 %v5148, %v5144
        %v5849 = vpack.c.b16 %v5149, %v5145
        %v5850 = vpack.c.b16 %v5150, %v5146
        %v5851 = vpack.c.b16 %v5151, %v5147
        %v5852 = vpack.c.b16 %v5156, %v5152
        %v5853 = vpack.c.b16 %v5157, %v5153
        %v5854 = vpack.c.b16 %v5158, %v5154
        %v5855 = vpack.c.b16 %v5159, %v5155
        %v5856 = vpack.c.b16 %v5164, %v5160
        %v5857 = vpack.c.b16 %v5165, %v5161
        %v5858 = vpack.c.b16 %v5166, %v5162
        %v5859 = vpack.c.b16 %v5167, %v5163
        %v5860 = vpack.c.b16 %v5172, %v5168
        %v5861 = vpack.c.b16 %v5173, %v5169
        %v5862 = vpack.c.b16 %v5174, %v5170
        %v5863 = vpack.c.b16 %v5175, %v5171
        %v5864 = vpack.c.b16 %v5180, %v5176
        %v5865 = vpack.c.b16 %v5181, %v5177
        %v5866 = vpack.c.b16 %v5182, %v5178
        %v5867 = vpack.c.b16 %v5183, %v5179
        %v5868 = vpack.c.b16 %v5188, %v5184
        %v5869 = vpack.c.b16 %v5189, %v5185
        %v5870 = vpack.c.b16 %v5190, %v5186
        %v5871 = vpack.c.b16 %v5191, %v5187
        %v5872 = vpack.c.b16 %v5196, %v5192
        %v5873 = vpack.c.b16 %v5197, %v5193
        %v5874 = vpack.c.b16 %v5198, %v5194
        %v5875 = vpack.c.b16 %v5199, %v5195
        %v5876 = vpack.c.b16 %v5204, %v5200
        %v5877 = vpack.c.b16 %v5205, %v5201
        %v5878 = vpack.c.b16 %v5206, %v5202
        %v5879 = vpack.c.b16 %v5207, %v5203
        %v5880 = vpack.c.b16 %v5212, %v5208
        %v5881 = vpack.c.b16 %v5213, %v5209
        %v5882 = vpack.c.b16 %v5214, %v5210
        %v5883 = vpack.c.b16 %v5215, %v5211
        %v5884 = vpack.c.b16 %v5220, %v5216
        %v5885 = vpack.c.b16 %v5221, %v5217
        %v5886 = vpack.c.b16 %v5222, %v5218
        %v5887 = vpack.c.b16 %v5223, %v5219
        %v5888 = vpack.c.b16 %v5228, %v5224
        %v5889 = vpack.c.b16 %v5229, %v5225
        %v5890 = vpack.c.b16 %v5230, %v5226
        %v5891 = vpack.c.b16 %v5231, %v5227
        %v5892 = vpack.c.b16 %v5236, %v5232
        %v5893 = vpack.c.b16 %v5237, %v5233
        %v5894 = vpack.c.b16 %v5238, %v5234
        %v5895 = vpack.c.b16 %v5239, %v5235
        %v5896 = vpack.c.b16 %v5244, %v5240
        %v5897 = vpack.c.b16 %v5245, %v5241
        %v5898 = vpack.c.b16 %v5246, %v5242
        %v5899 = vpack.c.b16 %v5247, %v5243
        %v5900 = vpack.c.b16 %v5252, %v5248
        %v5901 = vpack.c.b16 %v5253, %v5249
        %v5902 = vpack.c.b16 %v5254, %v5250
        %v5903 = vpack.c.b16 %v5255, %v5251
        %v5904 = vpack.c.b16 %v5260, %v5256
        %v5905 = vpack.c.b16 %v5261, %v5257
        %v5906 = vpack.c.b16 %v5262, %v5258
        %v5907 = vpack.c.b16 %v5263, %v5259
        %v5908 = vpack.c.b16 %v5268, %v5264
        %v5909 = vpack.c.b16 %v5269, %v5265
        %v5910 = vpack.c.b16 %v5270, %v5266
        %v5911 = vpack.c.b16 %v5271, %v5267
        %v5912 = vpack.c.b16 %v5276, %v5272
        %v5913 = vpack.c.b16 %v5277, %v5273
        %v5914 = vpack.c.b16 %v5278, %v5274
        %v5915 = vpack.c.b16 %v5279, %v5275
        %v5916 = vpack.c.b16 %v5284, %v5280
        %v5917 = vpack.c.b16 %v5285, %v5281
        %v5918 = vpack.c.b16 %v5286, %v5282
        %v5919 = vpack.c.b16 %v5287, %v5283
        %v5920 = vpack.c.b16 %v5292, %v5288
        %v5921 = vpack.c.b16 %v5293, %v5289
        %v5922 = vpack.c.b16 %v5294, %v5290
        %v5923 = vpack.c.b16 %v5295, %v5291
        %v5924 = vpack.c.b16 %v5300, %v5296
        %v5925 = vpack.c.b16 %v5301, %v5297
        %v5926 = vpack.c.b16 %v5302, %v5298
        %v5927 = vpack.c.b16 %v5303, %v5299
        %v5928 = vpack.c.b16 %v5308, %v5304
        %v5929 = vpack.c.b16 %v5309, %v5305
        %v5930 = vpack.c.b16 %v5310, %v5306
        %v5931 = vpack.c.b16 %v5311, %v5307
        %v5932 = vpack.c.b16 %v5316, %v5312
        %v5933 = vpack.c.b16 %v5317, %v5313
        %v5934 = vpack.c.b16 %v5318, %v5314
        %v5935 = vpack.c.b16 %v5319, %v5315
        %v5936 = vpack.c.b16 %v5324, %v5320
        %v5937 = vpack.c.b16 %v5325, %v5321
        %v5938 = vpack.c.b16 %v5326, %v5322
        %v5939 = vpack.c.b16 %v5327, %v5323
        %v5940 = vpack.c.b16 %v5332, %v5328
        %v5941 = vpack.c.b16 %v5333, %v5329
        %v5942 = vpack.c.b16 %v5334, %v5330
        %v5943 = vpack.c.b16 %v5335, %v5331
        %v5944 = vpack.c.b16 %v5340, %v5336
        %v5945 = vpack.c.b16 %v5341, %v5337
        %v5946 = vpack.c.b16 %v5342, %v5338
        %v5947 = vpack.c.b16 %v5343, %v5339
        %v5948 = vpack.c.b16 %v5348, %v5344
        %v5949 = vpack.c.b16 %v5349, %v5345
        %v5950 = vpack.c.b16 %v5350, %v5346
        %v5951 = vpack.c.b16 %v5351, %v5347
        %v5952 = vpack.c.b16 %v5356, %v5352
        %v5953 = vpack.c.b16 %v5357, %v5353
        %v5954 = vpack.c.b16 %v5358, %v5354
        %v5955 = vpack.c.b16 %v5359, %v5355
        %v5956 = vpack.c.b16 %v5364, %v5360
        %v5957 = vpack.c.b16 %v5365, %v5361
        %v5958 = vpack.c.b16 %v5366, %v5362
        %v5959 = vpack.c.b16 %v5367, %v5363
        %v5960 = vpack.c.b16 %v5372, %v5368
        %v5961 = vpack.c.b16 %v5373, %v5369
        %v5962 = vpack.c.b16 %v5374, %v5370
        %v5963 = vpack.c.b16 %v5375, %v5371
        %v5964 = vpack.c.b16 %v5380, %v5376
        %v5965 = vpack.c.b16 %v5381, %v5377
        %v5966 = vpack.c.b16 %v5382, %v5378
        %v5967 = vpack.c.b16 %v5383, %v5379
        %v5968 = vpack.c.b16 %v5388, %v5384
        %v5969 = vpack.c.b16 %v5389, %v5385
        %v5970 = vpack.c.b16 %v5390, %v5386
        %v5971 = vpack.c.b16 %v5391, %v5387
        %v5972 = vpack.c.b16 %v5396, %v5392
        %v5973 = vpack.c.b16 %v5397, %v5393
        %v5974 = vpack.c.b16 %v5398, %v5394
        %v5975 = vpack.c.b16 %v5399, %v5395
        %v5976 = vpack.c.b16 %v5404, %v5400
        %v5977 = vpack.c.b16 %v5405, %v5401
        %v5978 = vpack.c.b16 %v5406, %v5402
        %v5979 = vpack.c.b16 %v5407, %v5403
        %v5980 = vpack.c.b16 %v5412, %v5408
        %v5981 = vpack.c.b16 %v5413, %v5409
        %v5982 = vpack.c.b16 %v5414, %v5410
        %v5983 = vpack.c.b16 %v5415, %v5411
        %v5984 = vpack.c.b16 %v5420, %v5416
        %v5985 = vpack.c.b16 %v5421, %v5417
        %v5986 = vpack.c.b16 %v5422, %v5418
        %v5987 = vpack.c.b16 %v5423, %v5419
        %v5988 = vpack.c.b16 %v5428, %v5424
        %v5989 = vpack.c.b16 %v5429, %v5425
        %v5990 = vpack.c.b16 %v5430, %v5426
        %v5991 = vpack.c.b16 %v5431, %v5427
        %v5992 = vpack.c.b16 %v5436, %v5432
        %v5993 = vpack.c.b16 %v5437, %v5433
        %v5994 = vpack.c.b16 %v5438, %v5434
        %v5995 = vpack.c.b16 %v5439, %v5435
        %v5996 = vpack.c.b16 %v5444, %v5440
        %v5997 = vpack.c.b16 %v5445, %v5441
        %v5998 = vpack.c.b16 %v5446, %v5442
        %v5999 = vpack.c.b16 %v5447, %v5443
        %v6000 = vpack.c.b16 %v5452, %v5448
        %v6001 = vpack.c.b16 %v5453, %v5449
        %v6002 = vpack.c.b16 %v5454, %v5450
        %v6003 = vpack.c.b16 %v5455, %v5451
        %v6004 = vpack.c.b16 %v5460, %v5456
        %v6005 = vpack.c.b16 %v5461, %v5457
        %v6006 = vpack.c.b16 %v5462, %v5458
        %v6007 = vpack.c.b16 %v5463, %v5459
        %v6008 = vpack.c.b16 %v5468, %v5464
        %v6009 = vpack.c.b16 %v5469, %v5465
        %v6010 = vpack.c.b16 %v5470, %v5466
        %v6011 = vpack.c.b16 %v5471, %v5467
        %v6012 = vpack.c.b16 %v5476, %v5472
        %v6013 = vpack.c.b16 %v5477, %v5473
        %v6014 = vpack.c.b16 %v5478, %v5474
        %v6015 = vpack.c.b16 %v5479, %v5475
        %v6016 = vpack.c.b16 %v5484, %v5480
        %v6017 = vpack.c.b16 %v5485, %v5481
        %v6018 = vpack.c.b16 %v5486, %v5482
        %v6019 = vpack.c.b16 %v5487, %v5483
        %v6020 = vpack.c.b16 %v5492, %v5488
        %v6021 = vpack.c.b16 %v5493, %v5489
        %v6022 = vpack.c.b16 %v5494, %v5490
        %v6023 = vpack.c.b16 %v5495, %v5491
        %v6024 = vpack.c.b16 %v5500, %v5496
        %v6025 = vpack.c.b16 %v5501, %v5497
        %v6026 = vpack.c.b16 %v5502, %v5498
        %v6027 = vpack.c.b16 %v5503, %v5499
        %v6028 = vpack.c.b16 %v5508, %v5504
        %v6029 = vpack.c.b16 %v5509, %v5505
        %v6030 = vpack.c.b16 %v5510, %v5506
        %v6031 = vpack.c.b16 %v5511, %v5507
        %v6032 = vpack.c.b16 %v5516, %v5512
        %v6033 = vpack.c.b16 %v5517, %v5513
        %v6034 = vpack.c.b16 %v5518, %v5514
        %v6035 = vpack.c.b16 %v5519, %v5515
        %v6036 = vpack.c.b16 %v5524, %v5520
        %v6037 = vpack.c.b16 %v5525, %v5521
        %v6038 = vpack.c.b16 %v5526, %v5522
        %v6039 = vpack.c.b16 %v5527, %v5523
        %6552 = vmatprep.subr.bf16.mxu0 %v5529
        %6553 = vmatpush1.bf16.msra.mxu0 %v5528
        %6554 = vmatprep.subr.bf16.mxu0 %v5533
        %6555 = vmatpush1.bf16.msra.mxu0 %v5532
        %6556 = vmatprep.subr.bf16.mxu0 %v5537
        %6557 = vmatpush1.bf16.msra.mxu0 %v5536
        %6558 = vmatprep.subr.bf16.mxu0 %v5541
        %6559 = vmatpush1.bf16.msra.mxu0 %v5540
        %6560 = vmatprep.subr.bf16.mxu0 %v5545
        %6561 = vmatpush1.bf16.msra.mxu0 %v5544
        %6562 = vmatprep.subr.bf16.mxu0 %v5549
        %6563 = vmatpush1.bf16.msra.mxu0 %v5548
        %6564 = vmatprep.subr.bf16.mxu0 %v5553
        %6565 = vmatpush1.bf16.msra.mxu0 %v5552
        %6566 = vmatprep.subr.bf16.mxu0 %v5557
        %6567 = vmatpush1.bf16.msra.mxu0 %v5556
        %6568 = vmatprep.subr.bf16.mxu0 %v5561
        %6569 = vmatpush1.bf16.msra.mxu0 %v5560
        %6570 = vmatprep.subr.bf16.mxu0 %v5565
        %6571 = vmatpush1.bf16.msra.mxu0 %v5564
        %6572 = vmatprep.subr.bf16.mxu0 %v5569
        %6573 = vmatpush1.bf16.msra.mxu0 %v5568
        %6574 = vmatprep.subr.bf16.mxu0 %v5573
        %6575 = vmatpush1.bf16.msra.mxu0 %v5572
        %6576 = vmatprep.subr.bf16.mxu0 %v5577
        %6577 = vmatpush1.bf16.msra.mxu0 %v5576
        %6578 = vmatprep.subr.bf16.mxu0 %v5581
        %6579 = vmatpush1.bf16.msra.mxu0 %v5580
        %6580 = vmatprep.subr.bf16.mxu0 %v5585
        %6581 = vmatpush1.bf16.msra.mxu0 %v5584
        %6582 = vmatprep.subr.bf16.mxu0 %v5589
        %6583 = vmatpush1.bf16.msra.mxu0 %v5588
        %6584 = vmatprep.mubr.bf16.mxu0 %v3915
        %6585 = vmatmul.mubr.bf16.gmra.mrb[0].mxu0 %v3901
        %v6586 = vpop.f32.mrb[0].mxu0
        %v6587 = vadd.f32 %v3859, %v6586
        %v6588 = vpop.f32.mrb[0].mxu0
        %v6589 = vadd.f32 %v3863, %v6588
        %v6590 = vpop.f32.mrb[0].mxu0
        %v6591 = vpop.f32.mrb[0].mxu0
        %6592 = vdwg.mxu0
        %6593 = vmatprep.subr.bf16.mxu0 %v5593
        %6594 = vmatpush1.bf16.msra.mxu0 %v5592
        %6595 = vmatprep.subr.bf16.mxu0 %v5597
        %6596 = vmatpush1.bf16.msra.mxu0 %v5596
        %6597 = vmatprep.subr.bf16.mxu0 %v5601
        %6598 = vmatpush1.bf16.msra.mxu0 %v5600
        %6599 = vmatprep.subr.bf16.mxu0 %v5605
        %6600 = vmatpush1.bf16.msra.mxu0 %v5604
        %6601 = vmatprep.subr.bf16.mxu0 %v5609
        %6602 = vmatpush1.bf16.msra.mxu0 %v5608
        %6603 = vmatprep.subr.bf16.mxu0 %v5613
        %6604 = vmatpush1.bf16.msra.mxu0 %v5612
        %6605 = vmatprep.subr.bf16.mxu0 %v5617
        %6606 = vmatpush1.bf16.msra.mxu0 %v5616
        %6607 = vmatprep.subr.bf16.mxu0 %v5621
        %6608 = vmatpush1.bf16.msra.mxu0 %v5620
        %6609 = vmatprep.subr.bf16.mxu0 %v5625
        %6610 = vmatpush1.bf16.msra.mxu0 %v5624
        %6611 = vmatprep.subr.bf16.mxu0 %v5629
        %6612 = vmatpush1.bf16.msra.mxu0 %v5628
        %6613 = vmatprep.subr.bf16.mxu0 %v5633
        %6614 = vmatpush1.bf16.msra.mxu0 %v5632
        %6615 = vmatprep.subr.bf16.mxu0 %v5637
        %6616 = vmatpush1.bf16.msra.mxu0 %v5636
        %6617 = vmatprep.subr.bf16.mxu0 %v5641
        %6618 = vmatpush1.bf16.msra.mxu0 %v5640
        %6619 = vmatprep.subr.bf16.mxu0 %v5645
        %6620 = vmatpush1.bf16.msra.mxu0 %v5644
        %6621 = vmatprep.subr.bf16.mxu0 %v5649
        %6622 = vmatpush1.bf16.msra.mxu0 %v5648
        %6623 = vmatprep.subr.bf16.mxu0 %v5653
        %6624 = vmatpush1.bf16.msra.mxu0 %v5652
        %6625 = vmatprep.mubr.bf16.mxu0 %v3925
        %6626 = vmatmul.mubr.bf16.gmra.mrb[0].mxu0 %v3923
        %v6627 = vpop.f32.mrb[0].mxu0
        %v6628 = vadd.f32 %v6587, %v6627
        %v6629 = vpop.f32.mrb[0].mxu0
        %v6630 = vadd.f32 %v6589, %v6629
        %v6631 = vpop.f32.mrb[0].mxu0
        %v6632 = vpop.f32.mrb[0].mxu0
        %6633 = vdwg.mxu0
        %6634 = vmatprep.subr.bf16.mxu0 %v5657
        %6635 = vmatpush1.bf16.msra.mxu0 %v5656
        %6636 = vmatprep.subr.bf16.mxu0 %v5661
        %6637 = vmatpush1.bf16.msra.mxu0 %v5660
        %6638 = vmatprep.subr.bf16.mxu0 %v5665
        %6639 = vmatpush1.bf16.msra.mxu0 %v5664
        %6640 = vmatprep.subr.bf16.mxu0 %v5669
        %6641 = vmatpush1.bf16.msra.mxu0 %v5668
        %6642 = vmatprep.subr.bf16.mxu0 %v5673
        %6643 = vmatpush1.bf16.msra.mxu0 %v5672
        %6644 = vmatprep.subr.bf16.mxu0 %v5677
        %6645 = vmatpush1.bf16.msra.mxu0 %v5676
        %6646 = vmatprep.subr.bf16.mxu0 %v5681
        %6647 = vmatpush1.bf16.msra.mxu0 %v5680
        %6648 = vmatprep.subr.bf16.mxu0 %v5685
        %6649 = vmatpush1.bf16.msra.mxu0 %v5684
        %6650 = vmatprep.subr.bf16.mxu0 %v5689
        %6651 = vmatpush1.bf16.msra.mxu0 %v5688
        %6652 = vmatprep.subr.bf16.mxu0 %v5693
        %6653 = vmatpush1.bf16.msra.mxu0 %v5692
        %6654 = vmatprep.subr.bf16.mxu0 %v5697
        %6655 = vmatpush1.bf16.msra.mxu0 %v5696
        %6656 = vmatprep.subr.bf16.mxu0 %v5701
        %6657 = vmatpush1.bf16.msra.mxu0 %v5700
        %6658 = vmatprep.subr.bf16.mxu0 %v5705
        %6659 = vmatpush1.bf16.msra.mxu0 %v5704
        %6660 = vmatprep.subr.bf16.mxu0 %v5709
        %6661 = vmatpush1.bf16.msra.mxu0 %v5708
        %6662 = vmatprep.subr.bf16.mxu0 %v5713
        %6663 = vmatpush1.bf16.msra.mxu0 %v5712
        %6664 = vmatprep.subr.bf16.mxu0 %v5717
        %6665 = vmatpush1.bf16.msra.mxu0 %v5716
        %6666 = vmatprep.mubr.bf16.mxu0 %v3922
        %6667 = vmatmul.mubr.bf16.gmra.mrb[0].mxu0 %v3908
        %v6668 = vpop.f32.mrb[0].mxu0
        %v6669 = vadd.f32 %v6628, %v6668
        %v6670 = vpop.f32.mrb[0].mxu0
        %v6671 = vadd.f32 %v6630, %v6670
        %v6672 = vpop.f32.mrb[0].mxu0
        %v6673 = vpop.f32.mrb[0].mxu0
        %6674 = vdwg.mxu0
        %6675 = vmatprep.subr.bf16.mxu0 %v5721
        %6676 = vmatpush1.bf16.msra.mxu0 %v5720
        %6677 = vmatprep.subr.bf16.mxu0 %v5725
        %6678 = vmatpush1.bf16.msra.mxu0 %v5724
        %6679 = vmatprep.subr.bf16.mxu0 %v5729
        %6680 = vmatpush1.bf16.msra.mxu0 %v5728
        %6681 = vmatprep.subr.bf16.mxu0 %v5733
        %6682 = vmatpush1.bf16.msra.mxu0 %v5732
        %6683 = vmatprep.subr.bf16.mxu0 %v5737
        %6684 = vmatpush1.bf16.msra.mxu0 %v5736
        %6685 = vmatprep.subr.bf16.mxu0 %v5741
        %6686 = vmatpush1.bf16.msra.mxu0 %v5740
        %6687 = vmatprep.subr.bf16.mxu0 %v5745
        %6688 = vmatpush1.bf16.msra.mxu0 %v5744
        %6689 = vmatprep.subr.bf16.mxu0 %v5749
        %6690 = vmatpush1.bf16.msra.mxu0 %v5748
        %6691 = vmatprep.subr.bf16.mxu0 %v5753
        %6692 = vmatpush1.bf16.msra.mxu0 %v5752
        %6693 = vmatprep.subr.bf16.mxu0 %v5757
        %6694 = vmatpush1.bf16.msra.mxu0 %v5756
        %6695 = vmatprep.subr.bf16.mxu0 %v5761
        %6696 = vmatpush1.bf16.msra.mxu0 %v5760
        %6697 = vmatprep.subr.bf16.mxu0 %v5765
        %6698 = vmatpush1.bf16.msra.mxu0 %v5764
        %6699 = vmatprep.subr.bf16.mxu0 %v5769
        %6700 = vmatpush1.bf16.msra.mxu0 %v5768
        %6701 = vmatprep.subr.bf16.mxu0 %v5773
        %6702 = vmatpush1.bf16.msra.mxu0 %v5772
        %6703 = vmatprep.subr.bf16.mxu0 %v5777
        %6704 = vmatpush1.bf16.msra.mxu0 %v5776
        %6705 = vmatprep.subr.bf16.mxu0 %v5781
        %6706 = vmatpush1.bf16.msra.mxu0 %v5780
        %6707 = vmatprep.mubr.bf16.mxu0 %v3926
        %6708 = vmatmul.mubr.bf16.gmra.mrb[0].mxu0 %v3924
        %v6709 = vpop.f32.mrb[0].mxu0
        %v6710 = vadd.f32 %v6669, %v6709
        %v6711 = vpop.f32.mrb[0].mxu0
        %v6712 = vadd.f32 %v6671, %v6711
        %v6713 = vpop.f32.mrb[0].mxu0
        %v6714 = vpop.f32.mrb[0].mxu0
        %6715 = vdwg.mxu0
        %6716 = vmatprep.subr.bf16.mxu0 %v5785
        %6717 = vmatpush1.bf16.msra.mxu0 %v5784
        %6718 = vmatprep.subr.bf16.mxu0 %v5789
        %6719 = vmatpush1.bf16.msra.mxu0 %v5788
        %6720 = vmatprep.subr.bf16.mxu0 %v5793
        %6721 = vmatpush1.bf16.msra.mxu0 %v5792
        %6722 = vmatprep.subr.bf16.mxu0 %v5797
        %6723 = vmatpush1.bf16.msra.mxu0 %v5796
        %6724 = vmatprep.subr.bf16.mxu0 %v5801
        %6725 = vmatpush1.bf16.msra.mxu0 %v5800
        %6726 = vmatprep.subr.bf16.mxu0 %v5805
        %6727 = vmatpush1.bf16.msra.mxu0 %v5804
        %6728 = vmatprep.subr.bf16.mxu0 %v5809
        %6729 = vmatpush1.bf16.msra.mxu0 %v5808
        %6730 = vmatprep.subr.bf16.mxu0 %v5813
        %6731 = vmatpush1.bf16.msra.mxu0 %v5812
        %6732 = vmatprep.subr.bf16.mxu0 %v5817
        %6733 = vmatpush1.bf16.msra.mxu0 %v5816
        %6734 = vmatprep.subr.bf16.mxu0 %v5821
        %6735 = vmatpush1.bf16.msra.mxu0 %v5820
        %6736 = vmatprep.subr.bf16.mxu0 %v5825
        %6737 = vmatpush1.bf16.msra.mxu0 %v5824
        %6738 = vmatprep.subr.bf16.mxu0 %v5829
        %6739 = vmatpush1.bf16.msra.mxu0 %v5828
        %6740 = vmatprep.subr.bf16.mxu0 %v5833
        %6741 = vmatpush1.bf16.msra.mxu0 %v5832
        %6742 = vmatprep.subr.bf16.mxu0 %v5837
        %6743 = vmatpush1.bf16.msra.mxu0 %v5836
        %6744 = vmatprep.subr.bf16.mxu0 %v5841
        %6745 = vmatpush1.bf16.msra.mxu0 %v5840
        %6746 = vmatprep.subr.bf16.mxu0 %v5845
        %6747 = vmatpush1.bf16.msra.mxu0 %v5844
        %6748 = vmatprep.mubr.bf16.mxu0 %v3964
        %6749 = vmatmul.mubr.bf16.gmra.mrb[0].mxu0 %v3950
        %v6750 = vpop.f32.mrb[0].mxu0
        %v6751 = vadd.f32 %v6710, %v6750
        %v6752 = vpop.f32.mrb[0].mxu0
        %v6753 = vadd.f32 %v6712, %v6752
        %v6754 = vpop.f32.mrb[0].mxu0
        %v6755 = vpop.f32.mrb[0].mxu0
        %6756 = vdwg.mxu0
        %6757 = vmatprep.subr.bf16.mxu0 %v5849
        %6758 = vmatpush1.bf16.msra.mxu0 %v5848
        %6759 = vmatprep.subr.bf16.mxu0 %v5853
        %6760 = vmatpush1.bf16.msra.mxu0 %v5852
        %6761 = vmatprep.subr.bf16.mxu0 %v5857
        %6762 = vmatpush1.bf16.msra.mxu0 %v5856
        %6763 = vmatprep.subr.bf16.mxu0 %v5861
        %6764 = vmatpush1.bf16.msra.mxu0 %v5860
        %6765 = vmatprep.subr.bf16.mxu0 %v5865
        %6766 = vmatpush1.bf16.msra.mxu0 %v5864
        %6767 = vmatprep.subr.bf16.mxu0 %v5869
        %6768 = vmatpush1.bf16.msra.mxu0 %v5868
        %6769 = vmatprep.subr.bf16.mxu0 %v5873
        %6770 = vmatpush1.bf16.msra.mxu0 %v5872
        %6771 = vmatprep.subr.bf16.mxu0 %v5877
        %6772 = vmatpush1.bf16.msra.mxu0 %v5876
        %6773 = vmatprep.subr.bf16.mxu0 %v5881
        %6774 = vmatpush1.bf16.msra.mxu0 %v5880
        %6775 = vmatprep.subr.bf16.mxu0 %v5885
        %6776 = vmatpush1.bf16.msra.mxu0 %v5884
        %6777 = vmatprep.subr.bf16.mxu0 %v5889
        %6778 = vmatpush1.bf16.msra.mxu0 %v5888
        %6779 = vmatprep.subr.bf16.mxu0 %v5893
        %6780 = vmatpush1.bf16.msra.mxu0 %v5892
        %6781 = vmatprep.subr.bf16.mxu0 %v5897
        %6782 = vmatpush1.bf16.msra.mxu0 %v5896
        %6783 = vmatprep.subr.bf16.mxu0 %v5901
        %6784 = vmatpush1.bf16.msra.mxu0 %v5900
        %6785 = vmatprep.subr.bf16.mxu0 %v5905
        %6786 = vmatpush1.bf16.msra.mxu0 %v5904
        %6787 = vmatprep.subr.bf16.mxu0 %v5909
        %6788 = vmatpush1.bf16.msra.mxu0 %v5908
        %6789 = vmatprep.mubr.bf16.mxu0 %v3974
        %6790 = vmatmul.mubr.bf16.gmra.mrb[0].mxu0 %v3972
        %v6791 = vpop.f32.mrb[0].mxu0
        %v6792 = vadd.f32 %v6751, %v6791
        %v6793 = vpop.f32.mrb[0].mxu0
        %v6794 = vadd.f32 %v6753, %v6793
        %v6795 = vpop.f32.mrb[0].mxu0
        %v6796 = vpop.f32.mrb[0].mxu0
        %6797 = vdwg.mxu0
        %6798 = vmatprep.subr.bf16.mxu0 %v5913
        %6799 = vmatpush1.bf16.msra.mxu0 %v5912
        %6800 = vmatprep.subr.bf16.mxu0 %v5917
        %6801 = vmatpush1.bf16.msra.mxu0 %v5916
        %6802 = vmatprep.subr.bf16.mxu0 %v5921
        %6803 = vmatpush1.bf16.msra.mxu0 %v5920
        %6804 = vmatprep.subr.bf16.mxu0 %v5925
        %6805 = vmatpush1.bf16.msra.mxu0 %v5924
        %6806 = vmatprep.subr.bf16.mxu0 %v5929
        %6807 = vmatpush1.bf16.msra.mxu0 %v5928
        %6808 = vmatprep.subr.bf16.mxu0 %v5933
        %6809 = vmatpush1.bf16.msra.mxu0 %v5932
        %6810 = vmatprep.subr.bf16.mxu0 %v5937
        %6811 = vmatpush1.bf16.msra.mxu0 %v5936
        %6812 = vmatprep.subr.bf16.mxu0 %v5941
        %6813 = vmatpush1.bf16.msra.mxu0 %v5940
        %6814 = vmatprep.subr.bf16.mxu0 %v5945
        %6815 = vmatpush1.bf16.msra.mxu0 %v5944
        %6816 = vmatprep.subr.bf16.mxu0 %v5949
        %6817 = vmatpush1.bf16.msra.mxu0 %v5948
        %6818 = vmatprep.subr.bf16.mxu0 %v5953
        %6819 = vmatpush1.bf16.msra.mxu0 %v5952
        %6820 = vmatprep.subr.bf16.mxu0 %v5957
        %6821 = vmatpush1.bf16.msra.mxu0 %v5956
        %6822 = vmatprep.subr.bf16.mxu0 %v5961
        %6823 = vmatpush1.bf16.msra.mxu0 %v5960
        %6824 = vmatprep.subr.bf16.mxu0 %v5965
        %6825 = vmatpush1.bf16.msra.mxu0 %v5964
        %6826 = vmatprep.subr.bf16.mxu0 %v5969
        %6827 = vmatpush1.bf16.msra.mxu0 %v5968
        %6828 = vmatprep.subr.bf16.mxu0 %v5973
        %6829 = vmatpush1.bf16.msra.mxu0 %v5972
        %6830 = vmatprep.mubr.bf16.mxu0 %v3971
        %6831 = vmatmul.mubr.bf16.gmra.mrb[0].mxu0 %v3957
        %v6832 = vpop.f32.mrb[0].mxu0
        %v6833 = vadd.f32 %v6792, %v6832
        %v6834 = vpop.f32.mrb[0].mxu0
        %v6835 = vadd.f32 %v6794, %v6834
        %v6836 = vpop.f32.mrb[0].mxu0
        %v6837 = vpop.f32.mrb[0].mxu0
        %6838 = vdwg.mxu0
        %6839 = vmatprep.subr.bf16.mxu0 %v5977
        %6840 = vmatpush1.bf16.msra.mxu0 %v5976
        %6841 = vmatprep.subr.bf16.mxu0 %v5981
        %6842 = vmatpush1.bf16.msra.mxu0 %v5980
        %6843 = vmatprep.subr.bf16.mxu0 %v5985
        %6844 = vmatpush1.bf16.msra.mxu0 %v5984
        %6845 = vmatprep.subr.bf16.mxu0 %v5989
        %6846 = vmatpush1.bf16.msra.mxu0 %v5988
        %6847 = vmatprep.subr.bf16.mxu0 %v5993
        %6848 = vmatpush1.bf16.msra.mxu0 %v5992
        %6849 = vmatprep.subr.bf16.mxu0 %v5997
        %6850 = vmatpush1.bf16.msra.mxu0 %v5996
        %6851 = vmatprep.subr.bf16.mxu0 %v6001
        %6852 = vmatpush1.bf16.msra.mxu0 %v6000
        %6853 = vmatprep.subr.bf16.mxu0 %v6005
        %6854 = vmatpush1.bf16.msra.mxu0 %v6004
        %6855 = vmatprep.subr.bf16.mxu0 %v6009
        %6856 = vmatpush1.bf16.msra.mxu0 %v6008
        %6857 = vmatprep.subr.bf16.mxu0 %v6013
        %6858 = vmatpush1.bf16.msra.mxu0 %v6012
        %6859 = vmatprep.subr.bf16.mxu0 %v6017
        %6860 = vmatpush1.bf16.msra.mxu0 %v6016
        %6861 = vmatprep.subr.bf16.mxu0 %v6021
        %6862 = vmatpush1.bf16.msra.mxu0 %v6020
        %6863 = vmatprep.subr.bf16.mxu0 %v6025
        %6864 = vmatpush1.bf16.msra.mxu0 %v6024
        %6865 = vmatprep.subr.bf16.mxu0 %v6029
        %6866 = vmatpush1.bf16.msra.mxu0 %v6028
        %6867 = vmatprep.subr.bf16.mxu0 %v6033
        %6868 = vmatpush1.bf16.msra.mxu0 %v6032
        %6869 = vmatprep.subr.bf16.mxu0 %v6037
        %6870 = vmatpush1.bf16.msra.mxu0 %v6036
        %6871 = vmatprep.mubr.bf16.mxu0 %v3975
        %6872 = vmatmul.mubr.bf16.gmra.mrb[0].mxu0 %v3973
        %v6873 = vpop.f32.mrb[0].mxu0
        %v6874 = vadd.f32 %v6833, %v6873
        %v6875 = vpop.f32.mrb[0].mxu0
        %v6876 = vadd.f32 %v6835, %v6875
        %v6877 = vpop.f32.mrb[0].mxu0
        %v6878 = vpop.f32.mrb[0].mxu0
        %6879 = vdwg.mxu0
        %6880 = vmatprep.subr.bf16.mxu0 %v5531
        %6881 = vmatpush1.bf16.msra.mxu0 %v5530
        %6882 = vmatprep.subr.bf16.mxu0 %v5535
        %6883 = vmatpush1.bf16.msra.mxu0 %v5534
        %6884 = vmatprep.subr.bf16.mxu0 %v5539
        %6885 = vmatpush1.bf16.msra.mxu0 %v5538
        %6886 = vmatprep.subr.bf16.mxu0 %v5543
        %6887 = vmatpush1.bf16.msra.mxu0 %v5542
        %6888 = vmatprep.subr.bf16.mxu0 %v5547
        %6889 = vmatpush1.bf16.msra.mxu0 %v5546
        %6890 = vmatprep.subr.bf16.mxu0 %v5551
        %6891 = vmatpush1.bf16.msra.mxu0 %v5550
        %6892 = vmatprep.subr.bf16.mxu0 %v5555
        %6893 = vmatpush1.bf16.msra.mxu0 %v5554
        %6894 = vmatprep.subr.bf16.mxu0 %v5559
        %6895 = vmatpush1.bf16.msra.mxu0 %v5558
        %6896 = vmatprep.subr.bf16.mxu0 %v5563
        %6897 = vmatpush1.bf16.msra.mxu0 %v5562
        %6898 = vmatprep.subr.bf16.mxu0 %v5567
        %6899 = vmatpush1.bf16.msra.mxu0 %v5566
        %6900 = vmatprep.subr.bf16.mxu0 %v5571
        %6901 = vmatpush1.bf16.msra.mxu0 %v5570
        %6902 = vmatprep.subr.bf16.mxu0 %v5575
        %6903 = vmatpush1.bf16.msra.mxu0 %v5574
        %6904 = vmatprep.subr.bf16.mxu0 %v5579
        %6905 = vmatpush1.bf16.msra.mxu0 %v5578
        %6906 = vmatprep.subr.bf16.mxu0 %v5583
        %6907 = vmatpush1.bf16.msra.mxu0 %v5582
        %6908 = vmatprep.subr.bf16.mxu0 %v5587
        %6909 = vmatpush1.bf16.msra.mxu0 %v5586
        %6910 = vmatprep.subr.bf16.mxu0 %v5591
        %6911 = vmatpush1.bf16.msra.mxu0 %v5590
        %6912 = vmatprep.mubr.bf16.mxu0 %v3915
        %6913 = vmatmul.mubr.bf16.gmra.mrb[0].mxu0 %v3901
        %v6914 = vpop.f32.mrb[0].mxu0
        %v6915 = vadd.f32 %v3867, %v6914
        %v6916 = vpop.f32.mrb[0].mxu0
        %v6917 = vadd.f32 %v3871, %v6916
        %v6918 = vpop.f32.mrb[0].mxu0
        %v6919 = vpop.f32.mrb[0].mxu0
        %6920 = vdwg.mxu0
        %6921 = vmatprep.subr.bf16.mxu0 %v5595
        %6922 = vmatpush1.bf16.msra.mxu0 %v5594
        %6923 = vmatprep.subr.bf16.mxu0 %v5599
        %6924 = vmatpush1.bf16.msra.mxu0 %v5598
        %6925 = vmatprep.subr.bf16.mxu0 %v5603
        %6926 = vmatpush1.bf16.msra.mxu0 %v5602
        %6927 = vmatprep.subr.bf16.mxu0 %v5607
        %6928 = vmatpush1.bf16.msra.mxu0 %v5606
        %6929 = vmatprep.subr.bf16.mxu0 %v5611
        %6930 = vmatpush1.bf16.msra.mxu0 %v5610
        %6931 = vmatprep.subr.bf16.mxu0 %v5615
        %6932 = vmatpush1.bf16.msra.mxu0 %v5614
        %6933 = vmatprep.subr.bf16.mxu0 %v5619
        %6934 = vmatpush1.bf16.msra.mxu0 %v5618
        %6935 = vmatprep.subr.bf16.mxu0 %v5623
        %6936 = vmatpush1.bf16.msra.mxu0 %v5622
        %6937 = vmatprep.subr.bf16.mxu0 %v5627
        %6938 = vmatpush1.bf16.msra.mxu0 %v5626
        %6939 = vmatprep.subr.bf16.mxu0 %v5631
        %6940 = vmatpush1.bf16.msra.mxu0 %v5630
        %6941 = vmatprep.subr.bf16.mxu0 %v5635
        %6942 = vmatpush1.bf16.msra.mxu0 %v5634
        %6943 = vmatprep.subr.bf16.mxu0 %v5639
        %6944 = vmatpush1.bf16.msra.mxu0 %v5638
        %6945 = vmatprep.subr.bf16.mxu0 %v5643
        %6946 = vmatpush1.bf16.msra.mxu0 %v5642
        %6947 = vmatprep.subr.bf16.mxu0 %v5647
        %6948 = vmatpush1.bf16.msra.mxu0 %v5646
        %6949 = vmatprep.subr.bf16.mxu0 %v5651
        %6950 = vmatpush1.bf16.msra.mxu0 %v5650
        %6951 = vmatprep.subr.bf16.mxu0 %v5655
        %6952 = vmatpush1.bf16.msra.mxu0 %v5654
        %6953 = vmatprep.mubr.bf16.mxu0 %v3925
        %6954 = vmatmul.mubr.bf16.gmra.mrb[0].mxu0 %v3923
        %v6955 = vpop.f32.mrb[0].mxu0
        %v6956 = vadd.f32 %v6915, %v6955
        %v6957 = vpop.f32.mrb[0].mxu0
        %v6958 = vadd.f32 %v6917, %v6957
        %v6959 = vpop.f32.mrb[0].mxu0
        %v6960 = vpop.f32.mrb[0].mxu0
        %6961 = vdwg.mxu0
        %6962 = vmatprep.subr.bf16.mxu0 %v5659
        %6963 = vmatpush1.bf16.msra.mxu0 %v5658
        %6964 = vmatprep.subr.bf16.mxu0 %v5663
        %6965 = vmatpush1.bf16.msra.mxu0 %v5662
        %6966 = vmatprep.subr.bf16.mxu0 %v5667
        %6967 = vmatpush1.bf16.msra.mxu0 %v5666
        %6968 = vmatprep.subr.bf16.mxu0 %v5671
        %6969 = vmatpush1.bf16.msra.mxu0 %v5670
        %6970 = vmatprep.subr.bf16.mxu0 %v5675
        %6971 = vmatpush1.bf16.msra.mxu0 %v5674
        %6972 = vmatprep.subr.bf16.mxu0 %v5679
        %6973 = vmatpush1.bf16.msra.mxu0 %v5678
        %6974 = vmatprep.subr.bf16.mxu0 %v5683
        %6975 = vmatpush1.bf16.msra.mxu0 %v5682
        %6976 = vmatprep.subr.bf16.mxu0 %v5687
        %6977 = vmatpush1.bf16.msra.mxu0 %v5686
        %6978 = vmatprep.subr.bf16.mxu0 %v5691
        %6979 = vmatpush1.bf16.msra.mxu0 %v5690
        %6980 = vmatprep.subr.bf16.mxu0 %v5695
        %6981 = vmatpush1.bf16.msra.mxu0 %v5694
        %6982 = vmatprep.subr.bf16.mxu0 %v5699
        %6983 = vmatpush1.bf16.msra.mxu0 %v5698
        %6984 = vmatprep.subr.bf16.mxu0 %v5703
        %6985 = vmatpush1.bf16.msra.mxu0 %v5702
        %6986 = vmatprep.subr.bf16.mxu0 %v5707
        %6987 = vmatpush1.bf16.msra.mxu0 %v5706
        %6988 = vmatprep.subr.bf16.mxu0 %v5711
        %6989 = vmatpush1.bf16.msra.mxu0 %v5710
        %6990 = vmatprep.subr.bf16.mxu0 %v5715
        %6991 = vmatpush1.bf16.msra.mxu0 %v5714
        %6992 = vmatprep.subr.bf16.mxu0 %v5719
        %6993 = vmatpush1.bf16.msra.mxu0 %v5718
        %6994 = vmatprep.mubr.bf16.mxu0 %v3922
        %6995 = vmatmul.mubr.bf16.gmra.mrb[0].mxu0 %v3908
        %v6996 = vpop.f32.mrb[0].mxu0
        %v6997 = vadd.f32 %v6956, %v6996
        %v6998 = vpop.f32.mrb[0].mxu0
        %v6999 = vadd.f32 %v6958, %v6998
        %v7000 = vpop.f32.mrb[0].mxu0
        %v7001 = vpop.f32.mrb[0].mxu0
        %7002 = vdwg.mxu0
        %7003 = vmatprep.subr.bf16.mxu0 %v5723
        %7004 = vmatpush1.bf16.msra.mxu0 %v5722
        %7005 = vmatprep.subr.bf16.mxu0 %v5727
        %7006 = vmatpush1.bf16.msra.mxu0 %v5726
        %7007 = vmatprep.subr.bf16.mxu0 %v5731
        %7008 = vmatpush1.bf16.msra.mxu0 %v5730
        %7009 = vmatprep.subr.bf16.mxu0 %v5735
        %7010 = vmatpush1.bf16.msra.mxu0 %v5734
        %7011 = vmatprep.subr.bf16.mxu0 %v5739
        %7012 = vmatpush1.bf16.msra.mxu0 %v5738
        %7013 = vmatprep.subr.bf16.mxu0 %v5743
        %7014 = vmatpush1.bf16.msra.mxu0 %v5742
        %7015 = vmatprep.subr.bf16.mxu0 %v5747
        %7016 = vmatpush1.bf16.msra.mxu0 %v5746
        %7017 = vmatprep.subr.bf16.mxu0 %v5751
        %7018 = vmatpush1.bf16.msra.mxu0 %v5750
        %7019 = vmatprep.subr.bf16.mxu0 %v5755
        %7020 = vmatpush1.bf16.msra.mxu0 %v5754
        %7021 = vmatprep.subr.bf16.mxu0 %v5759
        %7022 = vmatpush1.bf16.msra.mxu0 %v5758
        %7023 = vmatprep.subr.bf16.mxu0 %v5763
        %7024 = vmatpush1.bf16.msra.mxu0 %v5762
        %7025 = vmatprep.subr.bf16.mxu0 %v5767
        %7026 = vmatpush1.bf16.msra.mxu0 %v5766
        %7027 = vmatprep.subr.bf16.mxu0 %v5771
        %7028 = vmatpush1.bf16.msra.mxu0 %v5770
        %7029 = vmatprep.subr.bf16.mxu0 %v5775
        %7030 = vmatpush1.bf16.msra.mxu0 %v5774
        %7031 = vmatprep.subr.bf16.mxu0 %v5779
        %7032 = vmatpush1.bf16.msra.mxu0 %v5778
        %7033 = vmatprep.subr.bf16.mxu0 %v5783
        %7034 = vmatpush1.bf16.msra.mxu0 %v5782
        %7035 = vmatprep.mubr.bf16.mxu0 %v3926
        %7036 = vmatmul.mubr.bf16.gmra.mrb[0].mxu0 %v3924
        %v7037 = vpop.f32.mrb[0].mxu0
        %v7038 = vadd.f32 %v6997, %v7037
        %v7039 = vpop.f32.mrb[0].mxu0
        %v7040 = vadd.f32 %v6999, %v7039
        %v7041 = vpop.f32.mrb[0].mxu0
        %v7042 = vpop.f32.mrb[0].mxu0
        %7043 = vdwg.mxu0
        %7044 = vmatprep.subr.bf16.mxu0 %v5787
        %7045 = vmatpush1.bf16.msra.mxu0 %v5786
        %7046 = vmatprep.subr.bf16.mxu0 %v5791
        %7047 = vmatpush1.bf16.msra.mxu0 %v5790
        %7048 = vmatprep.subr.bf16.mxu0 %v5795
        %7049 = vmatpush1.bf16.msra.mxu0 %v5794
        %7050 = vmatprep.subr.bf16.mxu0 %v5799
        %7051 = vmatpush1.bf16.msra.mxu0 %v5798
        %7052 = vmatprep.subr.bf16.mxu0 %v5803
        %7053 = vmatpush1.bf16.msra.mxu0 %v5802
        %7054 = vmatprep.subr.bf16.mxu0 %v5807
        %7055 = vmatpush1.bf16.msra.mxu0 %v5806
        %7056 = vmatprep.subr.bf16.mxu0 %v5811
        %7057 = vmatpush1.bf16.msra.mxu0 %v5810
        %7058 = vmatprep.subr.bf16.mxu0 %v5815
        %7059 = vmatpush1.bf16.msra.mxu0 %v5814
        %7060 = vmatprep.subr.bf16.mxu0 %v5819
        %7061 = vmatpush1.bf16.msra.mxu0 %v5818
        %7062 = vmatprep.subr.bf16.mxu0 %v5823
        %7063 = vmatpush1.bf16.msra.mxu0 %v5822
        %7064 = vmatprep.subr.bf16.mxu0 %v5827
        %7065 = vmatpush1.bf16.msra.mxu0 %v5826
        %7066 = vmatprep.subr.bf16.mxu0 %v5831
        %7067 = vmatpush1.bf16.msra.mxu0 %v5830
        %7068 = vmatprep.subr.bf16.mxu0 %v5835
        %7069 = vmatpush1.bf16.msra.mxu0 %v5834
        %7070 = vmatprep.subr.bf16.mxu0 %v5839
        %7071 = vmatpush1.bf16.msra.mxu0 %v5838
        %7072 = vmatprep.subr.bf16.mxu0 %v5843
        %7073 = vmatpush1.bf16.msra.mxu0 %v5842
        %7074 = vmatprep.subr.bf16.mxu0 %v5847
        %7075 = vmatpush1.bf16.msra.mxu0 %v5846
        %7076 = vmatprep.mubr.bf16.mxu0 %v3964
        %7077 = vmatmul.mubr.bf16.gmra.mrb[0].mxu0 %v3950
        %v7078 = vpop.f32.mrb[0].mxu0
        %v7079 = vadd.f32 %v7038, %v7078
        %v7080 = vpop.f32.mrb[0].mxu0
        %v7081 = vadd.f32 %v7040, %v7080
        %v7082 = vpop.f32.mrb[0].mxu0
        %v7083 = vpop.f32.mrb[0].mxu0
        %7084 = vdwg.mxu0
        %7085 = vmatprep.subr.bf16.mxu0 %v5851
        %7086 = vmatpush1.bf16.msra.mxu0 %v5850
        %7087 = vmatprep.subr.bf16.mxu0 %v5855
        %7088 = vmatpush1.bf16.msra.mxu0 %v5854
        %7089 = vmatprep.subr.bf16.mxu0 %v5859
        %7090 = vmatpush1.bf16.msra.mxu0 %v5858
        %7091 = vmatprep.subr.bf16.mxu0 %v5863
        %7092 = vmatpush1.bf16.msra.mxu0 %v5862
        %7093 = vmatprep.subr.bf16.mxu0 %v5867
        %7094 = vmatpush1.bf16.msra.mxu0 %v5866
        %7095 = vmatprep.subr.bf16.mxu0 %v5871
        %7096 = vmatpush1.bf16.msra.mxu0 %v5870
        %7097 = vmatprep.subr.bf16.mxu0 %v5875
        %7098 = vmatpush1.bf16.msra.mxu0 %v5874
        %7099 = vmatprep.subr.bf16.mxu0 %v5879
        %7100 = vmatpush1.bf16.msra.mxu0 %v5878
        %7101 = vmatprep.subr.bf16.mxu0 %v5883
        %7102 = vmatpush1.bf16.msra.mxu0 %v5882
        %7103 = vmatprep.subr.bf16.mxu0 %v5887
        %7104 = vmatpush1.bf16.msra.mxu0 %v5886
        %7105 = vmatprep.subr.bf16.mxu0 %v5891
        %7106 = vmatpush1.bf16.msra.mxu0 %v5890
        %7107 = vmatprep.subr.bf16.mxu0 %v5895
        %7108 = vmatpush1.bf16.msra.mxu0 %v5894
        %7109 = vmatprep.subr.bf16.mxu0 %v5899
        %7110 = vmatpush1.bf16.msra.mxu0 %v5898
        %7111 = vmatprep.subr.bf16.mxu0 %v5903
        %7112 = vmatpush1.bf16.msra.mxu0 %v5902
        %7113 = vmatprep.subr.bf16.mxu0 %v5907
        %7114 = vmatpush1.bf16.msra.mxu0 %v5906
        %7115 = vmatprep.subr.bf16.mxu0 %v5911
        %7116 = vmatpush1.bf16.msra.mxu0 %v5910
        %7117 = vmatprep.mubr.bf16.mxu0 %v3974
        %7118 = vmatmul.mubr.bf16.gmra.mrb[0].mxu0 %v3972
        %v7119 = vpop.f32.mrb[0].mxu0
        %v7120 = vadd.f32 %v7079, %v7119
        %v7121 = vpop.f32.mrb[0].mxu0
        %v7122 = vadd.f32 %v7081, %v7121
        %v7123 = vpop.f32.mrb[0].mxu0
        %v7124 = vpop.f32.mrb[0].mxu0
        %7125 = vdwg.mxu0
        %7126 = vmatprep.subr.bf16.mxu0 %v5915
        %7127 = vmatpush1.bf16.msra.mxu0 %v5914
        %7128 = vmatprep.subr.bf16.mxu0 %v5919
        %7129 = vmatpush1.bf16.msra.mxu0 %v5918
        %7130 = vmatprep.subr.bf16.mxu0 %v5923
        %7131 = vmatpush1.bf16.msra.mxu0 %v5922
        %7132 = vmatprep.subr.bf16.mxu0 %v5927
        %7133 = vmatpush1.bf16.msra.mxu0 %v5926
        %7134 = vmatprep.subr.bf16.mxu0 %v5931
        %7135 = vmatpush1.bf16.msra.mxu0 %v5930
        %7136 = vmatprep.subr.bf16.mxu0 %v5935
        %7137 = vmatpush1.bf16.msra.mxu0 %v5934
        %7138 = vmatprep.subr.bf16.mxu0 %v5939
        %7139 = vmatpush1.bf16.msra.mxu0 %v5938
        %7140 = vmatprep.subr.bf16.mxu0 %v5943
        %7141 = vmatpush1.bf16.msra.mxu0 %v5942
        %7142 = vmatprep.subr.bf16.mxu0 %v5947
        %7143 = vmatpush1.bf16.msra.mxu0 %v5946
        %7144 = vmatprep.subr.bf16.mxu0 %v5951
        %7145 = vmatpush1.bf16.msra.mxu0 %v5950
        %7146 = vmatprep.subr.bf16.mxu0 %v5955
        %7147 = vmatpush1.bf16.msra.mxu0 %v5954
        %7148 = vmatprep.subr.bf16.mxu0 %v5959
        %7149 = vmatpush1.bf16.msra.mxu0 %v5958
        %7150 = vmatprep.subr.bf16.mxu0 %v5963
        %7151 = vmatpush1.bf16.msra.mxu0 %v5962
        %7152 = vmatprep.subr.bf16.mxu0 %v5967
        %7153 = vmatpush1.bf16.msra.mxu0 %v5966
        %7154 = vmatprep.subr.bf16.mxu0 %v5971
        %7155 = vmatpush1.bf16.msra.mxu0 %v5970
        %7156 = vmatprep.subr.bf16.mxu0 %v5975
        %7157 = vmatpush1.bf16.msra.mxu0 %v5974
        %7158 = vmatprep.mubr.bf16.mxu0 %v3971
        %7159 = vmatmul.mubr.bf16.gmra.mrb[0].mxu0 %v3957
        %v7160 = vpop.f32.mrb[0].mxu0
        %v7161 = vadd.f32 %v7120, %v7160
        %v7162 = vpop.f32.mrb[0].mxu0
        %v7163 = vadd.f32 %v7122, %v7162
        %v7164 = vpop.f32.mrb[0].mxu0
        %v7165 = vpop.f32.mrb[0].mxu0
        %7166 = vdwg.mxu0
        %7167 = vmatprep.subr.bf16.mxu0 %v5979
        %7168 = vmatpush1.bf16.msra.mxu0 %v5978
        %7169 = vmatprep.subr.bf16.mxu0 %v5983
        %7170 = vmatpush1.bf16.msra.mxu0 %v5982
        %7171 = vmatprep.subr.bf16.mxu0 %v5987
        %7172 = vmatpush1.bf16.msra.mxu0 %v5986
        %7173 = vmatprep.subr.bf16.mxu0 %v5991
        %7174 = vmatpush1.bf16.msra.mxu0 %v5990
        %7175 = vmatprep.subr.bf16.mxu0 %v5995
        %7176 = vmatpush1.bf16.msra.mxu0 %v5994
        %7177 = vmatprep.subr.bf16.mxu0 %v5999
        %7178 = vmatpush1.bf16.msra.mxu0 %v5998
        %7179 = vmatprep.subr.bf16.mxu0 %v6003
        %7180 = vmatpush1.bf16.msra.mxu0 %v6002
        %7181 = vmatprep.subr.bf16.mxu0 %v6007
        %7182 = vmatpush1.bf16.msra.mxu0 %v6006
        %7183 = vmatprep.subr.bf16.mxu0 %v6011
        %7184 = vmatpush1.bf16.msra.mxu0 %v6010
        %7185 = vmatprep.subr.bf16.mxu0 %v6015
        %7186 = vmatpush1.bf16.msra.mxu0 %v6014
        %7187 = vmatprep.subr.bf16.mxu0 %v6019
        %7188 = vmatpush1.bf16.msra.mxu0 %v6018
        %7189 = vmatprep.subr.bf16.mxu0 %v6023
        %7190 = vmatpush1.bf16.msra.mxu0 %v6022
        %7191 = vmatprep.subr.bf16.mxu0 %v6027
        %7192 = vmatpush1.bf16.msra.mxu0 %v6026
        %7193 = vmatprep.subr.bf16.mxu0 %v6031
        %7194 = vmatpush1.bf16.msra.mxu0 %v6030
        %7195 = vmatprep.subr.bf16.mxu0 %v6035
        %7196 = vmatpush1.bf16.msra.mxu0 %v6034
        %7197 = vmatprep.subr.bf16.mxu0 %v6039
        %7198 = vmatpush1.bf16.msra.mxu0 %v6038
        %7199 = vmatprep.mubr.bf16.mxu0 %v3975
        %7200 = vmatmul.mubr.bf16.gmra.mrb[0].mxu0 %v3973
        %v7201 = vpop.f32.mrb[0].mxu0
        %v7202 = vadd.f32 %v7161, %v7201
        %v7203 = vpop.f32.mrb[0].mxu0
        %v7204 = vadd.f32 %v7163, %v7203
        %v7205 = vpop.f32.mrb[0].mxu0
        %v7206 = vpop.f32.mrb[0].mxu0
        %7207 = vdwg.mxu0
        %v7208 = vmax.f32 %v6874, 0.0
        %v7209 = vmax.f32 %v6876, 0.0
        %v7210 = vmax.f32 %v7202, 0.0
        %v7211 = vmax.f32 %v7204, 0.0
        %v7212 = vld [vmem:[%s8] sm:$0x3]
        %v7213 = vld [vmem:[%s1373] sm:$0xff]
        %v7214 = vld [vmem:[%s1373 + $0x8] sm:$0xff]
        %v7215 = vld [vmem:[%s1373 + $0x10] sm:$0xff]
        %v7216 = vld [vmem:[%s1373 + $0x18] sm:$0xff]
        %v7217 = vld [vmem:[%s1373 + $0x20] sm:$0xff]
        %v7218 = vld [vmem:[%s1373 + $0x28] sm:$0xff]
        %v7219 = vld [vmem:[%s1373 + $0x30] sm:$0xff]
        %v7220 = vld [vmem:[%s1373 + $0x38] sm:$0xff]
        %v7221 = vld [vmem:[%s1373 + $0x40] sm:$0xff]
        %v7222 = vld [vmem:[%s1373 + $0x48] sm:$0xff]
        %v7223 = vld [vmem:[%s1373 + $0x50] sm:$0xff]
        %v7224 = vld [vmem:[%s1373 + $0x58] sm:$0xff]
        %v7225 = vld [vmem:[%s1373 + $0x60] sm:$0xff]
        %v7226 = vld [vmem:[%s1373 + $0x68] sm:$0xff]
        %v7227 = vld [vmem:[%s1373 + $0x70] sm:$0xff]
        %v7228 = vld [vmem:[%s1373 + $0x78] sm:$0xff]
        %v7229 = vld [vmem:[%s1373 + $0x80] sm:$0xff]
        %v7230 = vld [vmem:[%s1373 + $0x88] sm:$0xff]
        %v7231 = vld [vmem:[%s1373 + $0x90] sm:$0xff]
        %v7232 = vld [vmem:[%s1373 + $0x98] sm:$0xff]
        %v7233 = vld [vmem:[%s1373 + $0xa0] sm:$0xff]
        %v7234 = vld [vmem:[%s1373 + $0xa8] sm:$0xff]
        %v7235 = vld [vmem:[%s1373 + $0xb0] sm:$0xff]
        %v7236 = vld [vmem:[%s1373 + $0xb8] sm:$0xff]
        %v7237 = vld [vmem:[%s1373 + $0xc0] sm:$0xff]
        %v7238 = vld [vmem:[%s1373 + $0xc8] sm:$0xff]
        %v7239 = vld [vmem:[%s1373 + $0xd0] sm:$0xff]
        %v7240 = vld [vmem:[%s1373 + $0xd8] sm:$0xff]
        %v7241 = vld [vmem:[%s1373 + $0xe0] sm:$0xff]
        %v7242 = vld [vmem:[%s1373 + $0xe8] sm:$0xff]
        %v7243 = vld [vmem:[%s1373 + $0xf0] sm:$0xff]
        %v7244 = vld [vmem:[%s1373 + $0xf8] sm:$0xff]
        %v7245 = vld [vmem:[%s1373 + $0x100] sm:$0xff]
        %v7246 = vld [vmem:[%s1373 + $0x108] sm:$0xff]
        %v7247 = vld [vmem:[%s1373 + $0x110] sm:$0xff]
        %v7248 = vld [vmem:[%s1373 + $0x118] sm:$0xff]
        %v7249 = vld [vmem:[%s1373 + $0x120] sm:$0xff]
        %v7250 = vld [vmem:[%s1373 + $0x128] sm:$0xff]
        %v7251 = vld [vmem:[%s1373 + $0x130] sm:$0xff]
        %v7252 = vld [vmem:[%s1373 + $0x138] sm:$0xff]
        %v7253 = vld [vmem:[%s1373 + $0x140] sm:$0xff]
        %v7254 = vld [vmem:[%s1373 + $0x148] sm:$0xff]
        %v7255 = vld [vmem:[%s1373 + $0x150] sm:$0xff]
        %v7256 = vld [vmem:[%s1373 + $0x158] sm:$0xff]
        %v7257 = vld [vmem:[%s1373 + $0x160] sm:$0xff]
        %v7258 = vld [vmem:[%s1373 + $0x168] sm:$0xff]
        %v7259 = vld [vmem:[%s1373 + $0x170] sm:$0xff]
        %v7260 = vld [vmem:[%s1373 + $0x178] sm:$0xff]
        %v7261 = vld [vmem:[%s1373 + $0x180] sm:$0xff]
        %v7262 = vld [vmem:[%s1373 + $0x188] sm:$0xff]
        %v7263 = vld [vmem:[%s1373 + $0x190] sm:$0xff]
        %v7264 = vld [vmem:[%s1373 + $0x198] sm:$0xff]
        %v7265 = vld [vmem:[%s1373 + $0x1a0] sm:$0xff]
        %v7266 = vld [vmem:[%s1373 + $0x1a8] sm:$0xff]
        %v7267 = vld [vmem:[%s1373 + $0x1b0] sm:$0xff]
        %v7268 = vld [vmem:[%s1373 + $0x1b8] sm:$0xff]
        %v7269 = vld [vmem:[%s1373 + $0x1c0] sm:$0xff]
        %v7270 = vld [vmem:[%s1373 + $0x1c8] sm:$0xff]
        %v7271 = vld [vmem:[%s1373 + $0x1d0] sm:$0xff]
        %v7272 = vld [vmem:[%s1373 + $0x1d8] sm:$0xff]
        %v7273 = vld [vmem:[%s1373 + $0x1e0] sm:$0xff]
        %v7274 = vld [vmem:[%s1373 + $0x1e8] sm:$0xff]
        %v7275 = vld [vmem:[%s1373 + $0x1f0] sm:$0xff]
        %v7276 = vld [vmem:[%s1373 + $0x1f8] sm:$0xff]
        %7277 = vmatprep.subr.mxu0 0.0
        %7278 = vmatpush1.msra.mxu0 %v7213
        %7279 = vmatprep.subr.mxu0 0.0
        %7280 = vmatpush1.msra.mxu0 %v7214
        %7281 = vmatprep.subr.mxu0 0.0
        %7282 = vmatpush1.msra.mxu0 %v7215
        %7283 = vmatprep.subr.mxu0 0.0
        %7284 = vmatpush1.msra.mxu0 %v7216
        %7285 = vmatprep.subr.mxu0 0.0
        %7286 = vmatpush1.msra.mxu0 %v7217
        %7287 = vmatprep.subr.mxu0 0.0
        %7288 = vmatpush1.msra.mxu0 %v7218
        %7289 = vmatprep.subr.mxu0 0.0
        %7290 = vmatpush1.msra.mxu0 %v7219
        %7291 = vmatprep.subr.mxu0 0.0
        %7292 = vmatpush1.msra.mxu0 %v7220
        %7293 = vmatprep.subr.mxu0 0.0
        %7294 = vmatpush1.msra.mxu0 %v7221
        %7295 = vmatprep.subr.mxu0 0.0
        %7296 = vmatpush1.msra.mxu0 %v7222
        %7297 = vmatprep.subr.mxu0 0.0
        %7298 = vmatpush1.msra.mxu0 %v7223
        %7299 = vmatprep.subr.mxu0 0.0
        %7300 = vmatpush1.msra.mxu0 %v7224
        %7301 = vmatprep.subr.mxu0 0.0
        %7302 = vmatpush1.msra.mxu0 %v7225
        %7303 = vmatprep.subr.mxu0 0.0
        %7304 = vmatpush1.msra.mxu0 %v7226
        %7305 = vmatprep.subr.mxu0 0.0
        %7306 = vmatpush1.msra.mxu0 %v7227
        %7307 = vmatprep.subr.mxu0 0.0
        %7308 = vmatpush1.msra.mxu0 %v7228
        %7309 = vmatprep.subr.mxu0 0.0
        %7310 = vmatpush1.msra.mxu0 %v7229
        %7311 = vmatprep.subr.mxu0 0.0
        %7312 = vmatpush1.msra.mxu0 %v7230
        %7313 = vmatprep.subr.mxu0 0.0
        %7314 = vmatpush1.msra.mxu0 %v7231
        %7315 = vmatprep.subr.mxu0 0.0
        %7316 = vmatpush1.msra.mxu0 %v7232
        %7317 = vmatprep.subr.mxu0 0.0
        %7318 = vmatpush1.msra.mxu0 %v7233
        %7319 = vmatprep.subr.mxu0 0.0
        %7320 = vmatpush1.msra.mxu0 %v7234
        %7321 = vmatprep.subr.mxu0 0.0
        %7322 = vmatpush1.msra.mxu0 %v7235
        %7323 = vmatprep.subr.mxu0 0.0
        %7324 = vmatpush1.msra.mxu0 %v7236
        %7325 = vmatprep.subr.mxu0 0.0
        %7326 = vmatpush1.msra.mxu0 %v7237
        %7327 = vmatprep.subr.mxu0 0.0
        %7328 = vmatpush1.msra.mxu0 %v7238
        %7329 = vmatprep.subr.mxu0 0.0
        %7330 = vmatpush1.msra.mxu0 %v7239
        %7331 = vmatprep.subr.mxu0 0.0
        %7332 = vmatpush1.msra.mxu0 %v7240
        %7333 = vmatprep.subr.mxu0 0.0
        %7334 = vmatpush1.msra.mxu0 %v7241
        %7335 = vmatprep.subr.mxu0 0.0
        %7336 = vmatpush1.msra.mxu0 %v7242
        %7337 = vmatprep.subr.mxu0 0.0
        %7338 = vmatpush1.msra.mxu0 %v7243
        %7339 = vmatprep.subr.mxu0 0.0
        %7340 = vmatpush1.msra.mxu0 %v7244
        %7341 = vmatprep.mubr.f32.mxu0 %v7209
        %7342 = vmatmul.mubr.f32.gmra.mrb[0].mxu0 %v7208
        %v7343 = vpop.f32.mrb[0].mxu0
        %v7344 = vadd.f32 0.0, %v7343
        %v7345 = vpop.f32.mrb[0].mxu0
        %7346 = vdwg.mxu0
        %7347 = vmatprep.subr.mxu0 0.0
        %7348 = vmatpush1.msra.mxu0 %v7245
        %7349 = vmatprep.subr.mxu0 0.0
        %7350 = vmatpush1.msra.mxu0 %v7246
        %7351 = vmatprep.subr.mxu0 0.0
        %7352 = vmatpush1.msra.mxu0 %v7247
        %7353 = vmatprep.subr.mxu0 0.0
        %7354 = vmatpush1.msra.mxu0 %v7248
        %7355 = vmatprep.subr.mxu0 0.0
        %7356 = vmatpush1.msra.mxu0 %v7249
        %7357 = vmatprep.subr.mxu0 0.0
        %7358 = vmatpush1.msra.mxu0 %v7250
        %7359 = vmatprep.subr.mxu0 0.0
        %7360 = vmatpush1.msra.mxu0 %v7251
        %7361 = vmatprep.subr.mxu0 0.0
        %7362 = vmatpush1.msra.mxu0 %v7252
        %7363 = vmatprep.subr.mxu0 0.0
        %7364 = vmatpush1.msra.mxu0 %v7253
        %7365 = vmatprep.subr.mxu0 0.0
        %7366 = vmatpush1.msra.mxu0 %v7254
        %7367 = vmatprep.subr.mxu0 0.0
        %7368 = vmatpush1.msra.mxu0 %v7255
        %7369 = vmatprep.subr.mxu0 0.0
        %7370 = vmatpush1.msra.mxu0 %v7256
        %7371 = vmatprep.subr.mxu0 0.0
        %7372 = vmatpush1.msra.mxu0 %v7257
        %7373 = vmatprep.subr.mxu0 0.0
        %7374 = vmatpush1.msra.mxu0 %v7258
        %7375 = vmatprep.subr.mxu0 0.0
        %7376 = vmatpush1.msra.mxu0 %v7259
        %7377 = vmatprep.subr.mxu0 0.0
        %7378 = vmatpush1.msra.mxu0 %v7260
        %7379 = vmatprep.subr.mxu0 0.0
        %7380 = vmatpush1.msra.mxu0 %v7261
        %7381 = vmatprep.subr.mxu0 0.0
        %7382 = vmatpush1.msra.mxu0 %v7262
        %7383 = vmatprep.subr.mxu0 0.0
        %7384 = vmatpush1.msra.mxu0 %v7263
        %7385 = vmatprep.subr.mxu0 0.0
        %7386 = vmatpush1.msra.mxu0 %v7264
        %7387 = vmatprep.subr.mxu0 0.0
        %7388 = vmatpush1.msra.mxu0 %v7265
        %7389 = vmatprep.subr.mxu0 0.0
        %7390 = vmatpush1.msra.mxu0 %v7266
        %7391 = vmatprep.subr.mxu0 0.0
        %7392 = vmatpush1.msra.mxu0 %v7267
        %7393 = vmatprep.subr.mxu0 0.0
        %7394 = vmatpush1.msra.mxu0 %v7268
        %7395 = vmatprep.subr.mxu0 0.0
        %7396 = vmatpush1.msra.mxu0 %v7269
        %7397 = vmatprep.subr.mxu0 0.0
        %7398 = vmatpush1.msra.mxu0 %v7270
        %7399 = vmatprep.subr.mxu0 0.0
        %7400 = vmatpush1.msra.mxu0 %v7271
        %7401 = vmatprep.subr.mxu0 0.0
        %7402 = vmatpush1.msra.mxu0 %v7272
        %7403 = vmatprep.subr.mxu0 0.0
        %7404 = vmatpush1.msra.mxu0 %v7273
        %7405 = vmatprep.subr.mxu0 0.0
        %7406 = vmatpush1.msra.mxu0 %v7274
        %7407 = vmatprep.subr.mxu0 0.0
        %7408 = vmatpush1.msra.mxu0 %v7275
        %7409 = vmatprep.subr.mxu0 0.0
        %7410 = vmatpush1.msra.mxu0 %v7276
        %7411 = vmatprep.mubr.f32.mxu0 %v7211
        %7412 = vmatmul.mubr.f32.gmra.mrb[0].mxu0 %v7210
        %v7413 = vpop.f32.mrb[0].mxu0
        %v7414 = vadd.f32 %v7344, %v7413
        %v7415 = vpop.f32.mrb[0].mxu0
        %7416 = vdwg.mxu0
        %v7417 = vadd.f32 %v7212, %v7414
        %vm7418 = vcmask 58368
        %7419 = vst.msk [vmem:[%s8] sm:$0x3] %vm7418, %v7417
        %p7420 = scmp.eq.s32.totalorder %s19, 1
        // Predicated region
        $region80: #{regression_forward.1} parent=70 // pred_check
          %p7421 = pneg %p7420
        $region81: #{regression_forward.1} parent=70 // pred_check_branch
          %7423 = sbr.rel (%p7421) target = $region83
        $region82: #{regression_forward.1} parent=70 // pred_region
          %v7424 = vld [vmem:[%s8] sm:$0x3]
          %v7425 = vld [vmem:[%s7] sm:$0x1]
          %v7427 = vlaneseq
          %v7428 = vshrl.u32 %v7427, 7
          %v7429 = vsub.s32 0, %v7428
          %v7430 = vrot.slane %v7425, %v7429
          %v7432 = vadd.f32 %v7424, %v7430
          %v7433 = vlaneseq
          %v7434 = vand.u32 %v7433, 127
          %vm7435 = vcmp.ge.s32.totalorder %v7434, 3
          %vm7436 = vcmp.lt.s32.totalorder %v7434, 7
          %vm7437 = vmand %vm7435, %vm7436
          %v7438 = vmul.f32 %v7432, %v7432
          %v7439 = vsel %vm7437, %v7438, 0.0
          %v7440 = vsel %vm7418, %v7439, 0.0
          %7441 = vadd.xlane.f32.xlu0 %v7440
          %v7442 = vpop.xlane.xlu0 %7441
          %v7443 = vrsqrt.pop %v7442
          %v7444 = vmul.f32 %v7442, %v7443
          %vm7445 = vcmp.eq.f32.partialorder %v7442, inf
          %v7446 = vsel %vm7445, %v7442, %v7444
          %vm7447 = vcmp.eq.f32.partialorder %v7442, 0.0
          %v7448 = vand.u32 %v7442, 2147483648
          %v7449 = vsel %vm7447, %v7448, %v7446
          %v7450 = vmax.f32 %v7449, 1e-12
          %v7451 = vrcp.pop %v7450
          %v7452 = vmul.f32 1.0, %v7451
          %v7453 = vmul.f32 %v7432, %v7452
          %v7454 = vsel %vm7437, %v7453, %v7432
          %7455 = vst.msk [vmem:[%s8] sm:$0x3] %vm7418, %v7454
        $region83: #{regression_forward.1} parent=70 // pred_fallthru
          _
        // Predicated region
        $region84: #{regression_forward.1} parent=70 // pred_check
          %p7456 = pneg %p215
        $region85: #{regression_forward.1} parent=70 // pred_check_branch
          %7458 = sbr.rel (%p7456) target = $region87
        $region86: #{regression_forward.1} parent=70 // pred_region
          _
        $region87: #{regression_forward.1} parent=70 // pred_fallthru
          _
        // Predicated region
        $region88: #{regression_forward.1} parent=70 // pred_check
          %p7459 = pneg %p215
        $region89: #{regression_forward.1} parent=70 // pred_check_branch
          %7461 = sbr.rel (%p7459) target = $region91
        $region90: #{regression_forward.1} parent=70 // pred_region
          _
        $region91: #{regression_forward.1} parent=70 // pred_fallthru
          _
      $region71: #{regression_forward.1} parent=5 // pred_fallthru
        _
      %p7462 = scmp.le.s32.totalorder 2, %s14
      // Predicated region
      $region92: #{regression_forward.1} parent=5 // pred_check
        %p7463 = pneg %p7462
      $region93: #{regression_forward.1} parent=5 // pred_check_branch
        %7465 = sbr.rel (%p7463) target = $region95
      $region94: #{regression_forward.1} parent=5 // pred_region
        %s7466 = ssub.s32 %s14, 2
      $region95: #{regression_forward.1} parent=5 // pred_fallthru
        _
    $region6: #{regression_forward.1} parent=1 // loop_footer
      %s18 = sadd.s32 1, %s14
    $region7: #{regression_forward.1} parent=1 // loop_footer_branch
      %13 = sbr.rel target = $region3
    $region8: #{regression_forward.1} parent=1 // loop_exit
      _

</llo_original>
